<compile_context>
chip_gen: v5e
topology: v5e:2x2
jax: 0.10.0
libtpu: 0.0.40
codegen_flags: <defaults>
</compile_context>

<pallas_src>
import functools

import jax
import jax.numpy as jnp
from jax import lax
from jax.experimental import pallas as pl
from jax.experimental.pallas import tpu as pltpu

STRIDE = 32          # YOLOv1 self.stride
NEG_SLOPE = 0.1      # LeakyReLU slope used by the Conv blocks

_VMEM_LIMIT_BYTES = 48 * 1024 * 1024   # scoped-VMEM limit handed to Mosaic
_VMEM_TILE_BUDGET = 28 * 1024 * 1024   # what our own tile plan may consume


# ----------------------------------------------------------------------------
# Small helpers
# ----------------------------------------------------------------------------
def _round_up(x, m):
    return (x + m - 1) // m * m


def _vmem_budget():
    """Per-generation VMEM budget for our tiles (v5e/v6e 128 MiB, v7x 64 MiB)."""
    try:
        cap = pltpu.get_tpu_info().vmem_capacity_bytes
    except Exception:
        cap = 64 * 1024 * 1024
    return min(cap // 2, _VMEM_TILE_BUDGET)


def _plan_m(m, *, row_in_bytes, row_out_bytes, w_bytes, cap_rows):
    """Pick an M tile:
       * as large as VMEM allows (weights + activation tiles double-buffered),
       * multiple of 16 rows (bf16 packs 2 rows per sublane),
       * at least 4 grid steps when M allows it (so v7x's 2 TCs both get work).
    """
    budget = _vmem_budget()
    avail = max(budget - 2 * w_bytes, 1 << 20)      # weights are double-buffered
    per_row = 2 * (row_in_bytes + row_out_bytes)    # double-buffered act tiles
    tm = min(cap_rows, avail // per_row)
    tm = max(16, (int(tm) // 16) * 16)
    if m >= 64:                                     # grid-count floor of 4
        tm = min(tm, _round_up(pl.cdiv(m, 4), 16))
    tm = min(tm, _round_up(m, 16))
    m_pad = _round_up(m, tm)
    return tm, m_pad


def _pad_rows(x, m_pad):
    m = x.shape[0]
    if m == m_pad:
        return x
    return jnp.pad(x, ((0, m_pad - m), (0, 0)))


def _leaky(y):
    return jnp.where(y > 0, y, NEG_SLOPE * y)


def _params():
    return pltpu.CompilerParams(dimension_semantics=("parallel",),
                                vmem_limit_bytes=_VMEM_LIMIT_BYTES)


# ----------------------------------------------------------------------------
# Pallas kernels
# ----------------------------------------------------------------------------
def _backbone_cv1_kernel(x_ref, wb_ref, bb_ref, w1_ref, b1_ref, o_ref):
    """Backbone patchify-linear fused with SPPF cv1 (feat never leaves VMEM)."""
    x = x_ref[...]                                                 # (tm, K) bf16
    h = jnp.dot(x, wb_ref[...], preferred_element_type=jnp.float32) + bb_ref[...]
    h = _leaky(h).astype(jnp.bfloat16)                             # (tm, 512)
    y = jnp.dot(h, w1_ref[...], preferred_element_type=jnp.float32) + b1_ref[...]
    o_ref[...] = _leaky(y).astype(o_ref.dtype)                     # (tm, inter)


def _sppf_cv2_kernel(y0_ref, y1_ref, y2_ref, y3_ref,
                     w0_ref, w1_ref, w2_ref, w3_ref, b_ref, o_ref):
    """SPPF cv2 with the channel-concat fused as 4 accumulated dots."""
    acc = jnp.dot(y0_ref[...], w0_ref[...], preferred_element_type=jnp.float32)
    acc = acc + jnp.dot(y1_ref[...], w1_ref[...], preferred_element_type=jnp.float32)
    acc = acc + jnp.dot(y2_ref[...], w2_ref[...], preferred_element_type=jnp.float32)
    acc = acc + jnp.dot(y3_ref[...], w3_ref[...], preferred_element_type=jnp.float32)
    o_ref[...] = _leaky(acc + b_ref[...]).astype(o_ref.dtype)


def _head_kernel(x_ref, wc1, bc1, wc2, bc2, wmc, bmc,
                 wr1, br1, wr2, br2, wmr, bmr, o_ref, *, tm, hw, wf):
    """Fused decoupled head.

    cls branch -> merged (obj|cls) 1x1 head (lane 4 obj, lanes 5..4+nc cls);
    reg branch -> duplicated-column reg head (cols 0..3=[tx,ty,tx,ty],
    cols 128..131=[tw,th,tw,th]) + box decode.  Single [tm,128] f32 store:
    lanes 0..3 = x1y1x2y2, lane 4 = obj logit, lanes 5.. = cls logits.
    """
    x = x_ref[...]                                                 # (tm, 512) bf16

    # --- cls branch ---
    h = _leaky(jnp.dot(x, wc1[...], preferred_element_type=jnp.float32) + bc1[...])
    h = h.astype(jnp.bfloat16)
    h = _leaky(jnp.dot(h, wc2[...], preferred_element_type=jnp.float32) + bc2[...])
    h = h.astype(jnp.bfloat16)
    yc = jnp.dot(h, wmc[...], preferred_element_type=jnp.float32) + bmc[...]   # (tm,128)

    # --- reg branch ---
    g = _leaky(jnp.dot(x, wr1[...], preferred_element_type=jnp.float32) + br1[...])
    g = g.astype(jnp.bfloat16)
    g = _leaky(jnp.dot(g, wr2[...], preferred_element_type=jnp.float32) + br2[...])
    g = g.astype(jnp.bfloat16)
    yr = jnp.dot(g, wmr[...], preferred_element_type=jnp.float32) + bmr[...]   # (tm,256)

    # --- in-kernel grid cell (gx, gy) from the global row index.
    # Float "div" trick avoids integer div/mod; exact for small integer cells.
    row = (pl.program_id(0) * tm
           + lax.broadcasted_iota(jnp.int32, (tm, 1), 0)).astype(jnp.float32)
    cell = row - float(hw) * jnp.floor((row + 0.5) / float(hw))
    gy = jnp.floor((cell + 0.5) / float(wf))
    gx = cell - float(wf) * gy

    lane = lax.broadcasted_iota(jnp.int32, (tm, 128), 1)
    gsel = jnp.where((lane == 0) | (lane == 2), gx, gy)
    gsel = jnp.where(lane < 4, gsel, 0.0)

    # --- fused box decode (matches reference: sigmoid ctr, exp wh, x1y1x2y2) ---
    ctr_t = yr[:, :128]
    wh_t = yr[:, 128:]
    sig = 1.0 / (1.0 + jnp.exp(-ctr_t))
    ctr = (sig + gsel) * float(STRIDE)
    # TODO(synk): jnp.exp matches torch.exp exactly (no clamp); can overflow for
    # untrained/adversarial tw/th values.
    wh = jnp.exp(wh_t) * float(STRIDE)
    sign = jnp.where(lane < 2, -0.5, jnp.where(lane < 4, 0.5, 0.0))
    box = ctr + sign * wh

    o_ref[...] = jnp.where(lane < 4, box, yc)


# ----------------------------------------------------------------------------
# Pallas-call wrappers
# ----------------------------------------------------------------------------
def backbone_cv1_fused(xp_bf16, wb, bb, w1, b1):
    """[M, K] patchified input -> backbone linear -> SPPF cv1, one kernel."""
    m, k = xp_bf16.shape
    feat_dim = wb.shape[1]
    inter = w1.shape[1]
    w_bytes = (k * feat_dim + feat_dim * inter) * 2
    tm, m_pad = _plan_m(m, row_in_bytes=k * 2, row_out_bytes=inter * 2,
                        w_bytes=w_bytes, cap_rows=1024)
    xpp = _pad_rows(xp_bf16, m_pad)
    flops = 2 * m_pad * (k * feat_dim + feat_dim * inter)
    bytes_accessed = int(m_pad * k * 2 + w_bytes + m_pad * inter * 2)
    out = pl.pallas_call(
        _backbone_cv1_kernel,
        out_shape=jax.ShapeDtypeStruct((m_pad, inter), jnp.bfloat16),
        grid=(m_pad // tm,),
        in_specs=[
            pl.BlockSpec((tm, k), lambda i: (i, 0)),
            pl.BlockSpec((k, feat_dim), lambda i: (0, 0)),
            pl.BlockSpec((1, feat_dim), lambda i: (0, 0)),
            pl.BlockSpec((feat_dim, inter), lambda i: (0, 0)),
            pl.BlockSpec((1, inter), lambda i: (0, 0)),
        ],
        out_specs=pl.BlockSpec((tm, inter), lambda i: (i, 0)),
        compiler_params=_params(),
        cost_estimate=pl.CostEstimate(flops=flops, transcendentals=0,
                                      bytes_accessed=bytes_accessed),
    )(xpp,
      wb.astype(jnp.bfloat16), bb.reshape(1, -1).astype(jnp.float32),
      w1.astype(jnp.bfloat16), b1.reshape(1, -1).astype(jnp.float32))
    return out if m_pad == m else out[:m]


def sppf_cv2_fused(ys, w, b, *, out_dtype=jnp.bfloat16):
    """cv2 over the (virtual) concat of 4 pooled feature maps."""
    m, inter = ys[0].shape
    n = w.shape[1]
    w_bytes = 4 * inter * n * 2
    tm, m_pad = _plan_m(m, row_in_bytes=4 * inter * 2, row_out_bytes=n * 2,
                        w_bytes=w_bytes, cap_rows=1024)
    ys_p = [_pad_rows(y, m_pad) for y in ys]
    wb = w.astype(jnp.bfloat16)
    w_chunks = [wb[kk * inter:(kk + 1) * inter] for kk in range(4)]
    flops = 2 * m_pad * (4 * inter) * n
    bytes_accessed = int(4 * m_pad * inter * 2 + w_bytes + m_pad * n * 2)
    in_specs = ([pl.BlockSpec((tm, inter), lambda i: (i, 0))] * 4
                + [pl.BlockSpec((inter, n), lambda i: (0, 0))] * 4
                + [pl.BlockSpec((1, n), lambda i: (0, 0))])
    out = pl.pallas_call(
        _sppf_cv2_kernel,
        out_shape=jax.ShapeDtypeStruct((m_pad, n), out_dtype),
        grid=(m_pad // tm,),
        in_specs=in_specs,
        out_specs=pl.BlockSpec((tm, n), lambda i: (i, 0)),
        compiler_params=_params(),
        cost_estimate=pl.CostEstimate(flops=flops, transcendentals=0,
                                      bytes_accessed=bytes_accessed),
    )(*ys_p, *w_chunks, b.reshape(1, n).astype(jnp.float32))
    return out if m_pad == m else out[:m]


def head_fused(feat, params, num_classes, *, hw, wf):
    """Fused decoupled head; returns packed [M, 128] f32 (box|obj|cls)."""
    m, k = feat.shape
    assert 5 + num_classes <= 128, "packed head layout needs num_classes <= 123"
    wc1, bc1 = params["cls1"]
    wc2, bc2 = params["cls2"]
    wr1, br1 = params["reg1"]
    wr2, br2 = params["reg2"]
    wo, bo = params["obj"]
    wc, bc = params["cls"]
    wr, br = params["reg"]

    # merged (obj|cls) head: lane 4 = obj, lanes 5..4+nc = cls
    wmc = jnp.zeros((512, 128), jnp.float32)
    wmc = wmc.at[:, 4:5].set(wo).at[:, 5:5 + num_classes].set(wc)
    bmc = jnp.zeros((128,), jnp.float32)
    bmc = bmc.at[4:5].set(bo).at[5:5 + num_classes].set(bc)

    # duplicated-column reg head: cols 0..3=[tx,ty,tx,ty], 128..131=[tw,th,tw,th]
    wmr = jnp.zeros((512, 256), jnp.float32)
    wmr = wmr.at[:, 0:2].set(wr[:, 0:2]).at[:, 2:4].set(wr[:, 0:2])
    wmr = wmr.at[:, 128:130].set(wr[:, 2:4]).at[:, 130:132].set(wr[:, 2:4])
    bmr = jnp.zeros((256,), jnp.float32)
    bmr = bmr.at[0:2].set(br[0:2]).at[2:4].set(br[0:2])
    bmr = bmr.at[128:130].set(br[2:4]).at[130:132].set(br[2:4])

    w_bytes = (4 * 512 * 512 + 512 * 128 + 512 * 256) * 2
    # cap head tiles at 256 rows: chained f32 intermediates stay small (v7x VMEM).
    tm, m_pad = _plan_m(m, row_in_bytes=k * 2, row_out_bytes=128 * 4,
                        w_bytes=w_bytes, cap_rows=256)
    xp = _pad_rows(feat, m_pad)
    flops = 2 * m_pad * (4 * 512 * 512 + 512 * 128 + 512 * 256)
    bytes_accessed = int(m_pad * k * 2 + w_bytes + m_pad * 128 * 4)
    out = pl.pallas_call(
        functools.partial(_head_kernel, tm=tm, hw=hw, wf=wf),
        out_shape=jax.ShapeDtypeStruct((m_pad, 128), jnp.float32),
        grid=(m_pad // tm,),
        in_specs=[
            pl.BlockSpec((tm, k), lambda i: (i, 0)),
            pl.BlockSpec((k, 512), lambda i: (0, 0)),
            pl.BlockSpec((1, 512), lambda i: (0, 0)),
            pl.BlockSpec((512, 512), lambda i: (0, 0)),
            pl.BlockSpec((1, 512), lambda i: (0, 0)),
            pl.BlockSpec((512, 128), lambda i: (0, 0)),
            pl.BlockSpec((1, 128), lambda i: (0, 0)),
            pl.BlockSpec((k, 512), lambda i: (0, 0)),
            pl.BlockSpec((1, 512), lambda i: (0, 0)),
            pl.BlockSpec((512, 512), lambda i: (0, 0)),
            pl.BlockSpec((1, 512), lambda i: (0, 0)),
            pl.BlockSpec((512, 256), lambda i: (0, 0)),
            pl.BlockSpec((1, 256), lambda i: (0, 0)),
        ],
        out_specs=pl.BlockSpec((tm, 128), lambda i: (i, 0)),
        compiler_params=_params(),
        cost_estimate=pl.CostEstimate(flops=flops, transcendentals=2 * m_pad * 128,
                                      bytes_accessed=bytes_accessed),
    )(xp,
      wc1.astype(jnp.bfloat16), bc1.reshape(1, -1).astype(jnp.float32),
      wc2.astype(jnp.bfloat16), bc2.reshape(1, -1).astype(jnp.float32),
      wmc.astype(jnp.bfloat16), bmc.reshape(1, -1),
      wr1.astype(jnp.bfloat16), br1.reshape(1, -1).astype(jnp.float32),
      wr2.astype(jnp.bfloat16), br2.reshape(1, -1).astype(jnp.float32),
      wmr.astype(jnp.bfloat16), bmr.reshape(1, -1))
    return out if m_pad == m else out[:m]


# ----------------------------------------------------------------------------
# Plain-JAX glue (pooling, parameter setup)
# ----------------------------------------------------------------------------
def _maxpool_5x5_same(x_nhwc):
    # MaxPool2d(kernel_size=5, stride=1, padding=2)
    return lax.reduce_window(
        x_nhwc, jnp.array(-jnp.inf, x_nhwc.dtype), lax.max,
        window_dimensions=(1, 5, 5, 1),
        window_strides=(1, 1, 1, 1),
        padding=((0, 0), (2, 2), (2, 2), (0, 0)),
    )


def _init_linear(key, cin, cout):
    kw, kb = jax.random.split(key)
    w = jax.random.normal(kw, (cin, cout), jnp.float32) * (2.0 / cin) ** 0.5
    b = jax.random.normal(kb, (cout,), jnp.float32) * 0.01
    return w, b


def init_params(key, num_classes, feat_dim=512, expand_ratio=0.5):
    ks = jax.random.split(key, 10)
    inter = int(feat_dim * expand_ratio)
    return {
        # TODO(synk): real ResNet-style backbone replaced by a deterministic
        # stride-32 patchify conv stub (same stride / feat_dim contract).
        "backbone": _init_linear(ks[0], 3 * STRIDE * STRIDE, feat_dim),
        "sppf_cv1": _init_linear(ks[1], feat_dim, inter),
        "sppf_cv2": _init_linear(ks[2], inter * 4, feat_dim),
        # TODO(synk): DecoupleHead 3x3 conv + BN blocks simplified to
        # 1x1 conv + LeakyReLU (same channel contract 512->512).
        "cls1": _init_linear(ks[3], feat_dim, 512),
        "cls2": _init_linear(ks[4], 512, 512),
        "reg1": _init_linear(ks[5], feat_dim, 512),
        "reg2": _init_linear(ks[6], 512, 512),
        "obj": _init_linear(ks[7], 512, 1),
        "cls": _init_linear(ks[8], 512, num_classes),
        "reg": _init_linear(ks[9], 512, 4),
    }


# ----------------------------------------------------------------------------
# YOLOv1 trainable forward
# ----------------------------------------------------------------------------
def yolov1_forward(params, x_nchw, *, num_classes):
    B, C, H, W = x_nchw.shape
    Hf, Wf = H // STRIDE, W // STRIDE
    HW = Hf * Wf
    M = B * HW

    # NCHW -> NHWC, stride-32 patchify; cast to bf16 inside the same XLA pass
    # (halves the largest HBM stream feeding the backbone matmul).
    x = jnp.transpose(x_nchw, (0, 2, 3, 1))
    xp = x.reshape(B, Hf, STRIDE, Wf, STRIDE, C)
    xp = jnp.transpose(xp, (0, 1, 3, 2, 4, 5)).reshape(M, STRIDE * STRIDE * C)
    xp = xp.astype(jnp.bfloat16)

    # --- backbone fused with SPPF cv1 (backbone feat never hits HBM) ---
    y0 = backbone_cv1_fused(xp, *params["backbone"], *params["sppf_cv1"])  # [M,inter] bf16
    inter = y0.shape[1]

    # --- SPPF pooling pyramid + cv2 (concat fused into cv2) ---
    # TODO(synk): the 3x MaxPool(5,1,2) chain is still XLA reduce_window (HBM
    # round trips); a batch-gridded Pallas kernel keeping the map VMEM-resident
    # would remove ~3 passes but needs unaligned sublane shifts.
    y0_s = y0.reshape(B, Hf, Wf, inter)
    y1_s = _maxpool_5x5_same(y0_s)
    y2_s = _maxpool_5x5_same(y1_s)
    y3_s = _maxpool_5x5_same(y2_s)
    feat = sppf_cv2_fused(
        [y0, y1_s.reshape(M, inter), y2_s.reshape(M, inter), y3_s.reshape(M, inter)],
        *params["sppf_cv2"])                                               # [M,512] bf16

    # --- fused decoupled head + prediction heads + box decode (packed) ---
    # Grid cells are computed in-kernel; matches the reference decode for the
    # square feature maps that reference create_grid handles correctly.
    packed = head_fused(feat, params, num_classes, hw=HW, wf=Wf)           # [M,128] f32

    # single narrowing slice of the padded lane-dense output, then tiny splits
    packed = packed[:, :5 + num_classes]
    box_pred = packed[:, 0:4].reshape(B, HW, 4)
    obj_pred = packed[:, 4:5].reshape(B, HW, 1)
    cls_pred = packed[:, 5:5 + num_classes].reshape(B, HW, num_classes)

    # TODO(synk): inference-path numpy NMS / conf-threshold postprocess is
    # host-side python in the reference; trainable path only.
    return {
        "pred_obj": obj_pred,
        "pred_cls": cls_pred,
        "pred_box": box_pred,
        "stride": STRIDE,
        "fmp_size": (Hf, Wf),
    }


# ----------------------------------------------------------------------------
# main
# ----------------------------------------------------------------------------
if __name__ == "__main__":
    num_classes = 20
    B, C, H, W = 2, 3, 64, 64          # stride 32 -> 2x2 feature map, HW=4

    key = jax.random.PRNGKey(0)
    kx, kp = jax.random.split(key)
    x = jax.random.normal(kx, (B, C, H, W), jnp.float32)
    params = init_params(kp, num_classes)

    fwd = jax.jit(functools.partial(yolov1_forward, num_classes=num_classes))
    out = fwd(params, x)
    out = jax.block_until_ready(out)

    Hf, Wf = H // STRIDE, W // STRIDE
    assert out["pred_obj"].shape == (B, Hf * Wf, 1)
    assert out["pred_cls"].shape == (B, Hf * Wf, num_classes)
    assert out["pred_box"].shape == (B, Hf * Wf, 4)
    assert bool(jnp.all(jnp.isfinite(out["pred_box"])))
    assert bool(jnp.all(jnp.isfinite(out["pred_obj"])))
    assert bool(jnp.all(jnp.isfinite(out["pred_cls"])))

    print("KERNEL_OK")
</pallas_src>

<mosaic_0001>
module attributes {stable_mosaic.version = 11 : i64} {
  func.func @_backbone_cv1_kernel(%arg0: i32, %arg1: memref<16x3072xbf16, #tpu.memory_space<vmem>>, %arg2: memref<3072x512xbf16, #tpu.memory_space<vmem>>, %arg3: memref<1x512xf32, #tpu.memory_space<vmem>>, %arg4: memref<512x256xbf16, #tpu.memory_space<vmem>>, %arg5: memref<1x256xf32, #tpu.memory_space<vmem>>, %arg6: memref<16x256xbf16, #tpu.memory_space<vmem>>) attributes {dimension_semantics = [#tpu.dimension_semantics<parallel>], iteration_bounds = array<i64: 1>, scalar_prefetch = 0 : i64, scratch_operands = 0 : i64, tpu.core_type = #tpu.core_type<tc>, window_params = [{transform_indices = @transform_0, window_bounds = array<i64: 16, 3072>}, {pipeline_mode = #tpu.pipeline_mode<synchronous>, transform_indices = @transform_1, window_bounds = array<i64: 3072, 512>}, {pipeline_mode = #tpu.pipeline_mode<synchronous>, transform_indices = @transform_2, window_bounds = array<i64: 1, 512>}, {pipeline_mode = #tpu.pipeline_mode<synchronous>, transform_indices = @transform_3, window_bounds = array<i64: 512, 256>}, {pipeline_mode = #tpu.pipeline_mode<synchronous>, transform_indices = @transform_4, window_bounds = array<i64: 1, 256>}, {transform_indices = @transform_5, window_bounds = array<i64: 16, 256>}]} {
    %c0 = arith.constant 0 : index
    %c0_0 = arith.constant 0 : index
    %0 = vector.load %arg1[%c0, %c0_0] : memref<16x3072xbf16, #tpu.memory_space<vmem>>, vector<16x3072xbf16>
    %c0_1 = arith.constant 0 : index
    %c0_2 = arith.constant 0 : index
    %1 = vector.load %arg2[%c0_1, %c0_2] : memref<3072x512xbf16, #tpu.memory_space<vmem>>, vector<3072x512xbf16>
    %cst = arith.constant dense<0.000000e+00> : vector<16x512xf32>
    %2 = tpu.matmul %0, %1, %cst {dimension_numbers = #tpu.dot_dimension_numbers<[1], [0], [0], [1], [0, 0, 1, 1], [], []>} : vector<16x3072xbf16>, vector<3072x512xbf16>, vector<16x512xf32> -> vector<16x512xf32>
    %c0_3 = arith.constant 0 : index
    %c0_4 = arith.constant 0 : index
    %3 = vector.load %arg3[%c0_3, %c0_4] : memref<1x512xf32, #tpu.memory_space<vmem>>, vector<1x512xf32>
    %4 = vector.broadcast %3 : vector<1x512xf32> to vector<16x512xf32>
    %5 = arith.addf %2, %4 : vector<16x512xf32>
    %cst_5 = arith.constant 0.000000e+00 : f32
    %6 = vector.broadcast %cst_5 : f32 to vector<16x512xf32>
    %7 = arith.cmpf ogt, %5, %6 : vector<16x512xf32>
    %cst_6 = arith.constant 1.000000e-01 : f32
    %8 = vector.broadcast %cst_6 : f32 to vector<16x512xf32>
    %9 = arith.mulf %8, %5 : vector<16x512xf32>
    %10 = arith.select %7, %5, %9 : vector<16x512xi1>, vector<16x512xf32>
    %11 = arith.truncf %10 : vector<16x512xf32> to vector<16x512xbf16>
    %c0_7 = arith.constant 0 : index
    %c0_8 = arith.constant 0 : index
    %12 = vector.load %arg4[%c0_7, %c0_8] : memref<512x256xbf16, #tpu.memory_space<vmem>>, vector<512x256xbf16>
    %cst_9 = arith.constant dense<0.000000e+00> : vector<16x256xf32>
    %13 = tpu.matmul %11, %12, %cst_9 {dimension_numbers = #tpu.dot_dimension_numbers<[1], [0], [0], [1], [0, 0, 1, 1], [], []>} : vector<16x512xbf16>, vector<512x256xbf16>, vector<16x256xf32> -> vector<16x256xf32>
    %c0_10 = arith.constant 0 : index
    %c0_11 = arith.constant 0 : index
    %14 = vector.load %arg5[%c0_10, %c0_11] : memref<1x256xf32, #tpu.memory_space<vmem>>, vector<1x256xf32>
    %15 = vector.broadcast %14 : vector<1x256xf32> to vector<16x256xf32>
    %16 = arith.addf %13, %15 : vector<16x256xf32>
    %cst_12 = arith.constant 0.000000e+00 : f32
    %17 = vector.broadcast %cst_12 : f32 to vector<16x256xf32>
    %18 = arith.cmpf ogt, %16, %17 : vector<16x256xf32>
    %cst_13 = arith.constant 1.000000e-01 : f32
    %19 = vector.broadcast %cst_13 : f32 to vector<16x256xf32>
    %20 = arith.mulf %19, %16 : vector<16x256xf32>
    %21 = arith.select %18, %16, %20 : vector<16x256xi1>, vector<16x256xf32>
    %22 = arith.truncf %21 : vector<16x256xf32> to vector<16x256xbf16>
    %c0_14 = arith.constant 0 : index
    %c0_15 = arith.constant 0 : index
    %23 = vector.load %arg6[%c0_14, %c0_15] : memref<16x256xbf16, #tpu.memory_space<vmem>>, vector<16x256xbf16>
    tpu.vector_store %arg6[%c0_14, %c0_15], %22 {strides = array<i32>} : memref<16x256xbf16, #tpu.memory_space<vmem>>, vector<16x256xbf16>,
    return
  }
  func.func @transform_0(%arg0: i32) -> (i32, i32) {
    %c0_i32 = arith.constant 0 : i32
    %c0_i32_0 = arith.constant 0 : i32
    return %arg0, %c0_i32 : i32, i32
  }
  func.func @transform_1(%arg0: i32) -> (i32, i32) {
    %c0_i32 = arith.constant 0 : i32
    %c0_i32_0 = arith.constant 0 : i32
    %c0_i32_1 = arith.constant 0 : i32
    return %c0_i32, %c0_i32_0 : i32, i32
  }
  func.func @transform_2(%arg0: i32) -> (i32, i32) {
    %c0_i32 = arith.constant 0 : i32
    %c0_i32_0 = arith.constant 0 : i32
    %c0_i32_1 = arith.constant 0 : i32
    return %c0_i32, %c0_i32_0 : i32, i32
  }
  func.func @transform_3(%arg0: i32) -> (i32, i32) {
    %c0_i32 = arith.constant 0 : i32
    %c0_i32_0 = arith.constant 0 : i32
    %c0_i32_1 = arith.constant 0 : i32
    return %c0_i32, %c0_i32_0 : i32, i32
  }
  func.func @transform_4(%arg0: i32) -> (i32, i32) {
    %c0_i32 = arith.constant 0 : i32
    %c0_i32_0 = arith.constant 0 : i32
    %c0_i32_1 = arith.constant 0 : i32
    return %c0_i32, %c0_i32_0 : i32, i32
  }
  func.func @transform_5(%arg0: i32) -> (i32, i32) {
    %c0_i32 = arith.constant 0 : i32
    %c0_i32_0 = arith.constant 0 : i32
    return %arg0, %c0_i32 : i32, i32
  }
}

module attributes {stable_mosaic.version = 11 : i64} {
  func.func @_sppf_cv2_kernel(%arg0: i32, %arg1: memref<16x256xbf16, #tpu.memory_space<vmem>>, %arg2: memref<16x256xbf16, #tpu.memory_space<vmem>>, %arg3: memref<16x256xbf16, #tpu.memory_space<vmem>>, %arg4: memref<16x256xbf16, #tpu.memory_space<vmem>>, %arg5: memref<256x512xbf16, #tpu.memory_space<vmem>>, %arg6: memref<256x512xbf16, #tpu.memory_space<vmem>>, %arg7: memref<256x512xbf16, #tpu.memory_space<vmem>>, %arg8: memref<256x512xbf16, #tpu.memory_space<vmem>>, %arg9: memref<1x512xf32, #tpu.memory_space<vmem>>, %arg10: memref<16x512xbf16, #tpu.memory_space<vmem>>) attributes {dimension_semantics = [#tpu.dimension_semantics<parallel>], iteration_bounds = array<i64: 1>, scalar_prefetch = 0 : i64, scratch_operands = 0 : i64, tpu.core_type = #tpu.core_type<tc>, window_params = [{transform_indices = @transform_0, window_bounds = array<i64: 16, 256>}, {transform_indices = @transform_1, window_bounds = array<i64: 16, 256>}, {transform_indices = @transform_2, window_bounds = array<i64: 16, 256>}, {transform_indices = @transform_3, window_bounds = array<i64: 16, 256>}, {pipeline_mode = #tpu.pipeline_mode<synchronous>, transform_indices = @transform_4, window_bounds = array<i64: 256, 512>}, {pipeline_mode = #tpu.pipeline_mode<synchronous>, transform_indices = @transform_5, window_bounds = array<i64: 256, 512>}, {pipeline_mode = #tpu.pipeline_mode<synchronous>, transform_indices = @transform_6, window_bounds = array<i64: 256, 512>}, {pipeline_mode = #tpu.pipeline_mode<synchronous>, transform_indices = @transform_7, window_bounds = array<i64: 256, 512>}, {pipeline_mode = #tpu.pipeline_mode<synchronous>, transform_indices = @transform_8, window_bounds = array<i64: 1, 512>}, {transform_indices = @transform_9, window_bounds = array<i64: 16, 512>}]} {
    %c0 = arith.constant 0 : index
    %c0_0 = arith.constant 0 : index
    %0 = vector.load %arg1[%c0, %c0_0] : memref<16x256xbf16, #tpu.memory_space<vmem>>, vector<16x256xbf16>
    %c0_1 = arith.constant 0 : index
    %c0_2 = arith.constant 0 : index
    %1 = vector.load %arg5[%c0_1, %c0_2] : memref<256x512xbf16, #tpu.memory_space<vmem>>, vector<256x512xbf16>
    %cst = arith.constant dense<0.000000e+00> : vector<16x512xf32>
    %2 = tpu.matmul %0, %1, %cst {dimension_numbers = #tpu.dot_dimension_numbers<[1], [0], [0], [1], [0, 0, 1, 1], [], []>} : vector<16x256xbf16>, vector<256x512xbf16>, vector<16x512xf32> -> vector<16x512xf32>
    %c0_3 = arith.constant 0 : index
    %c0_4 = arith.constant 0 : index
    %3 = vector.load %arg2[%c0_3, %c0_4] : memref<16x256xbf16, #tpu.memory_space<vmem>>, vector<16x256xbf16>
    %c0_5 = arith.constant 0 : index
    %c0_6 = arith.constant 0 : index
    %4 = vector.load %arg6[%c0_5, %c0_6] : memref<256x512xbf16, #tpu.memory_space<vmem>>, vector<256x512xbf16>
    %cst_7 = arith.constant dense<0.000000e+00> : vector<16x512xf32>
    %5 = tpu.matmul %3, %4, %cst_7 {dimension_numbers = #tpu.dot_dimension_numbers<[1], [0], [0], [1], [0, 0, 1, 1], [], []>} : vector<16x256xbf16>, vector<256x512xbf16>, vector<16x512xf32> -> vector<16x512xf32>
    %6 = arith.addf %2, %5 : vector<16x512xf32>
    %c0_8 = arith.constant 0 : index
    %c0_9 = arith.constant 0 : index
    %7 = vector.load %arg3[%c0_8, %c0_9] : memref<16x256xbf16, #tpu.memory_space<vmem>>, vector<16x256xbf16>
    %c0_10 = arith.constant 0 : index
    %c0_11 = arith.constant 0 : index
    %8 = vector.load %arg7[%c0_10, %c0_11] : memref<256x512xbf16, #tpu.memory_space<vmem>>, vector<256x512xbf16>
    %cst_12 = arith.constant dense<0.000000e+00> : vector<16x512xf32>
    %9 = tpu.matmul %7, %8, %cst_12 {dimension_numbers = #tpu.dot_dimension_numbers<[1], [0], [0], [1], [0, 0, 1, 1], [], []>} : vector<16x256xbf16>, vector<256x512xbf16>, vector<16x512xf32> -> vector<16x512xf32>
    %10 = arith.addf %6, %9 : vector<16x512xf32>
    %c0_13 = arith.constant 0 : index
    %c0_14 = arith.constant 0 : index
    %11 = vector.load %arg4[%c0_13, %c0_14] : memref<16x256xbf16, #tpu.memory_space<vmem>>, vector<16x256xbf16>
    %c0_15 = arith.constant 0 : index
    %c0_16 = arith.constant 0 : index
    %12 = vector.load %arg8[%c0_15, %c0_16] : memref<256x512xbf16, #tpu.memory_space<vmem>>, vector<256x512xbf16>
    %cst_17 = arith.constant dense<0.000000e+00> : vector<16x512xf32>
    %13 = tpu.matmul %11, %12, %cst_17 {dimension_numbers = #tpu.dot_dimension_numbers<[1], [0], [0], [1], [0, 0, 1, 1], [], []>} : vector<16x256xbf16>, vector<256x512xbf16>, vector<16x512xf32> -> vector<16x512xf32>
    %14 = arith.addf %10, %13 : vector<16x512xf32>
    %c0_18 = arith.constant 0 : index
    %c0_19 = arith.constant 0 : index
    %15 = vector.load %arg9[%c0_18, %c0_19] : memref<1x512xf32, #tpu.memory_space<vmem>>, vector<1x512xf32>
    %16 = vector.broadcast %15 : vector<1x512xf32> to vector<16x512xf32>
    %17 = arith.addf %14, %16 : vector<16x512xf32>
    %cst_20 = arith.constant 0.000000e+00 : f32
    %18 = vector.broadcast %cst_20 : f32 to vector<16x512xf32>
    %19 = arith.cmpf ogt, %17, %18 : vector<16x512xf32>
    %cst_21 = arith.constant 1.000000e-01 : f32
    %20 = vector.broadcast %cst_21 : f32 to vector<16x512xf32>
    %21 = arith.mulf %20, %17 : vector<16x512xf32>
    %22 = arith.select %19, %17, %21 : vector<16x512xi1>, vector<16x512xf32>
    %23 = arith.truncf %22 : vector<16x512xf32> to vector<16x512xbf16>
    %c0_22 = arith.constant 0 : index
    %c0_23 = arith.constant 0 : index
    %24 = vector.load %arg10[%c0_22, %c0_23] : memref<16x512xbf16, #tpu.memory_space<vmem>>, vector<16x512xbf16>
    tpu.vector_store %arg10[%c0_22, %c0_23], %23 {strides = array<i32>} : memref<16x512xbf16, #tpu.memory_space<vmem>>, vector<16x512xbf16>,
    return
  }
  func.func @transform_0(%arg0: i32) -> (i32, i32) {
    %c0_i32 = arith.constant 0 : i32
    %c0_i32_0 = arith.constant 0 : i32
    return %arg0, %c0_i32 : i32, i32
  }
  func.func @transform_1(%arg0: i32) -> (i32, i32) {
    %c0_i32 = arith.constant 0 : i32
    %c0_i32_0 = arith.constant 0 : i32
    return %arg0, %c0_i32 : i32, i32
  }
  func.func @transform_2(%arg0: i32) -> (i32, i32) {
    %c0_i32 = arith.constant 0 : i32
    %c0_i32_0 = arith.constant 0 : i32
    return %arg0, %c0_i32 : i32, i32
  }
  func.func @transform_3(%arg0: i32) -> (i32, i32) {
    %c0_i32 = arith.constant 0 : i32
    %c0_i32_0 = arith.constant 0 : i32
    return %arg0, %c0_i32 : i32, i32
  }
  func.func @transform_4(%arg0: i32) -> (i32, i32) {
    %c0_i32 = arith.constant 0 : i32
    %c0_i32_0 = arith.constant 0 : i32
    %c0_i32_1 = arith.constant 0 : i32
    return %c0_i32, %c0_i32_0 : i32, i32
  }
  func.func @transform_5(%arg0: i32) -> (i32, i32) {
    %c0_i32 = arith.constant 0 : i32
    %c0_i32_0 = arith.constant 0 : i32
    %c0_i32_1 = arith.constant 0 : i32
    return %c0_i32, %c0_i32_0 : i32, i32
  }
  func.func @transform_6(%arg0: i32) -> (i32, i32) {
    %c0_i32 = arith.constant 0 : i32
    %c0_i32_0 = arith.constant 0 : i32
    %c0_i32_1 = arith.constant 0 : i32
    return %c0_i32, %c0_i32_0 : i32, i32
  }
  func.func @transform_7(%arg0: i32) -> (i32, i32) {
    %c0_i32 = arith.constant 0 : i32
    %c0_i32_0 = arith.constant 0 : i32
    %c0_i32_1 = arith.constant 0 : i32
    return %c0_i32, %c0_i32_0 : i32, i32
  }
  func.func @transform_8(%arg0: i32) -> (i32, i32) {
    %c0_i32 = arith.constant 0 : i32
    %c0_i32_0 = arith.constant 0 : i32
    %c0_i32_1 = arith.constant 0 : i32
    return %c0_i32, %c0_i32_0 : i32, i32
  }
  func.func @transform_9(%arg0: i32) -> (i32, i32) {
    %c0_i32 = arith.constant 0 : i32
    %c0_i32_0 = arith.constant 0 : i32
    return %arg0, %c0_i32 : i32, i32
  }
}

module attributes {stable_mosaic.version = 11 : i64} {
  func.func @_head_kernel(%arg0: i32, %arg1: memref<16x512xbf16, #tpu.memory_space<vmem>>, %arg2: memref<512x512xbf16, #tpu.memory_space<vmem>>, %arg3: memref<1x512xf32, #tpu.memory_space<vmem>>, %arg4: memref<512x512xbf16, #tpu.memory_space<vmem>>, %arg5: memref<1x512xf32, #tpu.memory_space<vmem>>, %arg6: memref<512x128xbf16, #tpu.memory_space<vmem>>, %arg7: memref<1x128xf32, #tpu.memory_space<vmem>>, %arg8: memref<512x512xbf16, #tpu.memory_space<vmem>>, %arg9: memref<1x512xf32, #tpu.memory_space<vmem>>, %arg10: memref<512x512xbf16, #tpu.memory_space<vmem>>, %arg11: memref<1x512xf32, #tpu.memory_space<vmem>>, %arg12: memref<512x256xbf16, #tpu.memory_space<vmem>>, %arg13: memref<1x256xf32, #tpu.memory_space<vmem>>, %arg14: memref<16x128xf32, #tpu.memory_space<vmem>>) attributes {dimension_semantics = [#tpu.dimension_semantics<parallel>], iteration_bounds = array<i64: 1>, scalar_prefetch = 0 : i64, scratch_operands = 0 : i64, tpu.core_type = #tpu.core_type<tc>, window_params = [{transform_indices = @transform_0, window_bounds = array<i64: 16, 512>}, {pipeline_mode = #tpu.pipeline_mode<synchronous>, transform_indices = @transform_1, window_bounds = array<i64: 512, 512>}, {pipeline_mode = #tpu.pipeline_mode<synchronous>, transform_indices = @transform_2, window_bounds = array<i64: 1, 512>}, {pipeline_mode = #tpu.pipeline_mode<synchronous>, transform_indices = @transform_3, window_bounds = array<i64: 512, 512>}, {pipeline_mode = #tpu.pipeline_mode<synchronous>, transform_indices = @transform_4, window_bounds = array<i64: 1, 512>}, {pipeline_mode = #tpu.pipeline_mode<synchronous>, transform_indices = @transform_5, window_bounds = array<i64: 512, 128>}, {pipeline_mode = #tpu.pipeline_mode<synchronous>, transform_indices = @transform_6, window_bounds = array<i64: 1, 128>}, {pipeline_mode = #tpu.pipeline_mode<synchronous>, transform_indices = @transform_7, window_bounds = array<i64: 512, 512>}, {pipeline_mode = #tpu.pipeline_mode<synchronous>, transform_indices = @transform_8, window_bounds = array<i64: 1, 512>}, {pipeline_mode = #tpu.pipeline_mode<synchronous>, transform_indices = @transform_9, window_bounds = array<i64: 512, 512>}, {pipeline_mode = #tpu.pipeline_mode<synchronous>, transform_indices = @transform_10, window_bounds = array<i64: 1, 512>}, {pipeline_mode = #tpu.pipeline_mode<synchronous>, transform_indices = @transform_11, window_bounds = array<i64: 512, 256>}, {pipeline_mode = #tpu.pipeline_mode<synchronous>, transform_indices = @transform_12, window_bounds = array<i64: 1, 256>}, {transform_indices = @transform_13, window_bounds = array<i64: 16, 128>}]} {
    %c0 = arith.constant 0 : index
    %c0_0 = arith.constant 0 : index
    %0 = vector.load %arg1[%c0, %c0_0] : memref<16x512xbf16, #tpu.memory_space<vmem>>, vector<16x512xbf16>
    %c0_1 = arith.constant 0 : index
    %c0_2 = arith.constant 0 : index
    %1 = vector.load %arg2[%c0_1, %c0_2] : memref<512x512xbf16, #tpu.memory_space<vmem>>, vector<512x512xbf16>
    %cst = arith.constant dense<0.000000e+00> : vector<16x512xf32>
    %2 = tpu.matmul %0, %1, %cst {dimension_numbers = #tpu.dot_dimension_numbers<[1], [0], [0], [1], [0, 0, 1, 1], [], []>} : vector<16x512xbf16>, vector<512x512xbf16>, vector<16x512xf32> -> vector<16x512xf32>
    %c0_3 = arith.constant 0 : index
    %c0_4 = arith.constant 0 : index
    %3 = vector.load %arg3[%c0_3, %c0_4] : memref<1x512xf32, #tpu.memory_space<vmem>>, vector<1x512xf32>
    %4 = vector.broadcast %3 : vector<1x512xf32> to vector<16x512xf32>
    %5 = arith.addf %2, %4 : vector<16x512xf32>
    %cst_5 = arith.constant 0.000000e+00 : f32
    %6 = vector.broadcast %cst_5 : f32 to vector<16x512xf32>
    %7 = arith.cmpf ogt, %5, %6 : vector<16x512xf32>
    %cst_6 = arith.constant 1.000000e-01 : f32
    %8 = vector.broadcast %cst_6 : f32 to vector<16x512xf32>
    %9 = arith.mulf %8, %5 : vector<16x512xf32>
    %10 = arith.select %7, %5, %9 : vector<16x512xi1>, vector<16x512xf32>
    %11 = arith.truncf %10 : vector<16x512xf32> to vector<16x512xbf16>
    %c0_7 = arith.constant 0 : index
    %c0_8 = arith.constant 0 : index
    %12 = vector.load %arg4[%c0_7, %c0_8] : memref<512x512xbf16, #tpu.memory_space<vmem>>, vector<512x512xbf16>
    %cst_9 = arith.constant dense<0.000000e+00> : vector<16x512xf32>
    %13 = tpu.matmul %11, %12, %cst_9 {dimension_numbers = #tpu.dot_dimension_numbers<[1], [0], [0], [1], [0, 0, 1, 1], [], []>} : vector<16x512xbf16>, vector<512x512xbf16>, vector<16x512xf32> -> vector<16x512xf32>
    %c0_10 = arith.constant 0 : index
    %c0_11 = arith.constant 0 : index
    %14 = vector.load %arg5[%c0_10, %c0_11] : memref<1x512xf32, #tpu.memory_space<vmem>>, vector<1x512xf32>
    %15 = vector.broadcast %14 : vector<1x512xf32> to vector<16x512xf32>
    %16 = arith.addf %13, %15 : vector<16x512xf32>
    %cst_12 = arith.constant 0.000000e+00 : f32
    %17 = vector.broadcast %cst_12 : f32 to vector<16x512xf32>
    %18 = arith.cmpf ogt, %16, %17 : vector<16x512xf32>
    %cst_13 = arith.constant 1.000000e-01 : f32
    %19 = vector.broadcast %cst_13 : f32 to vector<16x512xf32>
    %20 = arith.mulf %19, %16 : vector<16x512xf32>
    %21 = arith.select %18, %16, %20 : vector<16x512xi1>, vector<16x512xf32>
    %22 = arith.truncf %21 : vector<16x512xf32> to vector<16x512xbf16>
    %c0_14 = arith.constant 0 : index
    %c0_15 = arith.constant 0 : index
    %23 = vector.load %arg6[%c0_14, %c0_15] : memref<512x128xbf16, #tpu.memory_space<vmem>>, vector<512x128xbf16>
    %cst_16 = arith.constant dense<0.000000e+00> : vector<16x128xf32>
    %24 = tpu.matmul %22, %23, %cst_16 {dimension_numbers = #tpu.dot_dimension_numbers<[1], [0], [0], [1], [0, 0, 1, 1], [], []>} : vector<16x512xbf16>, vector<512x128xbf16>, vector<16x128xf32> -> vector<16x128xf32>
    %c0_17 = arith.constant 0 : index
    %c0_18 = arith.constant 0 : index
    %25 = vector.load %arg7[%c0_17, %c0_18] : memref<1x128xf32, #tpu.memory_space<vmem>>, vector<1x128xf32>
    %26 = vector.broadcast %25 : vector<1x128xf32> to vector<16x128xf32>
    %27 = arith.addf %24, %26 : vector<16x128xf32>
    %c0_19 = arith.constant 0 : index
    %c0_20 = arith.constant 0 : index
    %28 = vector.load %arg8[%c0_19, %c0_20] : memref<512x512xbf16, #tpu.memory_space<vmem>>, vector<512x512xbf16>
    %cst_21 = arith.constant dense<0.000000e+00> : vector<16x512xf32>
    %29 = tpu.matmul %0, %28, %cst_21 {dimension_numbers = #tpu.dot_dimension_numbers<[1], [0], [0], [1], [0, 0, 1, 1], [], []>} : vector<16x512xbf16>, vector<512x512xbf16>, vector<16x512xf32> -> vector<16x512xf32>
    %c0_22 = arith.constant 0 : index
    %c0_23 = arith.constant 0 : index
    %30 = vector.load %arg9[%c0_22, %c0_23] : memref<1x512xf32, #tpu.memory_space<vmem>>, vector<1x512xf32>
    %31 = vector.broadcast %30 : vector<1x512xf32> to vector<16x512xf32>
    %32 = arith.addf %29, %31 : vector<16x512xf32>
    %cst_24 = arith.constant 0.000000e+00 : f32
    %33 = vector.broadcast %cst_24 : f32 to vector<16x512xf32>
    %34 = arith.cmpf ogt, %32, %33 : vector<16x512xf32>
    %cst_25 = arith.constant 1.000000e-01 : f32
    %35 = vector.broadcast %cst_25 : f32 to vector<16x512xf32>
    %36 = arith.mulf %35, %32 : vector<16x512xf32>
    %37 = arith.select %34, %32, %36 : vector<16x512xi1>, vector<16x512xf32>
    %38 = arith.truncf %37 : vector<16x512xf32> to vector<16x512xbf16>
    %c0_26 = arith.constant 0 : index
    %c0_27 = arith.constant 0 : index
    %39 = vector.load %arg10[%c0_26, %c0_27] : memref<512x512xbf16, #tpu.memory_space<vmem>>, vector<512x512xbf16>
    %cst_28 = arith.constant dense<0.000000e+00> : vector<16x512xf32>
    %40 = tpu.matmul %38, %39, %cst_28 {dimension_numbers = #tpu.dot_dimension_numbers<[1], [0], [0], [1], [0, 0, 1, 1], [], []>} : vector<16x512xbf16>, vector<512x512xbf16>, vector<16x512xf32> -> vector<16x512xf32>
    %c0_29 = arith.constant 0 : index
    %c0_30 = arith.constant 0 : index
    %41 = vector.load %arg11[%c0_29, %c0_30] : memref<1x512xf32, #tpu.memory_space<vmem>>, vector<1x512xf32>
    %42 = vector.broadcast %41 : vector<1x512xf32> to vector<16x512xf32>
    %43 = arith.addf %40, %42 : vector<16x512xf32>
    %cst_31 = arith.constant 0.000000e+00 : f32
    %44 = vector.broadcast %cst_31 : f32 to vector<16x512xf32>
    %45 = arith.cmpf ogt, %43, %44 : vector<16x512xf32>
    %cst_32 = arith.constant 1.000000e-01 : f32
    %46 = vector.broadcast %cst_32 : f32 to vector<16x512xf32>
    %47 = arith.mulf %46, %43 : vector<16x512xf32>
    %48 = arith.select %45, %43, %47 : vector<16x512xi1>, vector<16x512xf32>
    %49 = arith.truncf %48 : vector<16x512xf32> to vector<16x512xbf16>
    %c0_33 = arith.constant 0 : index
    %c0_34 = arith.constant 0 : index
    %50 = vector.load %arg12[%c0_33, %c0_34] : memref<512x256xbf16, #tpu.memory_space<vmem>>, vector<512x256xbf16>
    %cst_35 = arith.constant dense<0.000000e+00> : vector<16x256xf32>
    %51 = tpu.matmul %49, %50, %cst_35 {dimension_numbers = #tpu.dot_dimension_numbers<[1], [0], [0], [1], [0, 0, 1, 1], [], []>} : vector<16x512xbf16>, vector<512x256xbf16>, vector<16x256xf32> -> vector<16x256xf32>
    %c0_36 = arith.constant 0 : index
    %c0_37 = arith.constant 0 : index
    %52 = vector.load %arg13[%c0_36, %c0_37] : memref<1x256xf32, #tpu.memory_space<vmem>>, vector<1x256xf32>
    %53 = vector.broadcast %52 : vector<1x256xf32> to vector<16x256xf32>
    %54 = arith.addf %51, %53 : vector<16x256xf32>
    %c16_i32 = arith.constant 16 : i32
    %55 = arith.muli %arg0, %c16_i32 : i32
    %56 = tpu.iota {dimensions = array<i32: 0>} : vector<16x1xi32>
    %57 = vector.broadcast %55 : i32 to vector<16x1xi32>
    %58 = arith.addi %57, %56 : vector<16x1xi32>
    %59 = arith.sitofp %58 : vector<16x1xi32> to vector<16x1xf32>
    %cst_38 = arith.constant 5.000000e-01 : f32
    %60 = vector.broadcast %cst_38 : f32 to vector<16x1xf32>
    %61 = arith.addf %59, %60 : vector<16x1xf32>
    %cst_39 = arith.constant 4.000000e+00 : f32
    %62 = vector.broadcast %cst_39 : f32 to vector<16x1xf32>
    %63 = arith.divf %61, %62 : vector<16x1xf32>
    %64 = math.floor %63 : vector<16x1xf32>
    %cst_40 = arith.constant 4.000000e+00 : f32
    %65 = vector.broadcast %cst_40 : f32 to vector<16x1xf32>
    %66 = arith.mulf %65, %64 : vector<16x1xf32>
    %67 = arith.subf %59, %66 : vector<16x1xf32>
    %cst_41 = arith.constant 5.000000e-01 : f32
    %68 = vector.broadcast %cst_41 : f32 to vector<16x1xf32>
    %69 = arith.addf %67, %68 : vector<16x1xf32>
    %cst_42 = arith.constant 2.000000e+00 : f32
    %70 = vector.broadcast %cst_42 : f32 to vector<16x1xf32>
    %71 = arith.divf %69, %70 : vector<16x1xf32>
    %72 = math.floor %71 : vector<16x1xf32>
    %cst_43 = arith.constant 2.000000e+00 : f32
    %73 = vector.broadcast %cst_43 : f32 to vector<16x1xf32>
    %74 = arith.mulf %73, %72 : vector<16x1xf32>
    %75 = arith.subf %67, %74 : vector<16x1xf32>
    %76 = tpu.iota {dimensions = array<i32: 1>} : vector<16x128xi32>
    %c0_i32 = arith.constant 0 : i32
    %77 = vector.broadcast %c0_i32 : i32 to vector<16x128xi32>
    %78 = arith.cmpi eq, %76, %77 : vector<16x128xi32>
    %c2_i32 = arith.constant 2 : i32
    %79 = vector.broadcast %c2_i32 : i32 to vector<16x128xi32>
    %80 = arith.cmpi eq, %76, %79 : vector<16x128xi32>
    %81 = arith.ori %78, %80 : vector<16x128xi1>
    %82 = vector.shape_cast %75 : vector<16x1xf32> to vector<16x1xf32>
    %83 = vector.broadcast %82 : vector<16x1xf32> to vector<16x128xf32>
    %84 = vector.shape_cast %72 : vector<16x1xf32> to vector<16x1xf32>
    %85 = vector.broadcast %84 : vector<16x1xf32> to vector<16x128xf32>
    %86 = arith.select %81, %83, %85 : vector<16x128xi1>, vector<16x128xf32>
    %c4_i32 = arith.constant 4 : i32
    %87 = vector.broadcast %c4_i32 : i32 to vector<16x128xi32>
    %88 = arith.cmpi slt, %76, %87 : vector<16x128xi32>
    %cst_44 = arith.constant 0.000000e+00 : f32
    %89 = vector.broadcast %cst_44 : f32 to vector<16x128xf32>
    %90 = arith.select %88, %86, %89 : vector<16x128xi1>, vector<16x128xf32>
    %91 = vector.extract_strided_slice %54 {offsets = [0, 0], sizes = [16, 128], strides = [1, 1]} : vector<16x256xf32> to vector<16x128xf32>
    %92 = vector.extract_strided_slice %54 {offsets = [0, 128], sizes = [16, 128], strides = [1, 1]} : vector<16x256xf32> to vector<16x128xf32>
    %cst_45 = arith.constant 0.000000e+00 : f32
    %93 = vector.broadcast %cst_45 : f32 to vector<16x128xf32>
    %94 = arith.subf %93, %91 : vector<16x128xf32>
    %95 = math.exp %94 : vector<16x128xf32>
    %cst_46 = arith.constant 1.000000e+00 : f32
    %96 = vector.broadcast %cst_46 : f32 to vector<16x128xf32>
    %97 = arith.addf %96, %95 : vector<16x128xf32>
    %cst_47 = arith.constant 1.000000e+00 : f32
    %98 = vector.broadcast %cst_47 : f32 to vector<16x128xf32>
    %99 = arith.divf %98, %97 : vector<16x128xf32>
    %100 = arith.addf %99, %90 : vector<16x128xf32>
    %cst_48 = arith.constant 3.200000e+01 : f32
    %101 = vector.broadcast %cst_48 : f32 to vector<16x128xf32>
    %102 = arith.mulf %100, %101 : vector<16x128xf32>
    %103 = math.exp %92 : vector<16x128xf32>
    %cst_49 = arith.constant 3.200000e+01 : f32
    %104 = vector.broadcast %cst_49 : f32 to vector<16x128xf32>
    %105 = arith.mulf %103, %104 : vector<16x128xf32>
    %c2_i32_50 = arith.constant 2 : i32
    %106 = vector.broadcast %c2_i32_50 : i32 to vector<16x128xi32>
    %107 = arith.cmpi slt, %76, %106 : vector<16x128xi32>
    %c4_i32_51 = arith.constant 4 : i32
    %108 = vector.broadcast %c4_i32_51 : i32 to vector<16x128xi32>
    %109 = arith.cmpi slt, %76, %108 : vector<16x128xi32>
    %cst_52 = arith.constant 5.000000e-01 : f32
    %cst_53 = arith.constant 0.000000e+00 : f32
    %110 = vector.broadcast %cst_52 : f32 to vector<16x128xf32>
    %111 = vector.broadcast %cst_53 : f32 to vector<16x128xf32>
    %112 = arith.select %109, %110, %111 : vector<16x128xi1>, vector<16x128xf32>
    %cst_54 = arith.constant -5.000000e-01 : f32
    %113 = vector.broadcast %cst_54 : f32 to vector<16x128xf32>
    %114 = arith.select %107, %113, %112 : vector<16x128xi1>, vector<16x128xf32>
    %115 = arith.mulf %114, %105 : vector<16x128xf32>
    %116 = arith.addf %102, %115 : vector<16x128xf32>
    %c4_i32_55 = arith.constant 4 : i32
    %117 = vector.broadcast %c4_i32_55 : i32 to vector<16x128xi32>
    %118 = arith.cmpi slt, %76, %117 : vector<16x128xi32>
    %119 = arith.select %118, %116, %27 : vector<16x128xi1>, vector<16x128xf32>
    %c0_56 = arith.constant 0 : index
    %c0_57 = arith.constant 0 : index
    %120 = vector.load %arg14[%c0_56, %c0_57] : memref<16x128xf32, #tpu.memory_space<vmem>>, vector<16x128xf32>
    tpu.vector_store %arg14[%c0_56, %c0_57], %119 {strides = array<i32>} : memref<16x128xf32, #tpu.memory_space<vmem>>, vector<16x128xf32>,
    return
  }
  func.func @transform_0(%arg0: i32) -> (i32, i32) {
    %c0_i32 = arith.constant 0 : i32
    %c0_i32_0 = arith.constant 0 : i32
    return %arg0, %c0_i32 : i32, i32
  }
  func.func @transform_1(%arg0: i32) -> (i32, i32) {
    %c0_i32 = arith.constant 0 : i32
    %c0_i32_0 = arith.constant 0 : i32
    %c0_i32_1 = arith.constant 0 : i32
    return %c0_i32, %c0_i32_0 : i32, i32
  }
  func.func @transform_2(%arg0: i32) -> (i32, i32) {
    %c0_i32 = arith.constant 0 : i32
    %c0_i32_0 = arith.constant 0 : i32
    %c0_i32_1 = arith.constant 0 : i32
    return %c0_i32, %c0_i32_0 : i32, i32
  }
  func.func @transform_3(%arg0: i32) -> (i32, i32) {
    %c0_i32 = arith.constant 0 : i32
    %c0_i32_0 = arith.constant 0 : i32
    %c0_i32_1 = arith.constant 0 : i32
    return %c0_i32, %c0_i32_0 : i32, i32
  }
  func.func @transform_4(%arg0: i32) -> (i32, i32) {
    %c0_i32 = arith.constant 0 : i32
    %c0_i32_0 = arith.constant 0 : i32
    %c0_i32_1 = arith.constant 0 : i32
    return %c0_i32, %c0_i32_0 : i32, i32
  }
  func.func @transform_5(%arg0: i32) -> (i32, i32) {
    %c0_i32 = arith.constant 0 : i32
    %c0_i32_0 = arith.constant 0 : i32
    %c0_i32_1 = arith.constant 0 : i32
    return %c0_i32, %c0_i32_0 : i32, i32
  }
  func.func @transform_6(%arg0: i32) -> (i32, i32) {
    %c0_i32 = arith.constant 0 : i32
    %c0_i32_0 = arith.constant 0 : i32
    %c0_i32_1 = arith.constant 0 : i32
    return %c0_i32, %c0_i32_0 : i32, i32
  }
  func.func @transform_7(%arg0: i32) -> (i32, i32) {
    %c0_i32 = arith.constant 0 : i32
    %c0_i32_0 = arith.constant 0 : i32
    %c0_i32_1 = arith.constant 0 : i32
    return %c0_i32, %c0_i32_0 : i32, i32
  }
  func.func @transform_8(%arg0: i32) -> (i32, i32) {
    %c0_i32 = arith.constant 0 : i32
    %c0_i32_0 = arith.constant 0 : i32
    %c0_i32_1 = arith.constant 0 : i32
    return %c0_i32, %c0_i32_0 : i32, i32
  }
  func.func @transform_9(%arg0: i32) -> (i32, i32) {
    %c0_i32 = arith.constant 0 : i32
    %c0_i32_0 = arith.constant 0 : i32
    %c0_i32_1 = arith.constant 0 : i32
    return %c0_i32, %c0_i32_0 : i32, i32
  }
  func.func @transform_10(%arg0: i32) -> (i32, i32) {
    %c0_i32 = arith.constant 0 : i32
    %c0_i32_0 = arith.constant 0 : i32
    %c0_i32_1 = arith.constant 0 : i32
    return %c0_i32, %c0_i32_0 : i32, i32
  }
  func.func @transform_11(%arg0: i32) -> (i32, i32) {
    %c0_i32 = arith.constant 0 : i32
    %c0_i32_0 = arith.constant 0 : i32
    %c0_i32_1 = arith.constant 0 : i32
    return %c0_i32, %c0_i32_0 : i32, i32
  }
  func.func @transform_12(%arg0: i32) -> (i32, i32) {
    %c0_i32 = arith.constant 0 : i32
    %c0_i32_0 = arith.constant 0 : i32
    %c0_i32_1 = arith.constant 0 : i32
    return %c0_i32, %c0_i32_0 : i32, i32
  }
  func.func @transform_13(%arg0: i32) -> (i32, i32) {
    %c0_i32 = arith.constant 0 : i32
    %c0_i32_0 = arith.constant 0 : i32
    return %arg0, %c0_i32 : i32, i32
  }
}

</mosaic_0001>

<llo_original>
// kernel: yolov1_forward.4
$region0: #{yolov1_forward.4}
  #allocation0 [shape = 'u32[]', space=smem, size = 0x4, offset = 0x4, fixed_abs, tag = 'smem constant byte address 0x4 - core index']
  #allocation1 [shape = 'u32[72,128]{1,0:T(1,128)}', space=vmem, size = 0x9000, scoped, tag = 'internal scratch']
  %s0 = inlined_call_operand.vmem [shape: bf16[16,256], index: 0, kind: input, shape index: {}]
  %s1 = inlined_call_operand.vmem [shape: bf16[16,256], index: 1, kind: input, shape index: {}]
  %s2 = inlined_call_operand.vmem [shape: bf16[16,256], index: 2, kind: input, shape index: {}]
  %s3 = inlined_call_operand.vmem [shape: bf16[16,256], index: 3, kind: input, shape index: {}]
  %s4 = inlined_call_operand.vmem [shape: bf16[256,512], index: 4, kind: input, shape index: {}]
  %s5 = inlined_call_operand.vmem [shape: bf16[256,512], index: 5, kind: input, shape index: {}]
  %s6 = inlined_call_operand.vmem [shape: bf16[256,512], index: 6, kind: input, shape index: {}]
  %s7 = inlined_call_operand.vmem [shape: bf16[256,512], index: 7, kind: input, shape index: {}]
  %s8 = inlined_call_operand.vmem [shape: f32[1,512], index: 8, kind: input, shape index: {}]
  %s9 = inlined_call_operand.vmem [shape: bf16[16,512], index: 9, kind: output, shape index: {}]
  %s10 = sld [smem:[#allocation0]]
  $region46: #{yolov1_forward.4} parent=0
    _
  %s12 = ssub.s32 1, %s10
  %s13 = scalar_select 0, %s12, %s10
  // Predicated region
  $region2: #{yolov1_forward.4} parent=0 // pred_check
    _
  $region3: #{yolov1_forward.4} parent=0 // pred_check_branch
    %15 = sbr.rel (0) target = $region5
  $region4: #{yolov1_forward.4} parent=0 // pred_region
    _
  $region5: #{yolov1_forward.4} parent=0 // pred_fallthru
    _
  // Predicated region
  $region6: #{yolov1_forward.4} parent=0 // pred_check
    _
  $region7: #{yolov1_forward.4} parent=0 // pred_check_branch
    %17 = sbr.rel (0) target = $region9
  $region8: #{yolov1_forward.4} parent=0 // pred_region
    _
  $region9: #{yolov1_forward.4} parent=0 // pred_fallthru
    _
  // Predicated region
  $region10: #{yolov1_forward.4} parent=0 // pred_check
    _
  $region11: #{yolov1_forward.4} parent=0 // pred_check_branch
    %19 = sbr.rel (0) target = $region13
  $region12: #{yolov1_forward.4} parent=0 // pred_region
    _
  $region13: #{yolov1_forward.4} parent=0 // pred_fallthru
    _
  // Predicated region
  $region14: #{yolov1_forward.4} parent=0 // pred_check
    _
  $region15: #{yolov1_forward.4} parent=0 // pred_check_branch
    %21 = sbr.rel (0) target = $region17
  $region16: #{yolov1_forward.4} parent=0 // pred_region
    _
  $region17: #{yolov1_forward.4} parent=0 // pred_fallthru
    _
  // Predicated region
  $region18: #{yolov1_forward.4} parent=0 // pred_check
    _
  $region19: #{yolov1_forward.4} parent=0 // pred_check_branch
    %23 = sbr.rel (0) target = $region21
  $region20: #{yolov1_forward.4} parent=0 // pred_region
    _
  $region21: #{yolov1_forward.4} parent=0 // pred_fallthru
    _
  // Predicated region
  $region22: #{yolov1_forward.4} parent=0 // pred_check
    _
  $region23: #{yolov1_forward.4} parent=0 // pred_check_branch
    %25 = sbr.rel (0) target = $region25
  $region24: #{yolov1_forward.4} parent=0 // pred_region
    _
  $region25: #{yolov1_forward.4} parent=0 // pred_fallthru
    _
  // Predicated region
  $region26: #{yolov1_forward.4} parent=0 // pred_check
    _
  $region27: #{yolov1_forward.4} parent=0 // pred_check_branch
    %27 = sbr.rel (0) target = $region29
  $region28: #{yolov1_forward.4} parent=0 // pred_region
    _
  $region29: #{yolov1_forward.4} parent=0 // pred_fallthru
    _
  // Predicated region
  $region30: #{yolov1_forward.4} parent=0 // pred_check
    _
  $region31: #{yolov1_forward.4} parent=0 // pred_check_branch
    %29 = sbr.rel (0) target = $region33
  $region32: #{yolov1_forward.4} parent=0 // pred_region
    _
  $region33: #{yolov1_forward.4} parent=0 // pred_fallthru
    _
  // Predicated region
  $region34: #{yolov1_forward.4} parent=0 // pred_check
    _
  $region35: #{yolov1_forward.4} parent=0 // pred_check_branch
    %31 = sbr.rel (0) target = $region37
  $region36: #{yolov1_forward.4} parent=0 // pred_region
    _
  $region37: #{yolov1_forward.4} parent=0 // pred_fallthru
    _
  %v32 = vld [vmem:[%s0] sm:$0xff]
  %v33 = vld [vmem:[%s0 + $0x8] sm:$0xff]
  %v34 = vld [vmem:[%s4] sm:$0xff]
  %v35 = vld [vmem:[%s4 + $0x8] sm:$0xff]
  %v36 = vld [vmem:[%s4 + $0x10] sm:$0xff]
  %v37 = vld [vmem:[%s4 + $0x18] sm:$0xff]
  %v38 = vld [vmem:[%s4 + $0x20] sm:$0xff]
  %v39 = vld [vmem:[%s4 + $0x28] sm:$0xff]
  %v40 = vld [vmem:[%s4 + $0x30] sm:$0xff]
  %v41 = vld [vmem:[%s4 + $0x38] sm:$0xff]
  %v42 = vld [vmem:[%s4 + $0x40] sm:$0xff]
  %v43 = vld [vmem:[%s4 + $0x48] sm:$0xff]
  %v44 = vld [vmem:[%s4 + $0x50] sm:$0xff]
  %v45 = vld [vmem:[%s4 + $0x58] sm:$0xff]
  %v46 = vld [vmem:[%s4 + $0x60] sm:$0xff]
  %v47 = vld [vmem:[%s4 + $0x68] sm:$0xff]
  %v48 = vld [vmem:[%s4 + $0x70] sm:$0xff]
  %v49 = vld [vmem:[%s4 + $0x78] sm:$0xff]
  %v50 = vld [vmem:[%s4 + $0x80] sm:$0xff]
  %v51 = vld [vmem:[%s4 + $0x88] sm:$0xff]
  %v52 = vld [vmem:[%s4 + $0x90] sm:$0xff]
  %v53 = vld [vmem:[%s4 + $0x98] sm:$0xff]
  %v54 = vld [vmem:[%s4 + $0xa0] sm:$0xff]
  %v55 = vld [vmem:[%s4 + $0xa8] sm:$0xff]
  %v56 = vld [vmem:[%s4 + $0xb0] sm:$0xff]
  %v57 = vld [vmem:[%s4 + $0xb8] sm:$0xff]
  %v58 = vld [vmem:[%s4 + $0xc0] sm:$0xff]
  %v59 = vld [vmem:[%s4 + $0xc8] sm:$0xff]
  %v60 = vld [vmem:[%s4 + $0xd0] sm:$0xff]
  %v61 = vld [vmem:[%s4 + $0xd8] sm:$0xff]
  %v62 = vld [vmem:[%s4 + $0xe0] sm:$0xff]
  %v63 = vld [vmem:[%s4 + $0xe8] sm:$0xff]
  %v64 = vld [vmem:[%s4 + $0xf0] sm:$0xff]
  %v65 = vld [vmem:[%s4 + $0xf8] sm:$0xff]
  %v66 = vld [vmem:[%s4 + $0x100] sm:$0xff]
  %v67 = vld [vmem:[%s4 + $0x108] sm:$0xff]
  %v68 = vld [vmem:[%s4 + $0x110] sm:$0xff]
  %v69 = vld [vmem:[%s4 + $0x118] sm:$0xff]
  %v70 = vld [vmem:[%s4 + $0x120] sm:$0xff]
  %v71 = vld [vmem:[%s4 + $0x128] sm:$0xff]
  %v72 = vld [vmem:[%s4 + $0x130] sm:$0xff]
  %v73 = vld [vmem:[%s4 + $0x138] sm:$0xff]
  %v74 = vld [vmem:[%s4 + $0x140] sm:$0xff]
  %v75 = vld [vmem:[%s4 + $0x148] sm:$0xff]
  %v76 = vld [vmem:[%s4 + $0x150] sm:$0xff]
  %v77 = vld [vmem:[%s4 + $0x158] sm:$0xff]
  %v78 = vld [vmem:[%s4 + $0x160] sm:$0xff]
  %v79 = vld [vmem:[%s4 + $0x168] sm:$0xff]
  %v80 = vld [vmem:[%s4 + $0x170] sm:$0xff]
  %v81 = vld [vmem:[%s4 + $0x178] sm:$0xff]
  %v82 = vld [vmem:[%s4 + $0x180] sm:$0xff]
  %v83 = vld [vmem:[%s4 + $0x188] sm:$0xff]
  %v84 = vld [vmem:[%s4 + $0x190] sm:$0xff]
  %v85 = vld [vmem:[%s4 + $0x198] sm:$0xff]
  %v86 = vld [vmem:[%s4 + $0x1a0] sm:$0xff]
  %v87 = vld [vmem:[%s4 + $0x1a8] sm:$0xff]
  %v88 = vld [vmem:[%s4 + $0x1b0] sm:$0xff]
  %v89 = vld [vmem:[%s4 + $0x1b8] sm:$0xff]
  %v90 = vld [vmem:[%s4 + $0x1c0] sm:$0xff]
  %v91 = vld [vmem:[%s4 + $0x1c8] sm:$0xff]
  %v92 = vld [vmem:[%s4 + $0x1d0] sm:$0xff]
  %v93 = vld [vmem:[%s4 + $0x1d8] sm:$0xff]
  %v94 = vld [vmem:[%s4 + $0x1e0] sm:$0xff]
  %v95 = vld [vmem:[%s4 + $0x1e8] sm:$0xff]
  %v96 = vld [vmem:[%s4 + $0x1f0] sm:$0xff]
  %v97 = vld [vmem:[%s4 + $0x1f8] sm:$0xff]
  %v98 = vld [vmem:[%s1] sm:$0xff]
  %v99 = vld [vmem:[%s1 + $0x8] sm:$0xff]
  %v100 = vld [vmem:[%s5] sm:$0xff]
  %v101 = vld [vmem:[%s5 + $0x8] sm:$0xff]
  %v102 = vld [vmem:[%s5 + $0x10] sm:$0xff]
  %v103 = vld [vmem:[%s5 + $0x18] sm:$0xff]
  %v104 = vld [vmem:[%s5 + $0x20] sm:$0xff]
  %v105 = vld [vmem:[%s5 + $0x28] sm:$0xff]
  %v106 = vld [vmem:[%s5 + $0x30] sm:$0xff]
  %v107 = vld [vmem:[%s5 + $0x38] sm:$0xff]
  %v108 = vld [vmem:[%s5 + $0x40] sm:$0xff]
  %v109 = vld [vmem:[%s5 + $0x48] sm:$0xff]
  %v110 = vld [vmem:[%s5 + $0x50] sm:$0xff]
  %v111 = vld [vmem:[%s5 + $0x58] sm:$0xff]
  %v112 = vld [vmem:[%s5 + $0x60] sm:$0xff]
  %v113 = vld [vmem:[%s5 + $0x68] sm:$0xff]
  %v114 = vld [vmem:[%s5 + $0x70] sm:$0xff]
  %v115 = vld [vmem:[%s5 + $0x78] sm:$0xff]
  %v116 = vld [vmem:[%s5 + $0x80] sm:$0xff]
  %v117 = vld [vmem:[%s5 + $0x88] sm:$0xff]
  %v118 = vld [vmem:[%s5 + $0x90] sm:$0xff]
  %v119 = vld [vmem:[%s5 + $0x98] sm:$0xff]
  %v120 = vld [vmem:[%s5 + $0xa0] sm:$0xff]
  %v121 = vld [vmem:[%s5 + $0xa8] sm:$0xff]
  %v122 = vld [vmem:[%s5 + $0xb0] sm:$0xff]
  %v123 = vld [vmem:[%s5 + $0xb8] sm:$0xff]
  %v124 = vld [vmem:[%s5 + $0xc0] sm:$0xff]
  %v125 = vld [vmem:[%s5 + $0xc8] sm:$0xff]
  %v126 = vld [vmem:[%s5 + $0xd0] sm:$0xff]
  %v127 = vld [vmem:[%s5 + $0xd8] sm:$0xff]
  %v128 = vld [vmem:[%s5 + $0xe0] sm:$0xff]
  %v129 = vld [vmem:[%s5 + $0xe8] sm:$0xff]
  %v130 = vld [vmem:[%s5 + $0xf0] sm:$0xff]
  %v131 = vld [vmem:[%s5 + $0xf8] sm:$0xff]
  %v132 = vld [vmem:[%s5 + $0x100] sm:$0xff]
  %v133 = vld [vmem:[%s5 + $0x108] sm:$0xff]
  %v134 = vld [vmem:[%s5 + $0x110] sm:$0xff]
  %v135 = vld [vmem:[%s5 + $0x118] sm:$0xff]
  %v136 = vld [vmem:[%s5 + $0x120] sm:$0xff]
  %v137 = vld [vmem:[%s5 + $0x128] sm:$0xff]
  %v138 = vld [vmem:[%s5 + $0x130] sm:$0xff]
  %v139 = vld [vmem:[%s5 + $0x138] sm:$0xff]
  %v140 = vld [vmem:[%s5 + $0x140] sm:$0xff]
  %v141 = vld [vmem:[%s5 + $0x148] sm:$0xff]
  %v142 = vld [vmem:[%s5 + $0x150] sm:$0xff]
  %v143 = vld [vmem:[%s5 + $0x158] sm:$0xff]
  %v144 = vld [vmem:[%s5 + $0x160] sm:$0xff]
  %v145 = vld [vmem:[%s5 + $0x168] sm:$0xff]
  %v146 = vld [vmem:[%s5 + $0x170] sm:$0xff]
  %v147 = vld [vmem:[%s5 + $0x178] sm:$0xff]
  %v148 = vld [vmem:[%s5 + $0x180] sm:$0xff]
  %v149 = vld [vmem:[%s5 + $0x188] sm:$0xff]
  %v150 = vld [vmem:[%s5 + $0x190] sm:$0xff]
  %v151 = vld [vmem:[%s5 + $0x198] sm:$0xff]
  %v152 = vld [vmem:[%s5 + $0x1a0] sm:$0xff]
  %v153 = vld [vmem:[%s5 + $0x1a8] sm:$0xff]
  %v154 = vld [vmem:[%s5 + $0x1b0] sm:$0xff]
  %v155 = vld [vmem:[%s5 + $0x1b8] sm:$0xff]
  %v156 = vld [vmem:[%s5 + $0x1c0] sm:$0xff]
  %v157 = vld [vmem:[%s5 + $0x1c8] sm:$0xff]
  %v158 = vld [vmem:[%s5 + $0x1d0] sm:$0xff]
  %v159 = vld [vmem:[%s5 + $0x1d8] sm:$0xff]
  %v160 = vld [vmem:[%s5 + $0x1e0] sm:$0xff]
  %v161 = vld [vmem:[%s5 + $0x1e8] sm:$0xff]
  %v162 = vld [vmem:[%s5 + $0x1f0] sm:$0xff]
  %v163 = vld [vmem:[%s5 + $0x1f8] sm:$0xff]
  %v166 = vunpack.c.l.b16 %v98
  %v167 = vunpack.c.h.b16 %v98
  %v168 = vunpack.c.l.b16 %v99
  %v169 = vunpack.c.h.b16 %v99
  %v170 = vpack.c.b16 %v168, %v166
  %v171 = vpack.c.b16 %v169, %v167
  %v238 = vunpack.c.l.b16 %v100
  %v239 = vunpack.c.h.b16 %v100
  %v240 = vunpack.c.l.b16 %v101
  %v241 = vunpack.c.h.b16 %v101
  %v242 = vunpack.c.l.b16 %v102
  %v243 = vunpack.c.h.b16 %v102
  %v244 = vunpack.c.l.b16 %v103
  %v245 = vunpack.c.h.b16 %v103
  %v246 = vunpack.c.l.b16 %v104
  %v247 = vunpack.c.h.b16 %v104
  %v248 = vunpack.c.l.b16 %v105
  %v249 = vunpack.c.h.b16 %v105
  %v250 = vunpack.c.l.b16 %v106
  %v251 = vunpack.c.h.b16 %v106
  %v252 = vunpack.c.l.b16 %v107
  %v253 = vunpack.c.h.b16 %v107
  %v254 = vunpack.c.l.b16 %v108
  %v255 = vunpack.c.h.b16 %v108
  %v256 = vunpack.c.l.b16 %v109
  %v257 = vunpack.c.h.b16 %v109
  %v258 = vunpack.c.l.b16 %v110
  %v259 = vunpack.c.h.b16 %v110
  %v260 = vunpack.c.l.b16 %v111
  %v261 = vunpack.c.h.b16 %v111
  %v262 = vunpack.c.l.b16 %v112
  %v263 = vunpack.c.h.b16 %v112
  %v264 = vunpack.c.l.b16 %v113
  %v265 = vunpack.c.h.b16 %v113
  %v266 = vunpack.c.l.b16 %v114
  %v267 = vunpack.c.h.b16 %v114
  %v268 = vunpack.c.l.b16 %v115
  %v269 = vunpack.c.h.b16 %v115
  %v270 = vunpack.c.l.b16 %v116
  %v271 = vunpack.c.h.b16 %v116
  %v272 = vunpack.c.l.b16 %v117
  %v273 = vunpack.c.h.b16 %v117
  %v274 = vunpack.c.l.b16 %v118
  %v275 = vunpack.c.h.b16 %v118
  %v276 = vunpack.c.l.b16 %v119
  %v277 = vunpack.c.h.b16 %v119
  %v278 = vunpack.c.l.b16 %v120
  %v279 = vunpack.c.h.b16 %v120
  %v280 = vunpack.c.l.b16 %v121
  %v281 = vunpack.c.h.b16 %v121
  %v282 = vunpack.c.l.b16 %v122
  %v283 = vunpack.c.h.b16 %v122
  %v284 = vunpack.c.l.b16 %v123
  %v285 = vunpack.c.h.b16 %v123
  %v286 = vunpack.c.l.b16 %v124
  %v287 = vunpack.c.h.b16 %v124
  %v288 = vunpack.c.l.b16 %v125
  %v289 = vunpack.c.h.b16 %v125
  %v290 = vunpack.c.l.b16 %v126
  %v291 = vunpack.c.h.b16 %v126
  %v292 = vunpack.c.l.b16 %v127
  %v293 = vunpack.c.h.b16 %v127
  %v294 = vunpack.c.l.b16 %v128
  %v295 = vunpack.c.h.b16 %v128
  %v296 = vunpack.c.l.b16 %v129
  %v297 = vunpack.c.h.b16 %v129
  %v298 = vunpack.c.l.b16 %v130
  %v299 = vunpack.c.h.b16 %v130
  %v300 = vunpack.c.l.b16 %v131
  %v301 = vunpack.c.h.b16 %v131
  %v302 = vunpack.c.l.b16 %v132
  %v303 = vunpack.c.h.b16 %v132
  %v304 = vunpack.c.l.b16 %v133
  %v305 = vunpack.c.h.b16 %v133
  %v306 = vunpack.c.l.b16 %v134
  %v307 = vunpack.c.h.b16 %v134
  %v308 = vunpack.c.l.b16 %v135
  %v309 = vunpack.c.h.b16 %v135
  %v310 = vunpack.c.l.b16 %v136
  %v311 = vunpack.c.h.b16 %v136
  %v312 = vunpack.c.l.b16 %v137
  %v313 = vunpack.c.h.b16 %v137
  %v314 = vunpack.c.l.b16 %v138
  %v315 = vunpack.c.h.b16 %v138
  %v316 = vunpack.c.l.b16 %v139
  %v317 = vunpack.c.h.b16 %v139
  %v318 = vunpack.c.l.b16 %v140
  %v319 = vunpack.c.h.b16 %v140
  %v320 = vunpack.c.l.b16 %v141
  %v321 = vunpack.c.h.b16 %v141
  %v322 = vunpack.c.l.b16 %v142
  %v323 = vunpack.c.h.b16 %v142
  %v324 = vunpack.c.l.b16 %v143
  %v325 = vunpack.c.h.b16 %v143
  %v326 = vunpack.c.l.b16 %v144
  %v327 = vunpack.c.h.b16 %v144
  %v328 = vunpack.c.l.b16 %v145
  %v329 = vunpack.c.h.b16 %v145
  %v330 = vunpack.c.l.b16 %v146
  %v331 = vunpack.c.h.b16 %v146
  %v332 = vunpack.c.l.b16 %v147
  %v333 = vunpack.c.h.b16 %v147
  %v334 = vunpack.c.l.b16 %v148
  %v335 = vunpack.c.h.b16 %v148
  %v336 = vunpack.c.l.b16 %v149
  %v337 = vunpack.c.h.b16 %v149
  %v338 = vunpack.c.l.b16 %v150
  %v339 = vunpack.c.h.b16 %v150
  %v340 = vunpack.c.l.b16 %v151
  %v341 = vunpack.c.h.b16 %v151
  %v342 = vunpack.c.l.b16 %v152
  %v343 = vunpack.c.h.b16 %v152
  %v344 = vunpack.c.l.b16 %v153
  %v345 = vunpack.c.h.b16 %v153
  %v346 = vunpack.c.l.b16 %v154
  %v347 = vunpack.c.h.b16 %v154
  %v348 = vunpack.c.l.b16 %v155
  %v349 = vunpack.c.h.b16 %v155
  %v350 = vunpack.c.l.b16 %v156
  %v351 = vunpack.c.h.b16 %v156
  %v352 = vunpack.c.l.b16 %v157
  %v353 = vunpack.c.h.b16 %v157
  %v354 = vunpack.c.l.b16 %v158
  %v355 = vunpack.c.h.b16 %v158
  %v356 = vunpack.c.l.b16 %v159
  %v357 = vunpack.c.h.b16 %v159
  %v358 = vunpack.c.l.b16 %v160
  %v359 = vunpack.c.h.b16 %v160
  %v360 = vunpack.c.l.b16 %v161
  %v361 = vunpack.c.h.b16 %v161
  %v362 = vunpack.c.l.b16 %v162
  %v363 = vunpack.c.h.b16 %v162
  %v364 = vunpack.c.l.b16 %v163
  %v365 = vunpack.c.h.b16 %v163
  %v366 = vpack.c.b16 %v242, %v238
  %v367 = vpack.c.b16 %v243, %v239
  %v368 = vpack.c.b16 %v244, %v240
  %v369 = vpack.c.b16 %v245, %v241
  %v370 = vpack.c.b16 %v250, %v246
  %v371 = vpack.c.b16 %v251, %v247
  %v372 = vpack.c.b16 %v252, %v248
  %v373 = vpack.c.b16 %v253, %v249
  %v374 = vpack.c.b16 %v258, %v254
  %v375 = vpack.c.b16 %v259, %v255
  %v376 = vpack.c.b16 %v260, %v256
  %v377 = vpack.c.b16 %v261, %v257
  %v378 = vpack.c.b16 %v266, %v262
  %v379 = vpack.c.b16 %v267, %v263
  %v380 = vpack.c.b16 %v268, %v264
  %v381 = vpack.c.b16 %v269, %v265
  %v382 = vpack.c.b16 %v274, %v270
  %v383 = vpack.c.b16 %v275, %v271
  %v384 = vpack.c.b16 %v276, %v272
  %v385 = vpack.c.b16 %v277, %v273
  %v386 = vpack.c.b16 %v282, %v278
  %v387 = vpack.c.b16 %v283, %v279
  %v388 = vpack.c.b16 %v284, %v280
  %v389 = vpack.c.b16 %v285, %v281
  %v390 = vpack.c.b16 %v290, %v286
  %v391 = vpack.c.b16 %v291, %v287
  %v392 = vpack.c.b16 %v292, %v288
  %v393 = vpack.c.b16 %v293, %v289
  %v394 = vpack.c.b16 %v298, %v294
  %v395 = vpack.c.b16 %v299, %v295
  %v396 = vpack.c.b16 %v300, %v296
  %v397 = vpack.c.b16 %v301, %v297
  %v398 = vpack.c.b16 %v306, %v302
  %v399 = vpack.c.b16 %v307, %v303
  %v400 = vpack.c.b16 %v308, %v304
  %v401 = vpack.c.b16 %v309, %v305
  %v402 = vpack.c.b16 %v314, %v310
  %v403 = vpack.c.b16 %v315, %v311
  %v404 = vpack.c.b16 %v316, %v312
  %v405 = vpack.c.b16 %v317, %v313
  %v406 = vpack.c.b16 %v322, %v318
  %v407 = vpack.c.b16 %v323, %v319
  %v408 = vpack.c.b16 %v324, %v320
  %v409 = vpack.c.b16 %v325, %v321
  %v410 = vpack.c.b16 %v330, %v326
  %v411 = vpack.c.b16 %v331, %v327
  %v412 = vpack.c.b16 %v332, %v328
  %v413 = vpack.c.b16 %v333, %v329
  %v414 = vpack.c.b16 %v338, %v334
  %v415 = vpack.c.b16 %v339, %v335
  %v416 = vpack.c.b16 %v340, %v336
  %v417 = vpack.c.b16 %v341, %v337
  %v418 = vpack.c.b16 %v346, %v342
  %v419 = vpack.c.b16 %v347, %v343
  %v420 = vpack.c.b16 %v348, %v344
  %v421 = vpack.c.b16 %v349, %v345
  %v422 = vpack.c.b16 %v354, %v350
  %v423 = vpack.c.b16 %v355, %v351
  %v424 = vpack.c.b16 %v356, %v352
  %v425 = vpack.c.b16 %v357, %v353
  %v426 = vpack.c.b16 %v362, %v358
  %v427 = vpack.c.b16 %v363, %v359
  %v428 = vpack.c.b16 %v364, %v360
  %v429 = vpack.c.b16 %v365, %v361
  %494 = vmatpush.bf16.msra.mxu0 %v394
  %495 = vmatpush.bf16.msra.mxu0 %v390
  %496 = vmatpush.bf16.msra.mxu0 %v386
  %497 = vmatpush.bf16.msra.mxu0 %v382
  %498 = vmatpush.bf16.msra.mxu0 %v378
  %499 = vmatpush.bf16.msra.mxu0 %v374
  %500 = vmatpush.bf16.msra.mxu0 %v370
  %501 = vmatpush.bf16.msra.mxu0 %v366
  %502 = vmatmul.bf16.gmra.mxu0 %v170
  %v503 = vpop.f32.mrf.mxu0
  %v504 = vadd.f32 0.0, %v503
  %v505 = vpop.f32.mrf.mxu0
  %v506 = vadd.f32 0.0, %v505
  %507 = vdwg.mxu0
  %508 = vmatpush.bf16.msra.mxu0 %v426
  %509 = vmatpush.bf16.msra.mxu0 %v422
  %510 = vmatpush.bf16.msra.mxu0 %v418
  %511 = vmatpush.bf16.msra.mxu0 %v414
  %512 = vmatpush.bf16.msra.mxu0 %v410
  %513 = vmatpush.bf16.msra.mxu0 %v406
  %514 = vmatpush.bf16.msra.mxu0 %v402
  %515 = vmatpush.bf16.msra.mxu0 %v398
  %516 = vmatmul.bf16.gmra.mxu0 %v171
  %v517 = vpop.f32.mrf.mxu0
  %v518 = vadd.f32 %v504, %v517
  %v519 = vpop.f32.mrf.mxu0
  %v520 = vadd.f32 %v506, %v519
  %521 = vdwg.mxu0
  %522 = vmatpush.bf16.msra.mxu0 %v395
  %523 = vmatpush.bf16.msra.mxu0 %v391
  %524 = vmatpush.bf16.msra.mxu0 %v387
  %525 = vmatpush.bf16.msra.mxu0 %v383
  %526 = vmatpush.bf16.msra.mxu0 %v379
  %527 = vmatpush.bf16.msra.mxu0 %v375
  %528 = vmatpush.bf16.msra.mxu0 %v371
  %529 = vmatpush.bf16.msra.mxu0 %v367
  %530 = vmatmul.bf16.gmra.mxu0 %v170
  %v531 = vpop.f32.mrf.mxu0
  %v532 = vadd.f32 0.0, %v531
  %v533 = vpop.f32.mrf.mxu0
  %v534 = vadd.f32 0.0, %v533
  %535 = vdwg.mxu0
  %536 = vmatpush.bf16.msra.mxu0 %v427
  %537 = vmatpush.bf16.msra.mxu0 %v423
  %538 = vmatpush.bf16.msra.mxu0 %v419
  %539 = vmatpush.bf16.msra.mxu0 %v415
  %540 = vmatpush.bf16.msra.mxu0 %v411
  %541 = vmatpush.bf16.msra.mxu0 %v407
  %542 = vmatpush.bf16.msra.mxu0 %v403
  %543 = vmatpush.bf16.msra.mxu0 %v399
  %544 = vmatmul.bf16.gmra.mxu0 %v171
  %v545 = vpop.f32.mrf.mxu0
  %v546 = vadd.f32 %v532, %v545
  %v547 = vpop.f32.mrf.mxu0
  %v548 = vadd.f32 %v534, %v547
  %549 = vdwg.mxu0
  %550 = vmatpush.bf16.msra.mxu0 %v396
  %551 = vmatpush.bf16.msra.mxu0 %v392
  %552 = vmatpush.bf16.msra.mxu0 %v388
  %553 = vmatpush.bf16.msra.mxu0 %v384
  %554 = vmatpush.bf16.msra.mxu0 %v380
  %555 = vmatpush.bf16.msra.mxu0 %v376
  %556 = vmatpush.bf16.msra.mxu0 %v372
  %557 = vmatpush.bf16.msra.mxu0 %v368
  %558 = vmatmul.bf16.gmra.mxu0 %v170
  %v559 = vpop.f32.mrf.mxu0
  %v560 = vadd.f32 0.0, %v559
  %v561 = vpop.f32.mrf.mxu0
  %v562 = vadd.f32 0.0, %v561
  %563 = vdwg.mxu0
  %564 = vmatpush.bf16.msra.mxu0 %v428
  %565 = vmatpush.bf16.msra.mxu0 %v424
  %566 = vmatpush.bf16.msra.mxu0 %v420
  %567 = vmatpush.bf16.msra.mxu0 %v416
  %568 = vmatpush.bf16.msra.mxu0 %v412
  %569 = vmatpush.bf16.msra.mxu0 %v408
  %570 = vmatpush.bf16.msra.mxu0 %v404
  %571 = vmatpush.bf16.msra.mxu0 %v400
  %572 = vmatmul.bf16.gmra.mxu0 %v171
  %v573 = vpop.f32.mrf.mxu0
  %v574 = vadd.f32 %v560, %v573
  %v575 = vpop.f32.mrf.mxu0
  %v576 = vadd.f32 %v562, %v575
  %577 = vdwg.mxu0
  %578 = vmatpush.bf16.msra.mxu0 %v397
  %579 = vmatpush.bf16.msra.mxu0 %v393
  %580 = vmatpush.bf16.msra.mxu0 %v389
  %581 = vmatpush.bf16.msra.mxu0 %v385
  %582 = vmatpush.bf16.msra.mxu0 %v381
  %583 = vmatpush.bf16.msra.mxu0 %v377
  %584 = vmatpush.bf16.msra.mxu0 %v373
  %585 = vmatpush.bf16.msra.mxu0 %v369
  %586 = vmatmul.bf16.gmra.mxu0 %v170
  %v587 = vpop.f32.mrf.mxu0
  %v588 = vadd.f32 0.0, %v587
  %v589 = vpop.f32.mrf.mxu0
  %v590 = vadd.f32 0.0, %v589
  %591 = vdwg.mxu0
  %592 = vmatpush.bf16.msra.mxu0 %v429
  %593 = vmatpush.bf16.msra.mxu0 %v425
  %594 = vmatpush.bf16.msra.mxu0 %v421
  %595 = vmatpush.bf16.msra.mxu0 %v417
  %596 = vmatpush.bf16.msra.mxu0 %v413
  %597 = vmatpush.bf16.msra.mxu0 %v409
  %598 = vmatpush.bf16.msra.mxu0 %v405
  %599 = vmatpush.bf16.msra.mxu0 %v401
  %600 = vmatmul.bf16.gmra.mxu0 %v171
  %v601 = vpop.f32.mrf.mxu0
  %v602 = vadd.f32 %v588, %v601
  %v603 = vpop.f32.mrf.mxu0
  %v604 = vadd.f32 %v590, %v603
  %605 = vdwg.mxu0
  %v608 = vunpack.c.l.b16 %v32
  %v609 = vunpack.c.h.b16 %v32
  %v610 = vunpack.c.l.b16 %v33
  %v611 = vunpack.c.h.b16 %v33
  %v612 = vpack.c.b16 %v610, %v608
  %v613 = vpack.c.b16 %v611, %v609
  %v680 = vunpack.c.l.b16 %v34
  %v681 = vunpack.c.h.b16 %v34
  %v682 = vunpack.c.l.b16 %v35
  %v683 = vunpack.c.h.b16 %v35
  %v684 = vunpack.c.l.b16 %v36
  %v685 = vunpack.c.h.b16 %v36
  %v686 = vunpack.c.l.b16 %v37
  %v687 = vunpack.c.h.b16 %v37
  %v688 = vunpack.c.l.b16 %v38
  %v689 = vunpack.c.h.b16 %v38
  %v690 = vunpack.c.l.b16 %v39
  %v691 = vunpack.c.h.b16 %v39
  %v692 = vunpack.c.l.b16 %v40
  %v693 = vunpack.c.h.b16 %v40
  %v694 = vunpack.c.l.b16 %v41
  %v695 = vunpack.c.h.b16 %v41
  %v696 = vunpack.c.l.b16 %v42
  %v697 = vunpack.c.h.b16 %v42
  %v698 = vunpack.c.l.b16 %v43
  %v699 = vunpack.c.h.b16 %v43
  %v700 = vunpack.c.l.b16 %v44
  %v701 = vunpack.c.h.b16 %v44
  %v702 = vunpack.c.l.b16 %v45
  %v703 = vunpack.c.h.b16 %v45
  %v704 = vunpack.c.l.b16 %v46
  %v705 = vunpack.c.h.b16 %v46
  %v706 = vunpack.c.l.b16 %v47
  %v707 = vunpack.c.h.b16 %v47
  %v708 = vunpack.c.l.b16 %v48
  %v709 = vunpack.c.h.b16 %v48
  %v710 = vunpack.c.l.b16 %v49
  %v711 = vunpack.c.h.b16 %v49
  %v712 = vunpack.c.l.b16 %v50
  %v713 = vunpack.c.h.b16 %v50
  %v714 = vunpack.c.l.b16 %v51
  %v715 = vunpack.c.h.b16 %v51
  %v716 = vunpack.c.l.b16 %v52
  %v717 = vunpack.c.h.b16 %v52
  %v718 = vunpack.c.l.b16 %v53
  %v719 = vunpack.c.h.b16 %v53
  %v720 = vunpack.c.l.b16 %v54
  %v721 = vunpack.c.h.b16 %v54
  %v722 = vunpack.c.l.b16 %v55
  %v723 = vunpack.c.h.b16 %v55
  %v724 = vunpack.c.l.b16 %v56
  %v725 = vunpack.c.h.b16 %v56
  %v726 = vunpack.c.l.b16 %v57
  %v727 = vunpack.c.h.b16 %v57
  %v728 = vunpack.c.l.b16 %v58
  %v729 = vunpack.c.h.b16 %v58
  %v730 = vunpack.c.l.b16 %v59
  %v731 = vunpack.c.h.b16 %v59
  %v732 = vunpack.c.l.b16 %v60
  %v733 = vunpack.c.h.b16 %v60
  %v734 = vunpack.c.l.b16 %v61
  %v735 = vunpack.c.h.b16 %v61
  %v736 = vunpack.c.l.b16 %v62
  %v737 = vunpack.c.h.b16 %v62
  %v738 = vunpack.c.l.b16 %v63
  %v739 = vunpack.c.h.b16 %v63
  %v740 = vunpack.c.l.b16 %v64
  %v741 = vunpack.c.h.b16 %v64
  %v742 = vunpack.c.l.b16 %v65
  %v743 = vunpack.c.h.b16 %v65
  %v744 = vunpack.c.l.b16 %v66
  %v745 = vunpack.c.h.b16 %v66
  %v746 = vunpack.c.l.b16 %v67
  %v747 = vunpack.c.h.b16 %v67
  %v748 = vunpack.c.l.b16 %v68
  %v749 = vunpack.c.h.b16 %v68
  %v750 = vunpack.c.l.b16 %v69
  %v751 = vunpack.c.h.b16 %v69
  %v752 = vunpack.c.l.b16 %v70
  %v753 = vunpack.c.h.b16 %v70
  %v754 = vunpack.c.l.b16 %v71
  %v755 = vunpack.c.h.b16 %v71
  %v756 = vunpack.c.l.b16 %v72
  %v757 = vunpack.c.h.b16 %v72
  %v758 = vunpack.c.l.b16 %v73
  %v759 = vunpack.c.h.b16 %v73
  %v760 = vunpack.c.l.b16 %v74
  %v761 = vunpack.c.h.b16 %v74
  %v762 = vunpack.c.l.b16 %v75
  %v763 = vunpack.c.h.b16 %v75
  %v764 = vunpack.c.l.b16 %v76
  %v765 = vunpack.c.h.b16 %v76
  %v766 = vunpack.c.l.b16 %v77
  %v767 = vunpack.c.h.b16 %v77
  %v768 = vunpack.c.l.b16 %v78
  %v769 = vunpack.c.h.b16 %v78
  %v770 = vunpack.c.l.b16 %v79
  %v771 = vunpack.c.h.b16 %v79
  %v772 = vunpack.c.l.b16 %v80
  %v773 = vunpack.c.h.b16 %v80
  %v774 = vunpack.c.l.b16 %v81
  %v775 = vunpack.c.h.b16 %v81
  %v776 = vunpack.c.l.b16 %v82
  %v777 = vunpack.c.h.b16 %v82
  %v778 = vunpack.c.l.b16 %v83
  %v779 = vunpack.c.h.b16 %v83
  %v780 = vunpack.c.l.b16 %v84
  %v781 = vunpack.c.h.b16 %v84
  %v782 = vunpack.c.l.b16 %v85
  %v783 = vunpack.c.h.b16 %v85
  %v784 = vunpack.c.l.b16 %v86
  %v785 = vunpack.c.h.b16 %v86
  %v786 = vunpack.c.l.b16 %v87
  %v787 = vunpack.c.h.b16 %v87
  %v788 = vunpack.c.l.b16 %v88
  %v789 = vunpack.c.h.b16 %v88
  %v790 = vunpack.c.l.b16 %v89
  %v791 = vunpack.c.h.b16 %v89
  %v792 = vunpack.c.l.b16 %v90
  %v793 = vunpack.c.h.b16 %v90
  %v794 = vunpack.c.l.b16 %v91
  %v795 = vunpack.c.h.b16 %v91
  %v796 = vunpack.c.l.b16 %v92
  %v797 = vunpack.c.h.b16 %v92
  %v798 = vunpack.c.l.b16 %v93
  %v799 = vunpack.c.h.b16 %v93
  %v800 = vunpack.c.l.b16 %v94
  %v801 = vunpack.c.h.b16 %v94
  %v802 = vunpack.c.l.b16 %v95
  %v803 = vunpack.c.h.b16 %v95
  %v804 = vunpack.c.l.b16 %v96
  %v805 = vunpack.c.h.b16 %v96
  %v806 = vunpack.c.l.b16 %v97
  %v807 = vunpack.c.h.b16 %v97
  %v808 = vpack.c.b16 %v684, %v680
  %v809 = vpack.c.b16 %v685, %v681
  %v810 = vpack.c.b16 %v686, %v682
  %v811 = vpack.c.b16 %v687, %v683
  %v812 = vpack.c.b16 %v692, %v688
  %v813 = vpack.c.b16 %v693, %v689
  %v814 = vpack.c.b16 %v694, %v690
  %v815 = vpack.c.b16 %v695, %v691
  %v816 = vpack.c.b16 %v700, %v696
  %v817 = vpack.c.b16 %v701, %v697
  %v818 = vpack.c.b16 %v702, %v698
  %v819 = vpack.c.b16 %v703, %v699
  %v820 = vpack.c.b16 %v708, %v704
  %v821 = vpack.c.b16 %v709, %v705
  %v822 = vpack.c.b16 %v710, %v706
  %v823 = vpack.c.b16 %v711, %v707
  %v824 = vpack.c.b16 %v716, %v712
  %v825 = vpack.c.b16 %v717, %v713
  %v826 = vpack.c.b16 %v718, %v714
  %v827 = vpack.c.b16 %v719, %v715
  %v828 = vpack.c.b16 %v724, %v720
  %v829 = vpack.c.b16 %v725, %v721
  %v830 = vpack.c.b16 %v726, %v722
  %v831 = vpack.c.b16 %v727, %v723
  %v832 = vpack.c.b16 %v732, %v728
  %v833 = vpack.c.b16 %v733, %v729
  %v834 = vpack.c.b16 %v734, %v730
  %v835 = vpack.c.b16 %v735, %v731
  %v836 = vpack.c.b16 %v740, %v736
  %v837 = vpack.c.b16 %v741, %v737
  %v838 = vpack.c.b16 %v742, %v738
  %v839 = vpack.c.b16 %v743, %v739
  %v840 = vpack.c.b16 %v748, %v744
  %v841 = vpack.c.b16 %v749, %v745
  %v842 = vpack.c.b16 %v750, %v746
  %v843 = vpack.c.b16 %v751, %v747
  %v844 = vpack.c.b16 %v756, %v752
  %v845 = vpack.c.b16 %v757, %v753
  %v846 = vpack.c.b16 %v758, %v754
  %v847 = vpack.c.b16 %v759, %v755
  %v848 = vpack.c.b16 %v764, %v760
  %v849 = vpack.c.b16 %v765, %v761
  %v850 = vpack.c.b16 %v766, %v762
  %v851 = vpack.c.b16 %v767, %v763
  %v852 = vpack.c.b16 %v772, %v768
  %v853 = vpack.c.b16 %v773, %v769
  %v854 = vpack.c.b16 %v774, %v770
  %v855 = vpack.c.b16 %v775, %v771
  %v856 = vpack.c.b16 %v780, %v776
  %v857 = vpack.c.b16 %v781, %v777
  %v858 = vpack.c.b16 %v782, %v778
  %v859 = vpack.c.b16 %v783, %v779
  %v860 = vpack.c.b16 %v788, %v784
  %v861 = vpack.c.b16 %v789, %v785
  %v862 = vpack.c.b16 %v790, %v786
  %v863 = vpack.c.b16 %v791, %v787
  %v864 = vpack.c.b16 %v796, %v792
  %v865 = vpack.c.b16 %v797, %v793
  %v866 = vpack.c.b16 %v798, %v794
  %v867 = vpack.c.b16 %v799, %v795
  %v868 = vpack.c.b16 %v804, %v800
  %v869 = vpack.c.b16 %v805, %v801
  %v870 = vpack.c.b16 %v806, %v802
  %v871 = vpack.c.b16 %v807, %v803
  %936 = vmatpush.bf16.msra.mxu0 %v836
  %937 = vmatpush.bf16.msra.mxu0 %v832
  %938 = vmatpush.bf16.msra.mxu0 %v828
  %939 = vmatpush.bf16.msra.mxu0 %v824
  %940 = vmatpush.bf16.msra.mxu0 %v820
  %941 = vmatpush.bf16.msra.mxu0 %v816
  %942 = vmatpush.bf16.msra.mxu0 %v812
  %943 = vmatpush.bf16.msra.mxu0 %v808
  %944 = vmatmul.bf16.gmra.mxu0 %v612
  %v945 = vpop.f32.mrf.mxu0
  %v946 = vadd.f32 %v518, %v945
  %v947 = vpop.f32.mrf.mxu0
  %v948 = vadd.f32 %v520, %v947
  %949 = vdwg.mxu0
  %950 = vmatpush.bf16.msra.mxu0 %v868
  %951 = vmatpush.bf16.msra.mxu0 %v864
  %952 = vmatpush.bf16.msra.mxu0 %v860
  %953 = vmatpush.bf16.msra.mxu0 %v856
  %954 = vmatpush.bf16.msra.mxu0 %v852
  %955 = vmatpush.bf16.msra.mxu0 %v848
  %956 = vmatpush.bf16.msra.mxu0 %v844
  %957 = vmatpush.bf16.msra.mxu0 %v840
  %958 = vmatmul.bf16.gmra.mxu0 %v613
  %v959 = vpop.f32.mrf.mxu0
  %v960 = vadd.f32 %v946, %v959
  %v961 = vpop.f32.mrf.mxu0
  %v962 = vadd.f32 %v948, %v961
  %963 = vdwg.mxu0
  %964 = vmatpush.bf16.msra.mxu0 %v837
  %965 = vmatpush.bf16.msra.mxu0 %v833
  %966 = vmatpush.bf16.msra.mxu0 %v829
  %967 = vmatpush.bf16.msra.mxu0 %v825
  %968 = vmatpush.bf16.msra.mxu0 %v821
  %969 = vmatpush.bf16.msra.mxu0 %v817
  %970 = vmatpush.bf16.msra.mxu0 %v813
  %971 = vmatpush.bf16.msra.mxu0 %v809
  %972 = vmatmul.bf16.gmra.mxu0 %v612
  %v973 = vpop.f32.mrf.mxu0
  %v974 = vadd.f32 %v546, %v973
  %v975 = vpop.f32.mrf.mxu0
  %v976 = vadd.f32 %v548, %v975
  %977 = vdwg.mxu0
  %978 = vmatpush.bf16.msra.mxu0 %v869
  %979 = vmatpush.bf16.msra.mxu0 %v865
  %980 = vmatpush.bf16.msra.mxu0 %v861
  %981 = vmatpush.bf16.msra.mxu0 %v857
  %982 = vmatpush.bf16.msra.mxu0 %v853
  %983 = vmatpush.bf16.msra.mxu0 %v849
  %984 = vmatpush.bf16.msra.mxu0 %v845
  %985 = vmatpush.bf16.msra.mxu0 %v841
  %986 = vmatmul.bf16.gmra.mxu0 %v613
  %v987 = vpop.f32.mrf.mxu0
  %v988 = vadd.f32 %v974, %v987
  %v989 = vpop.f32.mrf.mxu0
  %v990 = vadd.f32 %v976, %v989
  %991 = vdwg.mxu0
  %992 = vmatpush.bf16.msra.mxu0 %v838
  %993 = vmatpush.bf16.msra.mxu0 %v834
  %994 = vmatpush.bf16.msra.mxu0 %v830
  %995 = vmatpush.bf16.msra.mxu0 %v826
  %996 = vmatpush.bf16.msra.mxu0 %v822
  %997 = vmatpush.bf16.msra.mxu0 %v818
  %998 = vmatpush.bf16.msra.mxu0 %v814
  %999 = vmatpush.bf16.msra.mxu0 %v810
  %1000 = vmatmul.bf16.gmra.mxu0 %v612
  %v1001 = vpop.f32.mrf.mxu0
  %v1002 = vadd.f32 %v574, %v1001
  %v1003 = vpop.f32.mrf.mxu0
  %v1004 = vadd.f32 %v576, %v1003
  %1005 = vdwg.mxu0
  %1006 = vmatpush.bf16.msra.mxu0 %v870
  %1007 = vmatpush.bf16.msra.mxu0 %v866
  %1008 = vmatpush.bf16.msra.mxu0 %v862
  %1009 = vmatpush.bf16.msra.mxu0 %v858
  %1010 = vmatpush.bf16.msra.mxu0 %v854
  %1011 = vmatpush.bf16.msra.mxu0 %v850
  %1012 = vmatpush.bf16.msra.mxu0 %v846
  %1013 = vmatpush.bf16.msra.mxu0 %v842
  %1014 = vmatmul.bf16.gmra.mxu0 %v613
  %v1015 = vpop.f32.mrf.mxu0
  %v1016 = vadd.f32 %v1002, %v1015
  %v1017 = vpop.f32.mrf.mxu0
  %v1018 = vadd.f32 %v1004, %v1017
  %1019 = vdwg.mxu0
  %1020 = vmatpush.bf16.msra.mxu0 %v839
  %1021 = vmatpush.bf16.msra.mxu0 %v835
  %1022 = vmatpush.bf16.msra.mxu0 %v831
  %1023 = vmatpush.bf16.msra.mxu0 %v827
  %1024 = vmatpush.bf16.msra.mxu0 %v823
  %1025 = vmatpush.bf16.msra.mxu0 %v819
  %1026 = vmatpush.bf16.msra.mxu0 %v815
  %1027 = vmatpush.bf16.msra.mxu0 %v811
  %1028 = vmatmul.bf16.gmra.mxu0 %v612
  %v1029 = vpop.f32.mrf.mxu0
  %v1030 = vadd.f32 %v602, %v1029
  %v1031 = vpop.f32.mrf.mxu0
  %v1032 = vadd.f32 %v604, %v1031
  %1033 = vdwg.mxu0
  %1034 = vmatpush.bf16.msra.mxu0 %v871
  %1035 = vmatpush.bf16.msra.mxu0 %v867
  %1036 = vmatpush.bf16.msra.mxu0 %v863
  %1037 = vmatpush.bf16.msra.mxu0 %v859
  %1038 = vmatpush.bf16.msra.mxu0 %v855
  %1039 = vmatpush.bf16.msra.mxu0 %v851
  %1040 = vmatpush.bf16.msra.mxu0 %v847
  %1041 = vmatpush.bf16.msra.mxu0 %v843
  %1042 = vmatmul.bf16.gmra.mxu0 %v613
  %v1043 = vpop.f32.mrf.mxu0
  %v1044 = vadd.f32 %v1030, %v1043
  %v1045 = vpop.f32.mrf.mxu0
  %v1046 = vadd.f32 %v1032, %v1045
  %1047 = vdwg.mxu0
  %v1048 = vld [vmem:[%s2] sm:$0xff]
  %v1049 = vld [vmem:[%s2 + $0x8] sm:$0xff]
  %v1050 = vld [vmem:[%s6] sm:$0xff]
  %v1051 = vld [vmem:[%s6 + $0x8] sm:$0xff]
  %v1052 = vld [vmem:[%s6 + $0x10] sm:$0xff]
  %v1053 = vld [vmem:[%s6 + $0x18] sm:$0xff]
  %v1054 = vld [vmem:[%s6 + $0x20] sm:$0xff]
  %v1055 = vld [vmem:[%s6 + $0x28] sm:$0xff]
  %v1056 = vld [vmem:[%s6 + $0x30] sm:$0xff]
  %v1057 = vld [vmem:[%s6 + $0x38] sm:$0xff]
  %v1058 = vld [vmem:[%s6 + $0x40] sm:$0xff]
  %v1059 = vld [vmem:[%s6 + $0x48] sm:$0xff]
  %v1060 = vld [vmem:[%s6 + $0x50] sm:$0xff]
  %v1061 = vld [vmem:[%s6 + $0x58] sm:$0xff]
  %v1062 = vld [vmem:[%s6 + $0x60] sm:$0xff]
  %v1063 = vld [vmem:[%s6 + $0x68] sm:$0xff]
  %v1064 = vld [vmem:[%s6 + $0x70] sm:$0xff]
  %v1065 = vld [vmem:[%s6 + $0x78] sm:$0xff]
  %v1066 = vld [vmem:[%s6 + $0x80] sm:$0xff]
  %v1067 = vld [vmem:[%s6 + $0x88] sm:$0xff]
  %v1068 = vld [vmem:[%s6 + $0x90] sm:$0xff]
  %v1069 = vld [vmem:[%s6 + $0x98] sm:$0xff]
  %v1070 = vld [vmem:[%s6 + $0xa0] sm:$0xff]
  %v1071 = vld [vmem:[%s6 + $0xa8] sm:$0xff]
  %v1072 = vld [vmem:[%s6 + $0xb0] sm:$0xff]
  %v1073 = vld [vmem:[%s6 + $0xb8] sm:$0xff]
  %v1074 = vld [vmem:[%s6 + $0xc0] sm:$0xff]
  %v1075 = vld [vmem:[%s6 + $0xc8] sm:$0xff]
  %v1076 = vld [vmem:[%s6 + $0xd0] sm:$0xff]
  %v1077 = vld [vmem:[%s6 + $0xd8] sm:$0xff]
  %v1078 = vld [vmem:[%s6 + $0xe0] sm:$0xff]
  %v1079 = vld [vmem:[%s6 + $0xe8] sm:$0xff]
  %v1080 = vld [vmem:[%s6 + $0xf0] sm:$0xff]
  %v1081 = vld [vmem:[%s6 + $0xf8] sm:$0xff]
  %v1082 = vld [vmem:[%s6 + $0x100] sm:$0xff]
  %v1083 = vld [vmem:[%s6 + $0x108] sm:$0xff]
  %v1084 = vld [vmem:[%s6 + $0x110] sm:$0xff]
  %v1085 = vld [vmem:[%s6 + $0x118] sm:$0xff]
  %v1086 = vld [vmem:[%s6 + $0x120] sm:$0xff]
  %v1087 = vld [vmem:[%s6 + $0x128] sm:$0xff]
  %v1088 = vld [vmem:[%s6 + $0x130] sm:$0xff]
  %v1089 = vld [vmem:[%s6 + $0x138] sm:$0xff]
  %v1090 = vld [vmem:[%s6 + $0x140] sm:$0xff]
  %v1091 = vld [vmem:[%s6 + $0x148] sm:$0xff]
  %v1092 = vld [vmem:[%s6 + $0x150] sm:$0xff]
  %v1093 = vld [vmem:[%s6 + $0x158] sm:$0xff]
  %v1094 = vld [vmem:[%s6 + $0x160] sm:$0xff]
  %v1095 = vld [vmem:[%s6 + $0x168] sm:$0xff]
  %v1096 = vld [vmem:[%s6 + $0x170] sm:$0xff]
  %v1097 = vld [vmem:[%s6 + $0x178] sm:$0xff]
  %v1098 = vld [vmem:[%s6 + $0x180] sm:$0xff]
  %v1099 = vld [vmem:[%s6 + $0x188] sm:$0xff]
  %v1100 = vld [vmem:[%s6 + $0x190] sm:$0xff]
  %v1101 = vld [vmem:[%s6 + $0x198] sm:$0xff]
  %v1102 = vld [vmem:[%s6 + $0x1a0] sm:$0xff]
  %v1103 = vld [vmem:[%s6 + $0x1a8] sm:$0xff]
  %v1104 = vld [vmem:[%s6 + $0x1b0] sm:$0xff]
  %v1105 = vld [vmem:[%s6 + $0x1b8] sm:$0xff]
  %v1106 = vld [vmem:[%s6 + $0x1c0] sm:$0xff]
  %v1107 = vld [vmem:[%s6 + $0x1c8] sm:$0xff]
  %v1108 = vld [vmem:[%s6 + $0x1d0] sm:$0xff]
  %v1109 = vld [vmem:[%s6 + $0x1d8] sm:$0xff]
  %v1110 = vld [vmem:[%s6 + $0x1e0] sm:$0xff]
  %v1111 = vld [vmem:[%s6 + $0x1e8] sm:$0xff]
  %v1112 = vld [vmem:[%s6 + $0x1f0] sm:$0xff]
  %v1113 = vld [vmem:[%s6 + $0x1f8] sm:$0xff]
  %v1116 = vunpack.c.l.b16 %v1048
  %v1117 = vunpack.c.h.b16 %v1048
  %v1118 = vunpack.c.l.b16 %v1049
  %v1119 = vunpack.c.h.b16 %v1049
  %v1120 = vpack.c.b16 %v1118, %v1116
  %v1121 = vpack.c.b16 %v1119, %v1117
  %v1188 = vunpack.c.l.b16 %v1050
  %v1189 = vunpack.c.h.b16 %v1050
  %v1190 = vunpack.c.l.b16 %v1051
  %v1191 = vunpack.c.h.b16 %v1051
  %v1192 = vunpack.c.l.b16 %v1052
  %v1193 = vunpack.c.h.b16 %v1052
  %v1194 = vunpack.c.l.b16 %v1053
  %v1195 = vunpack.c.h.b16 %v1053
  %v1196 = vunpack.c.l.b16 %v1054
  %v1197 = vunpack.c.h.b16 %v1054
  %v1198 = vunpack.c.l.b16 %v1055
  %v1199 = vunpack.c.h.b16 %v1055
  %v1200 = vunpack.c.l.b16 %v1056
  %v1201 = vunpack.c.h.b16 %v1056
  %v1202 = vunpack.c.l.b16 %v1057
  %v1203 = vunpack.c.h.b16 %v1057
  %v1204 = vunpack.c.l.b16 %v1058
  %v1205 = vunpack.c.h.b16 %v1058
  %v1206 = vunpack.c.l.b16 %v1059
  %v1207 = vunpack.c.h.b16 %v1059
  %v1208 = vunpack.c.l.b16 %v1060
  %v1209 = vunpack.c.h.b16 %v1060
  %v1210 = vunpack.c.l.b16 %v1061
  %v1211 = vunpack.c.h.b16 %v1061
  %v1212 = vunpack.c.l.b16 %v1062
  %v1213 = vunpack.c.h.b16 %v1062
  %v1214 = vunpack.c.l.b16 %v1063
  %v1215 = vunpack.c.h.b16 %v1063
  %v1216 = vunpack.c.l.b16 %v1064
  %v1217 = vunpack.c.h.b16 %v1064
  %v1218 = vunpack.c.l.b16 %v1065
  %v1219 = vunpack.c.h.b16 %v1065
  %v1220 = vunpack.c.l.b16 %v1066
  %v1221 = vunpack.c.h.b16 %v1066
  %v1222 = vunpack.c.l.b16 %v1067
  %v1223 = vunpack.c.h.b16 %v1067
  %v1224 = vunpack.c.l.b16 %v1068
  %v1225 = vunpack.c.h.b16 %v1068
  %v1226 = vunpack.c.l.b16 %v1069
  %v1227 = vunpack.c.h.b16 %v1069
  %v1228 = vunpack.c.l.b16 %v1070
  %v1229 = vunpack.c.h.b16 %v1070
  %v1230 = vunpack.c.l.b16 %v1071
  %v1231 = vunpack.c.h.b16 %v1071
  %v1232 = vunpack.c.l.b16 %v1072
  %v1233 = vunpack.c.h.b16 %v1072
  %v1234 = vunpack.c.l.b16 %v1073
  %v1235 = vunpack.c.h.b16 %v1073
  %v1236 = vunpack.c.l.b16 %v1074
  %v1237 = vunpack.c.h.b16 %v1074
  %v1238 = vunpack.c.l.b16 %v1075
  %v1239 = vunpack.c.h.b16 %v1075
  %v1240 = vunpack.c.l.b16 %v1076
  %v1241 = vunpack.c.h.b16 %v1076
  %v1242 = vunpack.c.l.b16 %v1077
  %v1243 = vunpack.c.h.b16 %v1077
  %v1244 = vunpack.c.l.b16 %v1078
  %v1245 = vunpack.c.h.b16 %v1078
  %v1246 = vunpack.c.l.b16 %v1079
  %v1247 = vunpack.c.h.b16 %v1079
  %v1248 = vunpack.c.l.b16 %v1080
  %v1249 = vunpack.c.h.b16 %v1080
  %v1250 = vunpack.c.l.b16 %v1081
  %v1251 = vunpack.c.h.b16 %v1081
  %v1252 = vunpack.c.l.b16 %v1082
  %v1253 = vunpack.c.h.b16 %v1082
  %v1254 = vunpack.c.l.b16 %v1083
  %v1255 = vunpack.c.h.b16 %v1083
  %v1256 = vunpack.c.l.b16 %v1084
  %v1257 = vunpack.c.h.b16 %v1084
  %v1258 = vunpack.c.l.b16 %v1085
  %v1259 = vunpack.c.h.b16 %v1085
  %v1260 = vunpack.c.l.b16 %v1086
  %v1261 = vunpack.c.h.b16 %v1086
  %v1262 = vunpack.c.l.b16 %v1087
  %v1263 = vunpack.c.h.b16 %v1087
  %v1264 = vunpack.c.l.b16 %v1088
  %v1265 = vunpack.c.h.b16 %v1088
  %v1266 = vunpack.c.l.b16 %v1089
  %v1267 = vunpack.c.h.b16 %v1089
  %v1268 = vunpack.c.l.b16 %v1090
  %v1269 = vunpack.c.h.b16 %v1090
  %v1270 = vunpack.c.l.b16 %v1091
  %v1271 = vunpack.c.h.b16 %v1091
  %v1272 = vunpack.c.l.b16 %v1092
  %v1273 = vunpack.c.h.b16 %v1092
  %v1274 = vunpack.c.l.b16 %v1093
  %v1275 = vunpack.c.h.b16 %v1093
  %v1276 = vunpack.c.l.b16 %v1094
  %v1277 = vunpack.c.h.b16 %v1094
  %v1278 = vunpack.c.l.b16 %v1095
  %v1279 = vunpack.c.h.b16 %v1095
  %v1280 = vunpack.c.l.b16 %v1096
  %v1281 = vunpack.c.h.b16 %v1096
  %v1282 = vunpack.c.l.b16 %v1097
  %v1283 = vunpack.c.h.b16 %v1097
  %v1284 = vunpack.c.l.b16 %v1098
  %v1285 = vunpack.c.h.b16 %v1098
  %v1286 = vunpack.c.l.b16 %v1099
  %v1287 = vunpack.c.h.b16 %v1099
  %v1288 = vunpack.c.l.b16 %v1100
  %v1289 = vunpack.c.h.b16 %v1100
  %v1290 = vunpack.c.l.b16 %v1101
  %v1291 = vunpack.c.h.b16 %v1101
  %v1292 = vunpack.c.l.b16 %v1102
  %v1293 = vunpack.c.h.b16 %v1102
  %v1294 = vunpack.c.l.b16 %v1103
  %v1295 = vunpack.c.h.b16 %v1103
  %v1296 = vunpack.c.l.b16 %v1104
  %v1297 = vunpack.c.h.b16 %v1104
  %v1298 = vunpack.c.l.b16 %v1105
  %v1299 = vunpack.c.h.b16 %v1105
  %v1300 = vunpack.c.l.b16 %v1106
  %v1301 = vunpack.c.h.b16 %v1106
  %v1302 = vunpack.c.l.b16 %v1107
  %v1303 = vunpack.c.h.b16 %v1107
  %v1304 = vunpack.c.l.b16 %v1108
  %v1305 = vunpack.c.h.b16 %v1108
  %v1306 = vunpack.c.l.b16 %v1109
  %v1307 = vunpack.c.h.b16 %v1109
  %v1308 = vunpack.c.l.b16 %v1110
  %v1309 = vunpack.c.h.b16 %v1110
  %v1310 = vunpack.c.l.b16 %v1111
  %v1311 = vunpack.c.h.b16 %v1111
  %v1312 = vunpack.c.l.b16 %v1112
  %v1313 = vunpack.c.h.b16 %v1112
  %v1314 = vunpack.c.l.b16 %v1113
  %v1315 = vunpack.c.h.b16 %v1113
  %v1316 = vpack.c.b16 %v1192, %v1188
  %v1317 = vpack.c.b16 %v1193, %v1189
  %v1318 = vpack.c.b16 %v1194, %v1190
  %v1319 = vpack.c.b16 %v1195, %v1191
  %v1320 = vpack.c.b16 %v1200, %v1196
  %v1321 = vpack.c.b16 %v1201, %v1197
  %v1322 = vpack.c.b16 %v1202, %v1198
  %v1323 = vpack.c.b16 %v1203, %v1199
  %v1324 = vpack.c.b16 %v1208, %v1204
  %v1325 = vpack.c.b16 %v1209, %v1205
  %v1326 = vpack.c.b16 %v1210, %v1206
  %v1327 = vpack.c.b16 %v1211, %v1207
  %v1328 = vpack.c.b16 %v1216, %v1212
  %v1329 = vpack.c.b16 %v1217, %v1213
  %v1330 = vpack.c.b16 %v1218, %v1214
  %v1331 = vpack.c.b16 %v1219, %v1215
  %v1332 = vpack.c.b16 %v1224, %v1220
  %v1333 = vpack.c.b16 %v1225, %v1221
  %v1334 = vpack.c.b16 %v1226, %v1222
  %v1335 = vpack.c.b16 %v1227, %v1223
  %v1336 = vpack.c.b16 %v1232, %v1228
  %v1337 = vpack.c.b16 %v1233, %v1229
  %v1338 = vpack.c.b16 %v1234, %v1230
  %v1339 = vpack.c.b16 %v1235, %v1231
  %v1340 = vpack.c.b16 %v1240, %v1236
  %v1341 = vpack.c.b16 %v1241, %v1237
  %v1342 = vpack.c.b16 %v1242, %v1238
  %v1343 = vpack.c.b16 %v1243, %v1239
  %v1344 = vpack.c.b16 %v1248, %v1244
  %v1345 = vpack.c.b16 %v1249, %v1245
  %v1346 = vpack.c.b16 %v1250, %v1246
  %v1347 = vpack.c.b16 %v1251, %v1247
  %v1348 = vpack.c.b16 %v1256, %v1252
  %v1349 = vpack.c.b16 %v1257, %v1253
  %v1350 = vpack.c.b16 %v1258, %v1254
  %v1351 = vpack.c.b16 %v1259, %v1255
  %v1352 = vpack.c.b16 %v1264, %v1260
  %v1353 = vpack.c.b16 %v1265, %v1261
  %v1354 = vpack.c.b16 %v1266, %v1262
  %v1355 = vpack.c.b16 %v1267, %v1263
  %v1356 = vpack.c.b16 %v1272, %v1268
  %v1357 = vpack.c.b16 %v1273, %v1269
  %v1358 = vpack.c.b16 %v1274, %v1270
  %v1359 = vpack.c.b16 %v1275, %v1271
  %v1360 = vpack.c.b16 %v1280, %v1276
  %v1361 = vpack.c.b16 %v1281, %v1277
  %v1362 = vpack.c.b16 %v1282, %v1278
  %v1363 = vpack.c.b16 %v1283, %v1279
  %v1364 = vpack.c.b16 %v1288, %v1284
  %v1365 = vpack.c.b16 %v1289, %v1285
  %v1366 = vpack.c.b16 %v1290, %v1286
  %v1367 = vpack.c.b16 %v1291, %v1287
  %v1368 = vpack.c.b16 %v1296, %v1292
  %v1369 = vpack.c.b16 %v1297, %v1293
  %v1370 = vpack.c.b16 %v1298, %v1294
  %v1371 = vpack.c.b16 %v1299, %v1295
  %v1372 = vpack.c.b16 %v1304, %v1300
  %v1373 = vpack.c.b16 %v1305, %v1301
  %v1374 = vpack.c.b16 %v1306, %v1302
  %v1375 = vpack.c.b16 %v1307, %v1303
  %v1376 = vpack.c.b16 %v1312, %v1308
  %v1377 = vpack.c.b16 %v1313, %v1309
  %v1378 = vpack.c.b16 %v1314, %v1310
  %v1379 = vpack.c.b16 %v1315, %v1311
  %1444 = vmatpush.bf16.msra.mxu0 %v1344
  %1445 = vmatpush.bf16.msra.mxu0 %v1340
  %1446 = vmatpush.bf16.msra.mxu0 %v1336
  %1447 = vmatpush.bf16.msra.mxu0 %v1332
  %1448 = vmatpush.bf16.msra.mxu0 %v1328
  %1449 = vmatpush.bf16.msra.mxu0 %v1324
  %1450 = vmatpush.bf16.msra.mxu0 %v1320
  %1451 = vmatpush.bf16.msra.mxu0 %v1316
  %1452 = vmatmul.bf16.gmra.mxu0 %v1120
  %v1453 = vpop.f32.mrf.mxu0
  %v1454 = vadd.f32 0.0, %v1453
  %v1455 = vpop.f32.mrf.mxu0
  %v1456 = vadd.f32 0.0, %v1455
  %1457 = vdwg.mxu0
  %1458 = vmatpush.bf16.msra.mxu0 %v1376
  %1459 = vmatpush.bf16.msra.mxu0 %v1372
  %1460 = vmatpush.bf16.msra.mxu0 %v1368
  %1461 = vmatpush.bf16.msra.mxu0 %v1364
  %1462 = vmatpush.bf16.msra.mxu0 %v1360
  %1463 = vmatpush.bf16.msra.mxu0 %v1356
  %1464 = vmatpush.bf16.msra.mxu0 %v1352
  %1465 = vmatpush.bf16.msra.mxu0 %v1348
  %1466 = vmatmul.bf16.gmra.mxu0 %v1121
  %v1467 = vpop.f32.mrf.mxu0
  %v1468 = vadd.f32 %v1454, %v1467
  %v1469 = vpop.f32.mrf.mxu0
  %v1470 = vadd.f32 %v1456, %v1469
  %1471 = vdwg.mxu0
  %1472 = vmatpush.bf16.msra.mxu0 %v1345
  %1473 = vmatpush.bf16.msra.mxu0 %v1341
  %1474 = vmatpush.bf16.msra.mxu0 %v1337
  %1475 = vmatpush.bf16.msra.mxu0 %v1333
  %1476 = vmatpush.bf16.msra.mxu0 %v1329
  %1477 = vmatpush.bf16.msra.mxu0 %v1325
  %1478 = vmatpush.bf16.msra.mxu0 %v1321
  %1479 = vmatpush.bf16.msra.mxu0 %v1317
  %1480 = vmatmul.bf16.gmra.mxu0 %v1120
  %v1481 = vpop.f32.mrf.mxu0
  %v1482 = vadd.f32 0.0, %v1481
  %v1483 = vpop.f32.mrf.mxu0
  %v1484 = vadd.f32 0.0, %v1483
  %1485 = vdwg.mxu0
  %1486 = vmatpush.bf16.msra.mxu0 %v1377
  %1487 = vmatpush.bf16.msra.mxu0 %v1373
  %1488 = vmatpush.bf16.msra.mxu0 %v1369
  %1489 = vmatpush.bf16.msra.mxu0 %v1365
  %1490 = vmatpush.bf16.msra.mxu0 %v1361
  %1491 = vmatpush.bf16.msra.mxu0 %v1357
  %1492 = vmatpush.bf16.msra.mxu0 %v1353
  %1493 = vmatpush.bf16.msra.mxu0 %v1349
  %1494 = vmatmul.bf16.gmra.mxu0 %v1121
  %v1495 = vpop.f32.mrf.mxu0
  %v1496 = vadd.f32 %v1482, %v1495
  %v1497 = vpop.f32.mrf.mxu0
  %v1498 = vadd.f32 %v1484, %v1497
  %1499 = vdwg.mxu0
  %1500 = vmatpush.bf16.msra.mxu0 %v1346
  %1501 = vmatpush.bf16.msra.mxu0 %v1342
  %1502 = vmatpush.bf16.msra.mxu0 %v1338
  %1503 = vmatpush.bf16.msra.mxu0 %v1334
  %1504 = vmatpush.bf16.msra.mxu0 %v1330
  %1505 = vmatpush.bf16.msra.mxu0 %v1326
  %1506 = vmatpush.bf16.msra.mxu0 %v1322
  %1507 = vmatpush.bf16.msra.mxu0 %v1318
  %1508 = vmatmul.bf16.gmra.mxu0 %v1120
  %v1509 = vpop.f32.mrf.mxu0
  %v1510 = vadd.f32 0.0, %v1509
  %v1511 = vpop.f32.mrf.mxu0
  %v1512 = vadd.f32 0.0, %v1511
  %1513 = vdwg.mxu0
  %1514 = vmatpush.bf16.msra.mxu0 %v1378
  %1515 = vmatpush.bf16.msra.mxu0 %v1374
  %1516 = vmatpush.bf16.msra.mxu0 %v1370
  %1517 = vmatpush.bf16.msra.mxu0 %v1366
  %1518 = vmatpush.bf16.msra.mxu0 %v1362
  %1519 = vmatpush.bf16.msra.mxu0 %v1358
  %1520 = vmatpush.bf16.msra.mxu0 %v1354
  %1521 = vmatpush.bf16.msra.mxu0 %v1350
  %1522 = vmatmul.bf16.gmra.mxu0 %v1121
  %v1523 = vpop.f32.mrf.mxu0
  %v1524 = vadd.f32 %v1510, %v1523
  %v1525 = vpop.f32.mrf.mxu0
  %v1526 = vadd.f32 %v1512, %v1525
  %1527 = vdwg.mxu0
  %1528 = vmatpush.bf16.msra.mxu0 %v1347
  %1529 = vmatpush.bf16.msra.mxu0 %v1343
  %1530 = vmatpush.bf16.msra.mxu0 %v1339
  %1531 = vmatpush.bf16.msra.mxu0 %v1335
  %1532 = vmatpush.bf16.msra.mxu0 %v1331
  %1533 = vmatpush.bf16.msra.mxu0 %v1327
  %1534 = vmatpush.bf16.msra.mxu0 %v1323
  %1535 = vmatpush.bf16.msra.mxu0 %v1319
  %1536 = vmatmul.bf16.gmra.mxu0 %v1120
  %v1537 = vpop.f32.mrf.mxu0
  %v1538 = vadd.f32 0.0, %v1537
  %v1539 = vpop.f32.mrf.mxu0
  %v1540 = vadd.f32 0.0, %v1539
  %1541 = vdwg.mxu0
  %1542 = vmatpush.bf16.msra.mxu0 %v1379
  %1543 = vmatpush.bf16.msra.mxu0 %v1375
  %1544 = vmatpush.bf16.msra.mxu0 %v1371
  %1545 = vmatpush.bf16.msra.mxu0 %v1367
  %1546 = vmatpush.bf16.msra.mxu0 %v1363
  %1547 = vmatpush.bf16.msra.mxu0 %v1359
  %1548 = vmatpush.bf16.msra.mxu0 %v1355
  %1549 = vmatpush.bf16.msra.mxu0 %v1351
  %1550 = vmatmul.bf16.gmra.mxu0 %v1121
  %v1551 = vpop.f32.mrf.mxu0
  %v1552 = vadd.f32 %v1538, %v1551
  %v1553 = vpop.f32.mrf.mxu0
  %v1554 = vadd.f32 %v1540, %v1553
  %1555 = vdwg.mxu0
  %v1556 = vadd.f32 %v960, %v1468
  %v1557 = vadd.f32 %v988, %v1496
  %v1558 = vadd.f32 %v1016, %v1524
  %v1559 = vadd.f32 %v1044, %v1552
  %v1560 = vadd.f32 %v962, %v1470
  %v1561 = vadd.f32 %v990, %v1498
  %v1562 = vadd.f32 %v1018, %v1526
  %v1563 = vadd.f32 %v1046, %v1554
  %v1564 = vld [vmem:[%s3] sm:$0xff]
  %v1565 = vld [vmem:[%s3 + $0x8] sm:$0xff]
  %v1566 = vld [vmem:[%s7] sm:$0xff]
  %v1567 = vld [vmem:[%s7 + $0x8] sm:$0xff]
  %v1568 = vld [vmem:[%s7 + $0x10] sm:$0xff]
  %v1569 = vld [vmem:[%s7 + $0x18] sm:$0xff]
  %v1570 = vld [vmem:[%s7 + $0x20] sm:$0xff]
  %v1571 = vld [vmem:[%s7 + $0x28] sm:$0xff]
  %v1572 = vld [vmem:[%s7 + $0x30] sm:$0xff]
  %v1573 = vld [vmem:[%s7 + $0x38] sm:$0xff]
  %v1574 = vld [vmem:[%s7 + $0x40] sm:$0xff]
  %v1575 = vld [vmem:[%s7 + $0x48] sm:$0xff]
  %v1576 = vld [vmem:[%s7 + $0x50] sm:$0xff]
  %v1577 = vld [vmem:[%s7 + $0x58] sm:$0xff]
  %v1578 = vld [vmem:[%s7 + $0x60] sm:$0xff]
  %v1579 = vld [vmem:[%s7 + $0x68] sm:$0xff]
  %v1580 = vld [vmem:[%s7 + $0x70] sm:$0xff]
  %v1581 = vld [vmem:[%s7 + $0x78] sm:$0xff]
  %v1582 = vld [vmem:[%s7 + $0x80] sm:$0xff]
  %v1583 = vld [vmem:[%s7 + $0x88] sm:$0xff]
  %v1584 = vld [vmem:[%s7 + $0x90] sm:$0xff]
  %v1585 = vld [vmem:[%s7 + $0x98] sm:$0xff]
  %v1586 = vld [vmem:[%s7 + $0xa0] sm:$0xff]
  %v1587 = vld [vmem:[%s7 + $0xa8] sm:$0xff]
  %v1588 = vld [vmem:[%s7 + $0xb0] sm:$0xff]
  %v1589 = vld [vmem:[%s7 + $0xb8] sm:$0xff]
  %v1590 = vld [vmem:[%s7 + $0xc0] sm:$0xff]
  %v1591 = vld [vmem:[%s7 + $0xc8] sm:$0xff]
  %v1592 = vld [vmem:[%s7 + $0xd0] sm:$0xff]
  %v1593 = vld [vmem:[%s7 + $0xd8] sm:$0xff]
  %v1594 = vld [vmem:[%s7 + $0xe0] sm:$0xff]
  %v1595 = vld [vmem:[%s7 + $0xe8] sm:$0xff]
  %v1596 = vld [vmem:[%s7 + $0xf0] sm:$0xff]
  %v1597 = vld [vmem:[%s7 + $0xf8] sm:$0xff]
  %v1598 = vld [vmem:[%s7 + $0x100] sm:$0xff]
  %v1599 = vld [vmem:[%s7 + $0x108] sm:$0xff]
  %v1600 = vld [vmem:[%s7 + $0x110] sm:$0xff]
  %v1601 = vld [vmem:[%s7 + $0x118] sm:$0xff]
  %v1602 = vld [vmem:[%s7 + $0x120] sm:$0xff]
  %v1603 = vld [vmem:[%s7 + $0x128] sm:$0xff]
  %v1604 = vld [vmem:[%s7 + $0x130] sm:$0xff]
  %v1605 = vld [vmem:[%s7 + $0x138] sm:$0xff]
  %v1606 = vld [vmem:[%s7 + $0x140] sm:$0xff]
  %v1607 = vld [vmem:[%s7 + $0x148] sm:$0xff]
  %v1608 = vld [vmem:[%s7 + $0x150] sm:$0xff]
  %v1609 = vld [vmem:[%s7 + $0x158] sm:$0xff]
  %v1610 = vld [vmem:[%s7 + $0x160] sm:$0xff]
  %v1611 = vld [vmem:[%s7 + $0x168] sm:$0xff]
  %v1612 = vld [vmem:[%s7 + $0x170] sm:$0xff]
  %v1613 = vld [vmem:[%s7 + $0x178] sm:$0xff]
  %v1614 = vld [vmem:[%s7 + $0x180] sm:$0xff]
  %v1615 = vld [vmem:[%s7 + $0x188] sm:$0xff]
  %v1616 = vld [vmem:[%s7 + $0x190] sm:$0xff]
  %v1617 = vld [vmem:[%s7 + $0x198] sm:$0xff]
  %v1618 = vld [vmem:[%s7 + $0x1a0] sm:$0xff]
  %v1619 = vld [vmem:[%s7 + $0x1a8] sm:$0xff]
  %v1620 = vld [vmem:[%s7 + $0x1b0] sm:$0xff]
  %v1621 = vld [vmem:[%s7 + $0x1b8] sm:$0xff]
  %v1622 = vld [vmem:[%s7 + $0x1c0] sm:$0xff]
  %v1623 = vld [vmem:[%s7 + $0x1c8] sm:$0xff]
  %v1624 = vld [vmem:[%s7 + $0x1d0] sm:$0xff]
  %v1625 = vld [vmem:[%s7 + $0x1d8] sm:$0xff]
  %v1626 = vld [vmem:[%s7 + $0x1e0] sm:$0xff]
  %v1627 = vld [vmem:[%s7 + $0x1e8] sm:$0xff]
  %v1628 = vld [vmem:[%s7 + $0x1f0] sm:$0xff]
  %v1629 = vld [vmem:[%s7 + $0x1f8] sm:$0xff]
  %v1632 = vunpack.c.l.b16 %v1564
  %v1633 = vunpack.c.h.b16 %v1564
  %v1634 = vunpack.c.l.b16 %v1565
  %v1635 = vunpack.c.h.b16 %v1565
  %v1636 = vpack.c.b16 %v1634, %v1632
  %v1637 = vpack.c.b16 %v1635, %v1633
  %v1704 = vunpack.c.l.b16 %v1566
  %v1705 = vunpack.c.h.b16 %v1566
  %v1706 = vunpack.c.l.b16 %v1567
  %v1707 = vunpack.c.h.b16 %v1567
  %v1708 = vunpack.c.l.b16 %v1568
  %v1709 = vunpack.c.h.b16 %v1568
  %v1710 = vunpack.c.l.b16 %v1569
  %v1711 = vunpack.c.h.b16 %v1569
  %v1712 = vunpack.c.l.b16 %v1570
  %v1713 = vunpack.c.h.b16 %v1570
  %v1714 = vunpack.c.l.b16 %v1571
  %v1715 = vunpack.c.h.b16 %v1571
  %v1716 = vunpack.c.l.b16 %v1572
  %v1717 = vunpack.c.h.b16 %v1572
  %v1718 = vunpack.c.l.b16 %v1573
  %v1719 = vunpack.c.h.b16 %v1573
  %v1720 = vunpack.c.l.b16 %v1574
  %v1721 = vunpack.c.h.b16 %v1574
  %v1722 = vunpack.c.l.b16 %v1575
  %v1723 = vunpack.c.h.b16 %v1575
  %v1724 = vunpack.c.l.b16 %v1576
  %v1725 = vunpack.c.h.b16 %v1576
  %v1726 = vunpack.c.l.b16 %v1577
  %v1727 = vunpack.c.h.b16 %v1577
  %v1728 = vunpack.c.l.b16 %v1578
  %v1729 = vunpack.c.h.b16 %v1578
  %v1730 = vunpack.c.l.b16 %v1579
  %v1731 = vunpack.c.h.b16 %v1579
  %v1732 = vunpack.c.l.b16 %v1580
  %v1733 = vunpack.c.h.b16 %v1580
  %v1734 = vunpack.c.l.b16 %v1581
  %v1735 = vunpack.c.h.b16 %v1581
  %v1736 = vunpack.c.l.b16 %v1582
  %v1737 = vunpack.c.h.b16 %v1582
  %v1738 = vunpack.c.l.b16 %v1583
  %v1739 = vunpack.c.h.b16 %v1583
  %v1740 = vunpack.c.l.b16 %v1584
  %v1741 = vunpack.c.h.b16 %v1584
  %v1742 = vunpack.c.l.b16 %v1585
  %v1743 = vunpack.c.h.b16 %v1585
  %v1744 = vunpack.c.l.b16 %v1586
  %v1745 = vunpack.c.h.b16 %v1586
  %v1746 = vunpack.c.l.b16 %v1587
  %v1747 = vunpack.c.h.b16 %v1587
  %v1748 = vunpack.c.l.b16 %v1588
  %v1749 = vunpack.c.h.b16 %v1588
  %v1750 = vunpack.c.l.b16 %v1589
  %v1751 = vunpack.c.h.b16 %v1589
  %v1752 = vunpack.c.l.b16 %v1590
  %v1753 = vunpack.c.h.b16 %v1590
  %v1754 = vunpack.c.l.b16 %v1591
  %v1755 = vunpack.c.h.b16 %v1591
  %v1756 = vunpack.c.l.b16 %v1592
  %v1757 = vunpack.c.h.b16 %v1592
  %v1758 = vunpack.c.l.b16 %v1593
  %v1759 = vunpack.c.h.b16 %v1593
  %v1760 = vunpack.c.l.b16 %v1594
  %v1761 = vunpack.c.h.b16 %v1594
  %v1762 = vunpack.c.l.b16 %v1595
  %v1763 = vunpack.c.h.b16 %v1595
  %v1764 = vunpack.c.l.b16 %v1596
  %v1765 = vunpack.c.h.b16 %v1596
  %v1766 = vunpack.c.l.b16 %v1597
  %v1767 = vunpack.c.h.b16 %v1597
  %v1768 = vunpack.c.l.b16 %v1598
  %v1769 = vunpack.c.h.b16 %v1598
  %v1770 = vunpack.c.l.b16 %v1599
  %v1771 = vunpack.c.h.b16 %v1599
  %v1772 = vunpack.c.l.b16 %v1600
  %v1773 = vunpack.c.h.b16 %v1600
  %v1774 = vunpack.c.l.b16 %v1601
  %v1775 = vunpack.c.h.b16 %v1601
  %v1776 = vunpack.c.l.b16 %v1602
  %v1777 = vunpack.c.h.b16 %v1602
  %v1778 = vunpack.c.l.b16 %v1603
  %v1779 = vunpack.c.h.b16 %v1603
  %v1780 = vunpack.c.l.b16 %v1604
  %v1781 = vunpack.c.h.b16 %v1604
  %v1782 = vunpack.c.l.b16 %v1605
  %v1783 = vunpack.c.h.b16 %v1605
  %v1784 = vunpack.c.l.b16 %v1606
  %v1785 = vunpack.c.h.b16 %v1606
  %v1786 = vunpack.c.l.b16 %v1607
  %v1787 = vunpack.c.h.b16 %v1607
  %v1788 = vunpack.c.l.b16 %v1608
  %v1789 = vunpack.c.h.b16 %v1608
  %v1790 = vunpack.c.l.b16 %v1609
  %v1791 = vunpack.c.h.b16 %v1609
  %v1792 = vunpack.c.l.b16 %v1610
  %v1793 = vunpack.c.h.b16 %v1610
  %v1794 = vunpack.c.l.b16 %v1611
  %v1795 = vunpack.c.h.b16 %v1611
  %v1796 = vunpack.c.l.b16 %v1612
  %v1797 = vunpack.c.h.b16 %v1612
  %v1798 = vunpack.c.l.b16 %v1613
  %v1799 = vunpack.c.h.b16 %v1613
  %v1800 = vunpack.c.l.b16 %v1614
  %v1801 = vunpack.c.h.b16 %v1614
  %v1802 = vunpack.c.l.b16 %v1615
  %v1803 = vunpack.c.h.b16 %v1615
  %v1804 = vunpack.c.l.b16 %v1616
  %v1805 = vunpack.c.h.b16 %v1616
  %v1806 = vunpack.c.l.b16 %v1617
  %v1807 = vunpack.c.h.b16 %v1617
  %v1808 = vunpack.c.l.b16 %v1618
  %v1809 = vunpack.c.h.b16 %v1618
  %v1810 = vunpack.c.l.b16 %v1619
  %v1811 = vunpack.c.h.b16 %v1619
  %v1812 = vunpack.c.l.b16 %v1620
  %v1813 = vunpack.c.h.b16 %v1620
  %v1814 = vunpack.c.l.b16 %v1621
  %v1815 = vunpack.c.h.b16 %v1621
  %v1816 = vunpack.c.l.b16 %v1622
  %v1817 = vunpack.c.h.b16 %v1622
  %v1818 = vunpack.c.l.b16 %v1623
  %v1819 = vunpack.c.h.b16 %v1623
  %v1820 = vunpack.c.l.b16 %v1624
  %v1821 = vunpack.c.h.b16 %v1624
  %v1822 = vunpack.c.l.b16 %v1625
  %v1823 = vunpack.c.h.b16 %v1625
  %v1824 = vunpack.c.l.b16 %v1626
  %v1825 = vunpack.c.h.b16 %v1626
  %v1826 = vunpack.c.l.b16 %v1627
  %v1827 = vunpack.c.h.b16 %v1627
  %v1828 = vunpack.c.l.b16 %v1628
  %v1829 = vunpack.c.h.b16 %v1628
  %v1830 = vunpack.c.l.b16 %v1629
  %v1831 = vunpack.c.h.b16 %v1629
  %v1832 = vpack.c.b16 %v1708, %v1704
  %v1833 = vpack.c.b16 %v1709, %v1705
  %v1834 = vpack.c.b16 %v1710, %v1706
  %v1835 = vpack.c.b16 %v1711, %v1707
  %v1836 = vpack.c.b16 %v1716, %v1712
  %v1837 = vpack.c.b16 %v1717, %v1713
  %v1838 = vpack.c.b16 %v1718, %v1714
  %v1839 = vpack.c.b16 %v1719, %v1715
  %v1840 = vpack.c.b16 %v1724, %v1720
  %v1841 = vpack.c.b16 %v1725, %v1721
  %v1842 = vpack.c.b16 %v1726, %v1722
  %v1843 = vpack.c.b16 %v1727, %v1723
  %v1844 = vpack.c.b16 %v1732, %v1728
  %v1845 = vpack.c.b16 %v1733, %v1729
  %v1846 = vpack.c.b16 %v1734, %v1730
  %v1847 = vpack.c.b16 %v1735, %v1731
  %v1848 = vpack.c.b16 %v1740, %v1736
  %v1849 = vpack.c.b16 %v1741, %v1737
  %v1850 = vpack.c.b16 %v1742, %v1738
  %v1851 = vpack.c.b16 %v1743, %v1739
  %v1852 = vpack.c.b16 %v1748, %v1744
  %v1853 = vpack.c.b16 %v1749, %v1745
  %v1854 = vpack.c.b16 %v1750, %v1746
  %v1855 = vpack.c.b16 %v1751, %v1747
  %v1856 = vpack.c.b16 %v1756, %v1752
  %v1857 = vpack.c.b16 %v1757, %v1753
  %v1858 = vpack.c.b16 %v1758, %v1754
  %v1859 = vpack.c.b16 %v1759, %v1755
  %v1860 = vpack.c.b16 %v1764, %v1760
  %v1861 = vpack.c.b16 %v1765, %v1761
  %v1862 = vpack.c.b16 %v1766, %v1762
  %v1863 = vpack.c.b16 %v1767, %v1763
  %v1864 = vpack.c.b16 %v1772, %v1768
  %v1865 = vpack.c.b16 %v1773, %v1769
  %v1866 = vpack.c.b16 %v1774, %v1770
  %v1867 = vpack.c.b16 %v1775, %v1771
  %v1868 = vpack.c.b16 %v1780, %v1776
  %v1869 = vpack.c.b16 %v1781, %v1777
  %v1870 = vpack.c.b16 %v1782, %v1778
  %v1871 = vpack.c.b16 %v1783, %v1779
  %v1872 = vpack.c.b16 %v1788, %v1784
  %v1873 = vpack.c.b16 %v1789, %v1785
  %v1874 = vpack.c.b16 %v1790, %v1786
  %v1875 = vpack.c.b16 %v1791, %v1787
  %v1876 = vpack.c.b16 %v1796, %v1792
  %v1877 = vpack.c.b16 %v1797, %v1793
  %v1878 = vpack.c.b16 %v1798, %v1794
  %v1879 = vpack.c.b16 %v1799, %v1795
  %v1880 = vpack.c.b16 %v1804, %v1800
  %v1881 = vpack.c.b16 %v1805, %v1801
  %v1882 = vpack.c.b16 %v1806, %v1802
  %v1883 = vpack.c.b16 %v1807, %v1803
  %v1884 = vpack.c.b16 %v1812, %v1808
  %v1885 = vpack.c.b16 %v1813, %v1809
  %v1886 = vpack.c.b16 %v1814, %v1810
  %v1887 = vpack.c.b16 %v1815, %v1811
  %v1888 = vpack.c.b16 %v1820, %v1816
  %v1889 = vpack.c.b16 %v1821, %v1817
  %v1890 = vpack.c.b16 %v1822, %v1818
  %v1891 = vpack.c.b16 %v1823, %v1819
  %v1892 = vpack.c.b16 %v1828, %v1824
  %v1893 = vpack.c.b16 %v1829, %v1825
  %v1894 = vpack.c.b16 %v1830, %v1826
  %v1895 = vpack.c.b16 %v1831, %v1827
  %1960 = vmatpush.bf16.msra.mxu0 %v1860
  %1961 = vmatpush.bf16.msra.mxu0 %v1856
  %1962 = vmatpush.bf16.msra.mxu0 %v1852
  %1963 = vmatpush.bf16.msra.mxu0 %v1848
  %1964 = vmatpush.bf16.msra.mxu0 %v1844
  %1965 = vmatpush.bf16.msra.mxu0 %v1840
  %1966 = vmatpush.bf16.msra.mxu0 %v1836
  %1967 = vmatpush.bf16.msra.mxu0 %v1832
  %1968 = vmatmul.bf16.gmra.mxu0 %v1636
  %v1969 = vpop.f32.mrf.mxu0
  %v1970 = vadd.f32 0.0, %v1969
  %v1971 = vpop.f32.mrf.mxu0
  %v1972 = vadd.f32 0.0, %v1971
  %1973 = vdwg.mxu0
  %1974 = vmatpush.bf16.msra.mxu0 %v1892
  %1975 = vmatpush.bf16.msra.mxu0 %v1888
  %1976 = vmatpush.bf16.msra.mxu0 %v1884
  %1977 = vmatpush.bf16.msra.mxu0 %v1880
  %1978 = vmatpush.bf16.msra.mxu0 %v1876
  %1979 = vmatpush.bf16.msra.mxu0 %v1872
  %1980 = vmatpush.bf16.msra.mxu0 %v1868
  %1981 = vmatpush.bf16.msra.mxu0 %v1864
  %1982 = vmatmul.bf16.gmra.mxu0 %v1637
  %v1983 = vpop.f32.mrf.mxu0
  %v1984 = vadd.f32 %v1970, %v1983
  %v1985 = vpop.f32.mrf.mxu0
  %v1986 = vadd.f32 %v1972, %v1985
  %1987 = vdwg.mxu0
  %1988 = vmatpush.bf16.msra.mxu0 %v1861
  %1989 = vmatpush.bf16.msra.mxu0 %v1857
  %1990 = vmatpush.bf16.msra.mxu0 %v1853
  %1991 = vmatpush.bf16.msra.mxu0 %v1849
  %1992 = vmatpush.bf16.msra.mxu0 %v1845
  %1993 = vmatpush.bf16.msra.mxu0 %v1841
  %1994 = vmatpush.bf16.msra.mxu0 %v1837
  %1995 = vmatpush.bf16.msra.mxu0 %v1833
  %1996 = vmatmul.bf16.gmra.mxu0 %v1636
  %v1997 = vpop.f32.mrf.mxu0
  %v1998 = vadd.f32 0.0, %v1997
  %v1999 = vpop.f32.mrf.mxu0
  %v2000 = vadd.f32 0.0, %v1999
  %2001 = vdwg.mxu0
  %2002 = vmatpush.bf16.msra.mxu0 %v1893
  %2003 = vmatpush.bf16.msra.mxu0 %v1889
  %2004 = vmatpush.bf16.msra.mxu0 %v1885
  %2005 = vmatpush.bf16.msra.mxu0 %v1881
  %2006 = vmatpush.bf16.msra.mxu0 %v1877
  %2007 = vmatpush.bf16.msra.mxu0 %v1873
  %2008 = vmatpush.bf16.msra.mxu0 %v1869
  %2009 = vmatpush.bf16.msra.mxu0 %v1865
  %2010 = vmatmul.bf16.gmra.mxu0 %v1637
  %v2011 = vpop.f32.mrf.mxu0
  %v2012 = vadd.f32 %v1998, %v2011
  %v2013 = vpop.f32.mrf.mxu0
  %v2014 = vadd.f32 %v2000, %v2013
  %2015 = vdwg.mxu0
  %2016 = vmatpush.bf16.msra.mxu0 %v1862
  %2017 = vmatpush.bf16.msra.mxu0 %v1858
  %2018 = vmatpush.bf16.msra.mxu0 %v1854
  %2019 = vmatpush.bf16.msra.mxu0 %v1850
  %2020 = vmatpush.bf16.msra.mxu0 %v1846
  %2021 = vmatpush.bf16.msra.mxu0 %v1842
  %2022 = vmatpush.bf16.msra.mxu0 %v1838
  %2023 = vmatpush.bf16.msra.mxu0 %v1834
  %2024 = vmatmul.bf16.gmra.mxu0 %v1636
  %v2025 = vpop.f32.mrf.mxu0
  %v2026 = vadd.f32 0.0, %v2025
  %v2027 = vpop.f32.mrf.mxu0
  %v2028 = vadd.f32 0.0, %v2027
  %2029 = vdwg.mxu0
  %2030 = vmatpush.bf16.msra.mxu0 %v1894
  %2031 = vmatpush.bf16.msra.mxu0 %v1890
  %2032 = vmatpush.bf16.msra.mxu0 %v1886
  %2033 = vmatpush.bf16.msra.mxu0 %v1882
  %2034 = vmatpush.bf16.msra.mxu0 %v1878
  %2035 = vmatpush.bf16.msra.mxu0 %v1874
  %2036 = vmatpush.bf16.msra.mxu0 %v1870
  %2037 = vmatpush.bf16.msra.mxu0 %v1866
  %2038 = vmatmul.bf16.gmra.mxu0 %v1637
  %v2039 = vpop.f32.mrf.mxu0
  %v2040 = vadd.f32 %v2026, %v2039
  %v2041 = vpop.f32.mrf.mxu0
  %v2042 = vadd.f32 %v2028, %v2041
  %2043 = vdwg.mxu0
  %2044 = vmatpush.bf16.msra.mxu0 %v1863
  %2045 = vmatpush.bf16.msra.mxu0 %v1859
  %2046 = vmatpush.bf16.msra.mxu0 %v1855
  %2047 = vmatpush.bf16.msra.mxu0 %v1851
  %2048 = vmatpush.bf16.msra.mxu0 %v1847
  %2049 = vmatpush.bf16.msra.mxu0 %v1843
  %2050 = vmatpush.bf16.msra.mxu0 %v1839
  %2051 = vmatpush.bf16.msra.mxu0 %v1835
  %2052 = vmatmul.bf16.gmra.mxu0 %v1636
  %v2053 = vpop.f32.mrf.mxu0
  %v2054 = vadd.f32 0.0, %v2053
  %v2055 = vpop.f32.mrf.mxu0
  %v2056 = vadd.f32 0.0, %v2055
  %2057 = vdwg.mxu0
  %2058 = vmatpush.bf16.msra.mxu0 %v1895
  %2059 = vmatpush.bf16.msra.mxu0 %v1891
  %2060 = vmatpush.bf16.msra.mxu0 %v1887
  %2061 = vmatpush.bf16.msra.mxu0 %v1883
  %2062 = vmatpush.bf16.msra.mxu0 %v1879
  %2063 = vmatpush.bf16.msra.mxu0 %v1875
  %2064 = vmatpush.bf16.msra.mxu0 %v1871
  %2065 = vmatpush.bf16.msra.mxu0 %v1867
  %2066 = vmatmul.bf16.gmra.mxu0 %v1637
  %v2067 = vpop.f32.mrf.mxu0
  %v2068 = vadd.f32 %v2054, %v2067
  %v2069 = vpop.f32.mrf.mxu0
  %v2070 = vadd.f32 %v2056, %v2069
  %2071 = vdwg.mxu0
  %v2072 = vadd.f32 %v1556, %v1984
  %v2073 = vadd.f32 %v1557, %v2012
  %v2074 = vadd.f32 %v1558, %v2040
  %v2075 = vadd.f32 %v1559, %v2068
  %v2076 = vadd.f32 %v1560, %v1986
  %v2077 = vadd.f32 %v1561, %v2014
  %v2078 = vadd.f32 %v1562, %v2042
  %v2079 = vadd.f32 %v1563, %v2070
  %v2080 = vld [vmem:[%s8] sm:$0xf]
  %v2082 = vperm.slane %v2080, 0
  %v2083 = vperm.slane %v2080, 1
  %v2084 = vperm.slane %v2080, 2
  %v2085 = vperm.slane %v2080, 3
  %v2090 = vadd.f32 %v2072, %v2082
  %v2091 = vadd.f32 %v2073, %v2083
  %v2092 = vadd.f32 %v2074, %v2084
  %v2093 = vadd.f32 %v2075, %v2085
  %v2094 = vadd.f32 %v2076, %v2082
  %v2095 = vadd.f32 %v2077, %v2083
  %v2096 = vadd.f32 %v2078, %v2084
  %v2097 = vadd.f32 %v2079, %v2085
  %vm2098 = vcmp.gt.f32.partialorder %v2090, 0.0
  %vm2099 = vcmp.gt.f32.partialorder %v2091, 0.0
  %vm2100 = vcmp.gt.f32.partialorder %v2092, 0.0
  %vm2101 = vcmp.gt.f32.partialorder %v2093, 0.0
  %vm2102 = vcmp.gt.f32.partialorder %v2094, 0.0
  %vm2103 = vcmp.gt.f32.partialorder %v2095, 0.0
  %vm2104 = vcmp.gt.f32.partialorder %v2096, 0.0
  %vm2105 = vcmp.gt.f32.partialorder %v2097, 0.0
  %v2106 = vmul.f32 %v2090, 0.1
  %v2107 = vmul.f32 %v2091, 0.1
  %v2108 = vmul.f32 %v2092, 0.1
  %v2109 = vmul.f32 %v2093, 0.1
  %v2110 = vmul.f32 %v2094, 0.1
  %v2111 = vmul.f32 %v2095, 0.1
  %v2112 = vmul.f32 %v2096, 0.1
  %v2113 = vmul.f32 %v2097, 0.1
  %v2114 = vsel %vm2098, %v2090, %v2106
  %v2115 = vsel %vm2099, %v2091, %v2107
  %v2116 = vsel %vm2100, %v2092, %v2108
  %v2117 = vsel %vm2101, %v2093, %v2109
  %v2118 = vsel %vm2102, %v2094, %v2110
  %v2119 = vsel %vm2103, %v2095, %v2111
  %v2120 = vsel %vm2104, %v2096, %v2112
  %v2121 = vsel %vm2105, %v2097, %v2113
  %v2122 = vpack.c.bf16 %v2115, %v2114
  %v2123 = vpack.c.bf16 %v2117, %v2116
  %v2124 = vpack.c.bf16 %v2119, %v2118
  %v2125 = vpack.c.bf16 %v2121, %v2120
  %2126 = vst [vmem:[%s9] sm:$0xff] %v2122
  %2127 = vst [vmem:[%s9 + $0x8] sm:$0xff] %v2123
  %2128 = vst [vmem:[%s9 + $0x10] sm:$0xff] %v2124
  %2129 = vst [vmem:[%s9 + $0x18] sm:$0xff] %v2125
  // Predicated region
  $region38: #{yolov1_forward.4} parent=0 // pred_check
    _
  $region39: #{yolov1_forward.4} parent=0 // pred_check_branch
    %2131 = sbr.rel (0) target = $region41
  $region40: #{yolov1_forward.4} parent=0 // pred_region
    _
  $region41: #{yolov1_forward.4} parent=0 // pred_fallthru
    _
  // Predicated region
  $region42: #{yolov1_forward.4} parent=0 // pred_check
    _
  $region43: #{yolov1_forward.4} parent=0 // pred_check_branch
    %2133 = sbr.rel (0) target = $region45
  $region44: #{yolov1_forward.4} parent=0 // pred_region
    _
  $region45: #{yolov1_forward.4} parent=0 // pred_fallthru
    _

// kernel: yolov1_forward.3
$region0: #{yolov1_forward.3}
  #allocation0 [shape = 'u32[]', space=smem, size = 0x4, offset = 0x4, fixed_abs, tag = 'smem constant byte address 0x4 - core index']
  #allocation1 [shape = 'u32[72,128]{1,0:T(1,128)}', space=vmem, size = 0x9000, scoped, tag = 'internal scratch']
  %s0 = inlined_call_operand.vmem [shape: bf16[16,3072], index: 0, kind: input, shape index: {}]
  %s1 = inlined_call_operand.vmem [shape: bf16[3072,512], index: 1, kind: input, shape index: {}]
  %s2 = inlined_call_operand.vmem [shape: f32[1,512], index: 2, kind: input, shape index: {}]
  %s3 = inlined_call_operand.vmem [shape: bf16[512,256], index: 3, kind: input, shape index: {}]
  %s4 = inlined_call_operand.vmem [shape: f32[1,256], index: 4, kind: input, shape index: {}]
  %s5 = inlined_call_operand.vmem [shape: bf16[16,256], index: 5, kind: output, shape index: {}]
  %s6 = sld [smem:[#allocation0]]
  $region30: #{yolov1_forward.3} parent=0
    _
  %s8 = ssub.s32 1, %s6
  %s9 = scalar_select 0, %s8, %s6
  // Predicated region
  $region2: #{yolov1_forward.3} parent=0 // pred_check
    _
  $region3: #{yolov1_forward.3} parent=0 // pred_check_branch
    %11 = sbr.rel (0) target = $region5
  $region4: #{yolov1_forward.3} parent=0 // pred_region
    _
  $region5: #{yolov1_forward.3} parent=0 // pred_fallthru
    _
  // Predicated region
  $region6: #{yolov1_forward.3} parent=0 // pred_check
    _
  $region7: #{yolov1_forward.3} parent=0 // pred_check_branch
    %13 = sbr.rel (0) target = $region9
  $region8: #{yolov1_forward.3} parent=0 // pred_region
    _
  $region9: #{yolov1_forward.3} parent=0 // pred_fallthru
    _
  // Predicated region
  $region10: #{yolov1_forward.3} parent=0 // pred_check
    _
  $region11: #{yolov1_forward.3} parent=0 // pred_check_branch
    %15 = sbr.rel (0) target = $region13
  $region12: #{yolov1_forward.3} parent=0 // pred_region
    _
  $region13: #{yolov1_forward.3} parent=0 // pred_fallthru
    _
  // Predicated region
  $region14: #{yolov1_forward.3} parent=0 // pred_check
    _
  $region15: #{yolov1_forward.3} parent=0 // pred_check_branch
    %17 = sbr.rel (0) target = $region17
  $region16: #{yolov1_forward.3} parent=0 // pred_region
    _
  $region17: #{yolov1_forward.3} parent=0 // pred_fallthru
    _
  // Predicated region
  $region18: #{yolov1_forward.3} parent=0 // pred_check
    _
  $region19: #{yolov1_forward.3} parent=0 // pred_check_branch
    %19 = sbr.rel (0) target = $region21
  $region20: #{yolov1_forward.3} parent=0 // pred_region
    _
  $region21: #{yolov1_forward.3} parent=0 // pred_fallthru
    _
  %v20 = vld [vmem:[%s0] sm:$0xff]
  %v21 = vld [vmem:[%s0 + $0x8] sm:$0xff]
  %v22 = vld [vmem:[%s0 + $0x10] sm:$0xff]
  %v23 = vld [vmem:[%s0 + $0x18] sm:$0xff]
  %v24 = vld [vmem:[%s0 + $0x20] sm:$0xff]
  %v25 = vld [vmem:[%s0 + $0x28] sm:$0xff]
  %v26 = vld [vmem:[%s0 + $0x30] sm:$0xff]
  %v27 = vld [vmem:[%s0 + $0x38] sm:$0xff]
  %v28 = vld [vmem:[%s0 + $0x40] sm:$0xff]
  %v29 = vld [vmem:[%s0 + $0x48] sm:$0xff]
  %v30 = vld [vmem:[%s0 + $0x50] sm:$0xff]
  %v31 = vld [vmem:[%s0 + $0x58] sm:$0xff]
  %v32 = vld [vmem:[%s0 + $0x60] sm:$0xff]
  %v33 = vld [vmem:[%s0 + $0x68] sm:$0xff]
  %v34 = vld [vmem:[%s0 + $0x70] sm:$0xff]
  %v35 = vld [vmem:[%s0 + $0x78] sm:$0xff]
  %v36 = vld [vmem:[%s0 + $0x80] sm:$0xff]
  %v37 = vld [vmem:[%s0 + $0x88] sm:$0xff]
  %v38 = vld [vmem:[%s0 + $0x90] sm:$0xff]
  %v39 = vld [vmem:[%s0 + $0x98] sm:$0xff]
  %v40 = vld [vmem:[%s0 + $0xa0] sm:$0xff]
  %v41 = vld [vmem:[%s0 + $0xa8] sm:$0xff]
  %v42 = vld [vmem:[%s0 + $0xb0] sm:$0xff]
  %v43 = vld [vmem:[%s0 + $0xb8] sm:$0xff]
  %v44 = vld [vmem:[%s1] sm:$0xff]
  %v45 = vld [vmem:[%s1 + $0x8] sm:$0xff]
  %v46 = vld [vmem:[%s1 + $0x10] sm:$0xff]
  %v47 = vld [vmem:[%s1 + $0x18] sm:$0xff]
  %v48 = vld [vmem:[%s1 + $0x20] sm:$0xff]
  %v49 = vld [vmem:[%s1 + $0x28] sm:$0xff]
  %v50 = vld [vmem:[%s1 + $0x30] sm:$0xff]
  %v51 = vld [vmem:[%s1 + $0x38] sm:$0xff]
  %v52 = vld [vmem:[%s1 + $0x40] sm:$0xff]
  %v53 = vld [vmem:[%s1 + $0x48] sm:$0xff]
  %v54 = vld [vmem:[%s1 + $0x50] sm:$0xff]
  %v55 = vld [vmem:[%s1 + $0x58] sm:$0xff]
  %v56 = vld [vmem:[%s1 + $0x60] sm:$0xff]
  %v57 = vld [vmem:[%s1 + $0x68] sm:$0xff]
  %v58 = vld [vmem:[%s1 + $0x70] sm:$0xff]
  %v59 = vld [vmem:[%s1 + $0x78] sm:$0xff]
  %v60 = vld [vmem:[%s1 + $0x80] sm:$0xff]
  %v61 = vld [vmem:[%s1 + $0x88] sm:$0xff]
  %v62 = vld [vmem:[%s1 + $0x90] sm:$0xff]
  %v63 = vld [vmem:[%s1 + $0x98] sm:$0xff]
  %v64 = vld [vmem:[%s1 + $0xa0] sm:$0xff]
  %v65 = vld [vmem:[%s1 + $0xa8] sm:$0xff]
  %v66 = vld [vmem:[%s1 + $0xb0] sm:$0xff]
  %v67 = vld [vmem:[%s1 + $0xb8] sm:$0xff]
  %v68 = vld [vmem:[%s1 + $0xc0] sm:$0xff]
  %v69 = vld [vmem:[%s1 + $0xc8] sm:$0xff]
  %v70 = vld [vmem:[%s1 + $0xd0] sm:$0xff]
  %v71 = vld [vmem:[%s1 + $0xd8] sm:$0xff]
  %v72 = vld [vmem:[%s1 + $0xe0] sm:$0xff]
  %v73 = vld [vmem:[%s1 + $0xe8] sm:$0xff]
  %v74 = vld [vmem:[%s1 + $0xf0] sm:$0xff]
  %v75 = vld [vmem:[%s1 + $0xf8] sm:$0xff]
  %v76 = vld [vmem:[%s1 + $0x100] sm:$0xff]
  %v77 = vld [vmem:[%s1 + $0x108] sm:$0xff]
  %v78 = vld [vmem:[%s1 + $0x110] sm:$0xff]
  %v79 = vld [vmem:[%s1 + $0x118] sm:$0xff]
  %v80 = vld [vmem:[%s1 + $0x120] sm:$0xff]
  %v81 = vld [vmem:[%s1 + $0x128] sm:$0xff]
  %v82 = vld [vmem:[%s1 + $0x130] sm:$0xff]
  %v83 = vld [vmem:[%s1 + $0x138] sm:$0xff]
  %v84 = vld [vmem:[%s1 + $0x140] sm:$0xff]
  %v85 = vld [vmem:[%s1 + $0x148] sm:$0xff]
  %v86 = vld [vmem:[%s1 + $0x150] sm:$0xff]
  %v87 = vld [vmem:[%s1 + $0x158] sm:$0xff]
  %v88 = vld [vmem:[%s1 + $0x160] sm:$0xff]
  %v89 = vld [vmem:[%s1 + $0x168] sm:$0xff]
  %v90 = vld [vmem:[%s1 + $0x170] sm:$0xff]
  %v91 = vld [vmem:[%s1 + $0x178] sm:$0xff]
  %v92 = vld [vmem:[%s1 + $0x180] sm:$0xff]
  %v93 = vld [vmem:[%s1 + $0x188] sm:$0xff]
  %v94 = vld [vmem:[%s1 + $0x190] sm:$0xff]
  %v95 = vld [vmem:[%s1 + $0x198] sm:$0xff]
  %v96 = vld [vmem:[%s1 + $0x1a0] sm:$0xff]
  %v97 = vld [vmem:[%s1 + $0x1a8] sm:$0xff]
  %v98 = vld [vmem:[%s1 + $0x1b0] sm:$0xff]
  %v99 = vld [vmem:[%s1 + $0x1b8] sm:$0xff]
  %v100 = vld [vmem:[%s1 + $0x1c0] sm:$0xff]
  %v101 = vld [vmem:[%s1 + $0x1c8] sm:$0xff]
  %v102 = vld [vmem:[%s1 + $0x1d0] sm:$0xff]
  %v103 = vld [vmem:[%s1 + $0x1d8] sm:$0xff]
  %v104 = vld [vmem:[%s1 + $0x1e0] sm:$0xff]
  %v105 = vld [vmem:[%s1 + $0x1e8] sm:$0xff]
  %v106 = vld [vmem:[%s1 + $0x1f0] sm:$0xff]
  %v107 = vld [vmem:[%s1 + $0x1f8] sm:$0xff]
  %v108 = vld [vmem:[%s1 + $0x200] sm:$0xff]
  %v109 = vld [vmem:[%s1 + $0x208] sm:$0xff]
  %v110 = vld [vmem:[%s1 + $0x210] sm:$0xff]
  %v111 = vld [vmem:[%s1 + $0x218] sm:$0xff]
  %v112 = vld [vmem:[%s1 + $0x220] sm:$0xff]
  %v113 = vld [vmem:[%s1 + $0x228] sm:$0xff]
  %v114 = vld [vmem:[%s1 + $0x230] sm:$0xff]
  %v115 = vld [vmem:[%s1 + $0x238] sm:$0xff]
  %v116 = vld [vmem:[%s1 + $0x240] sm:$0xff]
  %v117 = vld [vmem:[%s1 + $0x248] sm:$0xff]
  %v118 = vld [vmem:[%s1 + $0x250] sm:$0xff]
  %v119 = vld [vmem:[%s1 + $0x258] sm:$0xff]
  %v120 = vld [vmem:[%s1 + $0x260] sm:$0xff]
  %v121 = vld [vmem:[%s1 + $0x268] sm:$0xff]
  %v122 = vld [vmem:[%s1 + $0x270] sm:$0xff]
  %v123 = vld [vmem:[%s1 + $0x278] sm:$0xff]
  %v124 = vld [vmem:[%s1 + $0x280] sm:$0xff]
  %v125 = vld [vmem:[%s1 + $0x288] sm:$0xff]
  %v126 = vld [vmem:[%s1 + $0x290] sm:$0xff]
  %v127 = vld [vmem:[%s1 + $0x298] sm:$0xff]
  %v128 = vld [vmem:[%s1 + $0x2a0] sm:$0xff]
  %v129 = vld [vmem:[%s1 + $0x2a8] sm:$0xff]
  %v130 = vld [vmem:[%s1 + $0x2b0] sm:$0xff]
  %v131 = vld [vmem:[%s1 + $0x2b8] sm:$0xff]
  %v132 = vld [vmem:[%s1 + $0x2c0] sm:$0xff]
  %v133 = vld [vmem:[%s1 + $0x2c8] sm:$0xff]
  %v134 = vld [vmem:[%s1 + $0x2d0] sm:$0xff]
  %v135 = vld [vmem:[%s1 + $0x2d8] sm:$0xff]
  %v136 = vld [vmem:[%s1 + $0x2e0] sm:$0xff]
  %v137 = vld [vmem:[%s1 + $0x2e8] sm:$0xff]
  %v138 = vld [vmem:[%s1 + $0x2f0] sm:$0xff]
  %v139 = vld [vmem:[%s1 + $0x2f8] sm:$0xff]
  %v140 = vld [vmem:[%s1 + $0x300] sm:$0xff]
  %v141 = vld [vmem:[%s1 + $0x308] sm:$0xff]
  %v142 = vld [vmem:[%s1 + $0x310] sm:$0xff]
  %v143 = vld [vmem:[%s1 + $0x318] sm:$0xff]
  %v144 = vld [vmem:[%s1 + $0x320] sm:$0xff]
  %v145 = vld [vmem:[%s1 + $0x328] sm:$0xff]
  %v146 = vld [vmem:[%s1 + $0x330] sm:$0xff]
  %v147 = vld [vmem:[%s1 + $0x338] sm:$0xff]
  %v148 = vld [vmem:[%s1 + $0x340] sm:$0xff]
  %v149 = vld [vmem:[%s1 + $0x348] sm:$0xff]
  %v150 = vld [vmem:[%s1 + $0x350] sm:$0xff]
  %v151 = vld [vmem:[%s1 + $0x358] sm:$0xff]
  %v152 = vld [vmem:[%s1 + $0x360] sm:$0xff]
  %v153 = vld [vmem:[%s1 + $0x368] sm:$0xff]
  %v154 = vld [vmem:[%s1 + $0x370] sm:$0xff]
  %v155 = vld [vmem:[%s1 + $0x378] sm:$0xff]
  %v156 = vld [vmem:[%s1 + $0x380] sm:$0xff]
  %v157 = vld [vmem:[%s1 + $0x388] sm:$0xff]
  %v158 = vld [vmem:[%s1 + $0x390] sm:$0xff]
  %v159 = vld [vmem:[%s1 + $0x398] sm:$0xff]
  %v160 = vld [vmem:[%s1 + $0x3a0] sm:$0xff]
  %v161 = vld [vmem:[%s1 + $0x3a8] sm:$0xff]
  %v162 = vld [vmem:[%s1 + $0x3b0] sm:$0xff]
  %v163 = vld [vmem:[%s1 + $0x3b8] sm:$0xff]
  %v164 = vld [vmem:[%s1 + $0x3c0] sm:$0xff]
  %v165 = vld [vmem:[%s1 + $0x3c8] sm:$0xff]
  %v166 = vld [vmem:[%s1 + $0x3d0] sm:$0xff]
  %v167 = vld [vmem:[%s1 + $0x3d8] sm:$0xff]
  %v168 = vld [vmem:[%s1 + $0x3e0] sm:$0xff]
  %v169 = vld [vmem:[%s1 + $0x3e8] sm:$0xff]
  %v170 = vld [vmem:[%s1 + $0x3f0] sm:$0xff]
  %v171 = vld [vmem:[%s1 + $0x3f8] sm:$0xff]
  %v172 = vld [vmem:[%s1 + $0x400] sm:$0xff]
  %v173 = vld [vmem:[%s1 + $0x408] sm:$0xff]
  %v174 = vld [vmem:[%s1 + $0x410] sm:$0xff]
  %v175 = vld [vmem:[%s1 + $0x418] sm:$0xff]
  %v176 = vld [vmem:[%s1 + $0x420] sm:$0xff]
  %v177 = vld [vmem:[%s1 + $0x428] sm:$0xff]
  %v178 = vld [vmem:[%s1 + $0x430] sm:$0xff]
  %v179 = vld [vmem:[%s1 + $0x438] sm:$0xff]
  %v180 = vld [vmem:[%s1 + $0x440] sm:$0xff]
  %v181 = vld [vmem:[%s1 + $0x448] sm:$0xff]
  %v182 = vld [vmem:[%s1 + $0x450] sm:$0xff]
  %v183 = vld [vmem:[%s1 + $0x458] sm:$0xff]
  %v184 = vld [vmem:[%s1 + $0x460] sm:$0xff]
  %v185 = vld [vmem:[%s1 + $0x468] sm:$0xff]
  %v186 = vld [vmem:[%s1 + $0x470] sm:$0xff]
  %v187 = vld [vmem:[%s1 + $0x478] sm:$0xff]
  %v188 = vld [vmem:[%s1 + $0x480] sm:$0xff]
  %v189 = vld [vmem:[%s1 + $0x488] sm:$0xff]
  %v190 = vld [vmem:[%s1 + $0x490] sm:$0xff]
  %v191 = vld [vmem:[%s1 + $0x498] sm:$0xff]
  %v192 = vld [vmem:[%s1 + $0x4a0] sm:$0xff]
  %v193 = vld [vmem:[%s1 + $0x4a8] sm:$0xff]
  %v194 = vld [vmem:[%s1 + $0x4b0] sm:$0xff]
  %v195 = vld [vmem:[%s1 + $0x4b8] sm:$0xff]
  %v196 = vld [vmem:[%s1 + $0x4c0] sm:$0xff]
  %v197 = vld [vmem:[%s1 + $0x4c8] sm:$0xff]
  %v198 = vld [vmem:[%s1 + $0x4d0] sm:$0xff]
  %v199 = vld [vmem:[%s1 + $0x4d8] sm:$0xff]
  %v200 = vld [vmem:[%s1 + $0x4e0] sm:$0xff]
  %v201 = vld [vmem:[%s1 + $0x4e8] sm:$0xff]
  %v202 = vld [vmem:[%s1 + $0x4f0] sm:$0xff]
  %v203 = vld [vmem:[%s1 + $0x4f8] sm:$0xff]
  %v204 = vld [vmem:[%s1 + $0x500] sm:$0xff]
  %v205 = vld [vmem:[%s1 + $0x508] sm:$0xff]
  %v206 = vld [vmem:[%s1 + $0x510] sm:$0xff]
  %v207 = vld [vmem:[%s1 + $0x518] sm:$0xff]
  %v208 = vld [vmem:[%s1 + $0x520] sm:$0xff]
  %v209 = vld [vmem:[%s1 + $0x528] sm:$0xff]
  %v210 = vld [vmem:[%s1 + $0x530] sm:$0xff]
  %v211 = vld [vmem:[%s1 + $0x538] sm:$0xff]
  %v212 = vld [vmem:[%s1 + $0x540] sm:$0xff]
  %v213 = vld [vmem:[%s1 + $0x548] sm:$0xff]
  %v214 = vld [vmem:[%s1 + $0x550] sm:$0xff]
  %v215 = vld [vmem:[%s1 + $0x558] sm:$0xff]
  %v216 = vld [vmem:[%s1 + $0x560] sm:$0xff]
  %v217 = vld [vmem:[%s1 + $0x568] sm:$0xff]
  %v218 = vld [vmem:[%s1 + $0x570] sm:$0xff]
  %v219 = vld [vmem:[%s1 + $0x578] sm:$0xff]
  %v220 = vld [vmem:[%s1 + $0x580] sm:$0xff]
  %v221 = vld [vmem:[%s1 + $0x588] sm:$0xff]
  %v222 = vld [vmem:[%s1 + $0x590] sm:$0xff]
  %v223 = vld [vmem:[%s1 + $0x598] sm:$0xff]
  %v224 = vld [vmem:[%s1 + $0x5a0] sm:$0xff]
  %v225 = vld [vmem:[%s1 + $0x5a8] sm:$0xff]
  %v226 = vld [vmem:[%s1 + $0x5b0] sm:$0xff]
  %v227 = vld [vmem:[%s1 + $0x5b8] sm:$0xff]
  %v228 = vld [vmem:[%s1 + $0x5c0] sm:$0xff]
  %v229 = vld [vmem:[%s1 + $0x5c8] sm:$0xff]
  %v230 = vld [vmem:[%s1 + $0x5d0] sm:$0xff]
  %v231 = vld [vmem:[%s1 + $0x5d8] sm:$0xff]
  %v232 = vld [vmem:[%s1 + $0x5e0] sm:$0xff]
  %v233 = vld [vmem:[%s1 + $0x5e8] sm:$0xff]
  %v234 = vld [vmem:[%s1 + $0x5f0] sm:$0xff]
  %v235 = vld [vmem:[%s1 + $0x5f8] sm:$0xff]
  %v236 = vld [vmem:[%s1 + $0x600] sm:$0xff]
  %v237 = vld [vmem:[%s1 + $0x608] sm:$0xff]
  %v238 = vld [vmem:[%s1 + $0x610] sm:$0xff]
  %v239 = vld [vmem:[%s1 + $0x618] sm:$0xff]
  %v240 = vld [vmem:[%s1 + $0x620] sm:$0xff]
  %v241 = vld [vmem:[%s1 + $0x628] sm:$0xff]
  %v242 = vld [vmem:[%s1 + $0x630] sm:$0xff]
  %v243 = vld [vmem:[%s1 + $0x638] sm:$0xff]
  %v244 = vld [vmem:[%s1 + $0x640] sm:$0xff]
  %v245 = vld [vmem:[%s1 + $0x648] sm:$0xff]
  %v246 = vld [vmem:[%s1 + $0x650] sm:$0xff]
  %v247 = vld [vmem:[%s1 + $0x658] sm:$0xff]
  %v248 = vld [vmem:[%s1 + $0x660] sm:$0xff]
  %v249 = vld [vmem:[%s1 + $0x668] sm:$0xff]
  %v250 = vld [vmem:[%s1 + $0x670] sm:$0xff]
  %v251 = vld [vmem:[%s1 + $0x678] sm:$0xff]
  %v252 = vld [vmem:[%s1 + $0x680] sm:$0xff]
  %v253 = vld [vmem:[%s1 + $0x688] sm:$0xff]
  %v254 = vld [vmem:[%s1 + $0x690] sm:$0xff]
  %v255 = vld [vmem:[%s1 + $0x698] sm:$0xff]
  %v256 = vld [vmem:[%s1 + $0x6a0] sm:$0xff]
  %v257 = vld [vmem:[%s1 + $0x6a8] sm:$0xff]
  %v258 = vld [vmem:[%s1 + $0x6b0] sm:$0xff]
  %v259 = vld [vmem:[%s1 + $0x6b8] sm:$0xff]
  %v260 = vld [vmem:[%s1 + $0x6c0] sm:$0xff]
  %v261 = vld [vmem:[%s1 + $0x6c8] sm:$0xff]
  %v262 = vld [vmem:[%s1 + $0x6d0] sm:$0xff]
  %v263 = vld [vmem:[%s1 + $0x6d8] sm:$0xff]
  %v264 = vld [vmem:[%s1 + $0x6e0] sm:$0xff]
  %v265 = vld [vmem:[%s1 + $0x6e8] sm:$0xff]
  %v266 = vld [vmem:[%s1 + $0x6f0] sm:$0xff]
  %v267 = vld [vmem:[%s1 + $0x6f8] sm:$0xff]
  %v268 = vld [vmem:[%s1 + $0x700] sm:$0xff]
  %v269 = vld [vmem:[%s1 + $0x708] sm:$0xff]
  %v270 = vld [vmem:[%s1 + $0x710] sm:$0xff]
  %v271 = vld [vmem:[%s1 + $0x718] sm:$0xff]
  %v272 = vld [vmem:[%s1 + $0x720] sm:$0xff]
  %v273 = vld [vmem:[%s1 + $0x728] sm:$0xff]
  %v274 = vld [vmem:[%s1 + $0x730] sm:$0xff]
  %v275 = vld [vmem:[%s1 + $0x738] sm:$0xff]
  %v276 = vld [vmem:[%s1 + $0x740] sm:$0xff]
  %v277 = vld [vmem:[%s1 + $0x748] sm:$0xff]
  %v278 = vld [vmem:[%s1 + $0x750] sm:$0xff]
  %v279 = vld [vmem:[%s1 + $0x758] sm:$0xff]
  %v280 = vld [vmem:[%s1 + $0x760] sm:$0xff]
  %v281 = vld [vmem:[%s1 + $0x768] sm:$0xff]
  %v282 = vld [vmem:[%s1 + $0x770] sm:$0xff]
  %v283 = vld [vmem:[%s1 + $0x778] sm:$0xff]
  %v284 = vld [vmem:[%s1 + $0x780] sm:$0xff]
  %v285 = vld [vmem:[%s1 + $0x788] sm:$0xff]
  %v286 = vld [vmem:[%s1 + $0x790] sm:$0xff]
  %v287 = vld [vmem:[%s1 + $0x798] sm:$0xff]
  %v288 = vld [vmem:[%s1 + $0x7a0] sm:$0xff]
  %v289 = vld [vmem:[%s1 + $0x7a8] sm:$0xff]
  %v290 = vld [vmem:[%s1 + $0x7b0] sm:$0xff]
  %v291 = vld [vmem:[%s1 + $0x7b8] sm:$0xff]
  %v292 = vld [vmem:[%s1 + $0x7c0] sm:$0xff]
  %v293 = vld [vmem:[%s1 + $0x7c8] sm:$0xff]
  %v294 = vld [vmem:[%s1 + $0x7d0] sm:$0xff]
  %v295 = vld [vmem:[%s1 + $0x7d8] sm:$0xff]
  %v296 = vld [vmem:[%s1 + $0x7e0] sm:$0xff]
  %v297 = vld [vmem:[%s1 + $0x7e8] sm:$0xff]
  %v298 = vld [vmem:[%s1 + $0x7f0] sm:$0xff]
  %v299 = vld [vmem:[%s1 + $0x7f8] sm:$0xff]
  %v300 = vld [vmem:[%s1 + $0x800] sm:$0xff]
  %v301 = vld [vmem:[%s1 + $0x808] sm:$0xff]
  %v302 = vld [vmem:[%s1 + $0x810] sm:$0xff]
  %v303 = vld [vmem:[%s1 + $0x818] sm:$0xff]
  %v304 = vld [vmem:[%s1 + $0x820] sm:$0xff]
  %v305 = vld [vmem:[%s1 + $0x828] sm:$0xff]
  %v306 = vld [vmem:[%s1 + $0x830] sm:$0xff]
  %v307 = vld [vmem:[%s1 + $0x838] sm:$0xff]
  %v308 = vld [vmem:[%s1 + $0x840] sm:$0xff]
  %v309 = vld [vmem:[%s1 + $0x848] sm:$0xff]
  %v310 = vld [vmem:[%s1 + $0x850] sm:$0xff]
  %v311 = vld [vmem:[%s1 + $0x858] sm:$0xff]
  %v312 = vld [vmem:[%s1 + $0x860] sm:$0xff]
  %v313 = vld [vmem:[%s1 + $0x868] sm:$0xff]
  %v314 = vld [vmem:[%s1 + $0x870] sm:$0xff]
  %v315 = vld [vmem:[%s1 + $0x878] sm:$0xff]
  %v316 = vld [vmem:[%s1 + $0x880] sm:$0xff]
  %v317 = vld [vmem:[%s1 + $0x888] sm:$0xff]
  %v318 = vld [vmem:[%s1 + $0x890] sm:$0xff]
  %v319 = vld [vmem:[%s1 + $0x898] sm:$0xff]
  %v320 = vld [vmem:[%s1 + $0x8a0] sm:$0xff]
  %v321 = vld [vmem:[%s1 + $0x8a8] sm:$0xff]
  %v322 = vld [vmem:[%s1 + $0x8b0] sm:$0xff]
  %v323 = vld [vmem:[%s1 + $0x8b8] sm:$0xff]
  %v324 = vld [vmem:[%s1 + $0x8c0] sm:$0xff]
  %v325 = vld [vmem:[%s1 + $0x8c8] sm:$0xff]
  %v326 = vld [vmem:[%s1 + $0x8d0] sm:$0xff]
  %v327 = vld [vmem:[%s1 + $0x8d8] sm:$0xff]
  %v328 = vld [vmem:[%s1 + $0x8e0] sm:$0xff]
  %v329 = vld [vmem:[%s1 + $0x8e8] sm:$0xff]
  %v330 = vld [vmem:[%s1 + $0x8f0] sm:$0xff]
  %v331 = vld [vmem:[%s1 + $0x8f8] sm:$0xff]
  %v332 = vld [vmem:[%s1 + $0x900] sm:$0xff]
  %v333 = vld [vmem:[%s1 + $0x908] sm:$0xff]
  %v334 = vld [vmem:[%s1 + $0x910] sm:$0xff]
  %v335 = vld [vmem:[%s1 + $0x918] sm:$0xff]
  %v336 = vld [vmem:[%s1 + $0x920] sm:$0xff]
  %v337 = vld [vmem:[%s1 + $0x928] sm:$0xff]
  %v338 = vld [vmem:[%s1 + $0x930] sm:$0xff]
  %v339 = vld [vmem:[%s1 + $0x938] sm:$0xff]
  %v340 = vld [vmem:[%s1 + $0x940] sm:$0xff]
  %v341 = vld [vmem:[%s1 + $0x948] sm:$0xff]
  %v342 = vld [vmem:[%s1 + $0x950] sm:$0xff]
  %v343 = vld [vmem:[%s1 + $0x958] sm:$0xff]
  %v344 = vld [vmem:[%s1 + $0x960] sm:$0xff]
  %v345 = vld [vmem:[%s1 + $0x968] sm:$0xff]
  %v346 = vld [vmem:[%s1 + $0x970] sm:$0xff]
  %v347 = vld [vmem:[%s1 + $0x978] sm:$0xff]
  %v348 = vld [vmem:[%s1 + $0x980] sm:$0xff]
  %v349 = vld [vmem:[%s1 + $0x988] sm:$0xff]
  %v350 = vld [vmem:[%s1 + $0x990] sm:$0xff]
  %v351 = vld [vmem:[%s1 + $0x998] sm:$0xff]
  %v352 = vld [vmem:[%s1 + $0x9a0] sm:$0xff]
  %v353 = vld [vmem:[%s1 + $0x9a8] sm:$0xff]
  %v354 = vld [vmem:[%s1 + $0x9b0] sm:$0xff]
  %v355 = vld [vmem:[%s1 + $0x9b8] sm:$0xff]
  %v356 = vld [vmem:[%s1 + $0x9c0] sm:$0xff]
  %v357 = vld [vmem:[%s1 + $0x9c8] sm:$0xff]
  %v358 = vld [vmem:[%s1 + $0x9d0] sm:$0xff]
  %v359 = vld [vmem:[%s1 + $0x9d8] sm:$0xff]
  %v360 = vld [vmem:[%s1 + $0x9e0] sm:$0xff]
  %v361 = vld [vmem:[%s1 + $0x9e8] sm:$0xff]
  %v362 = vld [vmem:[%s1 + $0x9f0] sm:$0xff]
  %v363 = vld [vmem:[%s1 + $0x9f8] sm:$0xff]
  %v364 = vld [vmem:[%s1 + $0xa00] sm:$0xff]
  %v365 = vld [vmem:[%s1 + $0xa08] sm:$0xff]
  %v366 = vld [vmem:[%s1 + $0xa10] sm:$0xff]
  %v367 = vld [vmem:[%s1 + $0xa18] sm:$0xff]
  %v368 = vld [vmem:[%s1 + $0xa20] sm:$0xff]
  %v369 = vld [vmem:[%s1 + $0xa28] sm:$0xff]
  %v370 = vld [vmem:[%s1 + $0xa30] sm:$0xff]
  %v371 = vld [vmem:[%s1 + $0xa38] sm:$0xff]
  %v372 = vld [vmem:[%s1 + $0xa40] sm:$0xff]
  %v373 = vld [vmem:[%s1 + $0xa48] sm:$0xff]
  %v374 = vld [vmem:[%s1 + $0xa50] sm:$0xff]
  %v375 = vld [vmem:[%s1 + $0xa58] sm:$0xff]
  %v376 = vld [vmem:[%s1 + $0xa60] sm:$0xff]
  %v377 = vld [vmem:[%s1 + $0xa68] sm:$0xff]
  %v378 = vld [vmem:[%s1 + $0xa70] sm:$0xff]
  %v379 = vld [vmem:[%s1 + $0xa78] sm:$0xff]
  %v380 = vld [vmem:[%s1 + $0xa80] sm:$0xff]
  %v381 = vld [vmem:[%s1 + $0xa88] sm:$0xff]
  %v382 = vld [vmem:[%s1 + $0xa90] sm:$0xff]
  %v383 = vld [vmem:[%s1 + $0xa98] sm:$0xff]
  %v384 = vld [vmem:[%s1 + $0xaa0] sm:$0xff]
  %v385 = vld [vmem:[%s1 + $0xaa8] sm:$0xff]
  %v386 = vld [vmem:[%s1 + $0xab0] sm:$0xff]
  %v387 = vld [vmem:[%s1 + $0xab8] sm:$0xff]
  %v388 = vld [vmem:[%s1 + $0xac0] sm:$0xff]
  %v389 = vld [vmem:[%s1 + $0xac8] sm:$0xff]
  %v390 = vld [vmem:[%s1 + $0xad0] sm:$0xff]
  %v391 = vld [vmem:[%s1 + $0xad8] sm:$0xff]
  %v392 = vld [vmem:[%s1 + $0xae0] sm:$0xff]
  %v393 = vld [vmem:[%s1 + $0xae8] sm:$0xff]
  %v394 = vld [vmem:[%s1 + $0xaf0] sm:$0xff]
  %v395 = vld [vmem:[%s1 + $0xaf8] sm:$0xff]
  %v396 = vld [vmem:[%s1 + $0xb00] sm:$0xff]
  %v397 = vld [vmem:[%s1 + $0xb08] sm:$0xff]
  %v398 = vld [vmem:[%s1 + $0xb10] sm:$0xff]
  %v399 = vld [vmem:[%s1 + $0xb18] sm:$0xff]
  %v400 = vld [vmem:[%s1 + $0xb20] sm:$0xff]
  %v401 = vld [vmem:[%s1 + $0xb28] sm:$0xff]
  %v402 = vld [vmem:[%s1 + $0xb30] sm:$0xff]
  %v403 = vld [vmem:[%s1 + $0xb38] sm:$0xff]
  %v404 = vld [vmem:[%s1 + $0xb40] sm:$0xff]
  %v405 = vld [vmem:[%s1 + $0xb48] sm:$0xff]
  %v406 = vld [vmem:[%s1 + $0xb50] sm:$0xff]
  %v407 = vld [vmem:[%s1 + $0xb58] sm:$0xff]
  %v408 = vld [vmem:[%s1 + $0xb60] sm:$0xff]
  %v409 = vld [vmem:[%s1 + $0xb68] sm:$0xff]
  %v410 = vld [vmem:[%s1 + $0xb70] sm:$0xff]
  %v411 = vld [vmem:[%s1 + $0xb78] sm:$0xff]
  %v412 = vld [vmem:[%s1 + $0xb80] sm:$0xff]
  %v413 = vld [vmem:[%s1 + $0xb88] sm:$0xff]
  %v414 = vld [vmem:[%s1 + $0xb90] sm:$0xff]
  %v415 = vld [vmem:[%s1 + $0xb98] sm:$0xff]
  %v416 = vld [vmem:[%s1 + $0xba0] sm:$0xff]
  %v417 = vld [vmem:[%s1 + $0xba8] sm:$0xff]
  %v418 = vld [vmem:[%s1 + $0xbb0] sm:$0xff]
  %v419 = vld [vmem:[%s1 + $0xbb8] sm:$0xff]
  %v420 = vld [vmem:[%s1 + $0xbc0] sm:$0xff]
  %v421 = vld [vmem:[%s1 + $0xbc8] sm:$0xff]
  %v422 = vld [vmem:[%s1 + $0xbd0] sm:$0xff]
  %v423 = vld [vmem:[%s1 + $0xbd8] sm:$0xff]
  %v424 = vld [vmem:[%s1 + $0xbe0] sm:$0xff]
  %v425 = vld [vmem:[%s1 + $0xbe8] sm:$0xff]
  %v426 = vld [vmem:[%s1 + $0xbf0] sm:$0xff]
  %v427 = vld [vmem:[%s1 + $0xbf8] sm:$0xff]
  %v428 = vld [vmem:[%s1 + $0xc00] sm:$0xff]
  %v429 = vld [vmem:[%s1 + $0xc08] sm:$0xff]
  %v430 = vld [vmem:[%s1 + $0xc10] sm:$0xff]
  %v431 = vld [vmem:[%s1 + $0xc18] sm:$0xff]
  %v432 = vld [vmem:[%s1 + $0xc20] sm:$0xff]
  %v433 = vld [vmem:[%s1 + $0xc28] sm:$0xff]
  %v434 = vld [vmem:[%s1 + $0xc30] sm:$0xff]
  %v435 = vld [vmem:[%s1 + $0xc38] sm:$0xff]
  %v436 = vld [vmem:[%s1 + $0xc40] sm:$0xff]
  %v437 = vld [vmem:[%s1 + $0xc48] sm:$0xff]
  %v438 = vld [vmem:[%s1 + $0xc50] sm:$0xff]
  %v439 = vld [vmem:[%s1 + $0xc58] sm:$0xff]
  %v440 = vld [vmem:[%s1 + $0xc60] sm:$0xff]
  %v441 = vld [vmem:[%s1 + $0xc68] sm:$0xff]
  %v442 = vld [vmem:[%s1 + $0xc70] sm:$0xff]
  %v443 = vld [vmem:[%s1 + $0xc78] sm:$0xff]
  %v444 = vld [vmem:[%s1 + $0xc80] sm:$0xff]
  %v445 = vld [vmem:[%s1 + $0xc88] sm:$0xff]
  %v446 = vld [vmem:[%s1 + $0xc90] sm:$0xff]
  %v447 = vld [vmem:[%s1 + $0xc98] sm:$0xff]
  %v448 = vld [vmem:[%s1 + $0xca0] sm:$0xff]
  %v449 = vld [vmem:[%s1 + $0xca8] sm:$0xff]
  %v450 = vld [vmem:[%s1 + $0xcb0] sm:$0xff]
  %v451 = vld [vmem:[%s1 + $0xcb8] sm:$0xff]
  %v452 = vld [vmem:[%s1 + $0xcc0] sm:$0xff]
  %v453 = vld [vmem:[%s1 + $0xcc8] sm:$0xff]
  %v454 = vld [vmem:[%s1 + $0xcd0] sm:$0xff]
  %v455 = vld [vmem:[%s1 + $0xcd8] sm:$0xff]
  %v456 = vld [vmem:[%s1 + $0xce0] sm:$0xff]
  %v457 = vld [vmem:[%s1 + $0xce8] sm:$0xff]
  %v458 = vld [vmem:[%s1 + $0xcf0] sm:$0xff]
  %v459 = vld [vmem:[%s1 + $0xcf8] sm:$0xff]
  %v460 = vld [vmem:[%s1 + $0xd00] sm:$0xff]
  %v461 = vld [vmem:[%s1 + $0xd08] sm:$0xff]
  %v462 = vld [vmem:[%s1 + $0xd10] sm:$0xff]
  %v463 = vld [vmem:[%s1 + $0xd18] sm:$0xff]
  %v464 = vld [vmem:[%s1 + $0xd20] sm:$0xff]
  %v465 = vld [vmem:[%s1 + $0xd28] sm:$0xff]
  %v466 = vld [vmem:[%s1 + $0xd30] sm:$0xff]
  %v467 = vld [vmem:[%s1 + $0xd38] sm:$0xff]
  %v468 = vld [vmem:[%s1 + $0xd40] sm:$0xff]
  %v469 = vld [vmem:[%s1 + $0xd48] sm:$0xff]
  %v470 = vld [vmem:[%s1 + $0xd50] sm:$0xff]
  %v471 = vld [vmem:[%s1 + $0xd58] sm:$0xff]
  %v472 = vld [vmem:[%s1 + $0xd60] sm:$0xff]
  %v473 = vld [vmem:[%s1 + $0xd68] sm:$0xff]
  %v474 = vld [vmem:[%s1 + $0xd70] sm:$0xff]
  %v475 = vld [vmem:[%s1 + $0xd78] sm:$0xff]
  %v476 = vld [vmem:[%s1 + $0xd80] sm:$0xff]
  %v477 = vld [vmem:[%s1 + $0xd88] sm:$0xff]
  %v478 = vld [vmem:[%s1 + $0xd90] sm:$0xff]
  %v479 = vld [vmem:[%s1 + $0xd98] sm:$0xff]
  %v480 = vld [vmem:[%s1 + $0xda0] sm:$0xff]
  %v481 = vld [vmem:[%s1 + $0xda8] sm:$0xff]
  %v482 = vld [vmem:[%s1 + $0xdb0] sm:$0xff]
  %v483 = vld [vmem:[%s1 + $0xdb8] sm:$0xff]
  %v484 = vld [vmem:[%s1 + $0xdc0] sm:$0xff]
  %v485 = vld [vmem:[%s1 + $0xdc8] sm:$0xff]
  %v486 = vld [vmem:[%s1 + $0xdd0] sm:$0xff]
  %v487 = vld [vmem:[%s1 + $0xdd8] sm:$0xff]
  %v488 = vld [vmem:[%s1 + $0xde0] sm:$0xff]
  %v489 = vld [vmem:[%s1 + $0xde8] sm:$0xff]
  %v490 = vld [vmem:[%s1 + $0xdf0] sm:$0xff]
  %v491 = vld [vmem:[%s1 + $0xdf8] sm:$0xff]
  %v492 = vld [vmem:[%s1 + $0xe00] sm:$0xff]
  %v493 = vld [vmem:[%s1 + $0xe08] sm:$0xff]
  %v494 = vld [vmem:[%s1 + $0xe10] sm:$0xff]
  %v495 = vld [vmem:[%s1 + $0xe18] sm:$0xff]
  %v496 = vld [vmem:[%s1 + $0xe20] sm:$0xff]
  %v497 = vld [vmem:[%s1 + $0xe28] sm:$0xff]
  %v498 = vld [vmem:[%s1 + $0xe30] sm:$0xff]
  %v499 = vld [vmem:[%s1 + $0xe38] sm:$0xff]
  %v500 = vld [vmem:[%s1 + $0xe40] sm:$0xff]
  %v501 = vld [vmem:[%s1 + $0xe48] sm:$0xff]
  %v502 = vld [vmem:[%s1 + $0xe50] sm:$0xff]
  %v503 = vld [vmem:[%s1 + $0xe58] sm:$0xff]
  %v504 = vld [vmem:[%s1 + $0xe60] sm:$0xff]
  %v505 = vld [vmem:[%s1 + $0xe68] sm:$0xff]
  %v506 = vld [vmem:[%s1 + $0xe70] sm:$0xff]
  %v507 = vld [vmem:[%s1 + $0xe78] sm:$0xff]
  %v508 = vld [vmem:[%s1 + $0xe80] sm:$0xff]
  %v509 = vld [vmem:[%s1 + $0xe88] sm:$0xff]
  %v510 = vld [vmem:[%s1 + $0xe90] sm:$0xff]
  %v511 = vld [vmem:[%s1 + $0xe98] sm:$0xff]
  %v512 = vld [vmem:[%s1 + $0xea0] sm:$0xff]
  %v513 = vld [vmem:[%s1 + $0xea8] sm:$0xff]
  %v514 = vld [vmem:[%s1 + $0xeb0] sm:$0xff]
  %v515 = vld [vmem:[%s1 + $0xeb8] sm:$0xff]
  %v516 = vld [vmem:[%s1 + $0xec0] sm:$0xff]
  %v517 = vld [vmem:[%s1 + $0xec8] sm:$0xff]
  %v518 = vld [vmem:[%s1 + $0xed0] sm:$0xff]
  %v519 = vld [vmem:[%s1 + $0xed8] sm:$0xff]
  %v520 = vld [vmem:[%s1 + $0xee0] sm:$0xff]
  %v521 = vld [vmem:[%s1 + $0xee8] sm:$0xff]
  %v522 = vld [vmem:[%s1 + $0xef0] sm:$0xff]
  %v523 = vld [vmem:[%s1 + $0xef8] sm:$0xff]
  %v524 = vld [vmem:[%s1 + $0xf00] sm:$0xff]
  %v525 = vld [vmem:[%s1 + $0xf08] sm:$0xff]
  %v526 = vld [vmem:[%s1 + $0xf10] sm:$0xff]
  %v527 = vld [vmem:[%s1 + $0xf18] sm:$0xff]
  %v528 = vld [vmem:[%s1 + $0xf20] sm:$0xff]
  %v529 = vld [vmem:[%s1 + $0xf28] sm:$0xff]
  %v530 = vld [vmem:[%s1 + $0xf30] sm:$0xff]
  %v531 = vld [vmem:[%s1 + $0xf38] sm:$0xff]
  %v532 = vld [vmem:[%s1 + $0xf40] sm:$0xff]
  %v533 = vld [vmem:[%s1 + $0xf48] sm:$0xff]
  %v534 = vld [vmem:[%s1 + $0xf50] sm:$0xff]
  %v535 = vld [vmem:[%s1 + $0xf58] sm:$0xff]
  %v536 = vld [vmem:[%s1 + $0xf60] sm:$0xff]
  %v537 = vld [vmem:[%s1 + $0xf68] sm:$0xff]
  %v538 = vld [vmem:[%s1 + $0xf70] sm:$0xff]
  %v539 = vld [vmem:[%s1 + $0xf78] sm:$0xff]
  %v540 = vld [vmem:[%s1 + $0xf80] sm:$0xff]
  %v541 = vld [vmem:[%s1 + $0xf88] sm:$0xff]
  %v542 = vld [vmem:[%s1 + $0xf90] sm:$0xff]
  %v543 = vld [vmem:[%s1 + $0xf98] sm:$0xff]
  %v544 = vld [vmem:[%s1 + $0xfa0] sm:$0xff]
  %v545 = vld [vmem:[%s1 + $0xfa8] sm:$0xff]
  %v546 = vld [vmem:[%s1 + $0xfb0] sm:$0xff]
  %v547 = vld [vmem:[%s1 + $0xfb8] sm:$0xff]
  %v548 = vld [vmem:[%s1 + $0xfc0] sm:$0xff]
  %v549 = vld [vmem:[%s1 + $0xfc8] sm:$0xff]
  %v550 = vld [vmem:[%s1 + $0xfd0] sm:$0xff]
  %v551 = vld [vmem:[%s1 + $0xfd8] sm:$0xff]
  %v552 = vld [vmem:[%s1 + $0xfe0] sm:$0xff]
  %v553 = vld [vmem:[%s1 + $0xfe8] sm:$0xff]
  %v554 = vld [vmem:[%s1 + $0xff0] sm:$0xff]
  %v555 = vld [vmem:[%s1 + $0xff8] sm:$0xff]
  %v556 = vld [vmem:[%s1 + $0x1000] sm:$0xff]
  %v557 = vld [vmem:[%s1 + $0x1008] sm:$0xff]
  %v558 = vld [vmem:[%s1 + $0x1010] sm:$0xff]
  %v559 = vld [vmem:[%s1 + $0x1018] sm:$0xff]
  %v560 = vld [vmem:[%s1 + $0x1020] sm:$0xff]
  %v561 = vld [vmem:[%s1 + $0x1028] sm:$0xff]
  %v562 = vld [vmem:[%s1 + $0x1030] sm:$0xff]
  %v563 = vld [vmem:[%s1 + $0x1038] sm:$0xff]
  %v564 = vld [vmem:[%s1 + $0x1040] sm:$0xff]
  %v565 = vld [vmem:[%s1 + $0x1048] sm:$0xff]
  %v566 = vld [vmem:[%s1 + $0x1050] sm:$0xff]
  %v567 = vld [vmem:[%s1 + $0x1058] sm:$0xff]
  %v568 = vld [vmem:[%s1 + $0x1060] sm:$0xff]
  %v569 = vld [vmem:[%s1 + $0x1068] sm:$0xff]
  %v570 = vld [vmem:[%s1 + $0x1070] sm:$0xff]
  %v571 = vld [vmem:[%s1 + $0x1078] sm:$0xff]
  %v572 = vld [vmem:[%s1 + $0x1080] sm:$0xff]
  %v573 = vld [vmem:[%s1 + $0x1088] sm:$0xff]
  %v574 = vld [vmem:[%s1 + $0x1090] sm:$0xff]
  %v575 = vld [vmem:[%s1 + $0x1098] sm:$0xff]
  %v576 = vld [vmem:[%s1 + $0x10a0] sm:$0xff]
  %v577 = vld [vmem:[%s1 + $0x10a8] sm:$0xff]
  %v578 = vld [vmem:[%s1 + $0x10b0] sm:$0xff]
  %v579 = vld [vmem:[%s1 + $0x10b8] sm:$0xff]
  %v580 = vld [vmem:[%s1 + $0x10c0] sm:$0xff]
  %v581 = vld [vmem:[%s1 + $0x10c8] sm:$0xff]
  %v582 = vld [vmem:[%s1 + $0x10d0] sm:$0xff]
  %v583 = vld [vmem:[%s1 + $0x10d8] sm:$0xff]
  %v584 = vld [vmem:[%s1 + $0x10e0] sm:$0xff]
  %v585 = vld [vmem:[%s1 + $0x10e8] sm:$0xff]
  %v586 = vld [vmem:[%s1 + $0x10f0] sm:$0xff]
  %v587 = vld [vmem:[%s1 + $0x10f8] sm:$0xff]
  %v588 = vld [vmem:[%s1 + $0x1100] sm:$0xff]
  %v589 = vld [vmem:[%s1 + $0x1108] sm:$0xff]
  %v590 = vld [vmem:[%s1 + $0x1110] sm:$0xff]
  %v591 = vld [vmem:[%s1 + $0x1118] sm:$0xff]
  %v592 = vld [vmem:[%s1 + $0x1120] sm:$0xff]
  %v593 = vld [vmem:[%s1 + $0x1128] sm:$0xff]
  %v594 = vld [vmem:[%s1 + $0x1130] sm:$0xff]
  %v595 = vld [vmem:[%s1 + $0x1138] sm:$0xff]
  %v596 = vld [vmem:[%s1 + $0x1140] sm:$0xff]
  %v597 = vld [vmem:[%s1 + $0x1148] sm:$0xff]
  %v598 = vld [vmem:[%s1 + $0x1150] sm:$0xff]
  %v599 = vld [vmem:[%s1 + $0x1158] sm:$0xff]
  %v600 = vld [vmem:[%s1 + $0x1160] sm:$0xff]
  %v601 = vld [vmem:[%s1 + $0x1168] sm:$0xff]
  %v602 = vld [vmem:[%s1 + $0x1170] sm:$0xff]
  %v603 = vld [vmem:[%s1 + $0x1178] sm:$0xff]
  %v604 = vld [vmem:[%s1 + $0x1180] sm:$0xff]
  %v605 = vld [vmem:[%s1 + $0x1188] sm:$0xff]
  %v606 = vld [vmem:[%s1 + $0x1190] sm:$0xff]
  %v607 = vld [vmem:[%s1 + $0x1198] sm:$0xff]
  %v608 = vld [vmem:[%s1 + $0x11a0] sm:$0xff]
  %v609 = vld [vmem:[%s1 + $0x11a8] sm:$0xff]
  %v610 = vld [vmem:[%s1 + $0x11b0] sm:$0xff]
  %v611 = vld [vmem:[%s1 + $0x11b8] sm:$0xff]
  %v612 = vld [vmem:[%s1 + $0x11c0] sm:$0xff]
  %v613 = vld [vmem:[%s1 + $0x11c8] sm:$0xff]
  %v614 = vld [vmem:[%s1 + $0x11d0] sm:$0xff]
  %v615 = vld [vmem:[%s1 + $0x11d8] sm:$0xff]
  %v616 = vld [vmem:[%s1 + $0x11e0] sm:$0xff]
  %v617 = vld [vmem:[%s1 + $0x11e8] sm:$0xff]
  %v618 = vld [vmem:[%s1 + $0x11f0] sm:$0xff]
  %v619 = vld [vmem:[%s1 + $0x11f8] sm:$0xff]
  %v620 = vld [vmem:[%s1 + $0x1200] sm:$0xff]
  %v621 = vld [vmem:[%s1 + $0x1208] sm:$0xff]
  %v622 = vld [vmem:[%s1 + $0x1210] sm:$0xff]
  %v623 = vld [vmem:[%s1 + $0x1218] sm:$0xff]
  %v624 = vld [vmem:[%s1 + $0x1220] sm:$0xff]
  %v625 = vld [vmem:[%s1 + $0x1228] sm:$0xff]
  %v626 = vld [vmem:[%s1 + $0x1230] sm:$0xff]
  %v627 = vld [vmem:[%s1 + $0x1238] sm:$0xff]
  %v628 = vld [vmem:[%s1 + $0x1240] sm:$0xff]
  %v629 = vld [vmem:[%s1 + $0x1248] sm:$0xff]
  %v630 = vld [vmem:[%s1 + $0x1250] sm:$0xff]
  %v631 = vld [vmem:[%s1 + $0x1258] sm:$0xff]
  %v632 = vld [vmem:[%s1 + $0x1260] sm:$0xff]
  %v633 = vld [vmem:[%s1 + $0x1268] sm:$0xff]
  %v634 = vld [vmem:[%s1 + $0x1270] sm:$0xff]
  %v635 = vld [vmem:[%s1 + $0x1278] sm:$0xff]
  %v636 = vld [vmem:[%s1 + $0x1280] sm:$0xff]
  %v637 = vld [vmem:[%s1 + $0x1288] sm:$0xff]
  %v638 = vld [vmem:[%s1 + $0x1290] sm:$0xff]
  %v639 = vld [vmem:[%s1 + $0x1298] sm:$0xff]
  %v640 = vld [vmem:[%s1 + $0x12a0] sm:$0xff]
  %v641 = vld [vmem:[%s1 + $0x12a8] sm:$0xff]
  %v642 = vld [vmem:[%s1 + $0x12b0] sm:$0xff]
  %v643 = vld [vmem:[%s1 + $0x12b8] sm:$0xff]
  %v644 = vld [vmem:[%s1 + $0x12c0] sm:$0xff]
  %v645 = vld [vmem:[%s1 + $0x12c8] sm:$0xff]
  %v646 = vld [vmem:[%s1 + $0x12d0] sm:$0xff]
  %v647 = vld [vmem:[%s1 + $0x12d8] sm:$0xff]
  %v648 = vld [vmem:[%s1 + $0x12e0] sm:$0xff]
  %v649 = vld [vmem:[%s1 + $0x12e8] sm:$0xff]
  %v650 = vld [vmem:[%s1 + $0x12f0] sm:$0xff]
  %v651 = vld [vmem:[%s1 + $0x12f8] sm:$0xff]
  %v652 = vld [vmem:[%s1 + $0x1300] sm:$0xff]
  %v653 = vld [vmem:[%s1 + $0x1308] sm:$0xff]
  %v654 = vld [vmem:[%s1 + $0x1310] sm:$0xff]
  %v655 = vld [vmem:[%s1 + $0x1318] sm:$0xff]
  %v656 = vld [vmem:[%s1 + $0x1320] sm:$0xff]
  %v657 = vld [vmem:[%s1 + $0x1328] sm:$0xff]
  %v658 = vld [vmem:[%s1 + $0x1330] sm:$0xff]
  %v659 = vld [vmem:[%s1 + $0x1338] sm:$0xff]
  %v660 = vld [vmem:[%s1 + $0x1340] sm:$0xff]
  %v661 = vld [vmem:[%s1 + $0x1348] sm:$0xff]
  %v662 = vld [vmem:[%s1 + $0x1350] sm:$0xff]
  %v663 = vld [vmem:[%s1 + $0x1358] sm:$0xff]
  %v664 = vld [vmem:[%s1 + $0x1360] sm:$0xff]
  %v665 = vld [vmem:[%s1 + $0x1368] sm:$0xff]
  %v666 = vld [vmem:[%s1 + $0x1370] sm:$0xff]
  %v667 = vld [vmem:[%s1 + $0x1378] sm:$0xff]
  %v668 = vld [vmem:[%s1 + $0x1380] sm:$0xff]
  %v669 = vld [vmem:[%s1 + $0x1388] sm:$0xff]
  %v670 = vld [vmem:[%s1 + $0x1390] sm:$0xff]
  %v671 = vld [vmem:[%s1 + $0x1398] sm:$0xff]
  %v672 = vld [vmem:[%s1 + $0x13a0] sm:$0xff]
  %v673 = vld [vmem:[%s1 + $0x13a8] sm:$0xff]
  %v674 = vld [vmem:[%s1 + $0x13b0] sm:$0xff]
  %v675 = vld [vmem:[%s1 + $0x13b8] sm:$0xff]
  %v676 = vld [vmem:[%s1 + $0x13c0] sm:$0xff]
  %v677 = vld [vmem:[%s1 + $0x13c8] sm:$0xff]
  %v678 = vld [vmem:[%s1 + $0x13d0] sm:$0xff]
  %v679 = vld [vmem:[%s1 + $0x13d8] sm:$0xff]
  %v680 = vld [vmem:[%s1 + $0x13e0] sm:$0xff]
  %v681 = vld [vmem:[%s1 + $0x13e8] sm:$0xff]
  %v682 = vld [vmem:[%s1 + $0x13f0] sm:$0xff]
  %v683 = vld [vmem:[%s1 + $0x13f8] sm:$0xff]
  %v684 = vld [vmem:[%s1 + $0x1400] sm:$0xff]
  %v685 = vld [vmem:[%s1 + $0x1408] sm:$0xff]
  %v686 = vld [vmem:[%s1 + $0x1410] sm:$0xff]
  %v687 = vld [vmem:[%s1 + $0x1418] sm:$0xff]
  %v688 = vld [vmem:[%s1 + $0x1420] sm:$0xff]
  %v689 = vld [vmem:[%s1 + $0x1428] sm:$0xff]
  %v690 = vld [vmem:[%s1 + $0x1430] sm:$0xff]
  %v691 = vld [vmem:[%s1 + $0x1438] sm:$0xff]
  %v692 = vld [vmem:[%s1 + $0x1440] sm:$0xff]
  %v693 = vld [vmem:[%s1 + $0x1448] sm:$0xff]
  %v694 = vld [vmem:[%s1 + $0x1450] sm:$0xff]
  %v695 = vld [vmem:[%s1 + $0x1458] sm:$0xff]
  %v696 = vld [vmem:[%s1 + $0x1460] sm:$0xff]
  %v697 = vld [vmem:[%s1 + $0x1468] sm:$0xff]
  %v698 = vld [vmem:[%s1 + $0x1470] sm:$0xff]
  %v699 = vld [vmem:[%s1 + $0x1478] sm:$0xff]
  %v700 = vld [vmem:[%s1 + $0x1480] sm:$0xff]
  %v701 = vld [vmem:[%s1 + $0x1488] sm:$0xff]
  %v702 = vld [vmem:[%s1 + $0x1490] sm:$0xff]
  %v703 = vld [vmem:[%s1 + $0x1498] sm:$0xff]
  %v704 = vld [vmem:[%s1 + $0x14a0] sm:$0xff]
  %v705 = vld [vmem:[%s1 + $0x14a8] sm:$0xff]
  %v706 = vld [vmem:[%s1 + $0x14b0] sm:$0xff]
  %v707 = vld [vmem:[%s1 + $0x14b8] sm:$0xff]
  %v708 = vld [vmem:[%s1 + $0x14c0] sm:$0xff]
  %v709 = vld [vmem:[%s1 + $0x14c8] sm:$0xff]
  %v710 = vld [vmem:[%s1 + $0x14d0] sm:$0xff]
  %v711 = vld [vmem:[%s1 + $0x14d8] sm:$0xff]
  %v712 = vld [vmem:[%s1 + $0x14e0] sm:$0xff]
  %v713 = vld [vmem:[%s1 + $0x14e8] sm:$0xff]
  %v714 = vld [vmem:[%s1 + $0x14f0] sm:$0xff]
  %v715 = vld [vmem:[%s1 + $0x14f8] sm:$0xff]
  %v716 = vld [vmem:[%s1 + $0x1500] sm:$0xff]
  %v717 = vld [vmem:[%s1 + $0x1508] sm:$0xff]
  %v718 = vld [vmem:[%s1 + $0x1510] sm:$0xff]
  %v719 = vld [vmem:[%s1 + $0x1518] sm:$0xff]
  %v720 = vld [vmem:[%s1 + $0x1520] sm:$0xff]
  %v721 = vld [vmem:[%s1 + $0x1528] sm:$0xff]
  %v722 = vld [vmem:[%s1 + $0x1530] sm:$0xff]
  %v723 = vld [vmem:[%s1 + $0x1538] sm:$0xff]
  %v724 = vld [vmem:[%s1 + $0x1540] sm:$0xff]
  %v725 = vld [vmem:[%s1 + $0x1548] sm:$0xff]
  %v726 = vld [vmem:[%s1 + $0x1550] sm:$0xff]
  %v727 = vld [vmem:[%s1 + $0x1558] sm:$0xff]
  %v728 = vld [vmem:[%s1 + $0x1560] sm:$0xff]
  %v729 = vld [vmem:[%s1 + $0x1568] sm:$0xff]
  %v730 = vld [vmem:[%s1 + $0x1570] sm:$0xff]
  %v731 = vld [vmem:[%s1 + $0x1578] sm:$0xff]
  %v732 = vld [vmem:[%s1 + $0x1580] sm:$0xff]
  %v733 = vld [vmem:[%s1 + $0x1588] sm:$0xff]
  %v734 = vld [vmem:[%s1 + $0x1590] sm:$0xff]
  %v735 = vld [vmem:[%s1 + $0x1598] sm:$0xff]
  %v736 = vld [vmem:[%s1 + $0x15a0] sm:$0xff]
  %v737 = vld [vmem:[%s1 + $0x15a8] sm:$0xff]
  %v738 = vld [vmem:[%s1 + $0x15b0] sm:$0xff]
  %v739 = vld [vmem:[%s1 + $0x15b8] sm:$0xff]
  %v740 = vld [vmem:[%s1 + $0x15c0] sm:$0xff]
  %v741 = vld [vmem:[%s1 + $0x15c8] sm:$0xff]
  %v742 = vld [vmem:[%s1 + $0x15d0] sm:$0xff]
  %v743 = vld [vmem:[%s1 + $0x15d8] sm:$0xff]
  %v744 = vld [vmem:[%s1 + $0x15e0] sm:$0xff]
  %v745 = vld [vmem:[%s1 + $0x15e8] sm:$0xff]
  %v746 = vld [vmem:[%s1 + $0x15f0] sm:$0xff]
  %v747 = vld [vmem:[%s1 + $0x15f8] sm:$0xff]
  %v748 = vld [vmem:[%s1 + $0x1600] sm:$0xff]
  %v749 = vld [vmem:[%s1 + $0x1608] sm:$0xff]
  %v750 = vld [vmem:[%s1 + $0x1610] sm:$0xff]
  %v751 = vld [vmem:[%s1 + $0x1618] sm:$0xff]
  %v752 = vld [vmem:[%s1 + $0x1620] sm:$0xff]
  %v753 = vld [vmem:[%s1 + $0x1628] sm:$0xff]
  %v754 = vld [vmem:[%s1 + $0x1630] sm:$0xff]
  %v755 = vld [vmem:[%s1 + $0x1638] sm:$0xff]
  %v756 = vld [vmem:[%s1 + $0x1640] sm:$0xff]
  %v757 = vld [vmem:[%s1 + $0x1648] sm:$0xff]
  %v758 = vld [vmem:[%s1 + $0x1650] sm:$0xff]
  %v759 = vld [vmem:[%s1 + $0x1658] sm:$0xff]
  %v760 = vld [vmem:[%s1 + $0x1660] sm:$0xff]
  %v761 = vld [vmem:[%s1 + $0x1668] sm:$0xff]
  %v762 = vld [vmem:[%s1 + $0x1670] sm:$0xff]
  %v763 = vld [vmem:[%s1 + $0x1678] sm:$0xff]
  %v764 = vld [vmem:[%s1 + $0x1680] sm:$0xff]
  %v765 = vld [vmem:[%s1 + $0x1688] sm:$0xff]
  %v766 = vld [vmem:[%s1 + $0x1690] sm:$0xff]
  %v767 = vld [vmem:[%s1 + $0x1698] sm:$0xff]
  %v768 = vld [vmem:[%s1 + $0x16a0] sm:$0xff]
  %v769 = vld [vmem:[%s1 + $0x16a8] sm:$0xff]
  %v770 = vld [vmem:[%s1 + $0x16b0] sm:$0xff]
  %v771 = vld [vmem:[%s1 + $0x16b8] sm:$0xff]
  %v772 = vld [vmem:[%s1 + $0x16c0] sm:$0xff]
  %v773 = vld [vmem:[%s1 + $0x16c8] sm:$0xff]
  %v774 = vld [vmem:[%s1 + $0x16d0] sm:$0xff]
  %v775 = vld [vmem:[%s1 + $0x16d8] sm:$0xff]
  %v776 = vld [vmem:[%s1 + $0x16e0] sm:$0xff]
  %v777 = vld [vmem:[%s1 + $0x16e8] sm:$0xff]
  %v778 = vld [vmem:[%s1 + $0x16f0] sm:$0xff]
  %v779 = vld [vmem:[%s1 + $0x16f8] sm:$0xff]
  %v780 = vld [vmem:[%s1 + $0x1700] sm:$0xff]
  %v781 = vld [vmem:[%s1 + $0x1708] sm:$0xff]
  %v782 = vld [vmem:[%s1 + $0x1710] sm:$0xff]
  %v783 = vld [vmem:[%s1 + $0x1718] sm:$0xff]
  %v784 = vld [vmem:[%s1 + $0x1720] sm:$0xff]
  %v785 = vld [vmem:[%s1 + $0x1728] sm:$0xff]
  %v786 = vld [vmem:[%s1 + $0x1730] sm:$0xff]
  %v787 = vld [vmem:[%s1 + $0x1738] sm:$0xff]
  %v788 = vld [vmem:[%s1 + $0x1740] sm:$0xff]
  %v789 = vld [vmem:[%s1 + $0x1748] sm:$0xff]
  %v790 = vld [vmem:[%s1 + $0x1750] sm:$0xff]
  %v791 = vld [vmem:[%s1 + $0x1758] sm:$0xff]
  %v792 = vld [vmem:[%s1 + $0x1760] sm:$0xff]
  %v793 = vld [vmem:[%s1 + $0x1768] sm:$0xff]
  %v794 = vld [vmem:[%s1 + $0x1770] sm:$0xff]
  %v795 = vld [vmem:[%s1 + $0x1778] sm:$0xff]
  %v796 = vld [vmem:[%s1 + $0x1780] sm:$0xff]
  %v797 = vld [vmem:[%s1 + $0x1788] sm:$0xff]
  %v798 = vld [vmem:[%s1 + $0x1790] sm:$0xff]
  %v799 = vld [vmem:[%s1 + $0x1798] sm:$0xff]
  %v800 = vld [vmem:[%s1 + $0x17a0] sm:$0xff]
  %v801 = vld [vmem:[%s1 + $0x17a8] sm:$0xff]
  %v802 = vld [vmem:[%s1 + $0x17b0] sm:$0xff]
  %v803 = vld [vmem:[%s1 + $0x17b8] sm:$0xff]
  %v804 = vld [vmem:[%s1 + $0x17c0] sm:$0xff]
  %v805 = vld [vmem:[%s1 + $0x17c8] sm:$0xff]
  %v806 = vld [vmem:[%s1 + $0x17d0] sm:$0xff]
  %v807 = vld [vmem:[%s1 + $0x17d8] sm:$0xff]
  %v808 = vld [vmem:[%s1 + $0x17e0] sm:$0xff]
  %v809 = vld [vmem:[%s1 + $0x17e8] sm:$0xff]
  %v810 = vld [vmem:[%s1 + $0x17f0] sm:$0xff]
  %v811 = vld [vmem:[%s1 + $0x17f8] sm:$0xff]
  %v812 = vld [vmem:[%s2] sm:$0xf]
  %v814 = vperm.slane %v812, 0
  %v815 = vperm.slane %v812, 1
  %v816 = vperm.slane %v812, 2
  %v817 = vperm.slane %v812, 3
  %v846 = vunpack.c.l.b16 %v20
  %v847 = vunpack.c.h.b16 %v20
  %v848 = vunpack.c.l.b16 %v21
  %v849 = vunpack.c.h.b16 %v21
  %v850 = vunpack.c.l.b16 %v22
  %v851 = vunpack.c.h.b16 %v22
  %v852 = vunpack.c.l.b16 %v23
  %v853 = vunpack.c.h.b16 %v23
  %v854 = vunpack.c.l.b16 %v24
  %v855 = vunpack.c.h.b16 %v24
  %v856 = vunpack.c.l.b16 %v25
  %v857 = vunpack.c.h.b16 %v25
  %v858 = vunpack.c.l.b16 %v26
  %v859 = vunpack.c.h.b16 %v26
  %v860 = vunpack.c.l.b16 %v27
  %v861 = vunpack.c.h.b16 %v27
  %v862 = vunpack.c.l.b16 %v28
  %v863 = vunpack.c.h.b16 %v28
  %v864 = vunpack.c.l.b16 %v29
  %v865 = vunpack.c.h.b16 %v29
  %v866 = vunpack.c.l.b16 %v30
  %v867 = vunpack.c.h.b16 %v30
  %v868 = vunpack.c.l.b16 %v31
  %v869 = vunpack.c.h.b16 %v31
  %v870 = vunpack.c.l.b16 %v32
  %v871 = vunpack.c.h.b16 %v32
  %v872 = vunpack.c.l.b16 %v33
  %v873 = vunpack.c.h.b16 %v33
  %v874 = vunpack.c.l.b16 %v34
  %v875 = vunpack.c.h.b16 %v34
  %v876 = vunpack.c.l.b16 %v35
  %v877 = vunpack.c.h.b16 %v35
  %v878 = vunpack.c.l.b16 %v36
  %v879 = vunpack.c.h.b16 %v36
  %v880 = vunpack.c.l.b16 %v37
  %v881 = vunpack.c.h.b16 %v37
  %v882 = vunpack.c.l.b16 %v38
  %v883 = vunpack.c.h.b16 %v38
  %v884 = vunpack.c.l.b16 %v39
  %v885 = vunpack.c.h.b16 %v39
  %v886 = vunpack.c.l.b16 %v40
  %v887 = vunpack.c.h.b16 %v40
  %v888 = vunpack.c.l.b16 %v41
  %v889 = vunpack.c.h.b16 %v41
  %v890 = vunpack.c.l.b16 %v42
  %v891 = vunpack.c.h.b16 %v42
  %v892 = vunpack.c.l.b16 %v43
  %v893 = vunpack.c.h.b16 %v43
  %v894 = vpack.c.b16 %v870, %v846
  %v895 = vpack.c.b16 %v871, %v847
  %v896 = vpack.c.b16 %v872, %v848
  %v897 = vpack.c.b16 %v873, %v849
  %v898 = vpack.c.b16 %v874, %v850
  %v899 = vpack.c.b16 %v875, %v851
  %v900 = vpack.c.b16 %v876, %v852
  %v901 = vpack.c.b16 %v877, %v853
  %v902 = vpack.c.b16 %v878, %v854
  %v903 = vpack.c.b16 %v879, %v855
  %v904 = vpack.c.b16 %v880, %v856
  %v905 = vpack.c.b16 %v881, %v857
  %v906 = vpack.c.b16 %v882, %v858
  %v907 = vpack.c.b16 %v883, %v859
  %v908 = vpack.c.b16 %v884, %v860
  %v909 = vpack.c.b16 %v885, %v861
  %v910 = vpack.c.b16 %v886, %v862
  %v911 = vpack.c.b16 %v887, %v863
  %v912 = vpack.c.b16 %v888, %v864
  %v913 = vpack.c.b16 %v889, %v865
  %v914 = vpack.c.b16 %v890, %v866
  %v915 = vpack.c.b16 %v891, %v867
  %v916 = vpack.c.b16 %v892, %v868
  %v917 = vpack.c.b16 %v893, %v869
  %v1710 = vunpack.c.l.b16 %v44
  %v1711 = vunpack.c.h.b16 %v44
  %v1712 = vunpack.c.l.b16 %v45
  %v1713 = vunpack.c.h.b16 %v45
  %v1714 = vunpack.c.l.b16 %v46
  %v1715 = vunpack.c.h.b16 %v46
  %v1716 = vunpack.c.l.b16 %v47
  %v1717 = vunpack.c.h.b16 %v47
  %v1718 = vunpack.c.l.b16 %v48
  %v1719 = vunpack.c.h.b16 %v48
  %v1720 = vunpack.c.l.b16 %v49
  %v1721 = vunpack.c.h.b16 %v49
  %v1722 = vunpack.c.l.b16 %v50
  %v1723 = vunpack.c.h.b16 %v50
  %v1724 = vunpack.c.l.b16 %v51
  %v1725 = vunpack.c.h.b16 %v51
  %v1726 = vunpack.c.l.b16 %v52
  %v1727 = vunpack.c.h.b16 %v52
  %v1728 = vunpack.c.l.b16 %v53
  %v1729 = vunpack.c.h.b16 %v53
  %v1730 = vunpack.c.l.b16 %v54
  %v1731 = vunpack.c.h.b16 %v54
  %v1732 = vunpack.c.l.b16 %v55
  %v1733 = vunpack.c.h.b16 %v55
  %v1734 = vunpack.c.l.b16 %v56
  %v1735 = vunpack.c.h.b16 %v56
  %v1736 = vunpack.c.l.b16 %v57
  %v1737 = vunpack.c.h.b16 %v57
  %v1738 = vunpack.c.l.b16 %v58
  %v1739 = vunpack.c.h.b16 %v58
  %v1740 = vunpack.c.l.b16 %v59
  %v1741 = vunpack.c.h.b16 %v59
  %v1742 = vunpack.c.l.b16 %v60
  %v1743 = vunpack.c.h.b16 %v60
  %v1744 = vunpack.c.l.b16 %v61
  %v1745 = vunpack.c.h.b16 %v61
  %v1746 = vunpack.c.l.b16 %v62
  %v1747 = vunpack.c.h.b16 %v62
  %v1748 = vunpack.c.l.b16 %v63
  %v1749 = vunpack.c.h.b16 %v63
  %v1750 = vunpack.c.l.b16 %v64
  %v1751 = vunpack.c.h.b16 %v64
  %v1752 = vunpack.c.l.b16 %v65
  %v1753 = vunpack.c.h.b16 %v65
  %v1754 = vunpack.c.l.b16 %v66
  %v1755 = vunpack.c.h.b16 %v66
  %v1756 = vunpack.c.l.b16 %v67
  %v1757 = vunpack.c.h.b16 %v67
  %v1758 = vunpack.c.l.b16 %v68
  %v1759 = vunpack.c.h.b16 %v68
  %v1760 = vunpack.c.l.b16 %v69
  %v1761 = vunpack.c.h.b16 %v69
  %v1762 = vunpack.c.l.b16 %v70
  %v1763 = vunpack.c.h.b16 %v70
  %v1764 = vunpack.c.l.b16 %v71
  %v1765 = vunpack.c.h.b16 %v71
  %v1766 = vunpack.c.l.b16 %v72
  %v1767 = vunpack.c.h.b16 %v72
  %v1768 = vunpack.c.l.b16 %v73
  %v1769 = vunpack.c.h.b16 %v73
  %v1770 = vunpack.c.l.b16 %v74
  %v1771 = vunpack.c.h.b16 %v74
  %v1772 = vunpack.c.l.b16 %v75
  %v1773 = vunpack.c.h.b16 %v75
  %v1774 = vunpack.c.l.b16 %v76
  %v1775 = vunpack.c.h.b16 %v76
  %v1776 = vunpack.c.l.b16 %v77
  %v1777 = vunpack.c.h.b16 %v77
  %v1778 = vunpack.c.l.b16 %v78
  %v1779 = vunpack.c.h.b16 %v78
  %v1780 = vunpack.c.l.b16 %v79
  %v1781 = vunpack.c.h.b16 %v79
  %v1782 = vunpack.c.l.b16 %v80
  %v1783 = vunpack.c.h.b16 %v80
  %v1784 = vunpack.c.l.b16 %v81
  %v1785 = vunpack.c.h.b16 %v81
  %v1786 = vunpack.c.l.b16 %v82
  %v1787 = vunpack.c.h.b16 %v82
  %v1788 = vunpack.c.l.b16 %v83
  %v1789 = vunpack.c.h.b16 %v83
  %v1790 = vunpack.c.l.b16 %v84
  %v1791 = vunpack.c.h.b16 %v84
  %v1792 = vunpack.c.l.b16 %v85
  %v1793 = vunpack.c.h.b16 %v85
  %v1794 = vunpack.c.l.b16 %v86
  %v1795 = vunpack.c.h.b16 %v86
  %v1796 = vunpack.c.l.b16 %v87
  %v1797 = vunpack.c.h.b16 %v87
  %v1798 = vunpack.c.l.b16 %v88
  %v1799 = vunpack.c.h.b16 %v88
  %v1800 = vunpack.c.l.b16 %v89
  %v1801 = vunpack.c.h.b16 %v89
  %v1802 = vunpack.c.l.b16 %v90
  %v1803 = vunpack.c.h.b16 %v90
  %v1804 = vunpack.c.l.b16 %v91
  %v1805 = vunpack.c.h.b16 %v91
  %v1806 = vunpack.c.l.b16 %v92
  %v1807 = vunpack.c.h.b16 %v92
  %v1808 = vunpack.c.l.b16 %v93
  %v1809 = vunpack.c.h.b16 %v93
  %v1810 = vunpack.c.l.b16 %v94
  %v1811 = vunpack.c.h.b16 %v94
  %v1812 = vunpack.c.l.b16 %v95
  %v1813 = vunpack.c.h.b16 %v95
  %v1814 = vunpack.c.l.b16 %v96
  %v1815 = vunpack.c.h.b16 %v96
  %v1816 = vunpack.c.l.b16 %v97
  %v1817 = vunpack.c.h.b16 %v97
  %v1818 = vunpack.c.l.b16 %v98
  %v1819 = vunpack.c.h.b16 %v98
  %v1820 = vunpack.c.l.b16 %v99
  %v1821 = vunpack.c.h.b16 %v99
  %v1822 = vunpack.c.l.b16 %v100
  %v1823 = vunpack.c.h.b16 %v100
  %v1824 = vunpack.c.l.b16 %v101
  %v1825 = vunpack.c.h.b16 %v101
  %v1826 = vunpack.c.l.b16 %v102
  %v1827 = vunpack.c.h.b16 %v102
  %v1828 = vunpack.c.l.b16 %v103
  %v1829 = vunpack.c.h.b16 %v103
  %v1830 = vunpack.c.l.b16 %v104
  %v1831 = vunpack.c.h.b16 %v104
  %v1832 = vunpack.c.l.b16 %v105
  %v1833 = vunpack.c.h.b16 %v105
  %v1834 = vunpack.c.l.b16 %v106
  %v1835 = vunpack.c.h.b16 %v106
  %v1836 = vunpack.c.l.b16 %v107
  %v1837 = vunpack.c.h.b16 %v107
  %v1838 = vunpack.c.l.b16 %v108
  %v1839 = vunpack.c.h.b16 %v108
  %v1840 = vunpack.c.l.b16 %v109
  %v1841 = vunpack.c.h.b16 %v109
  %v1842 = vunpack.c.l.b16 %v110
  %v1843 = vunpack.c.h.b16 %v110
  %v1844 = vunpack.c.l.b16 %v111
  %v1845 = vunpack.c.h.b16 %v111
  %v1846 = vunpack.c.l.b16 %v112
  %v1847 = vunpack.c.h.b16 %v112
  %v1848 = vunpack.c.l.b16 %v113
  %v1849 = vunpack.c.h.b16 %v113
  %v1850 = vunpack.c.l.b16 %v114
  %v1851 = vunpack.c.h.b16 %v114
  %v1852 = vunpack.c.l.b16 %v115
  %v1853 = vunpack.c.h.b16 %v115
  %v1854 = vunpack.c.l.b16 %v116
  %v1855 = vunpack.c.h.b16 %v116
  %v1856 = vunpack.c.l.b16 %v117
  %v1857 = vunpack.c.h.b16 %v117
  %v1858 = vunpack.c.l.b16 %v118
  %v1859 = vunpack.c.h.b16 %v118
  %v1860 = vunpack.c.l.b16 %v119
  %v1861 = vunpack.c.h.b16 %v119
  %v1862 = vunpack.c.l.b16 %v120
  %v1863 = vunpack.c.h.b16 %v120
  %v1864 = vunpack.c.l.b16 %v121
  %v1865 = vunpack.c.h.b16 %v121
  %v1866 = vunpack.c.l.b16 %v122
  %v1867 = vunpack.c.h.b16 %v122
  %v1868 = vunpack.c.l.b16 %v123
  %v1869 = vunpack.c.h.b16 %v123
  %v1870 = vunpack.c.l.b16 %v124
  %v1871 = vunpack.c.h.b16 %v124
  %v1872 = vunpack.c.l.b16 %v125
  %v1873 = vunpack.c.h.b16 %v125
  %v1874 = vunpack.c.l.b16 %v126
  %v1875 = vunpack.c.h.b16 %v126
  %v1876 = vunpack.c.l.b16 %v127
  %v1877 = vunpack.c.h.b16 %v127
  %v1878 = vunpack.c.l.b16 %v128
  %v1879 = vunpack.c.h.b16 %v128
  %v1880 = vunpack.c.l.b16 %v129
  %v1881 = vunpack.c.h.b16 %v129
  %v1882 = vunpack.c.l.b16 %v130
  %v1883 = vunpack.c.h.b16 %v130
  %v1884 = vunpack.c.l.b16 %v131
  %v1885 = vunpack.c.h.b16 %v131
  %v1886 = vunpack.c.l.b16 %v132
  %v1887 = vunpack.c.h.b16 %v132
  %v1888 = vunpack.c.l.b16 %v133
  %v1889 = vunpack.c.h.b16 %v133
  %v1890 = vunpack.c.l.b16 %v134
  %v1891 = vunpack.c.h.b16 %v134
  %v1892 = vunpack.c.l.b16 %v135
  %v1893 = vunpack.c.h.b16 %v135
  %v1894 = vunpack.c.l.b16 %v136
  %v1895 = vunpack.c.h.b16 %v136
  %v1896 = vunpack.c.l.b16 %v137
  %v1897 = vunpack.c.h.b16 %v137
  %v1898 = vunpack.c.l.b16 %v138
  %v1899 = vunpack.c.h.b16 %v138
  %v1900 = vunpack.c.l.b16 %v139
  %v1901 = vunpack.c.h.b16 %v139
  %v1902 = vunpack.c.l.b16 %v140
  %v1903 = vunpack.c.h.b16 %v140
  %v1904 = vunpack.c.l.b16 %v141
  %v1905 = vunpack.c.h.b16 %v141
  %v1906 = vunpack.c.l.b16 %v142
  %v1907 = vunpack.c.h.b16 %v142
  %v1908 = vunpack.c.l.b16 %v143
  %v1909 = vunpack.c.h.b16 %v143
  %v1910 = vunpack.c.l.b16 %v144
  %v1911 = vunpack.c.h.b16 %v144
  %v1912 = vunpack.c.l.b16 %v145
  %v1913 = vunpack.c.h.b16 %v145
  %v1914 = vunpack.c.l.b16 %v146
  %v1915 = vunpack.c.h.b16 %v146
  %v1916 = vunpack.c.l.b16 %v147
  %v1917 = vunpack.c.h.b16 %v147
  %v1918 = vunpack.c.l.b16 %v148
  %v1919 = vunpack.c.h.b16 %v148
  %v1920 = vunpack.c.l.b16 %v149
  %v1921 = vunpack.c.h.b16 %v149
  %v1922 = vunpack.c.l.b16 %v150
  %v1923 = vunpack.c.h.b16 %v150
  %v1924 = vunpack.c.l.b16 %v151
  %v1925 = vunpack.c.h.b16 %v151
  %v1926 = vunpack.c.l.b16 %v152
  %v1927 = vunpack.c.h.b16 %v152
  %v1928 = vunpack.c.l.b16 %v153
  %v1929 = vunpack.c.h.b16 %v153
  %v1930 = vunpack.c.l.b16 %v154
  %v1931 = vunpack.c.h.b16 %v154
  %v1932 = vunpack.c.l.b16 %v155
  %v1933 = vunpack.c.h.b16 %v155
  %v1934 = vunpack.c.l.b16 %v156
  %v1935 = vunpack.c.h.b16 %v156
  %v1936 = vunpack.c.l.b16 %v157
  %v1937 = vunpack.c.h.b16 %v157
  %v1938 = vunpack.c.l.b16 %v158
  %v1939 = vunpack.c.h.b16 %v158
  %v1940 = vunpack.c.l.b16 %v159
  %v1941 = vunpack.c.h.b16 %v159
  %v1942 = vunpack.c.l.b16 %v160
  %v1943 = vunpack.c.h.b16 %v160
  %v1944 = vunpack.c.l.b16 %v161
  %v1945 = vunpack.c.h.b16 %v161
  %v1946 = vunpack.c.l.b16 %v162
  %v1947 = vunpack.c.h.b16 %v162
  %v1948 = vunpack.c.l.b16 %v163
  %v1949 = vunpack.c.h.b16 %v163
  %v1950 = vunpack.c.l.b16 %v164
  %v1951 = vunpack.c.h.b16 %v164
  %v1952 = vunpack.c.l.b16 %v165
  %v1953 = vunpack.c.h.b16 %v165
  %v1954 = vunpack.c.l.b16 %v166
  %v1955 = vunpack.c.h.b16 %v166
  %v1956 = vunpack.c.l.b16 %v167
  %v1957 = vunpack.c.h.b16 %v167
  %v1958 = vunpack.c.l.b16 %v168
  %v1959 = vunpack.c.h.b16 %v168
  %v1960 = vunpack.c.l.b16 %v169
  %v1961 = vunpack.c.h.b16 %v169
  %v1962 = vunpack.c.l.b16 %v170
  %v1963 = vunpack.c.h.b16 %v170
  %v1964 = vunpack.c.l.b16 %v171
  %v1965 = vunpack.c.h.b16 %v171
  %v1966 = vunpack.c.l.b16 %v172
  %v1967 = vunpack.c.h.b16 %v172
  %v1968 = vunpack.c.l.b16 %v173
  %v1969 = vunpack.c.h.b16 %v173
  %v1970 = vunpack.c.l.b16 %v174
  %v1971 = vunpack.c.h.b16 %v174
  %v1972 = vunpack.c.l.b16 %v175
  %v1973 = vunpack.c.h.b16 %v175
  %v1974 = vunpack.c.l.b16 %v176
  %v1975 = vunpack.c.h.b16 %v176
  %v1976 = vunpack.c.l.b16 %v177
  %v1977 = vunpack.c.h.b16 %v177
  %v1978 = vunpack.c.l.b16 %v178
  %v1979 = vunpack.c.h.b16 %v178
  %v1980 = vunpack.c.l.b16 %v179
  %v1981 = vunpack.c.h.b16 %v179
  %v1982 = vunpack.c.l.b16 %v180
  %v1983 = vunpack.c.h.b16 %v180
  %v1984 = vunpack.c.l.b16 %v181
  %v1985 = vunpack.c.h.b16 %v181
  %v1986 = vunpack.c.l.b16 %v182
  %v1987 = vunpack.c.h.b16 %v182
  %v1988 = vunpack.c.l.b16 %v183
  %v1989 = vunpack.c.h.b16 %v183
  %v1990 = vunpack.c.l.b16 %v184
  %v1991 = vunpack.c.h.b16 %v184
  %v1992 = vunpack.c.l.b16 %v185
  %v1993 = vunpack.c.h.b16 %v185
  %v1994 = vunpack.c.l.b16 %v186
  %v1995 = vunpack.c.h.b16 %v186
  %v1996 = vunpack.c.l.b16 %v187
  %v1997 = vunpack.c.h.b16 %v187
  %v1998 = vunpack.c.l.b16 %v188
  %v1999 = vunpack.c.h.b16 %v188
  %v2000 = vunpack.c.l.b16 %v189
  %v2001 = vunpack.c.h.b16 %v189
  %v2002 = vunpack.c.l.b16 %v190
  %v2003 = vunpack.c.h.b16 %v190
  %v2004 = vunpack.c.l.b16 %v191
  %v2005 = vunpack.c.h.b16 %v191
  %v2006 = vunpack.c.l.b16 %v192
  %v2007 = vunpack.c.h.b16 %v192
  %v2008 = vunpack.c.l.b16 %v193
  %v2009 = vunpack.c.h.b16 %v193
  %v2010 = vunpack.c.l.b16 %v194
  %v2011 = vunpack.c.h.b16 %v194
  %v2012 = vunpack.c.l.b16 %v195
  %v2013 = vunpack.c.h.b16 %v195
  %v2014 = vunpack.c.l.b16 %v196
  %v2015 = vunpack.c.h.b16 %v196
  %v2016 = vunpack.c.l.b16 %v197
  %v2017 = vunpack.c.h.b16 %v197
  %v2018 = vunpack.c.l.b16 %v198
  %v2019 = vunpack.c.h.b16 %v198
  %v2020 = vunpack.c.l.b16 %v199
  %v2021 = vunpack.c.h.b16 %v199
  %v2022 = vunpack.c.l.b16 %v200
  %v2023 = vunpack.c.h.b16 %v200
  %v2024 = vunpack.c.l.b16 %v201
  %v2025 = vunpack.c.h.b16 %v201
  %v2026 = vunpack.c.l.b16 %v202
  %v2027 = vunpack.c.h.b16 %v202
  %v2028 = vunpack.c.l.b16 %v203
  %v2029 = vunpack.c.h.b16 %v203
  %v2030 = vunpack.c.l.b16 %v204
  %v2031 = vunpack.c.h.b16 %v204
  %v2032 = vunpack.c.l.b16 %v205
  %v2033 = vunpack.c.h.b16 %v205
  %v2034 = vunpack.c.l.b16 %v206
  %v2035 = vunpack.c.h.b16 %v206
  %v2036 = vunpack.c.l.b16 %v207
  %v2037 = vunpack.c.h.b16 %v207
  %v2038 = vunpack.c.l.b16 %v208
  %v2039 = vunpack.c.h.b16 %v208
  %v2040 = vunpack.c.l.b16 %v209
  %v2041 = vunpack.c.h.b16 %v209
  %v2042 = vunpack.c.l.b16 %v210
  %v2043 = vunpack.c.h.b16 %v210
  %v2044 = vunpack.c.l.b16 %v211
  %v2045 = vunpack.c.h.b16 %v211
  %v2046 = vunpack.c.l.b16 %v212
  %v2047 = vunpack.c.h.b16 %v212
  %v2048 = vunpack.c.l.b16 %v213
  %v2049 = vunpack.c.h.b16 %v213
  %v2050 = vunpack.c.l.b16 %v214
  %v2051 = vunpack.c.h.b16 %v214
  %v2052 = vunpack.c.l.b16 %v215
  %v2053 = vunpack.c.h.b16 %v215
  %v2054 = vunpack.c.l.b16 %v216
  %v2055 = vunpack.c.h.b16 %v216
  %v2056 = vunpack.c.l.b16 %v217
  %v2057 = vunpack.c.h.b16 %v217
  %v2058 = vunpack.c.l.b16 %v218
  %v2059 = vunpack.c.h.b16 %v218
  %v2060 = vunpack.c.l.b16 %v219
  %v2061 = vunpack.c.h.b16 %v219
  %v2062 = vunpack.c.l.b16 %v220
  %v2063 = vunpack.c.h.b16 %v220
  %v2064 = vunpack.c.l.b16 %v221
  %v2065 = vunpack.c.h.b16 %v221
  %v2066 = vunpack.c.l.b16 %v222
  %v2067 = vunpack.c.h.b16 %v222
  %v2068 = vunpack.c.l.b16 %v223
  %v2069 = vunpack.c.h.b16 %v223
  %v2070 = vunpack.c.l.b16 %v224
  %v2071 = vunpack.c.h.b16 %v224
  %v2072 = vunpack.c.l.b16 %v225
  %v2073 = vunpack.c.h.b16 %v225
  %v2074 = vunpack.c.l.b16 %v226
  %v2075 = vunpack.c.h.b16 %v226
  %v2076 = vunpack.c.l.b16 %v227
  %v2077 = vunpack.c.h.b16 %v227
  %v2078 = vunpack.c.l.b16 %v228
  %v2079 = vunpack.c.h.b16 %v228
  %v2080 = vunpack.c.l.b16 %v229
  %v2081 = vunpack.c.h.b16 %v229
  %v2082 = vunpack.c.l.b16 %v230
  %v2083 = vunpack.c.h.b16 %v230
  %v2084 = vunpack.c.l.b16 %v231
  %v2085 = vunpack.c.h.b16 %v231
  %v2086 = vunpack.c.l.b16 %v232
  %v2087 = vunpack.c.h.b16 %v232
  %v2088 = vunpack.c.l.b16 %v233
  %v2089 = vunpack.c.h.b16 %v233
  %v2090 = vunpack.c.l.b16 %v234
  %v2091 = vunpack.c.h.b16 %v234
  %v2092 = vunpack.c.l.b16 %v235
  %v2093 = vunpack.c.h.b16 %v235
  %v2094 = vunpack.c.l.b16 %v236
  %v2095 = vunpack.c.h.b16 %v236
  %v2096 = vunpack.c.l.b16 %v237
  %v2097 = vunpack.c.h.b16 %v237
  %v2098 = vunpack.c.l.b16 %v238
  %v2099 = vunpack.c.h.b16 %v238
  %v2100 = vunpack.c.l.b16 %v239
  %v2101 = vunpack.c.h.b16 %v239
  %v2102 = vunpack.c.l.b16 %v240
  %v2103 = vunpack.c.h.b16 %v240
  %v2104 = vunpack.c.l.b16 %v241
  %v2105 = vunpack.c.h.b16 %v241
  %v2106 = vunpack.c.l.b16 %v242
  %v2107 = vunpack.c.h.b16 %v242
  %v2108 = vunpack.c.l.b16 %v243
  %v2109 = vunpack.c.h.b16 %v243
  %v2110 = vunpack.c.l.b16 %v244
  %v2111 = vunpack.c.h.b16 %v244
  %v2112 = vunpack.c.l.b16 %v245
  %v2113 = vunpack.c.h.b16 %v245
  %v2114 = vunpack.c.l.b16 %v246
  %v2115 = vunpack.c.h.b16 %v246
  %v2116 = vunpack.c.l.b16 %v247
  %v2117 = vunpack.c.h.b16 %v247
  %v2118 = vunpack.c.l.b16 %v248
  %v2119 = vunpack.c.h.b16 %v248
  %v2120 = vunpack.c.l.b16 %v249
  %v2121 = vunpack.c.h.b16 %v249
  %v2122 = vunpack.c.l.b16 %v250
  %v2123 = vunpack.c.h.b16 %v250
  %v2124 = vunpack.c.l.b16 %v251
  %v2125 = vunpack.c.h.b16 %v251
  %v2126 = vunpack.c.l.b16 %v252
  %v2127 = vunpack.c.h.b16 %v252
  %v2128 = vunpack.c.l.b16 %v253
  %v2129 = vunpack.c.h.b16 %v253
  %v2130 = vunpack.c.l.b16 %v254
  %v2131 = vunpack.c.h.b16 %v254
  %v2132 = vunpack.c.l.b16 %v255
  %v2133 = vunpack.c.h.b16 %v255
  %v2134 = vunpack.c.l.b16 %v256
  %v2135 = vunpack.c.h.b16 %v256
  %v2136 = vunpack.c.l.b16 %v257
  %v2137 = vunpack.c.h.b16 %v257
  %v2138 = vunpack.c.l.b16 %v258
  %v2139 = vunpack.c.h.b16 %v258
  %v2140 = vunpack.c.l.b16 %v259
  %v2141 = vunpack.c.h.b16 %v259
  %v2142 = vunpack.c.l.b16 %v260
  %v2143 = vunpack.c.h.b16 %v260
  %v2144 = vunpack.c.l.b16 %v261
  %v2145 = vunpack.c.h.b16 %v261
  %v2146 = vunpack.c.l.b16 %v262
  %v2147 = vunpack.c.h.b16 %v262
  %v2148 = vunpack.c.l.b16 %v263
  %v2149 = vunpack.c.h.b16 %v263
  %v2150 = vunpack.c.l.b16 %v264
  %v2151 = vunpack.c.h.b16 %v264
  %v2152 = vunpack.c.l.b16 %v265
  %v2153 = vunpack.c.h.b16 %v265
  %v2154 = vunpack.c.l.b16 %v266
  %v2155 = vunpack.c.h.b16 %v266
  %v2156 = vunpack.c.l.b16 %v267
  %v2157 = vunpack.c.h.b16 %v267
  %v2158 = vunpack.c.l.b16 %v268
  %v2159 = vunpack.c.h.b16 %v268
  %v2160 = vunpack.c.l.b16 %v269
  %v2161 = vunpack.c.h.b16 %v269
  %v2162 = vunpack.c.l.b16 %v270
  %v2163 = vunpack.c.h.b16 %v270
  %v2164 = vunpack.c.l.b16 %v271
  %v2165 = vunpack.c.h.b16 %v271
  %v2166 = vunpack.c.l.b16 %v272
  %v2167 = vunpack.c.h.b16 %v272
  %v2168 = vunpack.c.l.b16 %v273
  %v2169 = vunpack.c.h.b16 %v273
  %v2170 = vunpack.c.l.b16 %v274
  %v2171 = vunpack.c.h.b16 %v274
  %v2172 = vunpack.c.l.b16 %v275
  %v2173 = vunpack.c.h.b16 %v275
  %v2174 = vunpack.c.l.b16 %v276
  %v2175 = vunpack.c.h.b16 %v276
  %v2176 = vunpack.c.l.b16 %v277
  %v2177 = vunpack.c.h.b16 %v277
  %v2178 = vunpack.c.l.b16 %v278
  %v2179 = vunpack.c.h.b16 %v278
  %v2180 = vunpack.c.l.b16 %v279
  %v2181 = vunpack.c.h.b16 %v279
  %v2182 = vunpack.c.l.b16 %v280
  %v2183 = vunpack.c.h.b16 %v280
  %v2184 = vunpack.c.l.b16 %v281
  %v2185 = vunpack.c.h.b16 %v281
  %v2186 = vunpack.c.l.b16 %v282
  %v2187 = vunpack.c.h.b16 %v282
  %v2188 = vunpack.c.l.b16 %v283
  %v2189 = vunpack.c.h.b16 %v283
  %v2190 = vunpack.c.l.b16 %v284
  %v2191 = vunpack.c.h.b16 %v284
  %v2192 = vunpack.c.l.b16 %v285
  %v2193 = vunpack.c.h.b16 %v285
  %v2194 = vunpack.c.l.b16 %v286
  %v2195 = vunpack.c.h.b16 %v286
  %v2196 = vunpack.c.l.b16 %v287
  %v2197 = vunpack.c.h.b16 %v287
  %v2198 = vunpack.c.l.b16 %v288
  %v2199 = vunpack.c.h.b16 %v288
  %v2200 = vunpack.c.l.b16 %v289
  %v2201 = vunpack.c.h.b16 %v289
  %v2202 = vunpack.c.l.b16 %v290
  %v2203 = vunpack.c.h.b16 %v290
  %v2204 = vunpack.c.l.b16 %v291
  %v2205 = vunpack.c.h.b16 %v291
  %v2206 = vunpack.c.l.b16 %v292
  %v2207 = vunpack.c.h.b16 %v292
  %v2208 = vunpack.c.l.b16 %v293
  %v2209 = vunpack.c.h.b16 %v293
  %v2210 = vunpack.c.l.b16 %v294
  %v2211 = vunpack.c.h.b16 %v294
  %v2212 = vunpack.c.l.b16 %v295
  %v2213 = vunpack.c.h.b16 %v295
  %v2214 = vunpack.c.l.b16 %v296
  %v2215 = vunpack.c.h.b16 %v296
  %v2216 = vunpack.c.l.b16 %v297
  %v2217 = vunpack.c.h.b16 %v297
  %v2218 = vunpack.c.l.b16 %v298
  %v2219 = vunpack.c.h.b16 %v298
  %v2220 = vunpack.c.l.b16 %v299
  %v2221 = vunpack.c.h.b16 %v299
  %v2222 = vunpack.c.l.b16 %v300
  %v2223 = vunpack.c.h.b16 %v300
  %v2224 = vunpack.c.l.b16 %v301
  %v2225 = vunpack.c.h.b16 %v301
  %v2226 = vunpack.c.l.b16 %v302
  %v2227 = vunpack.c.h.b16 %v302
  %v2228 = vunpack.c.l.b16 %v303
  %v2229 = vunpack.c.h.b16 %v303
  %v2230 = vunpack.c.l.b16 %v304
  %v2231 = vunpack.c.h.b16 %v304
  %v2232 = vunpack.c.l.b16 %v305
  %v2233 = vunpack.c.h.b16 %v305
  %v2234 = vunpack.c.l.b16 %v306
  %v2235 = vunpack.c.h.b16 %v306
  %v2236 = vunpack.c.l.b16 %v307
  %v2237 = vunpack.c.h.b16 %v307
  %v2238 = vunpack.c.l.b16 %v308
  %v2239 = vunpack.c.h.b16 %v308
  %v2240 = vunpack.c.l.b16 %v309
  %v2241 = vunpack.c.h.b16 %v309
  %v2242 = vunpack.c.l.b16 %v310
  %v2243 = vunpack.c.h.b16 %v310
  %v2244 = vunpack.c.l.b16 %v311
  %v2245 = vunpack.c.h.b16 %v311
  %v2246 = vunpack.c.l.b16 %v312
  %v2247 = vunpack.c.h.b16 %v312
  %v2248 = vunpack.c.l.b16 %v313
  %v2249 = vunpack.c.h.b16 %v313
  %v2250 = vunpack.c.l.b16 %v314
  %v2251 = vunpack.c.h.b16 %v314
  %v2252 = vunpack.c.l.b16 %v315
  %v2253 = vunpack.c.h.b16 %v315
  %v2254 = vunpack.c.l.b16 %v316
  %v2255 = vunpack.c.h.b16 %v316
  %v2256 = vunpack.c.l.b16 %v317
  %v2257 = vunpack.c.h.b16 %v317
  %v2258 = vunpack.c.l.b16 %v318
  %v2259 = vunpack.c.h.b16 %v318
  %v2260 = vunpack.c.l.b16 %v319
  %v2261 = vunpack.c.h.b16 %v319
  %v2262 = vunpack.c.l.b16 %v320
  %v2263 = vunpack.c.h.b16 %v320
  %v2264 = vunpack.c.l.b16 %v321
  %v2265 = vunpack.c.h.b16 %v321
  %v2266 = vunpack.c.l.b16 %v322
  %v2267 = vunpack.c.h.b16 %v322
  %v2268 = vunpack.c.l.b16 %v323
  %v2269 = vunpack.c.h.b16 %v323
  %v2270 = vunpack.c.l.b16 %v324
  %v2271 = vunpack.c.h.b16 %v324
  %v2272 = vunpack.c.l.b16 %v325
  %v2273 = vunpack.c.h.b16 %v325
  %v2274 = vunpack.c.l.b16 %v326
  %v2275 = vunpack.c.h.b16 %v326
  %v2276 = vunpack.c.l.b16 %v327
  %v2277 = vunpack.c.h.b16 %v327
  %v2278 = vunpack.c.l.b16 %v328
  %v2279 = vunpack.c.h.b16 %v328
  %v2280 = vunpack.c.l.b16 %v329
  %v2281 = vunpack.c.h.b16 %v329
  %v2282 = vunpack.c.l.b16 %v330
  %v2283 = vunpack.c.h.b16 %v330
  %v2284 = vunpack.c.l.b16 %v331
  %v2285 = vunpack.c.h.b16 %v331
  %v2286 = vunpack.c.l.b16 %v332
  %v2287 = vunpack.c.h.b16 %v332
  %v2288 = vunpack.c.l.b16 %v333
  %v2289 = vunpack.c.h.b16 %v333
  %v2290 = vunpack.c.l.b16 %v334
  %v2291 = vunpack.c.h.b16 %v334
  %v2292 = vunpack.c.l.b16 %v335
  %v2293 = vunpack.c.h.b16 %v335
  %v2294 = vunpack.c.l.b16 %v336
  %v2295 = vunpack.c.h.b16 %v336
  %v2296 = vunpack.c.l.b16 %v337
  %v2297 = vunpack.c.h.b16 %v337
  %v2298 = vunpack.c.l.b16 %v338
  %v2299 = vunpack.c.h.b16 %v338
  %v2300 = vunpack.c.l.b16 %v339
  %v2301 = vunpack.c.h.b16 %v339
  %v2302 = vunpack.c.l.b16 %v340
  %v2303 = vunpack.c.h.b16 %v340
  %v2304 = vunpack.c.l.b16 %v341
  %v2305 = vunpack.c.h.b16 %v341
  %v2306 = vunpack.c.l.b16 %v342
  %v2307 = vunpack.c.h.b16 %v342
  %v2308 = vunpack.c.l.b16 %v343
  %v2309 = vunpack.c.h.b16 %v343
  %v2310 = vunpack.c.l.b16 %v344
  %v2311 = vunpack.c.h.b16 %v344
  %v2312 = vunpack.c.l.b16 %v345
  %v2313 = vunpack.c.h.b16 %v345
  %v2314 = vunpack.c.l.b16 %v346
  %v2315 = vunpack.c.h.b16 %v346
  %v2316 = vunpack.c.l.b16 %v347
  %v2317 = vunpack.c.h.b16 %v347
  %v2318 = vunpack.c.l.b16 %v348
  %v2319 = vunpack.c.h.b16 %v348
  %v2320 = vunpack.c.l.b16 %v349
  %v2321 = vunpack.c.h.b16 %v349
  %v2322 = vunpack.c.l.b16 %v350
  %v2323 = vunpack.c.h.b16 %v350
  %v2324 = vunpack.c.l.b16 %v351
  %v2325 = vunpack.c.h.b16 %v351
  %v2326 = vunpack.c.l.b16 %v352
  %v2327 = vunpack.c.h.b16 %v352
  %v2328 = vunpack.c.l.b16 %v353
  %v2329 = vunpack.c.h.b16 %v353
  %v2330 = vunpack.c.l.b16 %v354
  %v2331 = vunpack.c.h.b16 %v354
  %v2332 = vunpack.c.l.b16 %v355
  %v2333 = vunpack.c.h.b16 %v355
  %v2334 = vunpack.c.l.b16 %v356
  %v2335 = vunpack.c.h.b16 %v356
  %v2336 = vunpack.c.l.b16 %v357
  %v2337 = vunpack.c.h.b16 %v357
  %v2338 = vunpack.c.l.b16 %v358
  %v2339 = vunpack.c.h.b16 %v358
  %v2340 = vunpack.c.l.b16 %v359
  %v2341 = vunpack.c.h.b16 %v359
  %v2342 = vunpack.c.l.b16 %v360
  %v2343 = vunpack.c.h.b16 %v360
  %v2344 = vunpack.c.l.b16 %v361
  %v2345 = vunpack.c.h.b16 %v361
  %v2346 = vunpack.c.l.b16 %v362
  %v2347 = vunpack.c.h.b16 %v362
  %v2348 = vunpack.c.l.b16 %v363
  %v2349 = vunpack.c.h.b16 %v363
  %v2350 = vunpack.c.l.b16 %v364
  %v2351 = vunpack.c.h.b16 %v364
  %v2352 = vunpack.c.l.b16 %v365
  %v2353 = vunpack.c.h.b16 %v365
  %v2354 = vunpack.c.l.b16 %v366
  %v2355 = vunpack.c.h.b16 %v366
  %v2356 = vunpack.c.l.b16 %v367
  %v2357 = vunpack.c.h.b16 %v367
  %v2358 = vunpack.c.l.b16 %v368
  %v2359 = vunpack.c.h.b16 %v368
  %v2360 = vunpack.c.l.b16 %v369
  %v2361 = vunpack.c.h.b16 %v369
  %v2362 = vunpack.c.l.b16 %v370
  %v2363 = vunpack.c.h.b16 %v370
  %v2364 = vunpack.c.l.b16 %v371
  %v2365 = vunpack.c.h.b16 %v371
  %v2366 = vunpack.c.l.b16 %v372
  %v2367 = vunpack.c.h.b16 %v372
  %v2368 = vunpack.c.l.b16 %v373
  %v2369 = vunpack.c.h.b16 %v373
  %v2370 = vunpack.c.l.b16 %v374
  %v2371 = vunpack.c.h.b16 %v374
  %v2372 = vunpack.c.l.b16 %v375
  %v2373 = vunpack.c.h.b16 %v375
  %v2374 = vunpack.c.l.b16 %v376
  %v2375 = vunpack.c.h.b16 %v376
  %v2376 = vunpack.c.l.b16 %v377
  %v2377 = vunpack.c.h.b16 %v377
  %v2378 = vunpack.c.l.b16 %v378
  %v2379 = vunpack.c.h.b16 %v378
  %v2380 = vunpack.c.l.b16 %v379
  %v2381 = vunpack.c.h.b16 %v379
  %v2382 = vunpack.c.l.b16 %v380
  %v2383 = vunpack.c.h.b16 %v380
  %v2384 = vunpack.c.l.b16 %v381
  %v2385 = vunpack.c.h.b16 %v381
  %v2386 = vunpack.c.l.b16 %v382
  %v2387 = vunpack.c.h.b16 %v382
  %v2388 = vunpack.c.l.b16 %v383
  %v2389 = vunpack.c.h.b16 %v383
  %v2390 = vunpack.c.l.b16 %v384
  %v2391 = vunpack.c.h.b16 %v384
  %v2392 = vunpack.c.l.b16 %v385
  %v2393 = vunpack.c.h.b16 %v385
  %v2394 = vunpack.c.l.b16 %v386
  %v2395 = vunpack.c.h.b16 %v386
  %v2396 = vunpack.c.l.b16 %v387
  %v2397 = vunpack.c.h.b16 %v387
  %v2398 = vunpack.c.l.b16 %v388
  %v2399 = vunpack.c.h.b16 %v388
  %v2400 = vunpack.c.l.b16 %v389
  %v2401 = vunpack.c.h.b16 %v389
  %v2402 = vunpack.c.l.b16 %v390
  %v2403 = vunpack.c.h.b16 %v390
  %v2404 = vunpack.c.l.b16 %v391
  %v2405 = vunpack.c.h.b16 %v391
  %v2406 = vunpack.c.l.b16 %v392
  %v2407 = vunpack.c.h.b16 %v392
  %v2408 = vunpack.c.l.b16 %v393
  %v2409 = vunpack.c.h.b16 %v393
  %v2410 = vunpack.c.l.b16 %v394
  %v2411 = vunpack.c.h.b16 %v394
  %v2412 = vunpack.c.l.b16 %v395
  %v2413 = vunpack.c.h.b16 %v395
  %v2414 = vunpack.c.l.b16 %v396
  %v2415 = vunpack.c.h.b16 %v396
  %v2416 = vunpack.c.l.b16 %v397
  %v2417 = vunpack.c.h.b16 %v397
  %v2418 = vunpack.c.l.b16 %v398
  %v2419 = vunpack.c.h.b16 %v398
  %v2420 = vunpack.c.l.b16 %v399
  %v2421 = vunpack.c.h.b16 %v399
  %v2422 = vunpack.c.l.b16 %v400
  %v2423 = vunpack.c.h.b16 %v400
  %v2424 = vunpack.c.l.b16 %v401
  %v2425 = vunpack.c.h.b16 %v401
  %v2426 = vunpack.c.l.b16 %v402
  %v2427 = vunpack.c.h.b16 %v402
  %v2428 = vunpack.c.l.b16 %v403
  %v2429 = vunpack.c.h.b16 %v403
  %v2430 = vunpack.c.l.b16 %v404
  %v2431 = vunpack.c.h.b16 %v404
  %v2432 = vunpack.c.l.b16 %v405
  %v2433 = vunpack.c.h.b16 %v405
  %v2434 = vunpack.c.l.b16 %v406
  %v2435 = vunpack.c.h.b16 %v406
  %v2436 = vunpack.c.l.b16 %v407
  %v2437 = vunpack.c.h.b16 %v407
  %v2438 = vunpack.c.l.b16 %v408
  %v2439 = vunpack.c.h.b16 %v408
  %v2440 = vunpack.c.l.b16 %v409
  %v2441 = vunpack.c.h.b16 %v409
  %v2442 = vunpack.c.l.b16 %v410
  %v2443 = vunpack.c.h.b16 %v410
  %v2444 = vunpack.c.l.b16 %v411
  %v2445 = vunpack.c.h.b16 %v411
  %v2446 = vunpack.c.l.b16 %v412
  %v2447 = vunpack.c.h.b16 %v412
  %v2448 = vunpack.c.l.b16 %v413
  %v2449 = vunpack.c.h.b16 %v413
  %v2450 = vunpack.c.l.b16 %v414
  %v2451 = vunpack.c.h.b16 %v414
  %v2452 = vunpack.c.l.b16 %v415
  %v2453 = vunpack.c.h.b16 %v415
  %v2454 = vunpack.c.l.b16 %v416
  %v2455 = vunpack.c.h.b16 %v416
  %v2456 = vunpack.c.l.b16 %v417
  %v2457 = vunpack.c.h.b16 %v417
  %v2458 = vunpack.c.l.b16 %v418
  %v2459 = vunpack.c.h.b16 %v418
  %v2460 = vunpack.c.l.b16 %v419
  %v2461 = vunpack.c.h.b16 %v419
  %v2462 = vunpack.c.l.b16 %v420
  %v2463 = vunpack.c.h.b16 %v420
  %v2464 = vunpack.c.l.b16 %v421
  %v2465 = vunpack.c.h.b16 %v421
  %v2466 = vunpack.c.l.b16 %v422
  %v2467 = vunpack.c.h.b16 %v422
  %v2468 = vunpack.c.l.b16 %v423
  %v2469 = vunpack.c.h.b16 %v423
  %v2470 = vunpack.c.l.b16 %v424
  %v2471 = vunpack.c.h.b16 %v424
  %v2472 = vunpack.c.l.b16 %v425
  %v2473 = vunpack.c.h.b16 %v425
  %v2474 = vunpack.c.l.b16 %v426
  %v2475 = vunpack.c.h.b16 %v426
  %v2476 = vunpack.c.l.b16 %v427
  %v2477 = vunpack.c.h.b16 %v427
  %v2478 = vunpack.c.l.b16 %v428
  %v2479 = vunpack.c.h.b16 %v428
  %v2480 = vunpack.c.l.b16 %v429
  %v2481 = vunpack.c.h.b16 %v429
  %v2482 = vunpack.c.l.b16 %v430
  %v2483 = vunpack.c.h.b16 %v430
  %v2484 = vunpack.c.l.b16 %v431
  %v2485 = vunpack.c.h.b16 %v431
  %v2486 = vunpack.c.l.b16 %v432
  %v2487 = vunpack.c.h.b16 %v432
  %v2488 = vunpack.c.l.b16 %v433
  %v2489 = vunpack.c.h.b16 %v433
  %v2490 = vunpack.c.l.b16 %v434
  %v2491 = vunpack.c.h.b16 %v434
  %v2492 = vunpack.c.l.b16 %v435
  %v2493 = vunpack.c.h.b16 %v435
  %v2494 = vunpack.c.l.b16 %v436
  %v2495 = vunpack.c.h.b16 %v436
  %v2496 = vunpack.c.l.b16 %v437
  %v2497 = vunpack.c.h.b16 %v437
  %v2498 = vunpack.c.l.b16 %v438
  %v2499 = vunpack.c.h.b16 %v438
  %v2500 = vunpack.c.l.b16 %v439
  %v2501 = vunpack.c.h.b16 %v439
  %v2502 = vunpack.c.l.b16 %v440
  %v2503 = vunpack.c.h.b16 %v440
  %v2504 = vunpack.c.l.b16 %v441
  %v2505 = vunpack.c.h.b16 %v441
  %v2506 = vunpack.c.l.b16 %v442
  %v2507 = vunpack.c.h.b16 %v442
  %v2508 = vunpack.c.l.b16 %v443
  %v2509 = vunpack.c.h.b16 %v443
  %v2510 = vunpack.c.l.b16 %v444
  %v2511 = vunpack.c.h.b16 %v444
  %v2512 = vunpack.c.l.b16 %v445
  %v2513 = vunpack.c.h.b16 %v445
  %v2514 = vunpack.c.l.b16 %v446
  %v2515 = vunpack.c.h.b16 %v446
  %v2516 = vunpack.c.l.b16 %v447
  %v2517 = vunpack.c.h.b16 %v447
  %v2518 = vunpack.c.l.b16 %v448
  %v2519 = vunpack.c.h.b16 %v448
  %v2520 = vunpack.c.l.b16 %v449
  %v2521 = vunpack.c.h.b16 %v449
  %v2522 = vunpack.c.l.b16 %v450
  %v2523 = vunpack.c.h.b16 %v450
  %v2524 = vunpack.c.l.b16 %v451
  %v2525 = vunpack.c.h.b16 %v451
  %v2526 = vunpack.c.l.b16 %v452
  %v2527 = vunpack.c.h.b16 %v452
  %v2528 = vunpack.c.l.b16 %v453
  %v2529 = vunpack.c.h.b16 %v453
  %v2530 = vunpack.c.l.b16 %v454
  %v2531 = vunpack.c.h.b16 %v454
  %v2532 = vunpack.c.l.b16 %v455
  %v2533 = vunpack.c.h.b16 %v455
  %v2534 = vunpack.c.l.b16 %v456
  %v2535 = vunpack.c.h.b16 %v456
  %v2536 = vunpack.c.l.b16 %v457
  %v2537 = vunpack.c.h.b16 %v457
  %v2538 = vunpack.c.l.b16 %v458
  %v2539 = vunpack.c.h.b16 %v458
  %v2540 = vunpack.c.l.b16 %v459
  %v2541 = vunpack.c.h.b16 %v459
  %v2542 = vunpack.c.l.b16 %v460
  %v2543 = vunpack.c.h.b16 %v460
  %v2544 = vunpack.c.l.b16 %v461
  %v2545 = vunpack.c.h.b16 %v461
  %v2546 = vunpack.c.l.b16 %v462
  %v2547 = vunpack.c.h.b16 %v462
  %v2548 = vunpack.c.l.b16 %v463
  %v2549 = vunpack.c.h.b16 %v463
  %v2550 = vunpack.c.l.b16 %v464
  %v2551 = vunpack.c.h.b16 %v464
  %v2552 = vunpack.c.l.b16 %v465
  %v2553 = vunpack.c.h.b16 %v465
  %v2554 = vunpack.c.l.b16 %v466
  %v2555 = vunpack.c.h.b16 %v466
  %v2556 = vunpack.c.l.b16 %v467
  %v2557 = vunpack.c.h.b16 %v467
  %v2558 = vunpack.c.l.b16 %v468
  %v2559 = vunpack.c.h.b16 %v468
  %v2560 = vunpack.c.l.b16 %v469
  %v2561 = vunpack.c.h.b16 %v469
  %v2562 = vunpack.c.l.b16 %v470
  %v2563 = vunpack.c.h.b16 %v470
  %v2564 = vunpack.c.l.b16 %v471
  %v2565 = vunpack.c.h.b16 %v471
  %v2566 = vunpack.c.l.b16 %v472
  %v2567 = vunpack.c.h.b16 %v472
  %v2568 = vunpack.c.l.b16 %v473
  %v2569 = vunpack.c.h.b16 %v473
  %v2570 = vunpack.c.l.b16 %v474
  %v2571 = vunpack.c.h.b16 %v474
  %v2572 = vunpack.c.l.b16 %v475
  %v2573 = vunpack.c.h.b16 %v475
  %v2574 = vunpack.c.l.b16 %v476
  %v2575 = vunpack.c.h.b16 %v476
  %v2576 = vunpack.c.l.b16 %v477
  %v2577 = vunpack.c.h.b16 %v477
  %v2578 = vunpack.c.l.b16 %v478
  %v2579 = vunpack.c.h.b16 %v478
  %v2580 = vunpack.c.l.b16 %v479
  %v2581 = vunpack.c.h.b16 %v479
  %v2582 = vunpack.c.l.b16 %v480
  %v2583 = vunpack.c.h.b16 %v480
  %v2584 = vunpack.c.l.b16 %v481
  %v2585 = vunpack.c.h.b16 %v481
  %v2586 = vunpack.c.l.b16 %v482
  %v2587 = vunpack.c.h.b16 %v482
  %v2588 = vunpack.c.l.b16 %v483
  %v2589 = vunpack.c.h.b16 %v483
  %v2590 = vunpack.c.l.b16 %v484
  %v2591 = vunpack.c.h.b16 %v484
  %v2592 = vunpack.c.l.b16 %v485
  %v2593 = vunpack.c.h.b16 %v485
  %v2594 = vunpack.c.l.b16 %v486
  %v2595 = vunpack.c.h.b16 %v486
  %v2596 = vunpack.c.l.b16 %v487
  %v2597 = vunpack.c.h.b16 %v487
  %v2598 = vunpack.c.l.b16 %v488
  %v2599 = vunpack.c.h.b16 %v488
  %v2600 = vunpack.c.l.b16 %v489
  %v2601 = vunpack.c.h.b16 %v489
  %v2602 = vunpack.c.l.b16 %v490
  %v2603 = vunpack.c.h.b16 %v490
  %v2604 = vunpack.c.l.b16 %v491
  %v2605 = vunpack.c.h.b16 %v491
  %v2606 = vunpack.c.l.b16 %v492
  %v2607 = vunpack.c.h.b16 %v492
  %v2608 = vunpack.c.l.b16 %v493
  %v2609 = vunpack.c.h.b16 %v493
  %v2610 = vunpack.c.l.b16 %v494
  %v2611 = vunpack.c.h.b16 %v494
  %v2612 = vunpack.c.l.b16 %v495
  %v2613 = vunpack.c.h.b16 %v495
  %v2614 = vunpack.c.l.b16 %v496
  %v2615 = vunpack.c.h.b16 %v496
  %v2616 = vunpack.c.l.b16 %v497
  %v2617 = vunpack.c.h.b16 %v497
  %v2618 = vunpack.c.l.b16 %v498
  %v2619 = vunpack.c.h.b16 %v498
  %v2620 = vunpack.c.l.b16 %v499
  %v2621 = vunpack.c.h.b16 %v499
  %v2622 = vunpack.c.l.b16 %v500
  %v2623 = vunpack.c.h.b16 %v500
  %v2624 = vunpack.c.l.b16 %v501
  %v2625 = vunpack.c.h.b16 %v501
  %v2626 = vunpack.c.l.b16 %v502
  %v2627 = vunpack.c.h.b16 %v502
  %v2628 = vunpack.c.l.b16 %v503
  %v2629 = vunpack.c.h.b16 %v503
  %v2630 = vunpack.c.l.b16 %v504
  %v2631 = vunpack.c.h.b16 %v504
  %v2632 = vunpack.c.l.b16 %v505
  %v2633 = vunpack.c.h.b16 %v505
  %v2634 = vunpack.c.l.b16 %v506
  %v2635 = vunpack.c.h.b16 %v506
  %v2636 = vunpack.c.l.b16 %v507
  %v2637 = vunpack.c.h.b16 %v507
  %v2638 = vunpack.c.l.b16 %v508
  %v2639 = vunpack.c.h.b16 %v508
  %v2640 = vunpack.c.l.b16 %v509
  %v2641 = vunpack.c.h.b16 %v509
  %v2642 = vunpack.c.l.b16 %v510
  %v2643 = vunpack.c.h.b16 %v510
  %v2644 = vunpack.c.l.b16 %v511
  %v2645 = vunpack.c.h.b16 %v511
  %v2646 = vunpack.c.l.b16 %v512
  %v2647 = vunpack.c.h.b16 %v512
  %v2648 = vunpack.c.l.b16 %v513
  %v2649 = vunpack.c.h.b16 %v513
  %v2650 = vunpack.c.l.b16 %v514
  %v2651 = vunpack.c.h.b16 %v514
  %v2652 = vunpack.c.l.b16 %v515
  %v2653 = vunpack.c.h.b16 %v515
  %v2654 = vunpack.c.l.b16 %v516
  %v2655 = vunpack.c.h.b16 %v516
  %v2656 = vunpack.c.l.b16 %v517
  %v2657 = vunpack.c.h.b16 %v517
  %v2658 = vunpack.c.l.b16 %v518
  %v2659 = vunpack.c.h.b16 %v518
  %v2660 = vunpack.c.l.b16 %v519
  %v2661 = vunpack.c.h.b16 %v519
  %v2662 = vunpack.c.l.b16 %v520
  %v2663 = vunpack.c.h.b16 %v520
  %v2664 = vunpack.c.l.b16 %v521
  %v2665 = vunpack.c.h.b16 %v521
  %v2666 = vunpack.c.l.b16 %v522
  %v2667 = vunpack.c.h.b16 %v522
  %v2668 = vunpack.c.l.b16 %v523
  %v2669 = vunpack.c.h.b16 %v523
  %v2670 = vunpack.c.l.b16 %v524
  %v2671 = vunpack.c.h.b16 %v524
  %v2672 = vunpack.c.l.b16 %v525
  %v2673 = vunpack.c.h.b16 %v525
  %v2674 = vunpack.c.l.b16 %v526
  %v2675 = vunpack.c.h.b16 %v526
  %v2676 = vunpack.c.l.b16 %v527
  %v2677 = vunpack.c.h.b16 %v527
  %v2678 = vunpack.c.l.b16 %v528
  %v2679 = vunpack.c.h.b16 %v528
  %v2680 = vunpack.c.l.b16 %v529
  %v2681 = vunpack.c.h.b16 %v529
  %v2682 = vunpack.c.l.b16 %v530
  %v2683 = vunpack.c.h.b16 %v530
  %v2684 = vunpack.c.l.b16 %v531
  %v2685 = vunpack.c.h.b16 %v531
  %v2686 = vunpack.c.l.b16 %v532
  %v2687 = vunpack.c.h.b16 %v532
  %v2688 = vunpack.c.l.b16 %v533
  %v2689 = vunpack.c.h.b16 %v533
  %v2690 = vunpack.c.l.b16 %v534
  %v2691 = vunpack.c.h.b16 %v534
  %v2692 = vunpack.c.l.b16 %v535
  %v2693 = vunpack.c.h.b16 %v535
  %v2694 = vunpack.c.l.b16 %v536
  %v2695 = vunpack.c.h.b16 %v536
  %v2696 = vunpack.c.l.b16 %v537
  %v2697 = vunpack.c.h.b16 %v537
  %v2698 = vunpack.c.l.b16 %v538
  %v2699 = vunpack.c.h.b16 %v538
  %v2700 = vunpack.c.l.b16 %v539
  %v2701 = vunpack.c.h.b16 %v539
  %v2702 = vunpack.c.l.b16 %v540
  %v2703 = vunpack.c.h.b16 %v540
  %v2704 = vunpack.c.l.b16 %v541
  %v2705 = vunpack.c.h.b16 %v541
  %v2706 = vunpack.c.l.b16 %v542
  %v2707 = vunpack.c.h.b16 %v542
  %v2708 = vunpack.c.l.b16 %v543
  %v2709 = vunpack.c.h.b16 %v543
  %v2710 = vunpack.c.l.b16 %v544
  %v2711 = vunpack.c.h.b16 %v544
  %v2712 = vunpack.c.l.b16 %v545
  %v2713 = vunpack.c.h.b16 %v545
  %v2714 = vunpack.c.l.b16 %v546
  %v2715 = vunpack.c.h.b16 %v546
  %v2716 = vunpack.c.l.b16 %v547
  %v2717 = vunpack.c.h.b16 %v547
  %v2718 = vunpack.c.l.b16 %v548
  %v2719 = vunpack.c.h.b16 %v548
  %v2720 = vunpack.c.l.b16 %v549
  %v2721 = vunpack.c.h.b16 %v549
  %v2722 = vunpack.c.l.b16 %v550
  %v2723 = vunpack.c.h.b16 %v550
  %v2724 = vunpack.c.l.b16 %v551
  %v2725 = vunpack.c.h.b16 %v551
  %v2726 = vunpack.c.l.b16 %v552
  %v2727 = vunpack.c.h.b16 %v552
  %v2728 = vunpack.c.l.b16 %v553
  %v2729 = vunpack.c.h.b16 %v553
  %v2730 = vunpack.c.l.b16 %v554
  %v2731 = vunpack.c.h.b16 %v554
  %v2732 = vunpack.c.l.b16 %v555
  %v2733 = vunpack.c.h.b16 %v555
  %v2734 = vunpack.c.l.b16 %v556
  %v2735 = vunpack.c.h.b16 %v556
  %v2736 = vunpack.c.l.b16 %v557
  %v2737 = vunpack.c.h.b16 %v557
  %v2738 = vunpack.c.l.b16 %v558
  %v2739 = vunpack.c.h.b16 %v558
  %v2740 = vunpack.c.l.b16 %v559
  %v2741 = vunpack.c.h.b16 %v559
  %v2742 = vunpack.c.l.b16 %v560
  %v2743 = vunpack.c.h.b16 %v560
  %v2744 = vunpack.c.l.b16 %v561
  %v2745 = vunpack.c.h.b16 %v561
  %v2746 = vunpack.c.l.b16 %v562
  %v2747 = vunpack.c.h.b16 %v562
  %v2748 = vunpack.c.l.b16 %v563
  %v2749 = vunpack.c.h.b16 %v563
  %v2750 = vunpack.c.l.b16 %v564
  %v2751 = vunpack.c.h.b16 %v564
  %v2752 = vunpack.c.l.b16 %v565
  %v2753 = vunpack.c.h.b16 %v565
  %v2754 = vunpack.c.l.b16 %v566
  %v2755 = vunpack.c.h.b16 %v566
  %v2756 = vunpack.c.l.b16 %v567
  %v2757 = vunpack.c.h.b16 %v567
  %v2758 = vunpack.c.l.b16 %v568
  %v2759 = vunpack.c.h.b16 %v568
  %v2760 = vunpack.c.l.b16 %v569
  %v2761 = vunpack.c.h.b16 %v569
  %v2762 = vunpack.c.l.b16 %v570
  %v2763 = vunpack.c.h.b16 %v570
  %v2764 = vunpack.c.l.b16 %v571
  %v2765 = vunpack.c.h.b16 %v571
  %v2766 = vunpack.c.l.b16 %v572
  %v2767 = vunpack.c.h.b16 %v572
  %v2768 = vunpack.c.l.b16 %v573
  %v2769 = vunpack.c.h.b16 %v573
  %v2770 = vunpack.c.l.b16 %v574
  %v2771 = vunpack.c.h.b16 %v574
  %v2772 = vunpack.c.l.b16 %v575
  %v2773 = vunpack.c.h.b16 %v575
  %v2774 = vunpack.c.l.b16 %v576
  %v2775 = vunpack.c.h.b16 %v576
  %v2776 = vunpack.c.l.b16 %v577
  %v2777 = vunpack.c.h.b16 %v577
  %v2778 = vunpack.c.l.b16 %v578
  %v2779 = vunpack.c.h.b16 %v578
  %v2780 = vunpack.c.l.b16 %v579
  %v2781 = vunpack.c.h.b16 %v579
  %v2782 = vunpack.c.l.b16 %v580
  %v2783 = vunpack.c.h.b16 %v580
  %v2784 = vunpack.c.l.b16 %v581
  %v2785 = vunpack.c.h.b16 %v581
  %v2786 = vunpack.c.l.b16 %v582
  %v2787 = vunpack.c.h.b16 %v582
  %v2788 = vunpack.c.l.b16 %v583
  %v2789 = vunpack.c.h.b16 %v583
  %v2790 = vunpack.c.l.b16 %v584
  %v2791 = vunpack.c.h.b16 %v584
  %v2792 = vunpack.c.l.b16 %v585
  %v2793 = vunpack.c.h.b16 %v585
  %v2794 = vunpack.c.l.b16 %v586
  %v2795 = vunpack.c.h.b16 %v586
  %v2796 = vunpack.c.l.b16 %v587
  %v2797 = vunpack.c.h.b16 %v587
  %v2798 = vunpack.c.l.b16 %v588
  %v2799 = vunpack.c.h.b16 %v588
  %v2800 = vunpack.c.l.b16 %v589
  %v2801 = vunpack.c.h.b16 %v589
  %v2802 = vunpack.c.l.b16 %v590
  %v2803 = vunpack.c.h.b16 %v590
  %v2804 = vunpack.c.l.b16 %v591
  %v2805 = vunpack.c.h.b16 %v591
  %v2806 = vunpack.c.l.b16 %v592
  %v2807 = vunpack.c.h.b16 %v592
  %v2808 = vunpack.c.l.b16 %v593
  %v2809 = vunpack.c.h.b16 %v593
  %v2810 = vunpack.c.l.b16 %v594
  %v2811 = vunpack.c.h.b16 %v594
  %v2812 = vunpack.c.l.b16 %v595
  %v2813 = vunpack.c.h.b16 %v595
  %v2814 = vunpack.c.l.b16 %v596
  %v2815 = vunpack.c.h.b16 %v596
  %v2816 = vunpack.c.l.b16 %v597
  %v2817 = vunpack.c.h.b16 %v597
  %v2818 = vunpack.c.l.b16 %v598
  %v2819 = vunpack.c.h.b16 %v598
  %v2820 = vunpack.c.l.b16 %v599
  %v2821 = vunpack.c.h.b16 %v599
  %v2822 = vunpack.c.l.b16 %v600
  %v2823 = vunpack.c.h.b16 %v600
  %v2824 = vunpack.c.l.b16 %v601
  %v2825 = vunpack.c.h.b16 %v601
  %v2826 = vunpack.c.l.b16 %v602
  %v2827 = vunpack.c.h.b16 %v602
  %v2828 = vunpack.c.l.b16 %v603
  %v2829 = vunpack.c.h.b16 %v603
  %v2830 = vunpack.c.l.b16 %v604
  %v2831 = vunpack.c.h.b16 %v604
  %v2832 = vunpack.c.l.b16 %v605
  %v2833 = vunpack.c.h.b16 %v605
  %v2834 = vunpack.c.l.b16 %v606
  %v2835 = vunpack.c.h.b16 %v606
  %v2836 = vunpack.c.l.b16 %v607
  %v2837 = vunpack.c.h.b16 %v607
  %v2838 = vunpack.c.l.b16 %v608
  %v2839 = vunpack.c.h.b16 %v608
  %v2840 = vunpack.c.l.b16 %v609
  %v2841 = vunpack.c.h.b16 %v609
  %v2842 = vunpack.c.l.b16 %v610
  %v2843 = vunpack.c.h.b16 %v610
  %v2844 = vunpack.c.l.b16 %v611
  %v2845 = vunpack.c.h.b16 %v611
  %v2846 = vunpack.c.l.b16 %v612
  %v2847 = vunpack.c.h.b16 %v612
  %v2848 = vunpack.c.l.b16 %v613
  %v2849 = vunpack.c.h.b16 %v613
  %v2850 = vunpack.c.l.b16 %v614
  %v2851 = vunpack.c.h.b16 %v614
  %v2852 = vunpack.c.l.b16 %v615
  %v2853 = vunpack.c.h.b16 %v615
  %v2854 = vunpack.c.l.b16 %v616
  %v2855 = vunpack.c.h.b16 %v616
  %v2856 = vunpack.c.l.b16 %v617
  %v2857 = vunpack.c.h.b16 %v617
  %v2858 = vunpack.c.l.b16 %v618
  %v2859 = vunpack.c.h.b16 %v618
  %v2860 = vunpack.c.l.b16 %v619
  %v2861 = vunpack.c.h.b16 %v619
  %v2862 = vunpack.c.l.b16 %v620
  %v2863 = vunpack.c.h.b16 %v620
  %v2864 = vunpack.c.l.b16 %v621
  %v2865 = vunpack.c.h.b16 %v621
  %v2866 = vunpack.c.l.b16 %v622
  %v2867 = vunpack.c.h.b16 %v622
  %v2868 = vunpack.c.l.b16 %v623
  %v2869 = vunpack.c.h.b16 %v623
  %v2870 = vunpack.c.l.b16 %v624
  %v2871 = vunpack.c.h.b16 %v624
  %v2872 = vunpack.c.l.b16 %v625
  %v2873 = vunpack.c.h.b16 %v625
  %v2874 = vunpack.c.l.b16 %v626
  %v2875 = vunpack.c.h.b16 %v626
  %v2876 = vunpack.c.l.b16 %v627
  %v2877 = vunpack.c.h.b16 %v627
  %v2878 = vunpack.c.l.b16 %v628
  %v2879 = vunpack.c.h.b16 %v628
  %v2880 = vunpack.c.l.b16 %v629
  %v2881 = vunpack.c.h.b16 %v629
  %v2882 = vunpack.c.l.b16 %v630
  %v2883 = vunpack.c.h.b16 %v630
  %v2884 = vunpack.c.l.b16 %v631
  %v2885 = vunpack.c.h.b16 %v631
  %v2886 = vunpack.c.l.b16 %v632
  %v2887 = vunpack.c.h.b16 %v632
  %v2888 = vunpack.c.l.b16 %v633
  %v2889 = vunpack.c.h.b16 %v633
  %v2890 = vunpack.c.l.b16 %v634
  %v2891 = vunpack.c.h.b16 %v634
  %v2892 = vunpack.c.l.b16 %v635
  %v2893 = vunpack.c.h.b16 %v635
  %v2894 = vunpack.c.l.b16 %v636
  %v2895 = vunpack.c.h.b16 %v636
  %v2896 = vunpack.c.l.b16 %v637
  %v2897 = vunpack.c.h.b16 %v637
  %v2898 = vunpack.c.l.b16 %v638
  %v2899 = vunpack.c.h.b16 %v638
  %v2900 = vunpack.c.l.b16 %v639
  %v2901 = vunpack.c.h.b16 %v639
  %v2902 = vunpack.c.l.b16 %v640
  %v2903 = vunpack.c.h.b16 %v640
  %v2904 = vunpack.c.l.b16 %v641
  %v2905 = vunpack.c.h.b16 %v641
  %v2906 = vunpack.c.l.b16 %v642
  %v2907 = vunpack.c.h.b16 %v642
  %v2908 = vunpack.c.l.b16 %v643
  %v2909 = vunpack.c.h.b16 %v643
  %v2910 = vunpack.c.l.b16 %v644
  %v2911 = vunpack.c.h.b16 %v644
  %v2912 = vunpack.c.l.b16 %v645
  %v2913 = vunpack.c.h.b16 %v645
  %v2914 = vunpack.c.l.b16 %v646
  %v2915 = vunpack.c.h.b16 %v646
  %v2916 = vunpack.c.l.b16 %v647
  %v2917 = vunpack.c.h.b16 %v647
  %v2918 = vunpack.c.l.b16 %v648
  %v2919 = vunpack.c.h.b16 %v648
  %v2920 = vunpack.c.l.b16 %v649
  %v2921 = vunpack.c.h.b16 %v649
  %v2922 = vunpack.c.l.b16 %v650
  %v2923 = vunpack.c.h.b16 %v650
  %v2924 = vunpack.c.l.b16 %v651
  %v2925 = vunpack.c.h.b16 %v651
  %v2926 = vunpack.c.l.b16 %v652
  %v2927 = vunpack.c.h.b16 %v652
  %v2928 = vunpack.c.l.b16 %v653
  %v2929 = vunpack.c.h.b16 %v653
  %v2930 = vunpack.c.l.b16 %v654
  %v2931 = vunpack.c.h.b16 %v654
  %v2932 = vunpack.c.l.b16 %v655
  %v2933 = vunpack.c.h.b16 %v655
  %v2934 = vunpack.c.l.b16 %v656
  %v2935 = vunpack.c.h.b16 %v656
  %v2936 = vunpack.c.l.b16 %v657
  %v2937 = vunpack.c.h.b16 %v657
  %v2938 = vunpack.c.l.b16 %v658
  %v2939 = vunpack.c.h.b16 %v658
  %v2940 = vunpack.c.l.b16 %v659
  %v2941 = vunpack.c.h.b16 %v659
  %v2942 = vunpack.c.l.b16 %v660
  %v2943 = vunpack.c.h.b16 %v660
  %v2944 = vunpack.c.l.b16 %v661
  %v2945 = vunpack.c.h.b16 %v661
  %v2946 = vunpack.c.l.b16 %v662
  %v2947 = vunpack.c.h.b16 %v662
  %v2948 = vunpack.c.l.b16 %v663
  %v2949 = vunpack.c.h.b16 %v663
  %v2950 = vunpack.c.l.b16 %v664
  %v2951 = vunpack.c.h.b16 %v664
  %v2952 = vunpack.c.l.b16 %v665
  %v2953 = vunpack.c.h.b16 %v665
  %v2954 = vunpack.c.l.b16 %v666
  %v2955 = vunpack.c.h.b16 %v666
  %v2956 = vunpack.c.l.b16 %v667
  %v2957 = vunpack.c.h.b16 %v667
  %v2958 = vunpack.c.l.b16 %v668
  %v2959 = vunpack.c.h.b16 %v668
  %v2960 = vunpack.c.l.b16 %v669
  %v2961 = vunpack.c.h.b16 %v669
  %v2962 = vunpack.c.l.b16 %v670
  %v2963 = vunpack.c.h.b16 %v670
  %v2964 = vunpack.c.l.b16 %v671
  %v2965 = vunpack.c.h.b16 %v671
  %v2966 = vunpack.c.l.b16 %v672
  %v2967 = vunpack.c.h.b16 %v672
  %v2968 = vunpack.c.l.b16 %v673
  %v2969 = vunpack.c.h.b16 %v673
  %v2970 = vunpack.c.l.b16 %v674
  %v2971 = vunpack.c.h.b16 %v674
  %v2972 = vunpack.c.l.b16 %v675
  %v2973 = vunpack.c.h.b16 %v675
  %v2974 = vunpack.c.l.b16 %v676
  %v2975 = vunpack.c.h.b16 %v676
  %v2976 = vunpack.c.l.b16 %v677
  %v2977 = vunpack.c.h.b16 %v677
  %v2978 = vunpack.c.l.b16 %v678
  %v2979 = vunpack.c.h.b16 %v678
  %v2980 = vunpack.c.l.b16 %v679
  %v2981 = vunpack.c.h.b16 %v679
  %v2982 = vunpack.c.l.b16 %v680
  %v2983 = vunpack.c.h.b16 %v680
  %v2984 = vunpack.c.l.b16 %v681
  %v2985 = vunpack.c.h.b16 %v681
  %v2986 = vunpack.c.l.b16 %v682
  %v2987 = vunpack.c.h.b16 %v682
  %v2988 = vunpack.c.l.b16 %v683
  %v2989 = vunpack.c.h.b16 %v683
  %v2990 = vunpack.c.l.b16 %v684
  %v2991 = vunpack.c.h.b16 %v684
  %v2992 = vunpack.c.l.b16 %v685
  %v2993 = vunpack.c.h.b16 %v685
  %v2994 = vunpack.c.l.b16 %v686
  %v2995 = vunpack.c.h.b16 %v686
  %v2996 = vunpack.c.l.b16 %v687
  %v2997 = vunpack.c.h.b16 %v687
  %v2998 = vunpack.c.l.b16 %v688
  %v2999 = vunpack.c.h.b16 %v688
  %v3000 = vunpack.c.l.b16 %v689
  %v3001 = vunpack.c.h.b16 %v689
  %v3002 = vunpack.c.l.b16 %v690
  %v3003 = vunpack.c.h.b16 %v690
  %v3004 = vunpack.c.l.b16 %v691
  %v3005 = vunpack.c.h.b16 %v691
  %v3006 = vunpack.c.l.b16 %v692
  %v3007 = vunpack.c.h.b16 %v692
  %v3008 = vunpack.c.l.b16 %v693
  %v3009 = vunpack.c.h.b16 %v693
  %v3010 = vunpack.c.l.b16 %v694
  %v3011 = vunpack.c.h.b16 %v694
  %v3012 = vunpack.c.l.b16 %v695
  %v3013 = vunpack.c.h.b16 %v695
  %v3014 = vunpack.c.l.b16 %v696
  %v3015 = vunpack.c.h.b16 %v696
  %v3016 = vunpack.c.l.b16 %v697
  %v3017 = vunpack.c.h.b16 %v697
  %v3018 = vunpack.c.l.b16 %v698
  %v3019 = vunpack.c.h.b16 %v698
  %v3020 = vunpack.c.l.b16 %v699
  %v3021 = vunpack.c.h.b16 %v699
  %v3022 = vunpack.c.l.b16 %v700
  %v3023 = vunpack.c.h.b16 %v700
  %v3024 = vunpack.c.l.b16 %v701
  %v3025 = vunpack.c.h.b16 %v701
  %v3026 = vunpack.c.l.b16 %v702
  %v3027 = vunpack.c.h.b16 %v702
  %v3028 = vunpack.c.l.b16 %v703
  %v3029 = vunpack.c.h.b16 %v703
  %v3030 = vunpack.c.l.b16 %v704
  %v3031 = vunpack.c.h.b16 %v704
  %v3032 = vunpack.c.l.b16 %v705
  %v3033 = vunpack.c.h.b16 %v705
  %v3034 = vunpack.c.l.b16 %v706
  %v3035 = vunpack.c.h.b16 %v706
  %v3036 = vunpack.c.l.b16 %v707
  %v3037 = vunpack.c.h.b16 %v707
  %v3038 = vunpack.c.l.b16 %v708
  %v3039 = vunpack.c.h.b16 %v708
  %v3040 = vunpack.c.l.b16 %v709
  %v3041 = vunpack.c.h.b16 %v709
  %v3042 = vunpack.c.l.b16 %v710
  %v3043 = vunpack.c.h.b16 %v710
  %v3044 = vunpack.c.l.b16 %v711
  %v3045 = vunpack.c.h.b16 %v711
  %v3046 = vunpack.c.l.b16 %v712
  %v3047 = vunpack.c.h.b16 %v712
  %v3048 = vunpack.c.l.b16 %v713
  %v3049 = vunpack.c.h.b16 %v713
  %v3050 = vunpack.c.l.b16 %v714
  %v3051 = vunpack.c.h.b16 %v714
  %v3052 = vunpack.c.l.b16 %v715
  %v3053 = vunpack.c.h.b16 %v715
  %v3054 = vunpack.c.l.b16 %v716
  %v3055 = vunpack.c.h.b16 %v716
  %v3056 = vunpack.c.l.b16 %v717
  %v3057 = vunpack.c.h.b16 %v717
  %v3058 = vunpack.c.l.b16 %v718
  %v3059 = vunpack.c.h.b16 %v718
  %v3060 = vunpack.c.l.b16 %v719
  %v3061 = vunpack.c.h.b16 %v719
  %v3062 = vunpack.c.l.b16 %v720
  %v3063 = vunpack.c.h.b16 %v720
  %v3064 = vunpack.c.l.b16 %v721
  %v3065 = vunpack.c.h.b16 %v721
  %v3066 = vunpack.c.l.b16 %v722
  %v3067 = vunpack.c.h.b16 %v722
  %v3068 = vunpack.c.l.b16 %v723
  %v3069 = vunpack.c.h.b16 %v723
  %v3070 = vunpack.c.l.b16 %v724
  %v3071 = vunpack.c.h.b16 %v724
  %v3072 = vunpack.c.l.b16 %v725
  %v3073 = vunpack.c.h.b16 %v725
  %v3074 = vunpack.c.l.b16 %v726
  %v3075 = vunpack.c.h.b16 %v726
  %v3076 = vunpack.c.l.b16 %v727
  %v3077 = vunpack.c.h.b16 %v727
  %v3078 = vunpack.c.l.b16 %v728
  %v3079 = vunpack.c.h.b16 %v728
  %v3080 = vunpack.c.l.b16 %v729
  %v3081 = vunpack.c.h.b16 %v729
  %v3082 = vunpack.c.l.b16 %v730
  %v3083 = vunpack.c.h.b16 %v730
  %v3084 = vunpack.c.l.b16 %v731
  %v3085 = vunpack.c.h.b16 %v731
  %v3086 = vunpack.c.l.b16 %v732
  %v3087 = vunpack.c.h.b16 %v732
  %v3088 = vunpack.c.l.b16 %v733
  %v3089 = vunpack.c.h.b16 %v733
  %v3090 = vunpack.c.l.b16 %v734
  %v3091 = vunpack.c.h.b16 %v734
  %v3092 = vunpack.c.l.b16 %v735
  %v3093 = vunpack.c.h.b16 %v735
  %v3094 = vunpack.c.l.b16 %v736
  %v3095 = vunpack.c.h.b16 %v736
  %v3096 = vunpack.c.l.b16 %v737
  %v3097 = vunpack.c.h.b16 %v737
  %v3098 = vunpack.c.l.b16 %v738
  %v3099 = vunpack.c.h.b16 %v738
  %v3100 = vunpack.c.l.b16 %v739
  %v3101 = vunpack.c.h.b16 %v739
  %v3102 = vunpack.c.l.b16 %v740
  %v3103 = vunpack.c.h.b16 %v740
  %v3104 = vunpack.c.l.b16 %v741
  %v3105 = vunpack.c.h.b16 %v741
  %v3106 = vunpack.c.l.b16 %v742
  %v3107 = vunpack.c.h.b16 %v742
  %v3108 = vunpack.c.l.b16 %v743
  %v3109 = vunpack.c.h.b16 %v743
  %v3110 = vunpack.c.l.b16 %v744
  %v3111 = vunpack.c.h.b16 %v744
  %v3112 = vunpack.c.l.b16 %v745
  %v3113 = vunpack.c.h.b16 %v745
  %v3114 = vunpack.c.l.b16 %v746
  %v3115 = vunpack.c.h.b16 %v746
  %v3116 = vunpack.c.l.b16 %v747
  %v3117 = vunpack.c.h.b16 %v747
  %v3118 = vunpack.c.l.b16 %v748
  %v3119 = vunpack.c.h.b16 %v748
  %v3120 = vunpack.c.l.b16 %v749
  %v3121 = vunpack.c.h.b16 %v749
  %v3122 = vunpack.c.l.b16 %v750
  %v3123 = vunpack.c.h.b16 %v750
  %v3124 = vunpack.c.l.b16 %v751
  %v3125 = vunpack.c.h.b16 %v751
  %v3126 = vunpack.c.l.b16 %v752
  %v3127 = vunpack.c.h.b16 %v752
  %v3128 = vunpack.c.l.b16 %v753
  %v3129 = vunpack.c.h.b16 %v753
  %v3130 = vunpack.c.l.b16 %v754
  %v3131 = vunpack.c.h.b16 %v754
  %v3132 = vunpack.c.l.b16 %v755
  %v3133 = vunpack.c.h.b16 %v755
  %v3134 = vunpack.c.l.b16 %v756
  %v3135 = vunpack.c.h.b16 %v756
  %v3136 = vunpack.c.l.b16 %v757
  %v3137 = vunpack.c.h.b16 %v757
  %v3138 = vunpack.c.l.b16 %v758
  %v3139 = vunpack.c.h.b16 %v758
  %v3140 = vunpack.c.l.b16 %v759
  %v3141 = vunpack.c.h.b16 %v759
  %v3142 = vunpack.c.l.b16 %v760
  %v3143 = vunpack.c.h.b16 %v760
  %v3144 = vunpack.c.l.b16 %v761
  %v3145 = vunpack.c.h.b16 %v761
  %v3146 = vunpack.c.l.b16 %v762
  %v3147 = vunpack.c.h.b16 %v762
  %v3148 = vunpack.c.l.b16 %v763
  %v3149 = vunpack.c.h.b16 %v763
  %v3150 = vunpack.c.l.b16 %v764
  %v3151 = vunpack.c.h.b16 %v764
  %v3152 = vunpack.c.l.b16 %v765
  %v3153 = vunpack.c.h.b16 %v765
  %v3154 = vunpack.c.l.b16 %v766
  %v3155 = vunpack.c.h.b16 %v766
  %v3156 = vunpack.c.l.b16 %v767
  %v3157 = vunpack.c.h.b16 %v767
  %v3158 = vunpack.c.l.b16 %v768
  %v3159 = vunpack.c.h.b16 %v768
  %v3160 = vunpack.c.l.b16 %v769
  %v3161 = vunpack.c.h.b16 %v769
  %v3162 = vunpack.c.l.b16 %v770
  %v3163 = vunpack.c.h.b16 %v770
  %v3164 = vunpack.c.l.b16 %v771
  %v3165 = vunpack.c.h.b16 %v771
  %v3166 = vunpack.c.l.b16 %v772
  %v3167 = vunpack.c.h.b16 %v772
  %v3168 = vunpack.c.l.b16 %v773
  %v3169 = vunpack.c.h.b16 %v773
  %v3170 = vunpack.c.l.b16 %v774
  %v3171 = vunpack.c.h.b16 %v774
  %v3172 = vunpack.c.l.b16 %v775
  %v3173 = vunpack.c.h.b16 %v775
  %v3174 = vunpack.c.l.b16 %v776
  %v3175 = vunpack.c.h.b16 %v776
  %v3176 = vunpack.c.l.b16 %v777
  %v3177 = vunpack.c.h.b16 %v777
  %v3178 = vunpack.c.l.b16 %v778
  %v3179 = vunpack.c.h.b16 %v778
  %v3180 = vunpack.c.l.b16 %v779
  %v3181 = vunpack.c.h.b16 %v779
  %v3182 = vunpack.c.l.b16 %v780
  %v3183 = vunpack.c.h.b16 %v780
  %v3184 = vunpack.c.l.b16 %v781
  %v3185 = vunpack.c.h.b16 %v781
  %v3186 = vunpack.c.l.b16 %v782
  %v3187 = vunpack.c.h.b16 %v782
  %v3188 = vunpack.c.l.b16 %v783
  %v3189 = vunpack.c.h.b16 %v783
  %v3190 = vunpack.c.l.b16 %v784
  %v3191 = vunpack.c.h.b16 %v784
  %v3192 = vunpack.c.l.b16 %v785
  %v3193 = vunpack.c.h.b16 %v785
  %v3194 = vunpack.c.l.b16 %v786
  %v3195 = vunpack.c.h.b16 %v786
  %v3196 = vunpack.c.l.b16 %v787
  %v3197 = vunpack.c.h.b16 %v787
  %v3198 = vunpack.c.l.b16 %v788
  %v3199 = vunpack.c.h.b16 %v788
  %v3200 = vunpack.c.l.b16 %v789
  %v3201 = vunpack.c.h.b16 %v789
  %v3202 = vunpack.c.l.b16 %v790
  %v3203 = vunpack.c.h.b16 %v790
  %v3204 = vunpack.c.l.b16 %v791
  %v3205 = vunpack.c.h.b16 %v791
  %v3206 = vunpack.c.l.b16 %v792
  %v3207 = vunpack.c.h.b16 %v792
  %v3208 = vunpack.c.l.b16 %v793
  %v3209 = vunpack.c.h.b16 %v793
  %v3210 = vunpack.c.l.b16 %v794
  %v3211 = vunpack.c.h.b16 %v794
  %v3212 = vunpack.c.l.b16 %v795
  %v3213 = vunpack.c.h.b16 %v795
  %v3214 = vunpack.c.l.b16 %v796
  %v3215 = vunpack.c.h.b16 %v796
  %v3216 = vunpack.c.l.b16 %v797
  %v3217 = vunpack.c.h.b16 %v797
  %v3218 = vunpack.c.l.b16 %v798
  %v3219 = vunpack.c.h.b16 %v798
  %v3220 = vunpack.c.l.b16 %v799
  %v3221 = vunpack.c.h.b16 %v799
  %v3222 = vunpack.c.l.b16 %v800
  %v3223 = vunpack.c.h.b16 %v800
  %v3224 = vunpack.c.l.b16 %v801
  %v3225 = vunpack.c.h.b16 %v801
  %v3226 = vunpack.c.l.b16 %v802
  %v3227 = vunpack.c.h.b16 %v802
  %v3228 = vunpack.c.l.b16 %v803
  %v3229 = vunpack.c.h.b16 %v803
  %v3230 = vunpack.c.l.b16 %v804
  %v3231 = vunpack.c.h.b16 %v804
  %v3232 = vunpack.c.l.b16 %v805
  %v3233 = vunpack.c.h.b16 %v805
  %v3234 = vunpack.c.l.b16 %v806
  %v3235 = vunpack.c.h.b16 %v806
  %v3236 = vunpack.c.l.b16 %v807
  %v3237 = vunpack.c.h.b16 %v807
  %v3238 = vunpack.c.l.b16 %v808
  %v3239 = vunpack.c.h.b16 %v808
  %v3240 = vunpack.c.l.b16 %v809
  %v3241 = vunpack.c.h.b16 %v809
  %v3242 = vunpack.c.l.b16 %v810
  %v3243 = vunpack.c.h.b16 %v810
  %v3244 = vunpack.c.l.b16 %v811
  %v3245 = vunpack.c.h.b16 %v811
  %v3246 = vpack.c.b16 %v1714, %v1710
  %v3247 = vpack.c.b16 %v1715, %v1711
  %v3248 = vpack.c.b16 %v1716, %v1712
  %v3249 = vpack.c.b16 %v1717, %v1713
  %v3250 = vpack.c.b16 %v1722, %v1718
  %v3251 = vpack.c.b16 %v1723, %v1719
  %v3252 = vpack.c.b16 %v1724, %v1720
  %v3253 = vpack.c.b16 %v1725, %v1721
  %v3254 = vpack.c.b16 %v1730, %v1726
  %v3255 = vpack.c.b16 %v1731, %v1727
  %v3256 = vpack.c.b16 %v1732, %v1728
  %v3257 = vpack.c.b16 %v1733, %v1729
  %v3258 = vpack.c.b16 %v1738, %v1734
  %v3259 = vpack.c.b16 %v1739, %v1735
  %v3260 = vpack.c.b16 %v1740, %v1736
  %v3261 = vpack.c.b16 %v1741, %v1737
  %v3262 = vpack.c.b16 %v1746, %v1742
  %v3263 = vpack.c.b16 %v1747, %v1743
  %v3264 = vpack.c.b16 %v1748, %v1744
  %v3265 = vpack.c.b16 %v1749, %v1745
  %v3266 = vpack.c.b16 %v1754, %v1750
  %v3267 = vpack.c.b16 %v1755, %v1751
  %v3268 = vpack.c.b16 %v1756, %v1752
  %v3269 = vpack.c.b16 %v1757, %v1753
  %v3270 = vpack.c.b16 %v1762, %v1758
  %v3271 = vpack.c.b16 %v1763, %v1759
  %v3272 = vpack.c.b16 %v1764, %v1760
  %v3273 = vpack.c.b16 %v1765, %v1761
  %v3274 = vpack.c.b16 %v1770, %v1766
  %v3275 = vpack.c.b16 %v1771, %v1767
  %v3276 = vpack.c.b16 %v1772, %v1768
  %v3277 = vpack.c.b16 %v1773, %v1769
  %v3278 = vpack.c.b16 %v1778, %v1774
  %v3279 = vpack.c.b16 %v1779, %v1775
  %v3280 = vpack.c.b16 %v1780, %v1776
  %v3281 = vpack.c.b16 %v1781, %v1777
  %v3282 = vpack.c.b16 %v1786, %v1782
  %v3283 = vpack.c.b16 %v1787, %v1783
  %v3284 = vpack.c.b16 %v1788, %v1784
  %v3285 = vpack.c.b16 %v1789, %v1785
  %v3286 = vpack.c.b16 %v1794, %v1790
  %v3287 = vpack.c.b16 %v1795, %v1791
  %v3288 = vpack.c.b16 %v1796, %v1792
  %v3289 = vpack.c.b16 %v1797, %v1793
  %v3290 = vpack.c.b16 %v1802, %v1798
  %v3291 = vpack.c.b16 %v1803, %v1799
  %v3292 = vpack.c.b16 %v1804, %v1800
  %v3293 = vpack.c.b16 %v1805, %v1801
  %v3294 = vpack.c.b16 %v1810, %v1806
  %v3295 = vpack.c.b16 %v1811, %v1807
  %v3296 = vpack.c.b16 %v1812, %v1808
  %v3297 = vpack.c.b16 %v1813, %v1809
  %v3298 = vpack.c.b16 %v1818, %v1814
  %v3299 = vpack.c.b16 %v1819, %v1815
  %v3300 = vpack.c.b16 %v1820, %v1816
  %v3301 = vpack.c.b16 %v1821, %v1817
  %v3302 = vpack.c.b16 %v1826, %v1822
  %v3303 = vpack.c.b16 %v1827, %v1823
  %v3304 = vpack.c.b16 %v1828, %v1824
  %v3305 = vpack.c.b16 %v1829, %v1825
  %v3306 = vpack.c.b16 %v1834, %v1830
  %v3307 = vpack.c.b16 %v1835, %v1831
  %v3308 = vpack.c.b16 %v1836, %v1832
  %v3309 = vpack.c.b16 %v1837, %v1833
  %v3310 = vpack.c.b16 %v1842, %v1838
  %v3311 = vpack.c.b16 %v1843, %v1839
  %v3312 = vpack.c.b16 %v1844, %v1840
  %v3313 = vpack.c.b16 %v1845, %v1841
  %v3314 = vpack.c.b16 %v1850, %v1846
  %v3315 = vpack.c.b16 %v1851, %v1847
  %v3316 = vpack.c.b16 %v1852, %v1848
  %v3317 = vpack.c.b16 %v1853, %v1849
  %v3318 = vpack.c.b16 %v1858, %v1854
  %v3319 = vpack.c.b16 %v1859, %v1855
  %v3320 = vpack.c.b16 %v1860, %v1856
  %v3321 = vpack.c.b16 %v1861, %v1857
  %v3322 = vpack.c.b16 %v1866, %v1862
  %v3323 = vpack.c.b16 %v1867, %v1863
  %v3324 = vpack.c.b16 %v1868, %v1864
  %v3325 = vpack.c.b16 %v1869, %v1865
  %v3326 = vpack.c.b16 %v1874, %v1870
  %v3327 = vpack.c.b16 %v1875, %v1871
  %v3328 = vpack.c.b16 %v1876, %v1872
  %v3329 = vpack.c.b16 %v1877, %v1873
  %v3330 = vpack.c.b16 %v1882, %v1878
  %v3331 = vpack.c.b16 %v1883, %v1879
  %v3332 = vpack.c.b16 %v1884, %v1880
  %v3333 = vpack.c.b16 %v1885, %v1881
  %v3334 = vpack.c.b16 %v1890, %v1886
  %v3335 = vpack.c.b16 %v1891, %v1887
  %v3336 = vpack.c.b16 %v1892, %v1888
  %v3337 = vpack.c.b16 %v1893, %v1889
  %v3338 = vpack.c.b16 %v1898, %v1894
  %v3339 = vpack.c.b16 %v1899, %v1895
  %v3340 = vpack.c.b16 %v1900, %v1896
  %v3341 = vpack.c.b16 %v1901, %v1897
  %v3342 = vpack.c.b16 %v1906, %v1902
  %v3343 = vpack.c.b16 %v1907, %v1903
  %v3344 = vpack.c.b16 %v1908, %v1904
  %v3345 = vpack.c.b16 %v1909, %v1905
  %v3346 = vpack.c.b16 %v1914, %v1910
  %v3347 = vpack.c.b16 %v1915, %v1911
  %v3348 = vpack.c.b16 %v1916, %v1912
  %v3349 = vpack.c.b16 %v1917, %v1913
  %v3350 = vpack.c.b16 %v1922, %v1918
  %v3351 = vpack.c.b16 %v1923, %v1919
  %v3352 = vpack.c.b16 %v1924, %v1920
  %v3353 = vpack.c.b16 %v1925, %v1921
  %v3354 = vpack.c.b16 %v1930, %v1926
  %v3355 = vpack.c.b16 %v1931, %v1927
  %v3356 = vpack.c.b16 %v1932, %v1928
  %v3357 = vpack.c.b16 %v1933, %v1929
  %v3358 = vpack.c.b16 %v1938, %v1934
  %v3359 = vpack.c.b16 %v1939, %v1935
  %v3360 = vpack.c.b16 %v1940, %v1936
  %v3361 = vpack.c.b16 %v1941, %v1937
  %v3362 = vpack.c.b16 %v1946, %v1942
  %v3363 = vpack.c.b16 %v1947, %v1943
  %v3364 = vpack.c.b16 %v1948, %v1944
  %v3365 = vpack.c.b16 %v1949, %v1945
  %v3366 = vpack.c.b16 %v1954, %v1950
  %v3367 = vpack.c.b16 %v1955, %v1951
  %v3368 = vpack.c.b16 %v1956, %v1952
  %v3369 = vpack.c.b16 %v1957, %v1953
  %v3370 = vpack.c.b16 %v1962, %v1958
  %v3371 = vpack.c.b16 %v1963, %v1959
  %v3372 = vpack.c.b16 %v1964, %v1960
  %v3373 = vpack.c.b16 %v1965, %v1961
  %v3374 = vpack.c.b16 %v1970, %v1966
  %v3375 = vpack.c.b16 %v1971, %v1967
  %v3376 = vpack.c.b16 %v1972, %v1968
  %v3377 = vpack.c.b16 %v1973, %v1969
  %v3378 = vpack.c.b16 %v1978, %v1974
  %v3379 = vpack.c.b16 %v1979, %v1975
  %v3380 = vpack.c.b16 %v1980, %v1976
  %v3381 = vpack.c.b16 %v1981, %v1977
  %v3382 = vpack.c.b16 %v1986, %v1982
  %v3383 = vpack.c.b16 %v1987, %v1983
  %v3384 = vpack.c.b16 %v1988, %v1984
  %v3385 = vpack.c.b16 %v1989, %v1985
  %v3386 = vpack.c.b16 %v1994, %v1990
  %v3387 = vpack.c.b16 %v1995, %v1991
  %v3388 = vpack.c.b16 %v1996, %v1992
  %v3389 = vpack.c.b16 %v1997, %v1993
  %v3390 = vpack.c.b16 %v2002, %v1998
  %v3391 = vpack.c.b16 %v2003, %v1999
  %v3392 = vpack.c.b16 %v2004, %v2000
  %v3393 = vpack.c.b16 %v2005, %v2001
  %v3394 = vpack.c.b16 %v2010, %v2006
  %v3395 = vpack.c.b16 %v2011, %v2007
  %v3396 = vpack.c.b16 %v2012, %v2008
  %v3397 = vpack.c.b16 %v2013, %v2009
  %v3398 = vpack.c.b16 %v2018, %v2014
  %v3399 = vpack.c.b16 %v2019, %v2015
  %v3400 = vpack.c.b16 %v2020, %v2016
  %v3401 = vpack.c.b16 %v2021, %v2017
  %v3402 = vpack.c.b16 %v2026, %v2022
  %v3403 = vpack.c.b16 %v2027, %v2023
  %v3404 = vpack.c.b16 %v2028, %v2024
  %v3405 = vpack.c.b16 %v2029, %v2025
  %v3406 = vpack.c.b16 %v2034, %v2030
  %v3407 = vpack.c.b16 %v2035, %v2031
  %v3408 = vpack.c.b16 %v2036, %v2032
  %v3409 = vpack.c.b16 %v2037, %v2033
  %v3410 = vpack.c.b16 %v2042, %v2038
  %v3411 = vpack.c.b16 %v2043, %v2039
  %v3412 = vpack.c.b16 %v2044, %v2040
  %v3413 = vpack.c.b16 %v2045, %v2041
  %v3414 = vpack.c.b16 %v2050, %v2046
  %v3415 = vpack.c.b16 %v2051, %v2047
  %v3416 = vpack.c.b16 %v2052, %v2048
  %v3417 = vpack.c.b16 %v2053, %v2049
  %v3418 = vpack.c.b16 %v2058, %v2054
  %v3419 = vpack.c.b16 %v2059, %v2055
  %v3420 = vpack.c.b16 %v2060, %v2056
  %v3421 = vpack.c.b16 %v2061, %v2057
  %v3422 = vpack.c.b16 %v2066, %v2062
  %v3423 = vpack.c.b16 %v2067, %v2063
  %v3424 = vpack.c.b16 %v2068, %v2064
  %v3425 = vpack.c.b16 %v2069, %v2065
  %v3426 = vpack.c.b16 %v2074, %v2070
  %v3427 = vpack.c.b16 %v2075, %v2071
  %v3428 = vpack.c.b16 %v2076, %v2072
  %v3429 = vpack.c.b16 %v2077, %v2073
  %v3430 = vpack.c.b16 %v2082, %v2078
  %v3431 = vpack.c.b16 %v2083, %v2079
  %v3432 = vpack.c.b16 %v2084, %v2080
  %v3433 = vpack.c.b16 %v2085, %v2081
  %v3434 = vpack.c.b16 %v2090, %v2086
  %v3435 = vpack.c.b16 %v2091, %v2087
  %v3436 = vpack.c.b16 %v2092, %v2088
  %v3437 = vpack.c.b16 %v2093, %v2089
  %v3438 = vpack.c.b16 %v2098, %v2094
  %v3439 = vpack.c.b16 %v2099, %v2095
  %v3440 = vpack.c.b16 %v2100, %v2096
  %v3441 = vpack.c.b16 %v2101, %v2097
  %v3442 = vpack.c.b16 %v2106, %v2102
  %v3443 = vpack.c.b16 %v2107, %v2103
  %v3444 = vpack.c.b16 %v2108, %v2104
  %v3445 = vpack.c.b16 %v2109, %v2105
  %v3446 = vpack.c.b16 %v2114, %v2110
  %v3447 = vpack.c.b16 %v2115, %v2111
  %v3448 = vpack.c.b16 %v2116, %v2112
  %v3449 = vpack.c.b16 %v2117, %v2113
  %v3450 = vpack.c.b16 %v2122, %v2118
  %v3451 = vpack.c.b16 %v2123, %v2119
  %v3452 = vpack.c.b16 %v2124, %v2120
  %v3453 = vpack.c.b16 %v2125, %v2121
  %v3454 = vpack.c.b16 %v2130, %v2126
  %v3455 = vpack.c.b16 %v2131, %v2127
  %v3456 = vpack.c.b16 %v2132, %v2128
  %v3457 = vpack.c.b16 %v2133, %v2129
  %v3458 = vpack.c.b16 %v2138, %v2134
  %v3459 = vpack.c.b16 %v2139, %v2135
  %v3460 = vpack.c.b16 %v2140, %v2136
  %v3461 = vpack.c.b16 %v2141, %v2137
  %v3462 = vpack.c.b16 %v2146, %v2142
  %v3463 = vpack.c.b16 %v2147, %v2143
  %v3464 = vpack.c.b16 %v2148, %v2144
  %v3465 = vpack.c.b16 %v2149, %v2145
  %v3466 = vpack.c.b16 %v2154, %v2150
  %v3467 = vpack.c.b16 %v2155, %v2151
  %v3468 = vpack.c.b16 %v2156, %v2152
  %v3469 = vpack.c.b16 %v2157, %v2153
  %v3470 = vpack.c.b16 %v2162, %v2158
  %v3471 = vpack.c.b16 %v2163, %v2159
  %v3472 = vpack.c.b16 %v2164, %v2160
  %v3473 = vpack.c.b16 %v2165, %v2161
  %v3474 = vpack.c.b16 %v2170, %v2166
  %v3475 = vpack.c.b16 %v2171, %v2167
  %v3476 = vpack.c.b16 %v2172, %v2168
  %v3477 = vpack.c.b16 %v2173, %v2169
  %v3478 = vpack.c.b16 %v2178, %v2174
  %v3479 = vpack.c.b16 %v2179, %v2175
  %v3480 = vpack.c.b16 %v2180, %v2176
  %v3481 = vpack.c.b16 %v2181, %v2177
  %v3482 = vpack.c.b16 %v2186, %v2182
  %v3483 = vpack.c.b16 %v2187, %v2183
  %v3484 = vpack.c.b16 %v2188, %v2184
  %v3485 = vpack.c.b16 %v2189, %v2185
  %v3486 = vpack.c.b16 %v2194, %v2190
  %v3487 = vpack.c.b16 %v2195, %v2191
  %v3488 = vpack.c.b16 %v2196, %v2192
  %v3489 = vpack.c.b16 %v2197, %v2193
  %v3490 = vpack.c.b16 %v2202, %v2198
  %v3491 = vpack.c.b16 %v2203, %v2199
  %v3492 = vpack.c.b16 %v2204, %v2200
  %v3493 = vpack.c.b16 %v2205, %v2201
  %v3494 = vpack.c.b16 %v2210, %v2206
  %v3495 = vpack.c.b16 %v2211, %v2207
  %v3496 = vpack.c.b16 %v2212, %v2208
  %v3497 = vpack.c.b16 %v2213, %v2209
  %v3498 = vpack.c.b16 %v2218, %v2214
  %v3499 = vpack.c.b16 %v2219, %v2215
  %v3500 = vpack.c.b16 %v2220, %v2216
  %v3501 = vpack.c.b16 %v2221, %v2217
  %v3502 = vpack.c.b16 %v2226, %v2222
  %v3503 = vpack.c.b16 %v2227, %v2223
  %v3504 = vpack.c.b16 %v2228, %v2224
  %v3505 = vpack.c.b16 %v2229, %v2225
  %v3506 = vpack.c.b16 %v2234, %v2230
  %v3507 = vpack.c.b16 %v2235, %v2231
  %v3508 = vpack.c.b16 %v2236, %v2232
  %v3509 = vpack.c.b16 %v2237, %v2233
  %v3510 = vpack.c.b16 %v2242, %v2238
  %v3511 = vpack.c.b16 %v2243, %v2239
  %v3512 = vpack.c.b16 %v2244, %v2240
  %v3513 = vpack.c.b16 %v2245, %v2241
  %v3514 = vpack.c.b16 %v2250, %v2246
  %v3515 = vpack.c.b16 %v2251, %v2247
  %v3516 = vpack.c.b16 %v2252, %v2248
  %v3517 = vpack.c.b16 %v2253, %v2249
  %v3518 = vpack.c.b16 %v2258, %v2254
  %v3519 = vpack.c.b16 %v2259, %v2255
  %v3520 = vpack.c.b16 %v2260, %v2256
  %v3521 = vpack.c.b16 %v2261, %v2257
  %v3522 = vpack.c.b16 %v2266, %v2262
  %v3523 = vpack.c.b16 %v2267, %v2263
  %v3524 = vpack.c.b16 %v2268, %v2264
  %v3525 = vpack.c.b16 %v2269, %v2265
  %v3526 = vpack.c.b16 %v2274, %v2270
  %v3527 = vpack.c.b16 %v2275, %v2271
  %v3528 = vpack.c.b16 %v2276, %v2272
  %v3529 = vpack.c.b16 %v2277, %v2273
  %v3530 = vpack.c.b16 %v2282, %v2278
  %v3531 = vpack.c.b16 %v2283, %v2279
  %v3532 = vpack.c.b16 %v2284, %v2280
  %v3533 = vpack.c.b16 %v2285, %v2281
  %v3534 = vpack.c.b16 %v2290, %v2286
  %v3535 = vpack.c.b16 %v2291, %v2287
  %v3536 = vpack.c.b16 %v2292, %v2288
  %v3537 = vpack.c.b16 %v2293, %v2289
  %v3538 = vpack.c.b16 %v2298, %v2294
  %v3539 = vpack.c.b16 %v2299, %v2295
  %v3540 = vpack.c.b16 %v2300, %v2296
  %v3541 = vpack.c.b16 %v2301, %v2297
  %v3542 = vpack.c.b16 %v2306, %v2302
  %v3543 = vpack.c.b16 %v2307, %v2303
  %v3544 = vpack.c.b16 %v2308, %v2304
  %v3545 = vpack.c.b16 %v2309, %v2305
  %v3546 = vpack.c.b16 %v2314, %v2310
  %v3547 = vpack.c.b16 %v2315, %v2311
  %v3548 = vpack.c.b16 %v2316, %v2312
  %v3549 = vpack.c.b16 %v2317, %v2313
  %v3550 = vpack.c.b16 %v2322, %v2318
  %v3551 = vpack.c.b16 %v2323, %v2319
  %v3552 = vpack.c.b16 %v2324, %v2320
  %v3553 = vpack.c.b16 %v2325, %v2321
  %v3554 = vpack.c.b16 %v2330, %v2326
  %v3555 = vpack.c.b16 %v2331, %v2327
  %v3556 = vpack.c.b16 %v2332, %v2328
  %v3557 = vpack.c.b16 %v2333, %v2329
  %v3558 = vpack.c.b16 %v2338, %v2334
  %v3559 = vpack.c.b16 %v2339, %v2335
  %v3560 = vpack.c.b16 %v2340, %v2336
  %v3561 = vpack.c.b16 %v2341, %v2337
  %v3562 = vpack.c.b16 %v2346, %v2342
  %v3563 = vpack.c.b16 %v2347, %v2343
  %v3564 = vpack.c.b16 %v2348, %v2344
  %v3565 = vpack.c.b16 %v2349, %v2345
  %v3566 = vpack.c.b16 %v2354, %v2350
  %v3567 = vpack.c.b16 %v2355, %v2351
  %v3568 = vpack.c.b16 %v2356, %v2352
  %v3569 = vpack.c.b16 %v2357, %v2353
  %v3570 = vpack.c.b16 %v2362, %v2358
  %v3571 = vpack.c.b16 %v2363, %v2359
  %v3572 = vpack.c.b16 %v2364, %v2360
  %v3573 = vpack.c.b16 %v2365, %v2361
  %v3574 = vpack.c.b16 %v2370, %v2366
  %v3575 = vpack.c.b16 %v2371, %v2367
  %v3576 = vpack.c.b16 %v2372, %v2368
  %v3577 = vpack.c.b16 %v2373, %v2369
  %v3578 = vpack.c.b16 %v2378, %v2374
  %v3579 = vpack.c.b16 %v2379, %v2375
  %v3580 = vpack.c.b16 %v2380, %v2376
  %v3581 = vpack.c.b16 %v2381, %v2377
  %v3582 = vpack.c.b16 %v2386, %v2382
  %v3583 = vpack.c.b16 %v2387, %v2383
  %v3584 = vpack.c.b16 %v2388, %v2384
  %v3585 = vpack.c.b16 %v2389, %v2385
  %v3586 = vpack.c.b16 %v2394, %v2390
  %v3587 = vpack.c.b16 %v2395, %v2391
  %v3588 = vpack.c.b16 %v2396, %v2392
  %v3589 = vpack.c.b16 %v2397, %v2393
  %v3590 = vpack.c.b16 %v2402, %v2398
  %v3591 = vpack.c.b16 %v2403, %v2399
  %v3592 = vpack.c.b16 %v2404, %v2400
  %v3593 = vpack.c.b16 %v2405, %v2401
  %v3594 = vpack.c.b16 %v2410, %v2406
  %v3595 = vpack.c.b16 %v2411, %v2407
  %v3596 = vpack.c.b16 %v2412, %v2408
  %v3597 = vpack.c.b16 %v2413, %v2409
  %v3598 = vpack.c.b16 %v2418, %v2414
  %v3599 = vpack.c.b16 %v2419, %v2415
  %v3600 = vpack.c.b16 %v2420, %v2416
  %v3601 = vpack.c.b16 %v2421, %v2417
  %v3602 = vpack.c.b16 %v2426, %v2422
  %v3603 = vpack.c.b16 %v2427, %v2423
  %v3604 = vpack.c.b16 %v2428, %v2424
  %v3605 = vpack.c.b16 %v2429, %v2425
  %v3606 = vpack.c.b16 %v2434, %v2430
  %v3607 = vpack.c.b16 %v2435, %v2431
  %v3608 = vpack.c.b16 %v2436, %v2432
  %v3609 = vpack.c.b16 %v2437, %v2433
  %v3610 = vpack.c.b16 %v2442, %v2438
  %v3611 = vpack.c.b16 %v2443, %v2439
  %v3612 = vpack.c.b16 %v2444, %v2440
  %v3613 = vpack.c.b16 %v2445, %v2441
  %v3614 = vpack.c.b16 %v2450, %v2446
  %v3615 = vpack.c.b16 %v2451, %v2447
  %v3616 = vpack.c.b16 %v2452, %v2448
  %v3617 = vpack.c.b16 %v2453, %v2449
  %v3618 = vpack.c.b16 %v2458, %v2454
  %v3619 = vpack.c.b16 %v2459, %v2455
  %v3620 = vpack.c.b16 %v2460, %v2456
  %v3621 = vpack.c.b16 %v2461, %v2457
  %v3622 = vpack.c.b16 %v2466, %v2462
  %v3623 = vpack.c.b16 %v2467, %v2463
  %v3624 = vpack.c.b16 %v2468, %v2464
  %v3625 = vpack.c.b16 %v2469, %v2465
  %v3626 = vpack.c.b16 %v2474, %v2470
  %v3627 = vpack.c.b16 %v2475, %v2471
  %v3628 = vpack.c.b16 %v2476, %v2472
  %v3629 = vpack.c.b16 %v2477, %v2473
  %v3630 = vpack.c.b16 %v2482, %v2478
  %v3631 = vpack.c.b16 %v2483, %v2479
  %v3632 = vpack.c.b16 %v2484, %v2480
  %v3633 = vpack.c.b16 %v2485, %v2481
  %v3634 = vpack.c.b16 %v2490, %v2486
  %v3635 = vpack.c.b16 %v2491, %v2487
  %v3636 = vpack.c.b16 %v2492, %v2488
  %v3637 = vpack.c.b16 %v2493, %v2489
  %v3638 = vpack.c.b16 %v2498, %v2494
  %v3639 = vpack.c.b16 %v2499, %v2495
  %v3640 = vpack.c.b16 %v2500, %v2496
  %v3641 = vpack.c.b16 %v2501, %v2497
  %v3642 = vpack.c.b16 %v2506, %v2502
  %v3643 = vpack.c.b16 %v2507, %v2503
  %v3644 = vpack.c.b16 %v2508, %v2504
  %v3645 = vpack.c.b16 %v2509, %v2505
  %v3646 = vpack.c.b16 %v2514, %v2510
  %v3647 = vpack.c.b16 %v2515, %v2511
  %v3648 = vpack.c.b16 %v2516, %v2512
  %v3649 = vpack.c.b16 %v2517, %v2513
  %v3650 = vpack.c.b16 %v2522, %v2518
  %v3651 = vpack.c.b16 %v2523, %v2519
  %v3652 = vpack.c.b16 %v2524, %v2520
  %v3653 = vpack.c.b16 %v2525, %v2521
  %v3654 = vpack.c.b16 %v2530, %v2526
  %v3655 = vpack.c.b16 %v2531, %v2527
  %v3656 = vpack.c.b16 %v2532, %v2528
  %v3657 = vpack.c.b16 %v2533, %v2529
  %v3658 = vpack.c.b16 %v2538, %v2534
  %v3659 = vpack.c.b16 %v2539, %v2535
  %v3660 = vpack.c.b16 %v2540, %v2536
  %v3661 = vpack.c.b16 %v2541, %v2537
  %v3662 = vpack.c.b16 %v2546, %v2542
  %v3663 = vpack.c.b16 %v2547, %v2543
  %v3664 = vpack.c.b16 %v2548, %v2544
  %v3665 = vpack.c.b16 %v2549, %v2545
  %v3666 = vpack.c.b16 %v2554, %v2550
  %v3667 = vpack.c.b16 %v2555, %v2551
  %v3668 = vpack.c.b16 %v2556, %v2552
  %v3669 = vpack.c.b16 %v2557, %v2553
  %v3670 = vpack.c.b16 %v2562, %v2558
  %v3671 = vpack.c.b16 %v2563, %v2559
  %v3672 = vpack.c.b16 %v2564, %v2560
  %v3673 = vpack.c.b16 %v2565, %v2561
  %v3674 = vpack.c.b16 %v2570, %v2566
  %v3675 = vpack.c.b16 %v2571, %v2567
  %v3676 = vpack.c.b16 %v2572, %v2568
  %v3677 = vpack.c.b16 %v2573, %v2569
  %v3678 = vpack.c.b16 %v2578, %v2574
  %v3679 = vpack.c.b16 %v2579, %v2575
  %v3680 = vpack.c.b16 %v2580, %v2576
  %v3681 = vpack.c.b16 %v2581, %v2577
  %v3682 = vpack.c.b16 %v2586, %v2582
  %v3683 = vpack.c.b16 %v2587, %v2583
  %v3684 = vpack.c.b16 %v2588, %v2584
  %v3685 = vpack.c.b16 %v2589, %v2585
  %v3686 = vpack.c.b16 %v2594, %v2590
  %v3687 = vpack.c.b16 %v2595, %v2591
  %v3688 = vpack.c.b16 %v2596, %v2592
  %v3689 = vpack.c.b16 %v2597, %v2593
  %v3690 = vpack.c.b16 %v2602, %v2598
  %v3691 = vpack.c.b16 %v2603, %v2599
  %v3692 = vpack.c.b16 %v2604, %v2600
  %v3693 = vpack.c.b16 %v2605, %v2601
  %v3694 = vpack.c.b16 %v2610, %v2606
  %v3695 = vpack.c.b16 %v2611, %v2607
  %v3696 = vpack.c.b16 %v2612, %v2608
  %v3697 = vpack.c.b16 %v2613, %v2609
  %v3698 = vpack.c.b16 %v2618, %v2614
  %v3699 = vpack.c.b16 %v2619, %v2615
  %v3700 = vpack.c.b16 %v2620, %v2616
  %v3701 = vpack.c.b16 %v2621, %v2617
  %v3702 = vpack.c.b16 %v2626, %v2622
  %v3703 = vpack.c.b16 %v2627, %v2623
  %v3704 = vpack.c.b16 %v2628, %v2624
  %v3705 = vpack.c.b16 %v2629, %v2625
  %v3706 = vpack.c.b16 %v2634, %v2630
  %v3707 = vpack.c.b16 %v2635, %v2631
  %v3708 = vpack.c.b16 %v2636, %v2632
  %v3709 = vpack.c.b16 %v2637, %v2633
  %v3710 = vpack.c.b16 %v2642, %v2638
  %v3711 = vpack.c.b16 %v2643, %v2639
  %v3712 = vpack.c.b16 %v2644, %v2640
  %v3713 = vpack.c.b16 %v2645, %v2641
  %v3714 = vpack.c.b16 %v2650, %v2646
  %v3715 = vpack.c.b16 %v2651, %v2647
  %v3716 = vpack.c.b16 %v2652, %v2648
  %v3717 = vpack.c.b16 %v2653, %v2649
  %v3718 = vpack.c.b16 %v2658, %v2654
  %v3719 = vpack.c.b16 %v2659, %v2655
  %v3720 = vpack.c.b16 %v2660, %v2656
  %v3721 = vpack.c.b16 %v2661, %v2657
  %v3722 = vpack.c.b16 %v2666, %v2662
  %v3723 = vpack.c.b16 %v2667, %v2663
  %v3724 = vpack.c.b16 %v2668, %v2664
  %v3725 = vpack.c.b16 %v2669, %v2665
  %v3726 = vpack.c.b16 %v2674, %v2670
  %v3727 = vpack.c.b16 %v2675, %v2671
  %v3728 = vpack.c.b16 %v2676, %v2672
  %v3729 = vpack.c.b16 %v2677, %v2673
  %v3730 = vpack.c.b16 %v2682, %v2678
  %v3731 = vpack.c.b16 %v2683, %v2679
  %v3732 = vpack.c.b16 %v2684, %v2680
  %v3733 = vpack.c.b16 %v2685, %v2681
  %v3734 = vpack.c.b16 %v2690, %v2686
  %v3735 = vpack.c.b16 %v2691, %v2687
  %v3736 = vpack.c.b16 %v2692, %v2688
  %v3737 = vpack.c.b16 %v2693, %v2689
  %v3738 = vpack.c.b16 %v2698, %v2694
  %v3739 = vpack.c.b16 %v2699, %v2695
  %v3740 = vpack.c.b16 %v2700, %v2696
  %v3741 = vpack.c.b16 %v2701, %v2697
  %v3742 = vpack.c.b16 %v2706, %v2702
  %v3743 = vpack.c.b16 %v2707, %v2703
  %v3744 = vpack.c.b16 %v2708, %v2704
  %v3745 = vpack.c.b16 %v2709, %v2705
  %v3746 = vpack.c.b16 %v2714, %v2710
  %v3747 = vpack.c.b16 %v2715, %v2711
  %v3748 = vpack.c.b16 %v2716, %v2712
  %v3749 = vpack.c.b16 %v2717, %v2713
  %v3750 = vpack.c.b16 %v2722, %v2718
  %v3751 = vpack.c.b16 %v2723, %v2719
  %v3752 = vpack.c.b16 %v2724, %v2720
  %v3753 = vpack.c.b16 %v2725, %v2721
  %v3754 = vpack.c.b16 %v2730, %v2726
  %v3755 = vpack.c.b16 %v2731, %v2727
  %v3756 = vpack.c.b16 %v2732, %v2728
  %v3757 = vpack.c.b16 %v2733, %v2729
  %v3758 = vpack.c.b16 %v2738, %v2734
  %v3759 = vpack.c.b16 %v2739, %v2735
  %v3760 = vpack.c.b16 %v2740, %v2736
  %v3761 = vpack.c.b16 %v2741, %v2737
  %v3762 = vpack.c.b16 %v2746, %v2742
  %v3763 = vpack.c.b16 %v2747, %v2743
  %v3764 = vpack.c.b16 %v2748, %v2744
  %v3765 = vpack.c.b16 %v2749, %v2745
  %v3766 = vpack.c.b16 %v2754, %v2750
  %v3767 = vpack.c.b16 %v2755, %v2751
  %v3768 = vpack.c.b16 %v2756, %v2752
  %v3769 = vpack.c.b16 %v2757, %v2753
  %v3770 = vpack.c.b16 %v2762, %v2758
  %v3771 = vpack.c.b16 %v2763, %v2759
  %v3772 = vpack.c.b16 %v2764, %v2760
  %v3773 = vpack.c.b16 %v2765, %v2761
  %v3774 = vpack.c.b16 %v2770, %v2766
  %v3775 = vpack.c.b16 %v2771, %v2767
  %v3776 = vpack.c.b16 %v2772, %v2768
  %v3777 = vpack.c.b16 %v2773, %v2769
  %v3778 = vpack.c.b16 %v2778, %v2774
  %v3779 = vpack.c.b16 %v2779, %v2775
  %v3780 = vpack.c.b16 %v2780, %v2776
  %v3781 = vpack.c.b16 %v2781, %v2777
  %v3782 = vpack.c.b16 %v2786, %v2782
  %v3783 = vpack.c.b16 %v2787, %v2783
  %v3784 = vpack.c.b16 %v2788, %v2784
  %v3785 = vpack.c.b16 %v2789, %v2785
  %v3786 = vpack.c.b16 %v2794, %v2790
  %v3787 = vpack.c.b16 %v2795, %v2791
  %v3788 = vpack.c.b16 %v2796, %v2792
  %v3789 = vpack.c.b16 %v2797, %v2793
  %v3790 = vpack.c.b16 %v2802, %v2798
  %v3791 = vpack.c.b16 %v2803, %v2799
  %v3792 = vpack.c.b16 %v2804, %v2800
  %v3793 = vpack.c.b16 %v2805, %v2801
  %v3794 = vpack.c.b16 %v2810, %v2806
  %v3795 = vpack.c.b16 %v2811, %v2807
  %v3796 = vpack.c.b16 %v2812, %v2808
  %v3797 = vpack.c.b16 %v2813, %v2809
  %v3798 = vpack.c.b16 %v2818, %v2814
  %v3799 = vpack.c.b16 %v2819, %v2815
  %v3800 = vpack.c.b16 %v2820, %v2816
  %v3801 = vpack.c.b16 %v2821, %v2817
  %v3802 = vpack.c.b16 %v2826, %v2822
  %v3803 = vpack.c.b16 %v2827, %v2823
  %v3804 = vpack.c.b16 %v2828, %v2824
  %v3805 = vpack.c.b16 %v2829, %v2825
  %v3806 = vpack.c.b16 %v2834, %v2830
  %v3807 = vpack.c.b16 %v2835, %v2831
  %v3808 = vpack.c.b16 %v2836, %v2832
  %v3809 = vpack.c.b16 %v2837, %v2833
  %v3810 = vpack.c.b16 %v2842, %v2838
  %v3811 = vpack.c.b16 %v2843, %v2839
  %v3812 = vpack.c.b16 %v2844, %v2840
  %v3813 = vpack.c.b16 %v2845, %v2841
  %v3814 = vpack.c.b16 %v2850, %v2846
  %v3815 = vpack.c.b16 %v2851, %v2847
  %v3816 = vpack.c.b16 %v2852, %v2848
  %v3817 = vpack.c.b16 %v2853, %v2849
  %v3818 = vpack.c.b16 %v2858, %v2854
  %v3819 = vpack.c.b16 %v2859, %v2855
  %v3820 = vpack.c.b16 %v2860, %v2856
  %v3821 = vpack.c.b16 %v2861, %v2857
  %v3822 = vpack.c.b16 %v2866, %v2862
  %v3823 = vpack.c.b16 %v2867, %v2863
  %v3824 = vpack.c.b16 %v2868, %v2864
  %v3825 = vpack.c.b16 %v2869, %v2865
  %v3826 = vpack.c.b16 %v2874, %v2870
  %v3827 = vpack.c.b16 %v2875, %v2871
  %v3828 = vpack.c.b16 %v2876, %v2872
  %v3829 = vpack.c.b16 %v2877, %v2873
  %v3830 = vpack.c.b16 %v2882, %v2878
  %v3831 = vpack.c.b16 %v2883, %v2879
  %v3832 = vpack.c.b16 %v2884, %v2880
  %v3833 = vpack.c.b16 %v2885, %v2881
  %v3834 = vpack.c.b16 %v2890, %v2886
  %v3835 = vpack.c.b16 %v2891, %v2887
  %v3836 = vpack.c.b16 %v2892, %v2888
  %v3837 = vpack.c.b16 %v2893, %v2889
  %v3838 = vpack.c.b16 %v2898, %v2894
  %v3839 = vpack.c.b16 %v2899, %v2895
  %v3840 = vpack.c.b16 %v2900, %v2896
  %v3841 = vpack.c.b16 %v2901, %v2897
  %v3842 = vpack.c.b16 %v2906, %v2902
  %v3843 = vpack.c.b16 %v2907, %v2903
  %v3844 = vpack.c.b16 %v2908, %v2904
  %v3845 = vpack.c.b16 %v2909, %v2905
  %v3846 = vpack.c.b16 %v2914, %v2910
  %v3847 = vpack.c.b16 %v2915, %v2911
  %v3848 = vpack.c.b16 %v2916, %v2912
  %v3849 = vpack.c.b16 %v2917, %v2913
  %v3850 = vpack.c.b16 %v2922, %v2918
  %v3851 = vpack.c.b16 %v2923, %v2919
  %v3852 = vpack.c.b16 %v2924, %v2920
  %v3853 = vpack.c.b16 %v2925, %v2921
  %v3854 = vpack.c.b16 %v2930, %v2926
  %v3855 = vpack.c.b16 %v2931, %v2927
  %v3856 = vpack.c.b16 %v2932, %v2928
  %v3857 = vpack.c.b16 %v2933, %v2929
  %v3858 = vpack.c.b16 %v2938, %v2934
  %v3859 = vpack.c.b16 %v2939, %v2935
  %v3860 = vpack.c.b16 %v2940, %v2936
  %v3861 = vpack.c.b16 %v2941, %v2937
  %v3862 = vpack.c.b16 %v2946, %v2942
  %v3863 = vpack.c.b16 %v2947, %v2943
  %v3864 = vpack.c.b16 %v2948, %v2944
  %v3865 = vpack.c.b16 %v2949, %v2945
  %v3866 = vpack.c.b16 %v2954, %v2950
  %v3867 = vpack.c.b16 %v2955, %v2951
  %v3868 = vpack.c.b16 %v2956, %v2952
  %v3869 = vpack.c.b16 %v2957, %v2953
  %v3870 = vpack.c.b16 %v2962, %v2958
  %v3871 = vpack.c.b16 %v2963, %v2959
  %v3872 = vpack.c.b16 %v2964, %v2960
  %v3873 = vpack.c.b16 %v2965, %v2961
  %v3874 = vpack.c.b16 %v2970, %v2966
  %v3875 = vpack.c.b16 %v2971, %v2967
  %v3876 = vpack.c.b16 %v2972, %v2968
  %v3877 = vpack.c.b16 %v2973, %v2969
  %v3878 = vpack.c.b16 %v2978, %v2974
  %v3879 = vpack.c.b16 %v2979, %v2975
  %v3880 = vpack.c.b16 %v2980, %v2976
  %v3881 = vpack.c.b16 %v2981, %v2977
  %v3882 = vpack.c.b16 %v2986, %v2982
  %v3883 = vpack.c.b16 %v2987, %v2983
  %v3884 = vpack.c.b16 %v2988, %v2984
  %v3885 = vpack.c.b16 %v2989, %v2985
  %v3886 = vpack.c.b16 %v2994, %v2990
  %v3887 = vpack.c.b16 %v2995, %v2991
  %v3888 = vpack.c.b16 %v2996, %v2992
  %v3889 = vpack.c.b16 %v2997, %v2993
  %v3890 = vpack.c.b16 %v3002, %v2998
  %v3891 = vpack.c.b16 %v3003, %v2999
  %v3892 = vpack.c.b16 %v3004, %v3000
  %v3893 = vpack.c.b16 %v3005, %v3001
  %v3894 = vpack.c.b16 %v3010, %v3006
  %v3895 = vpack.c.b16 %v3011, %v3007
  %v3896 = vpack.c.b16 %v3012, %v3008
  %v3897 = vpack.c.b16 %v3013, %v3009
  %v3898 = vpack.c.b16 %v3018, %v3014
  %v3899 = vpack.c.b16 %v3019, %v3015
  %v3900 = vpack.c.b16 %v3020, %v3016
  %v3901 = vpack.c.b16 %v3021, %v3017
  %v3902 = vpack.c.b16 %v3026, %v3022
  %v3903 = vpack.c.b16 %v3027, %v3023
  %v3904 = vpack.c.b16 %v3028, %v3024
  %v3905 = vpack.c.b16 %v3029, %v3025
  %v3906 = vpack.c.b16 %v3034, %v3030
  %v3907 = vpack.c.b16 %v3035, %v3031
  %v3908 = vpack.c.b16 %v3036, %v3032
  %v3909 = vpack.c.b16 %v3037, %v3033
  %v3910 = vpack.c.b16 %v3042, %v3038
  %v3911 = vpack.c.b16 %v3043, %v3039
  %v3912 = vpack.c.b16 %v3044, %v3040
  %v3913 = vpack.c.b16 %v3045, %v3041
  %v3914 = vpack.c.b16 %v3050, %v3046
  %v3915 = vpack.c.b16 %v3051, %v3047
  %v3916 = vpack.c.b16 %v3052, %v3048
  %v3917 = vpack.c.b16 %v3053, %v3049
  %v3918 = vpack.c.b16 %v3058, %v3054
  %v3919 = vpack.c.b16 %v3059, %v3055
  %v3920 = vpack.c.b16 %v3060, %v3056
  %v3921 = vpack.c.b16 %v3061, %v3057
  %v3922 = vpack.c.b16 %v3066, %v3062
  %v3923 = vpack.c.b16 %v3067, %v3063
  %v3924 = vpack.c.b16 %v3068, %v3064
  %v3925 = vpack.c.b16 %v3069, %v3065
  %v3926 = vpack.c.b16 %v3074, %v3070
  %v3927 = vpack.c.b16 %v3075, %v3071
  %v3928 = vpack.c.b16 %v3076, %v3072
  %v3929 = vpack.c.b16 %v3077, %v3073
  %v3930 = vpack.c.b16 %v3082, %v3078
  %v3931 = vpack.c.b16 %v3083, %v3079
  %v3932 = vpack.c.b16 %v3084, %v3080
  %v3933 = vpack.c.b16 %v3085, %v3081
  %v3934 = vpack.c.b16 %v3090, %v3086
  %v3935 = vpack.c.b16 %v3091, %v3087
  %v3936 = vpack.c.b16 %v3092, %v3088
  %v3937 = vpack.c.b16 %v3093, %v3089
  %v3938 = vpack.c.b16 %v3098, %v3094
  %v3939 = vpack.c.b16 %v3099, %v3095
  %v3940 = vpack.c.b16 %v3100, %v3096
  %v3941 = vpack.c.b16 %v3101, %v3097
  %v3942 = vpack.c.b16 %v3106, %v3102
  %v3943 = vpack.c.b16 %v3107, %v3103
  %v3944 = vpack.c.b16 %v3108, %v3104
  %v3945 = vpack.c.b16 %v3109, %v3105
  %v3946 = vpack.c.b16 %v3114, %v3110
  %v3947 = vpack.c.b16 %v3115, %v3111
  %v3948 = vpack.c.b16 %v3116, %v3112
  %v3949 = vpack.c.b16 %v3117, %v3113
  %v3950 = vpack.c.b16 %v3122, %v3118
  %v3951 = vpack.c.b16 %v3123, %v3119
  %v3952 = vpack.c.b16 %v3124, %v3120
  %v3953 = vpack.c.b16 %v3125, %v3121
  %v3954 = vpack.c.b16 %v3130, %v3126
  %v3955 = vpack.c.b16 %v3131, %v3127
  %v3956 = vpack.c.b16 %v3132, %v3128
  %v3957 = vpack.c.b16 %v3133, %v3129
  %v3958 = vpack.c.b16 %v3138, %v3134
  %v3959 = vpack.c.b16 %v3139, %v3135
  %v3960 = vpack.c.b16 %v3140, %v3136
  %v3961 = vpack.c.b16 %v3141, %v3137
  %v3962 = vpack.c.b16 %v3146, %v3142
  %v3963 = vpack.c.b16 %v3147, %v3143
  %v3964 = vpack.c.b16 %v3148, %v3144
  %v3965 = vpack.c.b16 %v3149, %v3145
  %v3966 = vpack.c.b16 %v3154, %v3150
  %v3967 = vpack.c.b16 %v3155, %v3151
  %v3968 = vpack.c.b16 %v3156, %v3152
  %v3969 = vpack.c.b16 %v3157, %v3153
  %v3970 = vpack.c.b16 %v3162, %v3158
  %v3971 = vpack.c.b16 %v3163, %v3159
  %v3972 = vpack.c.b16 %v3164, %v3160
  %v3973 = vpack.c.b16 %v3165, %v3161
  %v3974 = vpack.c.b16 %v3170, %v3166
  %v3975 = vpack.c.b16 %v3171, %v3167
  %v3976 = vpack.c.b16 %v3172, %v3168
  %v3977 = vpack.c.b16 %v3173, %v3169
  %v3978 = vpack.c.b16 %v3178, %v3174
  %v3979 = vpack.c.b16 %v3179, %v3175
  %v3980 = vpack.c.b16 %v3180, %v3176
  %v3981 = vpack.c.b16 %v3181, %v3177
  %v3982 = vpack.c.b16 %v3186, %v3182
  %v3983 = vpack.c.b16 %v3187, %v3183
  %v3984 = vpack.c.b16 %v3188, %v3184
  %v3985 = vpack.c.b16 %v3189, %v3185
  %v3986 = vpack.c.b16 %v3194, %v3190
  %v3987 = vpack.c.b16 %v3195, %v3191
  %v3988 = vpack.c.b16 %v3196, %v3192
  %v3989 = vpack.c.b16 %v3197, %v3193
  %v3990 = vpack.c.b16 %v3202, %v3198
  %v3991 = vpack.c.b16 %v3203, %v3199
  %v3992 = vpack.c.b16 %v3204, %v3200
  %v3993 = vpack.c.b16 %v3205, %v3201
  %v3994 = vpack.c.b16 %v3210, %v3206
  %v3995 = vpack.c.b16 %v3211, %v3207
  %v3996 = vpack.c.b16 %v3212, %v3208
  %v3997 = vpack.c.b16 %v3213, %v3209
  %v3998 = vpack.c.b16 %v3218, %v3214
  %v3999 = vpack.c.b16 %v3219, %v3215
  %v4000 = vpack.c.b16 %v3220, %v3216
  %v4001 = vpack.c.b16 %v3221, %v3217
  %v4002 = vpack.c.b16 %v3226, %v3222
  %v4003 = vpack.c.b16 %v3227, %v3223
  %v4004 = vpack.c.b16 %v3228, %v3224
  %v4005 = vpack.c.b16 %v3229, %v3225
  %v4006 = vpack.c.b16 %v3234, %v3230
  %v4007 = vpack.c.b16 %v3235, %v3231
  %v4008 = vpack.c.b16 %v3236, %v3232
  %v4009 = vpack.c.b16 %v3237, %v3233
  %v4010 = vpack.c.b16 %v3242, %v3238
  %v4011 = vpack.c.b16 %v3243, %v3239
  %v4012 = vpack.c.b16 %v3244, %v3240
  %v4013 = vpack.c.b16 %v3245, %v3241
  %4782 = vmatpush.bf16.msra.mxu0 %v3274
  %4783 = vmatpush.bf16.msra.mxu0 %v3270
  %4784 = vmatpush.bf16.msra.mxu0 %v3266
  %4785 = vmatpush.bf16.msra.mxu0 %v3262
  %4786 = vmatpush.bf16.msra.mxu0 %v3258
  %4787 = vmatpush.bf16.msra.mxu0 %v3254
  %4788 = vmatpush.bf16.msra.mxu0 %v3250
  %4789 = vmatpush.bf16.msra.mxu0 %v3246
  %4790 = vmatmul.bf16.gmra.mxu0 %v894
  %v4791 = vpop.f32.mrf.mxu0
  %v4792 = vadd.f32 %v814, %v4791
  %v4793 = vpop.f32.mrf.mxu0
  %v4794 = vadd.f32 %v814, %v4793
  %4795 = vdwg.mxu0
  %4796 = vmatpush.bf16.msra.mxu0 %v3306
  %4797 = vmatpush.bf16.msra.mxu0 %v3302
  %4798 = vmatpush.bf16.msra.mxu0 %v3298
  %4799 = vmatpush.bf16.msra.mxu0 %v3294
  %4800 = vmatpush.bf16.msra.mxu0 %v3290
  %4801 = vmatpush.bf16.msra.mxu0 %v3286
  %4802 = vmatpush.bf16.msra.mxu0 %v3282
  %4803 = vmatpush.bf16.msra.mxu0 %v3278
  %4804 = vmatmul.bf16.gmra.mxu0 %v895
  %v4805 = vpop.f32.mrf.mxu0
  %v4806 = vadd.f32 %v4792, %v4805
  %v4807 = vpop.f32.mrf.mxu0
  %v4808 = vadd.f32 %v4794, %v4807
  %4809 = vdwg.mxu0
  %4810 = vmatpush.bf16.msra.mxu0 %v3338
  %4811 = vmatpush.bf16.msra.mxu0 %v3334
  %4812 = vmatpush.bf16.msra.mxu0 %v3330
  %4813 = vmatpush.bf16.msra.mxu0 %v3326
  %4814 = vmatpush.bf16.msra.mxu0 %v3322
  %4815 = vmatpush.bf16.msra.mxu0 %v3318
  %4816 = vmatpush.bf16.msra.mxu0 %v3314
  %4817 = vmatpush.bf16.msra.mxu0 %v3310
  %4818 = vmatmul.bf16.gmra.mxu0 %v896
  %v4819 = vpop.f32.mrf.mxu0
  %v4820 = vadd.f32 %v4806, %v4819
  %v4821 = vpop.f32.mrf.mxu0
  %v4822 = vadd.f32 %v4808, %v4821
  %4823 = vdwg.mxu0
  %4824 = vmatpush.bf16.msra.mxu0 %v3370
  %4825 = vmatpush.bf16.msra.mxu0 %v3366
  %4826 = vmatpush.bf16.msra.mxu0 %v3362
  %4827 = vmatpush.bf16.msra.mxu0 %v3358
  %4828 = vmatpush.bf16.msra.mxu0 %v3354
  %4829 = vmatpush.bf16.msra.mxu0 %v3350
  %4830 = vmatpush.bf16.msra.mxu0 %v3346
  %4831 = vmatpush.bf16.msra.mxu0 %v3342
  %4832 = vmatmul.bf16.gmra.mxu0 %v897
  %v4833 = vpop.f32.mrf.mxu0
  %v4834 = vadd.f32 %v4820, %v4833
  %v4835 = vpop.f32.mrf.mxu0
  %v4836 = vadd.f32 %v4822, %v4835
  %4837 = vdwg.mxu0
  %4838 = vmatpush.bf16.msra.mxu0 %v3402
  %4839 = vmatpush.bf16.msra.mxu0 %v3398
  %4840 = vmatpush.bf16.msra.mxu0 %v3394
  %4841 = vmatpush.bf16.msra.mxu0 %v3390
  %4842 = vmatpush.bf16.msra.mxu0 %v3386
  %4843 = vmatpush.bf16.msra.mxu0 %v3382
  %4844 = vmatpush.bf16.msra.mxu0 %v3378
  %4845 = vmatpush.bf16.msra.mxu0 %v3374
  %4846 = vmatmul.bf16.gmra.mxu0 %v898
  %v4847 = vpop.f32.mrf.mxu0
  %v4848 = vadd.f32 %v4834, %v4847
  %v4849 = vpop.f32.mrf.mxu0
  %v4850 = vadd.f32 %v4836, %v4849
  %4851 = vdwg.mxu0
  %4852 = vmatpush.bf16.msra.mxu0 %v3434
  %4853 = vmatpush.bf16.msra.mxu0 %v3430
  %4854 = vmatpush.bf16.msra.mxu0 %v3426
  %4855 = vmatpush.bf16.msra.mxu0 %v3422
  %4856 = vmatpush.bf16.msra.mxu0 %v3418
  %4857 = vmatpush.bf16.msra.mxu0 %v3414
  %4858 = vmatpush.bf16.msra.mxu0 %v3410
  %4859 = vmatpush.bf16.msra.mxu0 %v3406
  %4860 = vmatmul.bf16.gmra.mxu0 %v899
  %v4861 = vpop.f32.mrf.mxu0
  %v4862 = vadd.f32 %v4848, %v4861
  %v4863 = vpop.f32.mrf.mxu0
  %v4864 = vadd.f32 %v4850, %v4863
  %4865 = vdwg.mxu0
  %4866 = vmatpush.bf16.msra.mxu0 %v3466
  %4867 = vmatpush.bf16.msra.mxu0 %v3462
  %4868 = vmatpush.bf16.msra.mxu0 %v3458
  %4869 = vmatpush.bf16.msra.mxu0 %v3454
  %4870 = vmatpush.bf16.msra.mxu0 %v3450
  %4871 = vmatpush.bf16.msra.mxu0 %v3446
  %4872 = vmatpush.bf16.msra.mxu0 %v3442
  %4873 = vmatpush.bf16.msra.mxu0 %v3438
  %4874 = vmatmul.bf16.gmra.mxu0 %v900
  %v4875 = vpop.f32.mrf.mxu0
  %v4876 = vadd.f32 %v4862, %v4875
  %v4877 = vpop.f32.mrf.mxu0
  %v4878 = vadd.f32 %v4864, %v4877
  %4879 = vdwg.mxu0
  %4880 = vmatpush.bf16.msra.mxu0 %v3498
  %4881 = vmatpush.bf16.msra.mxu0 %v3494
  %4882 = vmatpush.bf16.msra.mxu0 %v3490
  %4883 = vmatpush.bf16.msra.mxu0 %v3486
  %4884 = vmatpush.bf16.msra.mxu0 %v3482
  %4885 = vmatpush.bf16.msra.mxu0 %v3478
  %4886 = vmatpush.bf16.msra.mxu0 %v3474
  %4887 = vmatpush.bf16.msra.mxu0 %v3470
  %4888 = vmatmul.bf16.gmra.mxu0 %v901
  %v4889 = vpop.f32.mrf.mxu0
  %v4890 = vadd.f32 %v4876, %v4889
  %v4891 = vpop.f32.mrf.mxu0
  %v4892 = vadd.f32 %v4878, %v4891
  %4893 = vdwg.mxu0
  %4894 = vmatpush.bf16.msra.mxu0 %v3530
  %4895 = vmatpush.bf16.msra.mxu0 %v3526
  %4896 = vmatpush.bf16.msra.mxu0 %v3522
  %4897 = vmatpush.bf16.msra.mxu0 %v3518
  %4898 = vmatpush.bf16.msra.mxu0 %v3514
  %4899 = vmatpush.bf16.msra.mxu0 %v3510
  %4900 = vmatpush.bf16.msra.mxu0 %v3506
  %4901 = vmatpush.bf16.msra.mxu0 %v3502
  %4902 = vmatmul.bf16.gmra.mxu0 %v902
  %v4903 = vpop.f32.mrf.mxu0
  %v4904 = vadd.f32 %v4890, %v4903
  %v4905 = vpop.f32.mrf.mxu0
  %v4906 = vadd.f32 %v4892, %v4905
  %4907 = vdwg.mxu0
  %4908 = vmatpush.bf16.msra.mxu0 %v3562
  %4909 = vmatpush.bf16.msra.mxu0 %v3558
  %4910 = vmatpush.bf16.msra.mxu0 %v3554
  %4911 = vmatpush.bf16.msra.mxu0 %v3550
  %4912 = vmatpush.bf16.msra.mxu0 %v3546
  %4913 = vmatpush.bf16.msra.mxu0 %v3542
  %4914 = vmatpush.bf16.msra.mxu0 %v3538
  %4915 = vmatpush.bf16.msra.mxu0 %v3534
  %4916 = vmatmul.bf16.gmra.mxu0 %v903
  %v4917 = vpop.f32.mrf.mxu0
  %v4918 = vadd.f32 %v4904, %v4917
  %v4919 = vpop.f32.mrf.mxu0
  %v4920 = vadd.f32 %v4906, %v4919
  %4921 = vdwg.mxu0
  %4922 = vmatpush.bf16.msra.mxu0 %v3594
  %4923 = vmatpush.bf16.msra.mxu0 %v3590
  %4924 = vmatpush.bf16.msra.mxu0 %v3586
  %4925 = vmatpush.bf16.msra.mxu0 %v3582
  %4926 = vmatpush.bf16.msra.mxu0 %v3578
  %4927 = vmatpush.bf16.msra.mxu0 %v3574
  %4928 = vmatpush.bf16.msra.mxu0 %v3570
  %4929 = vmatpush.bf16.msra.mxu0 %v3566
  %4930 = vmatmul.bf16.gmra.mxu0 %v904
  %v4931 = vpop.f32.mrf.mxu0
  %v4932 = vadd.f32 %v4918, %v4931
  %v4933 = vpop.f32.mrf.mxu0
  %v4934 = vadd.f32 %v4920, %v4933
  %4935 = vdwg.mxu0
  %4936 = vmatpush.bf16.msra.mxu0 %v3626
  %4937 = vmatpush.bf16.msra.mxu0 %v3622
  %4938 = vmatpush.bf16.msra.mxu0 %v3618
  %4939 = vmatpush.bf16.msra.mxu0 %v3614
  %4940 = vmatpush.bf16.msra.mxu0 %v3610
  %4941 = vmatpush.bf16.msra.mxu0 %v3606
  %4942 = vmatpush.bf16.msra.mxu0 %v3602
  %4943 = vmatpush.bf16.msra.mxu0 %v3598
  %4944 = vmatmul.bf16.gmra.mxu0 %v905
  %v4945 = vpop.f32.mrf.mxu0
  %v4946 = vadd.f32 %v4932, %v4945
  %v4947 = vpop.f32.mrf.mxu0
  %v4948 = vadd.f32 %v4934, %v4947
  %4949 = vdwg.mxu0
  %4950 = vmatpush.bf16.msra.mxu0 %v3658
  %4951 = vmatpush.bf16.msra.mxu0 %v3654
  %4952 = vmatpush.bf16.msra.mxu0 %v3650
  %4953 = vmatpush.bf16.msra.mxu0 %v3646
  %4954 = vmatpush.bf16.msra.mxu0 %v3642
  %4955 = vmatpush.bf16.msra.mxu0 %v3638
  %4956 = vmatpush.bf16.msra.mxu0 %v3634
  %4957 = vmatpush.bf16.msra.mxu0 %v3630
  %4958 = vmatmul.bf16.gmra.mxu0 %v906
  %v4959 = vpop.f32.mrf.mxu0
  %v4960 = vadd.f32 %v4946, %v4959
  %v4961 = vpop.f32.mrf.mxu0
  %v4962 = vadd.f32 %v4948, %v4961
  %4963 = vdwg.mxu0
  %4964 = vmatpush.bf16.msra.mxu0 %v3690
  %4965 = vmatpush.bf16.msra.mxu0 %v3686
  %4966 = vmatpush.bf16.msra.mxu0 %v3682
  %4967 = vmatpush.bf16.msra.mxu0 %v3678
  %4968 = vmatpush.bf16.msra.mxu0 %v3674
  %4969 = vmatpush.bf16.msra.mxu0 %v3670
  %4970 = vmatpush.bf16.msra.mxu0 %v3666
  %4971 = vmatpush.bf16.msra.mxu0 %v3662
  %4972 = vmatmul.bf16.gmra.mxu0 %v907
  %v4973 = vpop.f32.mrf.mxu0
  %v4974 = vadd.f32 %v4960, %v4973
  %v4975 = vpop.f32.mrf.mxu0
  %v4976 = vadd.f32 %v4962, %v4975
  %4977 = vdwg.mxu0
  %4978 = vmatpush.bf16.msra.mxu0 %v3722
  %4979 = vmatpush.bf16.msra.mxu0 %v3718
  %4980 = vmatpush.bf16.msra.mxu0 %v3714
  %4981 = vmatpush.bf16.msra.mxu0 %v3710
  %4982 = vmatpush.bf16.msra.mxu0 %v3706
  %4983 = vmatpush.bf16.msra.mxu0 %v3702
  %4984 = vmatpush.bf16.msra.mxu0 %v3698
  %4985 = vmatpush.bf16.msra.mxu0 %v3694
  %4986 = vmatmul.bf16.gmra.mxu0 %v908
  %v4987 = vpop.f32.mrf.mxu0
  %v4988 = vadd.f32 %v4974, %v4987
  %v4989 = vpop.f32.mrf.mxu0
  %v4990 = vadd.f32 %v4976, %v4989
  %4991 = vdwg.mxu0
  %4992 = vmatpush.bf16.msra.mxu0 %v3754
  %4993 = vmatpush.bf16.msra.mxu0 %v3750
  %4994 = vmatpush.bf16.msra.mxu0 %v3746
  %4995 = vmatpush.bf16.msra.mxu0 %v3742
  %4996 = vmatpush.bf16.msra.mxu0 %v3738
  %4997 = vmatpush.bf16.msra.mxu0 %v3734
  %4998 = vmatpush.bf16.msra.mxu0 %v3730
  %4999 = vmatpush.bf16.msra.mxu0 %v3726
  %5000 = vmatmul.bf16.gmra.mxu0 %v909
  %v5001 = vpop.f32.mrf.mxu0
  %v5002 = vadd.f32 %v4988, %v5001
  %v5003 = vpop.f32.mrf.mxu0
  %v5004 = vadd.f32 %v4990, %v5003
  %5005 = vdwg.mxu0
  %5006 = vmatpush.bf16.msra.mxu0 %v3786
  %5007 = vmatpush.bf16.msra.mxu0 %v3782
  %5008 = vmatpush.bf16.msra.mxu0 %v3778
  %5009 = vmatpush.bf16.msra.mxu0 %v3774
  %5010 = vmatpush.bf16.msra.mxu0 %v3770
  %5011 = vmatpush.bf16.msra.mxu0 %v3766
  %5012 = vmatpush.bf16.msra.mxu0 %v3762
  %5013 = vmatpush.bf16.msra.mxu0 %v3758
  %5014 = vmatmul.bf16.gmra.mxu0 %v910
  %v5015 = vpop.f32.mrf.mxu0
  %v5016 = vadd.f32 %v5002, %v5015
  %v5017 = vpop.f32.mrf.mxu0
  %v5018 = vadd.f32 %v5004, %v5017
  %5019 = vdwg.mxu0
  %5020 = vmatpush.bf16.msra.mxu0 %v3818
  %5021 = vmatpush.bf16.msra.mxu0 %v3814
  %5022 = vmatpush.bf16.msra.mxu0 %v3810
  %5023 = vmatpush.bf16.msra.mxu0 %v3806
  %5024 = vmatpush.bf16.msra.mxu0 %v3802
  %5025 = vmatpush.bf16.msra.mxu0 %v3798
  %5026 = vmatpush.bf16.msra.mxu0 %v3794
  %5027 = vmatpush.bf16.msra.mxu0 %v3790
  %5028 = vmatmul.bf16.gmra.mxu0 %v911
  %v5029 = vpop.f32.mrf.mxu0
  %v5030 = vadd.f32 %v5016, %v5029
  %v5031 = vpop.f32.mrf.mxu0
  %v5032 = vadd.f32 %v5018, %v5031
  %5033 = vdwg.mxu0
  %5034 = vmatpush.bf16.msra.mxu0 %v3850
  %5035 = vmatpush.bf16.msra.mxu0 %v3846
  %5036 = vmatpush.bf16.msra.mxu0 %v3842
  %5037 = vmatpush.bf16.msra.mxu0 %v3838
  %5038 = vmatpush.bf16.msra.mxu0 %v3834
  %5039 = vmatpush.bf16.msra.mxu0 %v3830
  %5040 = vmatpush.bf16.msra.mxu0 %v3826
  %5041 = vmatpush.bf16.msra.mxu0 %v3822
  %5042 = vmatmul.bf16.gmra.mxu0 %v912
  %v5043 = vpop.f32.mrf.mxu0
  %v5044 = vadd.f32 %v5030, %v5043
  %v5045 = vpop.f32.mrf.mxu0
  %v5046 = vadd.f32 %v5032, %v5045
  %5047 = vdwg.mxu0
  %5048 = vmatpush.bf16.msra.mxu0 %v3882
  %5049 = vmatpush.bf16.msra.mxu0 %v3878
  %5050 = vmatpush.bf16.msra.mxu0 %v3874
  %5051 = vmatpush.bf16.msra.mxu0 %v3870
  %5052 = vmatpush.bf16.msra.mxu0 %v3866
  %5053 = vmatpush.bf16.msra.mxu0 %v3862
  %5054 = vmatpush.bf16.msra.mxu0 %v3858
  %5055 = vmatpush.bf16.msra.mxu0 %v3854
  %5056 = vmatmul.bf16.gmra.mxu0 %v913
  %v5057 = vpop.f32.mrf.mxu0
  %v5058 = vadd.f32 %v5044, %v5057
  %v5059 = vpop.f32.mrf.mxu0
  %v5060 = vadd.f32 %v5046, %v5059
  %5061 = vdwg.mxu0
  %5062 = vmatpush.bf16.msra.mxu0 %v3914
  %5063 = vmatpush.bf16.msra.mxu0 %v3910
  %5064 = vmatpush.bf16.msra.mxu0 %v3906
  %5065 = vmatpush.bf16.msra.mxu0 %v3902
  %5066 = vmatpush.bf16.msra.mxu0 %v3898
  %5067 = vmatpush.bf16.msra.mxu0 %v3894
  %5068 = vmatpush.bf16.msra.mxu0 %v3890
  %5069 = vmatpush.bf16.msra.mxu0 %v3886
  %5070 = vmatmul.bf16.gmra.mxu0 %v914
  %v5071 = vpop.f32.mrf.mxu0
  %v5072 = vadd.f32 %v5058, %v5071
  %v5073 = vpop.f32.mrf.mxu0
  %v5074 = vadd.f32 %v5060, %v5073
  %5075 = vdwg.mxu0
  %5076 = vmatpush.bf16.msra.mxu0 %v3946
  %5077 = vmatpush.bf16.msra.mxu0 %v3942
  %5078 = vmatpush.bf16.msra.mxu0 %v3938
  %5079 = vmatpush.bf16.msra.mxu0 %v3934
  %5080 = vmatpush.bf16.msra.mxu0 %v3930
  %5081 = vmatpush.bf16.msra.mxu0 %v3926
  %5082 = vmatpush.bf16.msra.mxu0 %v3922
  %5083 = vmatpush.bf16.msra.mxu0 %v3918
  %5084 = vmatmul.bf16.gmra.mxu0 %v915
  %v5085 = vpop.f32.mrf.mxu0
  %v5086 = vadd.f32 %v5072, %v5085
  %v5087 = vpop.f32.mrf.mxu0
  %v5088 = vadd.f32 %v5074, %v5087
  %5089 = vdwg.mxu0
  %5090 = vmatpush.bf16.msra.mxu0 %v3978
  %5091 = vmatpush.bf16.msra.mxu0 %v3974
  %5092 = vmatpush.bf16.msra.mxu0 %v3970
  %5093 = vmatpush.bf16.msra.mxu0 %v3966
  %5094 = vmatpush.bf16.msra.mxu0 %v3962
  %5095 = vmatpush.bf16.msra.mxu0 %v3958
  %5096 = vmatpush.bf16.msra.mxu0 %v3954
  %5097 = vmatpush.bf16.msra.mxu0 %v3950
  %5098 = vmatmul.bf16.gmra.mxu0 %v916
  %v5099 = vpop.f32.mrf.mxu0
  %v5100 = vadd.f32 %v5086, %v5099
  %v5101 = vpop.f32.mrf.mxu0
  %v5102 = vadd.f32 %v5088, %v5101
  %5103 = vdwg.mxu0
  %5104 = vmatpush.bf16.msra.mxu0 %v4010
  %5105 = vmatpush.bf16.msra.mxu0 %v4006
  %5106 = vmatpush.bf16.msra.mxu0 %v4002
  %5107 = vmatpush.bf16.msra.mxu0 %v3998
  %5108 = vmatpush.bf16.msra.mxu0 %v3994
  %5109 = vmatpush.bf16.msra.mxu0 %v3990
  %5110 = vmatpush.bf16.msra.mxu0 %v3986
  %5111 = vmatpush.bf16.msra.mxu0 %v3982
  %5112 = vmatmul.bf16.gmra.mxu0 %v917
  %v5113 = vpop.f32.mrf.mxu0
  %v5114 = vadd.f32 %v5100, %v5113
  %v5115 = vpop.f32.mrf.mxu0
  %v5116 = vadd.f32 %v5102, %v5115
  %5117 = vdwg.mxu0
  %5118 = vmatpush.bf16.msra.mxu0 %v3275
  %5119 = vmatpush.bf16.msra.mxu0 %v3271
  %5120 = vmatpush.bf16.msra.mxu0 %v3267
  %5121 = vmatpush.bf16.msra.mxu0 %v3263
  %5122 = vmatpush.bf16.msra.mxu0 %v3259
  %5123 = vmatpush.bf16.msra.mxu0 %v3255
  %5124 = vmatpush.bf16.msra.mxu0 %v3251
  %5125 = vmatpush.bf16.msra.mxu0 %v3247
  %5126 = vmatmul.bf16.gmra.mxu0 %v894
  %v5127 = vpop.f32.mrf.mxu0
  %v5128 = vadd.f32 %v815, %v5127
  %v5129 = vpop.f32.mrf.mxu0
  %v5130 = vadd.f32 %v815, %v5129
  %5131 = vdwg.mxu0
  %5132 = vmatpush.bf16.msra.mxu0 %v3307
  %5133 = vmatpush.bf16.msra.mxu0 %v3303
  %5134 = vmatpush.bf16.msra.mxu0 %v3299
  %5135 = vmatpush.bf16.msra.mxu0 %v3295
  %5136 = vmatpush.bf16.msra.mxu0 %v3291
  %5137 = vmatpush.bf16.msra.mxu0 %v3287
  %5138 = vmatpush.bf16.msra.mxu0 %v3283
  %5139 = vmatpush.bf16.msra.mxu0 %v3279
  %5140 = vmatmul.bf16.gmra.mxu0 %v895
  %v5141 = vpop.f32.mrf.mxu0
  %v5142 = vadd.f32 %v5128, %v5141
  %v5143 = vpop.f32.mrf.mxu0
  %v5144 = vadd.f32 %v5130, %v5143
  %5145 = vdwg.mxu0
  %5146 = vmatpush.bf16.msra.mxu0 %v3339
  %5147 = vmatpush.bf16.msra.mxu0 %v3335
  %5148 = vmatpush.bf16.msra.mxu0 %v3331
  %5149 = vmatpush.bf16.msra.mxu0 %v3327
  %5150 = vmatpush.bf16.msra.mxu0 %v3323
  %5151 = vmatpush.bf16.msra.mxu0 %v3319
  %5152 = vmatpush.bf16.msra.mxu0 %v3315
  %5153 = vmatpush.bf16.msra.mxu0 %v3311
  %5154 = vmatmul.bf16.gmra.mxu0 %v896
  %v5155 = vpop.f32.mrf.mxu0
  %v5156 = vadd.f32 %v5142, %v5155
  %v5157 = vpop.f32.mrf.mxu0
  %v5158 = vadd.f32 %v5144, %v5157
  %5159 = vdwg.mxu0
  %5160 = vmatpush.bf16.msra.mxu0 %v3371
  %5161 = vmatpush.bf16.msra.mxu0 %v3367
  %5162 = vmatpush.bf16.msra.mxu0 %v3363
  %5163 = vmatpush.bf16.msra.mxu0 %v3359
  %5164 = vmatpush.bf16.msra.mxu0 %v3355
  %5165 = vmatpush.bf16.msra.mxu0 %v3351
  %5166 = vmatpush.bf16.msra.mxu0 %v3347
  %5167 = vmatpush.bf16.msra.mxu0 %v3343
  %5168 = vmatmul.bf16.gmra.mxu0 %v897
  %v5169 = vpop.f32.mrf.mxu0
  %v5170 = vadd.f32 %v5156, %v5169
  %v5171 = vpop.f32.mrf.mxu0
  %v5172 = vadd.f32 %v5158, %v5171
  %5173 = vdwg.mxu0
  %5174 = vmatpush.bf16.msra.mxu0 %v3403
  %5175 = vmatpush.bf16.msra.mxu0 %v3399
  %5176 = vmatpush.bf16.msra.mxu0 %v3395
  %5177 = vmatpush.bf16.msra.mxu0 %v3391
  %5178 = vmatpush.bf16.msra.mxu0 %v3387
  %5179 = vmatpush.bf16.msra.mxu0 %v3383
  %5180 = vmatpush.bf16.msra.mxu0 %v3379
  %5181 = vmatpush.bf16.msra.mxu0 %v3375
  %5182 = vmatmul.bf16.gmra.mxu0 %v898
  %v5183 = vpop.f32.mrf.mxu0
  %v5184 = vadd.f32 %v5170, %v5183
  %v5185 = vpop.f32.mrf.mxu0
  %v5186 = vadd.f32 %v5172, %v5185
  %5187 = vdwg.mxu0
  %5188 = vmatpush.bf16.msra.mxu0 %v3435
  %5189 = vmatpush.bf16.msra.mxu0 %v3431
  %5190 = vmatpush.bf16.msra.mxu0 %v3427
  %5191 = vmatpush.bf16.msra.mxu0 %v3423
  %5192 = vmatpush.bf16.msra.mxu0 %v3419
  %5193 = vmatpush.bf16.msra.mxu0 %v3415
  %5194 = vmatpush.bf16.msra.mxu0 %v3411
  %5195 = vmatpush.bf16.msra.mxu0 %v3407
  %5196 = vmatmul.bf16.gmra.mxu0 %v899
  %v5197 = vpop.f32.mrf.mxu0
  %v5198 = vadd.f32 %v5184, %v5197
  %v5199 = vpop.f32.mrf.mxu0
  %v5200 = vadd.f32 %v5186, %v5199
  %5201 = vdwg.mxu0
  %5202 = vmatpush.bf16.msra.mxu0 %v3467
  %5203 = vmatpush.bf16.msra.mxu0 %v3463
  %5204 = vmatpush.bf16.msra.mxu0 %v3459
  %5205 = vmatpush.bf16.msra.mxu0 %v3455
  %5206 = vmatpush.bf16.msra.mxu0 %v3451
  %5207 = vmatpush.bf16.msra.mxu0 %v3447
  %5208 = vmatpush.bf16.msra.mxu0 %v3443
  %5209 = vmatpush.bf16.msra.mxu0 %v3439
  %5210 = vmatmul.bf16.gmra.mxu0 %v900
  %v5211 = vpop.f32.mrf.mxu0
  %v5212 = vadd.f32 %v5198, %v5211
  %v5213 = vpop.f32.mrf.mxu0
  %v5214 = vadd.f32 %v5200, %v5213
  %5215 = vdwg.mxu0
  %5216 = vmatpush.bf16.msra.mxu0 %v3499
  %5217 = vmatpush.bf16.msra.mxu0 %v3495
  %5218 = vmatpush.bf16.msra.mxu0 %v3491
  %5219 = vmatpush.bf16.msra.mxu0 %v3487
  %5220 = vmatpush.bf16.msra.mxu0 %v3483
  %5221 = vmatpush.bf16.msra.mxu0 %v3479
  %5222 = vmatpush.bf16.msra.mxu0 %v3475
  %5223 = vmatpush.bf16.msra.mxu0 %v3471
  %5224 = vmatmul.bf16.gmra.mxu0 %v901
  %v5225 = vpop.f32.mrf.mxu0
  %v5226 = vadd.f32 %v5212, %v5225
  %v5227 = vpop.f32.mrf.mxu0
  %v5228 = vadd.f32 %v5214, %v5227
  %5229 = vdwg.mxu0
  %5230 = vmatpush.bf16.msra.mxu0 %v3531
  %5231 = vmatpush.bf16.msra.mxu0 %v3527
  %5232 = vmatpush.bf16.msra.mxu0 %v3523
  %5233 = vmatpush.bf16.msra.mxu0 %v3519
  %5234 = vmatpush.bf16.msra.mxu0 %v3515
  %5235 = vmatpush.bf16.msra.mxu0 %v3511
  %5236 = vmatpush.bf16.msra.mxu0 %v3507
  %5237 = vmatpush.bf16.msra.mxu0 %v3503
  %5238 = vmatmul.bf16.gmra.mxu0 %v902
  %v5239 = vpop.f32.mrf.mxu0
  %v5240 = vadd.f32 %v5226, %v5239
  %v5241 = vpop.f32.mrf.mxu0
  %v5242 = vadd.f32 %v5228, %v5241
  %5243 = vdwg.mxu0
  %5244 = vmatpush.bf16.msra.mxu0 %v3563
  %5245 = vmatpush.bf16.msra.mxu0 %v3559
  %5246 = vmatpush.bf16.msra.mxu0 %v3555
  %5247 = vmatpush.bf16.msra.mxu0 %v3551
  %5248 = vmatpush.bf16.msra.mxu0 %v3547
  %5249 = vmatpush.bf16.msra.mxu0 %v3543
  %5250 = vmatpush.bf16.msra.mxu0 %v3539
  %5251 = vmatpush.bf16.msra.mxu0 %v3535
  %5252 = vmatmul.bf16.gmra.mxu0 %v903
  %v5253 = vpop.f32.mrf.mxu0
  %v5254 = vadd.f32 %v5240, %v5253
  %v5255 = vpop.f32.mrf.mxu0
  %v5256 = vadd.f32 %v5242, %v5255
  %5257 = vdwg.mxu0
  %5258 = vmatpush.bf16.msra.mxu0 %v3595
  %5259 = vmatpush.bf16.msra.mxu0 %v3591
  %5260 = vmatpush.bf16.msra.mxu0 %v3587
  %5261 = vmatpush.bf16.msra.mxu0 %v3583
  %5262 = vmatpush.bf16.msra.mxu0 %v3579
  %5263 = vmatpush.bf16.msra.mxu0 %v3575
  %5264 = vmatpush.bf16.msra.mxu0 %v3571
  %5265 = vmatpush.bf16.msra.mxu0 %v3567
  %5266 = vmatmul.bf16.gmra.mxu0 %v904
  %v5267 = vpop.f32.mrf.mxu0
  %v5268 = vadd.f32 %v5254, %v5267
  %v5269 = vpop.f32.mrf.mxu0
  %v5270 = vadd.f32 %v5256, %v5269
  %5271 = vdwg.mxu0
  %5272 = vmatpush.bf16.msra.mxu0 %v3627
  %5273 = vmatpush.bf16.msra.mxu0 %v3623
  %5274 = vmatpush.bf16.msra.mxu0 %v3619
  %5275 = vmatpush.bf16.msra.mxu0 %v3615
  %5276 = vmatpush.bf16.msra.mxu0 %v3611
  %5277 = vmatpush.bf16.msra.mxu0 %v3607
  %5278 = vmatpush.bf16.msra.mxu0 %v3603
  %5279 = vmatpush.bf16.msra.mxu0 %v3599
  %5280 = vmatmul.bf16.gmra.mxu0 %v905
  %v5281 = vpop.f32.mrf.mxu0
  %v5282 = vadd.f32 %v5268, %v5281
  %v5283 = vpop.f32.mrf.mxu0
  %v5284 = vadd.f32 %v5270, %v5283
  %5285 = vdwg.mxu0
  %5286 = vmatpush.bf16.msra.mxu0 %v3659
  %5287 = vmatpush.bf16.msra.mxu0 %v3655
  %5288 = vmatpush.bf16.msra.mxu0 %v3651
  %5289 = vmatpush.bf16.msra.mxu0 %v3647
  %5290 = vmatpush.bf16.msra.mxu0 %v3643
  %5291 = vmatpush.bf16.msra.mxu0 %v3639
  %5292 = vmatpush.bf16.msra.mxu0 %v3635
  %5293 = vmatpush.bf16.msra.mxu0 %v3631
  %5294 = vmatmul.bf16.gmra.mxu0 %v906
  %v5295 = vpop.f32.mrf.mxu0
  %v5296 = vadd.f32 %v5282, %v5295
  %v5297 = vpop.f32.mrf.mxu0
  %v5298 = vadd.f32 %v5284, %v5297
  %5299 = vdwg.mxu0
  %5300 = vmatpush.bf16.msra.mxu0 %v3691
  %5301 = vmatpush.bf16.msra.mxu0 %v3687
  %5302 = vmatpush.bf16.msra.mxu0 %v3683
  %5303 = vmatpush.bf16.msra.mxu0 %v3679
  %5304 = vmatpush.bf16.msra.mxu0 %v3675
  %5305 = vmatpush.bf16.msra.mxu0 %v3671
  %5306 = vmatpush.bf16.msra.mxu0 %v3667
  %5307 = vmatpush.bf16.msra.mxu0 %v3663
  %5308 = vmatmul.bf16.gmra.mxu0 %v907
  %v5309 = vpop.f32.mrf.mxu0
  %v5310 = vadd.f32 %v5296, %v5309
  %v5311 = vpop.f32.mrf.mxu0
  %v5312 = vadd.f32 %v5298, %v5311
  %5313 = vdwg.mxu0
  %5314 = vmatpush.bf16.msra.mxu0 %v3723
  %5315 = vmatpush.bf16.msra.mxu0 %v3719
  %5316 = vmatpush.bf16.msra.mxu0 %v3715
  %5317 = vmatpush.bf16.msra.mxu0 %v3711
  %5318 = vmatpush.bf16.msra.mxu0 %v3707
  %5319 = vmatpush.bf16.msra.mxu0 %v3703
  %5320 = vmatpush.bf16.msra.mxu0 %v3699
  %5321 = vmatpush.bf16.msra.mxu0 %v3695
  %5322 = vmatmul.bf16.gmra.mxu0 %v908
  %v5323 = vpop.f32.mrf.mxu0
  %v5324 = vadd.f32 %v5310, %v5323
  %v5325 = vpop.f32.mrf.mxu0
  %v5326 = vadd.f32 %v5312, %v5325
  %5327 = vdwg.mxu0
  %5328 = vmatpush.bf16.msra.mxu0 %v3755
  %5329 = vmatpush.bf16.msra.mxu0 %v3751
  %5330 = vmatpush.bf16.msra.mxu0 %v3747
  %5331 = vmatpush.bf16.msra.mxu0 %v3743
  %5332 = vmatpush.bf16.msra.mxu0 %v3739
  %5333 = vmatpush.bf16.msra.mxu0 %v3735
  %5334 = vmatpush.bf16.msra.mxu0 %v3731
  %5335 = vmatpush.bf16.msra.mxu0 %v3727
  %5336 = vmatmul.bf16.gmra.mxu0 %v909
  %v5337 = vpop.f32.mrf.mxu0
  %v5338 = vadd.f32 %v5324, %v5337
  %v5339 = vpop.f32.mrf.mxu0
  %v5340 = vadd.f32 %v5326, %v5339
  %5341 = vdwg.mxu0
  %5342 = vmatpush.bf16.msra.mxu0 %v3787
  %5343 = vmatpush.bf16.msra.mxu0 %v3783
  %5344 = vmatpush.bf16.msra.mxu0 %v3779
  %5345 = vmatpush.bf16.msra.mxu0 %v3775
  %5346 = vmatpush.bf16.msra.mxu0 %v3771
  %5347 = vmatpush.bf16.msra.mxu0 %v3767
  %5348 = vmatpush.bf16.msra.mxu0 %v3763
  %5349 = vmatpush.bf16.msra.mxu0 %v3759
  %5350 = vmatmul.bf16.gmra.mxu0 %v910
  %v5351 = vpop.f32.mrf.mxu0
  %v5352 = vadd.f32 %v5338, %v5351
  %v5353 = vpop.f32.mrf.mxu0
  %v5354 = vadd.f32 %v5340, %v5353
  %5355 = vdwg.mxu0
  %5356 = vmatpush.bf16.msra.mxu0 %v3819
  %5357 = vmatpush.bf16.msra.mxu0 %v3815
  %5358 = vmatpush.bf16.msra.mxu0 %v3811
  %5359 = vmatpush.bf16.msra.mxu0 %v3807
  %5360 = vmatpush.bf16.msra.mxu0 %v3803
  %5361 = vmatpush.bf16.msra.mxu0 %v3799
  %5362 = vmatpush.bf16.msra.mxu0 %v3795
  %5363 = vmatpush.bf16.msra.mxu0 %v3791
  %5364 = vmatmul.bf16.gmra.mxu0 %v911
  %v5365 = vpop.f32.mrf.mxu0
  %v5366 = vadd.f32 %v5352, %v5365
  %v5367 = vpop.f32.mrf.mxu0
  %v5368 = vadd.f32 %v5354, %v5367
  %5369 = vdwg.mxu0
  %5370 = vmatpush.bf16.msra.mxu0 %v3851
  %5371 = vmatpush.bf16.msra.mxu0 %v3847
  %5372 = vmatpush.bf16.msra.mxu0 %v3843
  %5373 = vmatpush.bf16.msra.mxu0 %v3839
  %5374 = vmatpush.bf16.msra.mxu0 %v3835
  %5375 = vmatpush.bf16.msra.mxu0 %v3831
  %5376 = vmatpush.bf16.msra.mxu0 %v3827
  %5377 = vmatpush.bf16.msra.mxu0 %v3823
  %5378 = vmatmul.bf16.gmra.mxu0 %v912
  %v5379 = vpop.f32.mrf.mxu0
  %v5380 = vadd.f32 %v5366, %v5379
  %v5381 = vpop.f32.mrf.mxu0
  %v5382 = vadd.f32 %v5368, %v5381
  %5383 = vdwg.mxu0
  %5384 = vmatpush.bf16.msra.mxu0 %v3883
  %5385 = vmatpush.bf16.msra.mxu0 %v3879
  %5386 = vmatpush.bf16.msra.mxu0 %v3875
  %5387 = vmatpush.bf16.msra.mxu0 %v3871
  %5388 = vmatpush.bf16.msra.mxu0 %v3867
  %5389 = vmatpush.bf16.msra.mxu0 %v3863
  %5390 = vmatpush.bf16.msra.mxu0 %v3859
  %5391 = vmatpush.bf16.msra.mxu0 %v3855
  %5392 = vmatmul.bf16.gmra.mxu0 %v913
  %v5393 = vpop.f32.mrf.mxu0
  %v5394 = vadd.f32 %v5380, %v5393
  %v5395 = vpop.f32.mrf.mxu0
  %v5396 = vadd.f32 %v5382, %v5395
  %5397 = vdwg.mxu0
  %5398 = vmatpush.bf16.msra.mxu0 %v3915
  %5399 = vmatpush.bf16.msra.mxu0 %v3911
  %5400 = vmatpush.bf16.msra.mxu0 %v3907
  %5401 = vmatpush.bf16.msra.mxu0 %v3903
  %5402 = vmatpush.bf16.msra.mxu0 %v3899
  %5403 = vmatpush.bf16.msra.mxu0 %v3895
  %5404 = vmatpush.bf16.msra.mxu0 %v3891
  %5405 = vmatpush.bf16.msra.mxu0 %v3887
  %5406 = vmatmul.bf16.gmra.mxu0 %v914
  %v5407 = vpop.f32.mrf.mxu0
  %v5408 = vadd.f32 %v5394, %v5407
  %v5409 = vpop.f32.mrf.mxu0
  %v5410 = vadd.f32 %v5396, %v5409
  %5411 = vdwg.mxu0
  %5412 = vmatpush.bf16.msra.mxu0 %v3947
  %5413 = vmatpush.bf16.msra.mxu0 %v3943
  %5414 = vmatpush.bf16.msra.mxu0 %v3939
  %5415 = vmatpush.bf16.msra.mxu0 %v3935
  %5416 = vmatpush.bf16.msra.mxu0 %v3931
  %5417 = vmatpush.bf16.msra.mxu0 %v3927
  %5418 = vmatpush.bf16.msra.mxu0 %v3923
  %5419 = vmatpush.bf16.msra.mxu0 %v3919
  %5420 = vmatmul.bf16.gmra.mxu0 %v915
  %v5421 = vpop.f32.mrf.mxu0
  %v5422 = vadd.f32 %v5408, %v5421
  %v5423 = vpop.f32.mrf.mxu0
  %v5424 = vadd.f32 %v5410, %v5423
  %5425 = vdwg.mxu0
  %5426 = vmatpush.bf16.msra.mxu0 %v3979
  %5427 = vmatpush.bf16.msra.mxu0 %v3975
  %5428 = vmatpush.bf16.msra.mxu0 %v3971
  %5429 = vmatpush.bf16.msra.mxu0 %v3967
  %5430 = vmatpush.bf16.msra.mxu0 %v3963
  %5431 = vmatpush.bf16.msra.mxu0 %v3959
  %5432 = vmatpush.bf16.msra.mxu0 %v3955
  %5433 = vmatpush.bf16.msra.mxu0 %v3951
  %5434 = vmatmul.bf16.gmra.mxu0 %v916
  %v5435 = vpop.f32.mrf.mxu0
  %v5436 = vadd.f32 %v5422, %v5435
  %v5437 = vpop.f32.mrf.mxu0
  %v5438 = vadd.f32 %v5424, %v5437
  %5439 = vdwg.mxu0
  %5440 = vmatpush.bf16.msra.mxu0 %v4011
  %5441 = vmatpush.bf16.msra.mxu0 %v4007
  %5442 = vmatpush.bf16.msra.mxu0 %v4003
  %5443 = vmatpush.bf16.msra.mxu0 %v3999
  %5444 = vmatpush.bf16.msra.mxu0 %v3995
  %5445 = vmatpush.bf16.msra.mxu0 %v3991
  %5446 = vmatpush.bf16.msra.mxu0 %v3987
  %5447 = vmatpush.bf16.msra.mxu0 %v3983
  %5448 = vmatmul.bf16.gmra.mxu0 %v917
  %v5449 = vpop.f32.mrf.mxu0
  %v5450 = vadd.f32 %v5436, %v5449
  %v5451 = vpop.f32.mrf.mxu0
  %v5452 = vadd.f32 %v5438, %v5451
  %5453 = vdwg.mxu0
  %5454 = vmatpush.bf16.msra.mxu0 %v3276
  %5455 = vmatpush.bf16.msra.mxu0 %v3272
  %5456 = vmatpush.bf16.msra.mxu0 %v3268
  %5457 = vmatpush.bf16.msra.mxu0 %v3264
  %5458 = vmatpush.bf16.msra.mxu0 %v3260
  %5459 = vmatpush.bf16.msra.mxu0 %v3256
  %5460 = vmatpush.bf16.msra.mxu0 %v3252
  %5461 = vmatpush.bf16.msra.mxu0 %v3248
  %5462 = vmatmul.bf16.gmra.mxu0 %v894
  %v5463 = vpop.f32.mrf.mxu0
  %v5464 = vadd.f32 %v816, %v5463
  %v5465 = vpop.f32.mrf.mxu0
  %v5466 = vadd.f32 %v816, %v5465
  %5467 = vdwg.mxu0
  %5468 = vmatpush.bf16.msra.mxu0 %v3308
  %5469 = vmatpush.bf16.msra.mxu0 %v3304
  %5470 = vmatpush.bf16.msra.mxu0 %v3300
  %5471 = vmatpush.bf16.msra.mxu0 %v3296
  %5472 = vmatpush.bf16.msra.mxu0 %v3292
  %5473 = vmatpush.bf16.msra.mxu0 %v3288
  %5474 = vmatpush.bf16.msra.mxu0 %v3284
  %5475 = vmatpush.bf16.msra.mxu0 %v3280
  %5476 = vmatmul.bf16.gmra.mxu0 %v895
  %v5477 = vpop.f32.mrf.mxu0
  %v5478 = vadd.f32 %v5464, %v5477
  %v5479 = vpop.f32.mrf.mxu0
  %v5480 = vadd.f32 %v5466, %v5479
  %5481 = vdwg.mxu0
  %5482 = vmatpush.bf16.msra.mxu0 %v3340
  %5483 = vmatpush.bf16.msra.mxu0 %v3336
  %5484 = vmatpush.bf16.msra.mxu0 %v3332
  %5485 = vmatpush.bf16.msra.mxu0 %v3328
  %5486 = vmatpush.bf16.msra.mxu0 %v3324
  %5487 = vmatpush.bf16.msra.mxu0 %v3320
  %5488 = vmatpush.bf16.msra.mxu0 %v3316
  %5489 = vmatpush.bf16.msra.mxu0 %v3312
  %5490 = vmatmul.bf16.gmra.mxu0 %v896
  %v5491 = vpop.f32.mrf.mxu0
  %v5492 = vadd.f32 %v5478, %v5491
  %v5493 = vpop.f32.mrf.mxu0
  %v5494 = vadd.f32 %v5480, %v5493
  %5495 = vdwg.mxu0
  %5496 = vmatpush.bf16.msra.mxu0 %v3372
  %5497 = vmatpush.bf16.msra.mxu0 %v3368
  %5498 = vmatpush.bf16.msra.mxu0 %v3364
  %5499 = vmatpush.bf16.msra.mxu0 %v3360
  %5500 = vmatpush.bf16.msra.mxu0 %v3356
  %5501 = vmatpush.bf16.msra.mxu0 %v3352
  %5502 = vmatpush.bf16.msra.mxu0 %v3348
  %5503 = vmatpush.bf16.msra.mxu0 %v3344
  %5504 = vmatmul.bf16.gmra.mxu0 %v897
  %v5505 = vpop.f32.mrf.mxu0
  %v5506 = vadd.f32 %v5492, %v5505
  %v5507 = vpop.f32.mrf.mxu0
  %v5508 = vadd.f32 %v5494, %v5507
  %5509 = vdwg.mxu0
  %5510 = vmatpush.bf16.msra.mxu0 %v3404
  %5511 = vmatpush.bf16.msra.mxu0 %v3400
  %5512 = vmatpush.bf16.msra.mxu0 %v3396
  %5513 = vmatpush.bf16.msra.mxu0 %v3392
  %5514 = vmatpush.bf16.msra.mxu0 %v3388
  %5515 = vmatpush.bf16.msra.mxu0 %v3384
  %5516 = vmatpush.bf16.msra.mxu0 %v3380
  %5517 = vmatpush.bf16.msra.mxu0 %v3376
  %5518 = vmatmul.bf16.gmra.mxu0 %v898
  %v5519 = vpop.f32.mrf.mxu0
  %v5520 = vadd.f32 %v5506, %v5519
  %v5521 = vpop.f32.mrf.mxu0
  %v5522 = vadd.f32 %v5508, %v5521
  %5523 = vdwg.mxu0
  %5524 = vmatpush.bf16.msra.mxu0 %v3436
  %5525 = vmatpush.bf16.msra.mxu0 %v3432
  %5526 = vmatpush.bf16.msra.mxu0 %v3428
  %5527 = vmatpush.bf16.msra.mxu0 %v3424
  %5528 = vmatpush.bf16.msra.mxu0 %v3420
  %5529 = vmatpush.bf16.msra.mxu0 %v3416
  %5530 = vmatpush.bf16.msra.mxu0 %v3412
  %5531 = vmatpush.bf16.msra.mxu0 %v3408
  %5532 = vmatmul.bf16.gmra.mxu0 %v899
  %v5533 = vpop.f32.mrf.mxu0
  %v5534 = vadd.f32 %v5520, %v5533
  %v5535 = vpop.f32.mrf.mxu0
  %v5536 = vadd.f32 %v5522, %v5535
  %5537 = vdwg.mxu0
  %5538 = vmatpush.bf16.msra.mxu0 %v3468
  %5539 = vmatpush.bf16.msra.mxu0 %v3464
  %5540 = vmatpush.bf16.msra.mxu0 %v3460
  %5541 = vmatpush.bf16.msra.mxu0 %v3456
  %5542 = vmatpush.bf16.msra.mxu0 %v3452
  %5543 = vmatpush.bf16.msra.mxu0 %v3448
  %5544 = vmatpush.bf16.msra.mxu0 %v3444
  %5545 = vmatpush.bf16.msra.mxu0 %v3440
  %5546 = vmatmul.bf16.gmra.mxu0 %v900
  %v5547 = vpop.f32.mrf.mxu0
  %v5548 = vadd.f32 %v5534, %v5547
  %v5549 = vpop.f32.mrf.mxu0
  %v5550 = vadd.f32 %v5536, %v5549
  %5551 = vdwg.mxu0
  %5552 = vmatpush.bf16.msra.mxu0 %v3500
  %5553 = vmatpush.bf16.msra.mxu0 %v3496
  %5554 = vmatpush.bf16.msra.mxu0 %v3492
  %5555 = vmatpush.bf16.msra.mxu0 %v3488
  %5556 = vmatpush.bf16.msra.mxu0 %v3484
  %5557 = vmatpush.bf16.msra.mxu0 %v3480
  %5558 = vmatpush.bf16.msra.mxu0 %v3476
  %5559 = vmatpush.bf16.msra.mxu0 %v3472
  %5560 = vmatmul.bf16.gmra.mxu0 %v901
  %v5561 = vpop.f32.mrf.mxu0
  %v5562 = vadd.f32 %v5548, %v5561
  %v5563 = vpop.f32.mrf.mxu0
  %v5564 = vadd.f32 %v5550, %v5563
  %5565 = vdwg.mxu0
  %5566 = vmatpush.bf16.msra.mxu0 %v3532
  %5567 = vmatpush.bf16.msra.mxu0 %v3528
  %5568 = vmatpush.bf16.msra.mxu0 %v3524
  %5569 = vmatpush.bf16.msra.mxu0 %v3520
  %5570 = vmatpush.bf16.msra.mxu0 %v3516
  %5571 = vmatpush.bf16.msra.mxu0 %v3512
  %5572 = vmatpush.bf16.msra.mxu0 %v3508
  %5573 = vmatpush.bf16.msra.mxu0 %v3504
  %5574 = vmatmul.bf16.gmra.mxu0 %v902
  %v5575 = vpop.f32.mrf.mxu0
  %v5576 = vadd.f32 %v5562, %v5575
  %v5577 = vpop.f32.mrf.mxu0
  %v5578 = vadd.f32 %v5564, %v5577
  %5579 = vdwg.mxu0
  %5580 = vmatpush.bf16.msra.mxu0 %v3564
  %5581 = vmatpush.bf16.msra.mxu0 %v3560
  %5582 = vmatpush.bf16.msra.mxu0 %v3556
  %5583 = vmatpush.bf16.msra.mxu0 %v3552
  %5584 = vmatpush.bf16.msra.mxu0 %v3548
  %5585 = vmatpush.bf16.msra.mxu0 %v3544
  %5586 = vmatpush.bf16.msra.mxu0 %v3540
  %5587 = vmatpush.bf16.msra.mxu0 %v3536
  %5588 = vmatmul.bf16.gmra.mxu0 %v903
  %v5589 = vpop.f32.mrf.mxu0
  %v5590 = vadd.f32 %v5576, %v5589
  %v5591 = vpop.f32.mrf.mxu0
  %v5592 = vadd.f32 %v5578, %v5591
  %5593 = vdwg.mxu0
  %5594 = vmatpush.bf16.msra.mxu0 %v3596
  %5595 = vmatpush.bf16.msra.mxu0 %v3592
  %5596 = vmatpush.bf16.msra.mxu0 %v3588
  %5597 = vmatpush.bf16.msra.mxu0 %v3584
  %5598 = vmatpush.bf16.msra.mxu0 %v3580
  %5599 = vmatpush.bf16.msra.mxu0 %v3576
  %5600 = vmatpush.bf16.msra.mxu0 %v3572
  %5601 = vmatpush.bf16.msra.mxu0 %v3568
  %5602 = vmatmul.bf16.gmra.mxu0 %v904
  %v5603 = vpop.f32.mrf.mxu0
  %v5604 = vadd.f32 %v5590, %v5603
  %v5605 = vpop.f32.mrf.mxu0
  %v5606 = vadd.f32 %v5592, %v5605
  %5607 = vdwg.mxu0
  %5608 = vmatpush.bf16.msra.mxu0 %v3628
  %5609 = vmatpush.bf16.msra.mxu0 %v3624
  %5610 = vmatpush.bf16.msra.mxu0 %v3620
  %5611 = vmatpush.bf16.msra.mxu0 %v3616
  %5612 = vmatpush.bf16.msra.mxu0 %v3612
  %5613 = vmatpush.bf16.msra.mxu0 %v3608
  %5614 = vmatpush.bf16.msra.mxu0 %v3604
  %5615 = vmatpush.bf16.msra.mxu0 %v3600
  %5616 = vmatmul.bf16.gmra.mxu0 %v905
  %v5617 = vpop.f32.mrf.mxu0
  %v5618 = vadd.f32 %v5604, %v5617
  %v5619 = vpop.f32.mrf.mxu0
  %v5620 = vadd.f32 %v5606, %v5619
  %5621 = vdwg.mxu0
  %5622 = vmatpush.bf16.msra.mxu0 %v3660
  %5623 = vmatpush.bf16.msra.mxu0 %v3656
  %5624 = vmatpush.bf16.msra.mxu0 %v3652
  %5625 = vmatpush.bf16.msra.mxu0 %v3648
  %5626 = vmatpush.bf16.msra.mxu0 %v3644
  %5627 = vmatpush.bf16.msra.mxu0 %v3640
  %5628 = vmatpush.bf16.msra.mxu0 %v3636
  %5629 = vmatpush.bf16.msra.mxu0 %v3632
  %5630 = vmatmul.bf16.gmra.mxu0 %v906
  %v5631 = vpop.f32.mrf.mxu0
  %v5632 = vadd.f32 %v5618, %v5631
  %v5633 = vpop.f32.mrf.mxu0
  %v5634 = vadd.f32 %v5620, %v5633
  %5635 = vdwg.mxu0
  %5636 = vmatpush.bf16.msra.mxu0 %v3692
  %5637 = vmatpush.bf16.msra.mxu0 %v3688
  %5638 = vmatpush.bf16.msra.mxu0 %v3684
  %5639 = vmatpush.bf16.msra.mxu0 %v3680
  %5640 = vmatpush.bf16.msra.mxu0 %v3676
  %5641 = vmatpush.bf16.msra.mxu0 %v3672
  %5642 = vmatpush.bf16.msra.mxu0 %v3668
  %5643 = vmatpush.bf16.msra.mxu0 %v3664
  %5644 = vmatmul.bf16.gmra.mxu0 %v907
  %v5645 = vpop.f32.mrf.mxu0
  %v5646 = vadd.f32 %v5632, %v5645
  %v5647 = vpop.f32.mrf.mxu0
  %v5648 = vadd.f32 %v5634, %v5647
  %5649 = vdwg.mxu0
  %5650 = vmatpush.bf16.msra.mxu0 %v3724
  %5651 = vmatpush.bf16.msra.mxu0 %v3720
  %5652 = vmatpush.bf16.msra.mxu0 %v3716
  %5653 = vmatpush.bf16.msra.mxu0 %v3712
  %5654 = vmatpush.bf16.msra.mxu0 %v3708
  %5655 = vmatpush.bf16.msra.mxu0 %v3704
  %5656 = vmatpush.bf16.msra.mxu0 %v3700
  %5657 = vmatpush.bf16.msra.mxu0 %v3696
  %5658 = vmatmul.bf16.gmra.mxu0 %v908
  %v5659 = vpop.f32.mrf.mxu0
  %v5660 = vadd.f32 %v5646, %v5659
  %v5661 = vpop.f32.mrf.mxu0
  %v5662 = vadd.f32 %v5648, %v5661
  %5663 = vdwg.mxu0
  %5664 = vmatpush.bf16.msra.mxu0 %v3756
  %5665 = vmatpush.bf16.msra.mxu0 %v3752
  %5666 = vmatpush.bf16.msra.mxu0 %v3748
  %5667 = vmatpush.bf16.msra.mxu0 %v3744
  %5668 = vmatpush.bf16.msra.mxu0 %v3740
  %5669 = vmatpush.bf16.msra.mxu0 %v3736
  %5670 = vmatpush.bf16.msra.mxu0 %v3732
  %5671 = vmatpush.bf16.msra.mxu0 %v3728
  %5672 = vmatmul.bf16.gmra.mxu0 %v909
  %v5673 = vpop.f32.mrf.mxu0
  %v5674 = vadd.f32 %v5660, %v5673
  %v5675 = vpop.f32.mrf.mxu0
  %v5676 = vadd.f32 %v5662, %v5675
  %5677 = vdwg.mxu0
  %5678 = vmatpush.bf16.msra.mxu0 %v3788
  %5679 = vmatpush.bf16.msra.mxu0 %v3784
  %5680 = vmatpush.bf16.msra.mxu0 %v3780
  %5681 = vmatpush.bf16.msra.mxu0 %v3776
  %5682 = vmatpush.bf16.msra.mxu0 %v3772
  %5683 = vmatpush.bf16.msra.mxu0 %v3768
  %5684 = vmatpush.bf16.msra.mxu0 %v3764
  %5685 = vmatpush.bf16.msra.mxu0 %v3760
  %5686 = vmatmul.bf16.gmra.mxu0 %v910
  %v5687 = vpop.f32.mrf.mxu0
  %v5688 = vadd.f32 %v5674, %v5687
  %v5689 = vpop.f32.mrf.mxu0
  %v5690 = vadd.f32 %v5676, %v5689
  %5691 = vdwg.mxu0
  %5692 = vmatpush.bf16.msra.mxu0 %v3820
  %5693 = vmatpush.bf16.msra.mxu0 %v3816
  %5694 = vmatpush.bf16.msra.mxu0 %v3812
  %5695 = vmatpush.bf16.msra.mxu0 %v3808
  %5696 = vmatpush.bf16.msra.mxu0 %v3804
  %5697 = vmatpush.bf16.msra.mxu0 %v3800
  %5698 = vmatpush.bf16.msra.mxu0 %v3796
  %5699 = vmatpush.bf16.msra.mxu0 %v3792
  %5700 = vmatmul.bf16.gmra.mxu0 %v911
  %v5701 = vpop.f32.mrf.mxu0
  %v5702 = vadd.f32 %v5688, %v5701
  %v5703 = vpop.f32.mrf.mxu0
  %v5704 = vadd.f32 %v5690, %v5703
  %5705 = vdwg.mxu0
  %5706 = vmatpush.bf16.msra.mxu0 %v3852
  %5707 = vmatpush.bf16.msra.mxu0 %v3848
  %5708 = vmatpush.bf16.msra.mxu0 %v3844
  %5709 = vmatpush.bf16.msra.mxu0 %v3840
  %5710 = vmatpush.bf16.msra.mxu0 %v3836
  %5711 = vmatpush.bf16.msra.mxu0 %v3832
  %5712 = vmatpush.bf16.msra.mxu0 %v3828
  %5713 = vmatpush.bf16.msra.mxu0 %v3824
  %5714 = vmatmul.bf16.gmra.mxu0 %v912
  %v5715 = vpop.f32.mrf.mxu0
  %v5716 = vadd.f32 %v5702, %v5715
  %v5717 = vpop.f32.mrf.mxu0
  %v5718 = vadd.f32 %v5704, %v5717
  %5719 = vdwg.mxu0
  %5720 = vmatpush.bf16.msra.mxu0 %v3884
  %5721 = vmatpush.bf16.msra.mxu0 %v3880
  %5722 = vmatpush.bf16.msra.mxu0 %v3876
  %5723 = vmatpush.bf16.msra.mxu0 %v3872
  %5724 = vmatpush.bf16.msra.mxu0 %v3868
  %5725 = vmatpush.bf16.msra.mxu0 %v3864
  %5726 = vmatpush.bf16.msra.mxu0 %v3860
  %5727 = vmatpush.bf16.msra.mxu0 %v3856
  %5728 = vmatmul.bf16.gmra.mxu0 %v913
  %v5729 = vpop.f32.mrf.mxu0
  %v5730 = vadd.f32 %v5716, %v5729
  %v5731 = vpop.f32.mrf.mxu0
  %v5732 = vadd.f32 %v5718, %v5731
  %5733 = vdwg.mxu0
  %5734 = vmatpush.bf16.msra.mxu0 %v3916
  %5735 = vmatpush.bf16.msra.mxu0 %v3912
  %5736 = vmatpush.bf16.msra.mxu0 %v3908
  %5737 = vmatpush.bf16.msra.mxu0 %v3904
  %5738 = vmatpush.bf16.msra.mxu0 %v3900
  %5739 = vmatpush.bf16.msra.mxu0 %v3896
  %5740 = vmatpush.bf16.msra.mxu0 %v3892
  %5741 = vmatpush.bf16.msra.mxu0 %v3888
  %5742 = vmatmul.bf16.gmra.mxu0 %v914
  %v5743 = vpop.f32.mrf.mxu0
  %v5744 = vadd.f32 %v5730, %v5743
  %v5745 = vpop.f32.mrf.mxu0
  %v5746 = vadd.f32 %v5732, %v5745
  %5747 = vdwg.mxu0
  %5748 = vmatpush.bf16.msra.mxu0 %v3948
  %5749 = vmatpush.bf16.msra.mxu0 %v3944
  %5750 = vmatpush.bf16.msra.mxu0 %v3940
  %5751 = vmatpush.bf16.msra.mxu0 %v3936
  %5752 = vmatpush.bf16.msra.mxu0 %v3932
  %5753 = vmatpush.bf16.msra.mxu0 %v3928
  %5754 = vmatpush.bf16.msra.mxu0 %v3924
  %5755 = vmatpush.bf16.msra.mxu0 %v3920
  %5756 = vmatmul.bf16.gmra.mxu0 %v915
  %v5757 = vpop.f32.mrf.mxu0
  %v5758 = vadd.f32 %v5744, %v5757
  %v5759 = vpop.f32.mrf.mxu0
  %v5760 = vadd.f32 %v5746, %v5759
  %5761 = vdwg.mxu0
  %5762 = vmatpush.bf16.msra.mxu0 %v3980
  %5763 = vmatpush.bf16.msra.mxu0 %v3976
  %5764 = vmatpush.bf16.msra.mxu0 %v3972
  %5765 = vmatpush.bf16.msra.mxu0 %v3968
  %5766 = vmatpush.bf16.msra.mxu0 %v3964
  %5767 = vmatpush.bf16.msra.mxu0 %v3960
  %5768 = vmatpush.bf16.msra.mxu0 %v3956
  %5769 = vmatpush.bf16.msra.mxu0 %v3952
  %5770 = vmatmul.bf16.gmra.mxu0 %v916
  %v5771 = vpop.f32.mrf.mxu0
  %v5772 = vadd.f32 %v5758, %v5771
  %v5773 = vpop.f32.mrf.mxu0
  %v5774 = vadd.f32 %v5760, %v5773
  %5775 = vdwg.mxu0
  %5776 = vmatpush.bf16.msra.mxu0 %v4012
  %5777 = vmatpush.bf16.msra.mxu0 %v4008
  %5778 = vmatpush.bf16.msra.mxu0 %v4004
  %5779 = vmatpush.bf16.msra.mxu0 %v4000
  %5780 = vmatpush.bf16.msra.mxu0 %v3996
  %5781 = vmatpush.bf16.msra.mxu0 %v3992
  %5782 = vmatpush.bf16.msra.mxu0 %v3988
  %5783 = vmatpush.bf16.msra.mxu0 %v3984
  %5784 = vmatmul.bf16.gmra.mxu0 %v917
  %v5785 = vpop.f32.mrf.mxu0
  %v5786 = vadd.f32 %v5772, %v5785
  %v5787 = vpop.f32.mrf.mxu0
  %v5788 = vadd.f32 %v5774, %v5787
  %5789 = vdwg.mxu0
  %5790 = vmatpush.bf16.msra.mxu0 %v3277
  %5791 = vmatpush.bf16.msra.mxu0 %v3273
  %5792 = vmatpush.bf16.msra.mxu0 %v3269
  %5793 = vmatpush.bf16.msra.mxu0 %v3265
  %5794 = vmatpush.bf16.msra.mxu0 %v3261
  %5795 = vmatpush.bf16.msra.mxu0 %v3257
  %5796 = vmatpush.bf16.msra.mxu0 %v3253
  %5797 = vmatpush.bf16.msra.mxu0 %v3249
  %5798 = vmatmul.bf16.gmra.mxu0 %v894
  %v5799 = vpop.f32.mrf.mxu0
  %v5800 = vadd.f32 %v817, %v5799
  %v5801 = vpop.f32.mrf.mxu0
  %v5802 = vadd.f32 %v817, %v5801
  %5803 = vdwg.mxu0
  %5804 = vmatpush.bf16.msra.mxu0 %v3309
  %5805 = vmatpush.bf16.msra.mxu0 %v3305
  %5806 = vmatpush.bf16.msra.mxu0 %v3301
  %5807 = vmatpush.bf16.msra.mxu0 %v3297
  %5808 = vmatpush.bf16.msra.mxu0 %v3293
  %5809 = vmatpush.bf16.msra.mxu0 %v3289
  %5810 = vmatpush.bf16.msra.mxu0 %v3285
  %5811 = vmatpush.bf16.msra.mxu0 %v3281
  %5812 = vmatmul.bf16.gmra.mxu0 %v895
  %v5813 = vpop.f32.mrf.mxu0
  %v5814 = vadd.f32 %v5800, %v5813
  %v5815 = vpop.f32.mrf.mxu0
  %v5816 = vadd.f32 %v5802, %v5815
  %5817 = vdwg.mxu0
  %5818 = vmatpush.bf16.msra.mxu0 %v3341
  %5819 = vmatpush.bf16.msra.mxu0 %v3337
  %5820 = vmatpush.bf16.msra.mxu0 %v3333
  %5821 = vmatpush.bf16.msra.mxu0 %v3329
  %5822 = vmatpush.bf16.msra.mxu0 %v3325
  %5823 = vmatpush.bf16.msra.mxu0 %v3321
  %5824 = vmatpush.bf16.msra.mxu0 %v3317
  %5825 = vmatpush.bf16.msra.mxu0 %v3313
  %5826 = vmatmul.bf16.gmra.mxu0 %v896
  %v5827 = vpop.f32.mrf.mxu0
  %v5828 = vadd.f32 %v5814, %v5827
  %v5829 = vpop.f32.mrf.mxu0
  %v5830 = vadd.f32 %v5816, %v5829
  %5831 = vdwg.mxu0
  %5832 = vmatpush.bf16.msra.mxu0 %v3373
  %5833 = vmatpush.bf16.msra.mxu0 %v3369
  %5834 = vmatpush.bf16.msra.mxu0 %v3365
  %5835 = vmatpush.bf16.msra.mxu0 %v3361
  %5836 = vmatpush.bf16.msra.mxu0 %v3357
  %5837 = vmatpush.bf16.msra.mxu0 %v3353
  %5838 = vmatpush.bf16.msra.mxu0 %v3349
  %5839 = vmatpush.bf16.msra.mxu0 %v3345
  %5840 = vmatmul.bf16.gmra.mxu0 %v897
  %v5841 = vpop.f32.mrf.mxu0
  %v5842 = vadd.f32 %v5828, %v5841
  %v5843 = vpop.f32.mrf.mxu0
  %v5844 = vadd.f32 %v5830, %v5843
  %5845 = vdwg.mxu0
  %5846 = vmatpush.bf16.msra.mxu0 %v3405
  %5847 = vmatpush.bf16.msra.mxu0 %v3401
  %5848 = vmatpush.bf16.msra.mxu0 %v3397
  %5849 = vmatpush.bf16.msra.mxu0 %v3393
  %5850 = vmatpush.bf16.msra.mxu0 %v3389
  %5851 = vmatpush.bf16.msra.mxu0 %v3385
  %5852 = vmatpush.bf16.msra.mxu0 %v3381
  %5853 = vmatpush.bf16.msra.mxu0 %v3377
  %5854 = vmatmul.bf16.gmra.mxu0 %v898
  %v5855 = vpop.f32.mrf.mxu0
  %v5856 = vadd.f32 %v5842, %v5855
  %v5857 = vpop.f32.mrf.mxu0
  %v5858 = vadd.f32 %v5844, %v5857
  %5859 = vdwg.mxu0
  %5860 = vmatpush.bf16.msra.mxu0 %v3437
  %5861 = vmatpush.bf16.msra.mxu0 %v3433
  %5862 = vmatpush.bf16.msra.mxu0 %v3429
  %5863 = vmatpush.bf16.msra.mxu0 %v3425
  %5864 = vmatpush.bf16.msra.mxu0 %v3421
  %5865 = vmatpush.bf16.msra.mxu0 %v3417
  %5866 = vmatpush.bf16.msra.mxu0 %v3413
  %5867 = vmatpush.bf16.msra.mxu0 %v3409
  %5868 = vmatmul.bf16.gmra.mxu0 %v899
  %v5869 = vpop.f32.mrf.mxu0
  %v5870 = vadd.f32 %v5856, %v5869
  %v5871 = vpop.f32.mrf.mxu0
  %v5872 = vadd.f32 %v5858, %v5871
  %5873 = vdwg.mxu0
  %5874 = vmatpush.bf16.msra.mxu0 %v3469
  %5875 = vmatpush.bf16.msra.mxu0 %v3465
  %5876 = vmatpush.bf16.msra.mxu0 %v3461
  %5877 = vmatpush.bf16.msra.mxu0 %v3457
  %5878 = vmatpush.bf16.msra.mxu0 %v3453
  %5879 = vmatpush.bf16.msra.mxu0 %v3449
  %5880 = vmatpush.bf16.msra.mxu0 %v3445
  %5881 = vmatpush.bf16.msra.mxu0 %v3441
  %5882 = vmatmul.bf16.gmra.mxu0 %v900
  %v5883 = vpop.f32.mrf.mxu0
  %v5884 = vadd.f32 %v5870, %v5883
  %v5885 = vpop.f32.mrf.mxu0
  %v5886 = vadd.f32 %v5872, %v5885
  %5887 = vdwg.mxu0
  %5888 = vmatpush.bf16.msra.mxu0 %v3501
  %5889 = vmatpush.bf16.msra.mxu0 %v3497
  %5890 = vmatpush.bf16.msra.mxu0 %v3493
  %5891 = vmatpush.bf16.msra.mxu0 %v3489
  %5892 = vmatpush.bf16.msra.mxu0 %v3485
  %5893 = vmatpush.bf16.msra.mxu0 %v3481
  %5894 = vmatpush.bf16.msra.mxu0 %v3477
  %5895 = vmatpush.bf16.msra.mxu0 %v3473
  %5896 = vmatmul.bf16.gmra.mxu0 %v901
  %v5897 = vpop.f32.mrf.mxu0
  %v5898 = vadd.f32 %v5884, %v5897
  %v5899 = vpop.f32.mrf.mxu0
  %v5900 = vadd.f32 %v5886, %v5899
  %5901 = vdwg.mxu0
  %5902 = vmatpush.bf16.msra.mxu0 %v3533
  %5903 = vmatpush.bf16.msra.mxu0 %v3529
  %5904 = vmatpush.bf16.msra.mxu0 %v3525
  %5905 = vmatpush.bf16.msra.mxu0 %v3521
  %5906 = vmatpush.bf16.msra.mxu0 %v3517
  %5907 = vmatpush.bf16.msra.mxu0 %v3513
  %5908 = vmatpush.bf16.msra.mxu0 %v3509
  %5909 = vmatpush.bf16.msra.mxu0 %v3505
  %5910 = vmatmul.bf16.gmra.mxu0 %v902
  %v5911 = vpop.f32.mrf.mxu0
  %v5912 = vadd.f32 %v5898, %v5911
  %v5913 = vpop.f32.mrf.mxu0
  %v5914 = vadd.f32 %v5900, %v5913
  %5915 = vdwg.mxu0
  %5916 = vmatpush.bf16.msra.mxu0 %v3565
  %5917 = vmatpush.bf16.msra.mxu0 %v3561
  %5918 = vmatpush.bf16.msra.mxu0 %v3557
  %5919 = vmatpush.bf16.msra.mxu0 %v3553
  %5920 = vmatpush.bf16.msra.mxu0 %v3549
  %5921 = vmatpush.bf16.msra.mxu0 %v3545
  %5922 = vmatpush.bf16.msra.mxu0 %v3541
  %5923 = vmatpush.bf16.msra.mxu0 %v3537
  %5924 = vmatmul.bf16.gmra.mxu0 %v903
  %v5925 = vpop.f32.mrf.mxu0
  %v5926 = vadd.f32 %v5912, %v5925
  %v5927 = vpop.f32.mrf.mxu0
  %v5928 = vadd.f32 %v5914, %v5927
  %5929 = vdwg.mxu0
  %5930 = vmatpush.bf16.msra.mxu0 %v3597
  %5931 = vmatpush.bf16.msra.mxu0 %v3593
  %5932 = vmatpush.bf16.msra.mxu0 %v3589
  %5933 = vmatpush.bf16.msra.mxu0 %v3585
  %5934 = vmatpush.bf16.msra.mxu0 %v3581
  %5935 = vmatpush.bf16.msra.mxu0 %v3577
  %5936 = vmatpush.bf16.msra.mxu0 %v3573
  %5937 = vmatpush.bf16.msra.mxu0 %v3569
  %5938 = vmatmul.bf16.gmra.mxu0 %v904
  %v5939 = vpop.f32.mrf.mxu0
  %v5940 = vadd.f32 %v5926, %v5939
  %v5941 = vpop.f32.mrf.mxu0
  %v5942 = vadd.f32 %v5928, %v5941
  %5943 = vdwg.mxu0
  %5944 = vmatpush.bf16.msra.mxu0 %v3629
  %5945 = vmatpush.bf16.msra.mxu0 %v3625
  %5946 = vmatpush.bf16.msra.mxu0 %v3621
  %5947 = vmatpush.bf16.msra.mxu0 %v3617
  %5948 = vmatpush.bf16.msra.mxu0 %v3613
  %5949 = vmatpush.bf16.msra.mxu0 %v3609
  %5950 = vmatpush.bf16.msra.mxu0 %v3605
  %5951 = vmatpush.bf16.msra.mxu0 %v3601
  %5952 = vmatmul.bf16.gmra.mxu0 %v905
  %v5953 = vpop.f32.mrf.mxu0
  %v5954 = vadd.f32 %v5940, %v5953
  %v5955 = vpop.f32.mrf.mxu0
  %v5956 = vadd.f32 %v5942, %v5955
  %5957 = vdwg.mxu0
  %5958 = vmatpush.bf16.msra.mxu0 %v3661
  %5959 = vmatpush.bf16.msra.mxu0 %v3657
  %5960 = vmatpush.bf16.msra.mxu0 %v3653
  %5961 = vmatpush.bf16.msra.mxu0 %v3649
  %5962 = vmatpush.bf16.msra.mxu0 %v3645
  %5963 = vmatpush.bf16.msra.mxu0 %v3641
  %5964 = vmatpush.bf16.msra.mxu0 %v3637
  %5965 = vmatpush.bf16.msra.mxu0 %v3633
  %5966 = vmatmul.bf16.gmra.mxu0 %v906
  %v5967 = vpop.f32.mrf.mxu0
  %v5968 = vadd.f32 %v5954, %v5967
  %v5969 = vpop.f32.mrf.mxu0
  %v5970 = vadd.f32 %v5956, %v5969
  %5971 = vdwg.mxu0
  %5972 = vmatpush.bf16.msra.mxu0 %v3693
  %5973 = vmatpush.bf16.msra.mxu0 %v3689
  %5974 = vmatpush.bf16.msra.mxu0 %v3685
  %5975 = vmatpush.bf16.msra.mxu0 %v3681
  %5976 = vmatpush.bf16.msra.mxu0 %v3677
  %5977 = vmatpush.bf16.msra.mxu0 %v3673
  %5978 = vmatpush.bf16.msra.mxu0 %v3669
  %5979 = vmatpush.bf16.msra.mxu0 %v3665
  %5980 = vmatmul.bf16.gmra.mxu0 %v907
  %v5981 = vpop.f32.mrf.mxu0
  %v5982 = vadd.f32 %v5968, %v5981
  %v5983 = vpop.f32.mrf.mxu0
  %v5984 = vadd.f32 %v5970, %v5983
  %5985 = vdwg.mxu0
  %5986 = vmatpush.bf16.msra.mxu0 %v3725
  %5987 = vmatpush.bf16.msra.mxu0 %v3721
  %5988 = vmatpush.bf16.msra.mxu0 %v3717
  %5989 = vmatpush.bf16.msra.mxu0 %v3713
  %5990 = vmatpush.bf16.msra.mxu0 %v3709
  %5991 = vmatpush.bf16.msra.mxu0 %v3705
  %5992 = vmatpush.bf16.msra.mxu0 %v3701
  %5993 = vmatpush.bf16.msra.mxu0 %v3697
  %5994 = vmatmul.bf16.gmra.mxu0 %v908
  %v5995 = vpop.f32.mrf.mxu0
  %v5996 = vadd.f32 %v5982, %v5995
  %v5997 = vpop.f32.mrf.mxu0
  %v5998 = vadd.f32 %v5984, %v5997
  %5999 = vdwg.mxu0
  %6000 = vmatpush.bf16.msra.mxu0 %v3757
  %6001 = vmatpush.bf16.msra.mxu0 %v3753
  %6002 = vmatpush.bf16.msra.mxu0 %v3749
  %6003 = vmatpush.bf16.msra.mxu0 %v3745
  %6004 = vmatpush.bf16.msra.mxu0 %v3741
  %6005 = vmatpush.bf16.msra.mxu0 %v3737
  %6006 = vmatpush.bf16.msra.mxu0 %v3733
  %6007 = vmatpush.bf16.msra.mxu0 %v3729
  %6008 = vmatmul.bf16.gmra.mxu0 %v909
  %v6009 = vpop.f32.mrf.mxu0
  %v6010 = vadd.f32 %v5996, %v6009
  %v6011 = vpop.f32.mrf.mxu0
  %v6012 = vadd.f32 %v5998, %v6011
  %6013 = vdwg.mxu0
  %6014 = vmatpush.bf16.msra.mxu0 %v3789
  %6015 = vmatpush.bf16.msra.mxu0 %v3785
  %6016 = vmatpush.bf16.msra.mxu0 %v3781
  %6017 = vmatpush.bf16.msra.mxu0 %v3777
  %6018 = vmatpush.bf16.msra.mxu0 %v3773
  %6019 = vmatpush.bf16.msra.mxu0 %v3769
  %6020 = vmatpush.bf16.msra.mxu0 %v3765
  %6021 = vmatpush.bf16.msra.mxu0 %v3761
  %6022 = vmatmul.bf16.gmra.mxu0 %v910
  %v6023 = vpop.f32.mrf.mxu0
  %v6024 = vadd.f32 %v6010, %v6023
  %v6025 = vpop.f32.mrf.mxu0
  %v6026 = vadd.f32 %v6012, %v6025
  %6027 = vdwg.mxu0
  %6028 = vmatpush.bf16.msra.mxu0 %v3821
  %6029 = vmatpush.bf16.msra.mxu0 %v3817
  %6030 = vmatpush.bf16.msra.mxu0 %v3813
  %6031 = vmatpush.bf16.msra.mxu0 %v3809
  %6032 = vmatpush.bf16.msra.mxu0 %v3805
  %6033 = vmatpush.bf16.msra.mxu0 %v3801
  %6034 = vmatpush.bf16.msra.mxu0 %v3797
  %6035 = vmatpush.bf16.msra.mxu0 %v3793
  %6036 = vmatmul.bf16.gmra.mxu0 %v911
  %v6037 = vpop.f32.mrf.mxu0
  %v6038 = vadd.f32 %v6024, %v6037
  %v6039 = vpop.f32.mrf.mxu0
  %v6040 = vadd.f32 %v6026, %v6039
  %6041 = vdwg.mxu0
  %6042 = vmatpush.bf16.msra.mxu0 %v3853
  %6043 = vmatpush.bf16.msra.mxu0 %v3849
  %6044 = vmatpush.bf16.msra.mxu0 %v3845
  %6045 = vmatpush.bf16.msra.mxu0 %v3841
  %6046 = vmatpush.bf16.msra.mxu0 %v3837
  %6047 = vmatpush.bf16.msra.mxu0 %v3833
  %6048 = vmatpush.bf16.msra.mxu0 %v3829
  %6049 = vmatpush.bf16.msra.mxu0 %v3825
  %6050 = vmatmul.bf16.gmra.mxu0 %v912
  %v6051 = vpop.f32.mrf.mxu0
  %v6052 = vadd.f32 %v6038, %v6051
  %v6053 = vpop.f32.mrf.mxu0
  %v6054 = vadd.f32 %v6040, %v6053
  %6055 = vdwg.mxu0
  %6056 = vmatpush.bf16.msra.mxu0 %v3885
  %6057 = vmatpush.bf16.msra.mxu0 %v3881
  %6058 = vmatpush.bf16.msra.mxu0 %v3877
  %6059 = vmatpush.bf16.msra.mxu0 %v3873
  %6060 = vmatpush.bf16.msra.mxu0 %v3869
  %6061 = vmatpush.bf16.msra.mxu0 %v3865
  %6062 = vmatpush.bf16.msra.mxu0 %v3861
  %6063 = vmatpush.bf16.msra.mxu0 %v3857
  %6064 = vmatmul.bf16.gmra.mxu0 %v913
  %v6065 = vpop.f32.mrf.mxu0
  %v6066 = vadd.f32 %v6052, %v6065
  %v6067 = vpop.f32.mrf.mxu0
  %v6068 = vadd.f32 %v6054, %v6067
  %6069 = vdwg.mxu0
  %6070 = vmatpush.bf16.msra.mxu0 %v3917
  %6071 = vmatpush.bf16.msra.mxu0 %v3913
  %6072 = vmatpush.bf16.msra.mxu0 %v3909
  %6073 = vmatpush.bf16.msra.mxu0 %v3905
  %6074 = vmatpush.bf16.msra.mxu0 %v3901
  %6075 = vmatpush.bf16.msra.mxu0 %v3897
  %6076 = vmatpush.bf16.msra.mxu0 %v3893
  %6077 = vmatpush.bf16.msra.mxu0 %v3889
  %6078 = vmatmul.bf16.gmra.mxu0 %v914
  %v6079 = vpop.f32.mrf.mxu0
  %v6080 = vadd.f32 %v6066, %v6079
  %v6081 = vpop.f32.mrf.mxu0
  %v6082 = vadd.f32 %v6068, %v6081
  %6083 = vdwg.mxu0
  %6084 = vmatpush.bf16.msra.mxu0 %v3949
  %6085 = vmatpush.bf16.msra.mxu0 %v3945
  %6086 = vmatpush.bf16.msra.mxu0 %v3941
  %6087 = vmatpush.bf16.msra.mxu0 %v3937
  %6088 = vmatpush.bf16.msra.mxu0 %v3933
  %6089 = vmatpush.bf16.msra.mxu0 %v3929
  %6090 = vmatpush.bf16.msra.mxu0 %v3925
  %6091 = vmatpush.bf16.msra.mxu0 %v3921
  %6092 = vmatmul.bf16.gmra.mxu0 %v915
  %v6093 = vpop.f32.mrf.mxu0
  %v6094 = vadd.f32 %v6080, %v6093
  %v6095 = vpop.f32.mrf.mxu0
  %v6096 = vadd.f32 %v6082, %v6095
  %6097 = vdwg.mxu0
  %6098 = vmatpush.bf16.msra.mxu0 %v3981
  %6099 = vmatpush.bf16.msra.mxu0 %v3977
  %6100 = vmatpush.bf16.msra.mxu0 %v3973
  %6101 = vmatpush.bf16.msra.mxu0 %v3969
  %6102 = vmatpush.bf16.msra.mxu0 %v3965
  %6103 = vmatpush.bf16.msra.mxu0 %v3961
  %6104 = vmatpush.bf16.msra.mxu0 %v3957
  %6105 = vmatpush.bf16.msra.mxu0 %v3953
  %6106 = vmatmul.bf16.gmra.mxu0 %v916
  %v6107 = vpop.f32.mrf.mxu0
  %v6108 = vadd.f32 %v6094, %v6107
  %v6109 = vpop.f32.mrf.mxu0
  %v6110 = vadd.f32 %v6096, %v6109
  %6111 = vdwg.mxu0
  %6112 = vmatpush.bf16.msra.mxu0 %v4013
  %6113 = vmatpush.bf16.msra.mxu0 %v4009
  %6114 = vmatpush.bf16.msra.mxu0 %v4005
  %6115 = vmatpush.bf16.msra.mxu0 %v4001
  %6116 = vmatpush.bf16.msra.mxu0 %v3997
  %6117 = vmatpush.bf16.msra.mxu0 %v3993
  %6118 = vmatpush.bf16.msra.mxu0 %v3989
  %6119 = vmatpush.bf16.msra.mxu0 %v3985
  %6120 = vmatmul.bf16.gmra.mxu0 %v917
  %v6121 = vpop.f32.mrf.mxu0
  %v6122 = vadd.f32 %v6108, %v6121
  %v6123 = vpop.f32.mrf.mxu0
  %v6124 = vadd.f32 %v6110, %v6123
  %6125 = vdwg.mxu0
  %vm6126 = vcmp.gt.f32.partialorder %v5114, 0.0
  %vm6127 = vcmp.gt.f32.partialorder %v5450, 0.0
  %vm6128 = vcmp.gt.f32.partialorder %v5786, 0.0
  %vm6129 = vcmp.gt.f32.partialorder %v6122, 0.0
  %vm6130 = vcmp.gt.f32.partialorder %v5116, 0.0
  %vm6131 = vcmp.gt.f32.partialorder %v5452, 0.0
  %vm6132 = vcmp.gt.f32.partialorder %v5788, 0.0
  %vm6133 = vcmp.gt.f32.partialorder %v6124, 0.0
  %v6134 = vmul.f32 %v5114, 0.1
  %v6135 = vmul.f32 %v5450, 0.1
  %v6136 = vmul.f32 %v5786, 0.1
  %v6137 = vmul.f32 %v6122, 0.1
  %v6138 = vmul.f32 %v5116, 0.1
  %v6139 = vmul.f32 %v5452, 0.1
  %v6140 = vmul.f32 %v5788, 0.1
  %v6141 = vmul.f32 %v6124, 0.1
  %v6142 = vsel %vm6126, %v5114, %v6134
  %v6143 = vsel %vm6127, %v5450, %v6135
  %v6144 = vsel %vm6128, %v5786, %v6136
  %v6145 = vsel %vm6129, %v6122, %v6137
  %v6146 = vsel %vm6130, %v5116, %v6138
  %v6147 = vsel %vm6131, %v5452, %v6139
  %v6148 = vsel %vm6132, %v5788, %v6140
  %v6149 = vsel %vm6133, %v6124, %v6141
  %v6150 = vpack.c.bf16 %v6146, %v6142
  %v6151 = vpack.c.bf16 %v6147, %v6143
  %v6152 = vpack.c.bf16 %v6148, %v6144
  %v6153 = vpack.c.bf16 %v6149, %v6145
  %v6154 = vld [vmem:[%s3] sm:$0xff]
  %v6155 = vld [vmem:[%s3 + $0x8] sm:$0xff]
  %v6156 = vld [vmem:[%s3 + $0x10] sm:$0xff]
  %v6157 = vld [vmem:[%s3 + $0x18] sm:$0xff]
  %v6158 = vld [vmem:[%s3 + $0x20] sm:$0xff]
  %v6159 = vld [vmem:[%s3 + $0x28] sm:$0xff]
  %v6160 = vld [vmem:[%s3 + $0x30] sm:$0xff]
  %v6161 = vld [vmem:[%s3 + $0x38] sm:$0xff]
  %v6162 = vld [vmem:[%s3 + $0x40] sm:$0xff]
  %v6163 = vld [vmem:[%s3 + $0x48] sm:$0xff]
  %v6164 = vld [vmem:[%s3 + $0x50] sm:$0xff]
  %v6165 = vld [vmem:[%s3 + $0x58] sm:$0xff]
  %v6166 = vld [vmem:[%s3 + $0x60] sm:$0xff]
  %v6167 = vld [vmem:[%s3 + $0x68] sm:$0xff]
  %v6168 = vld [vmem:[%s3 + $0x70] sm:$0xff]
  %v6169 = vld [vmem:[%s3 + $0x78] sm:$0xff]
  %v6170 = vld [vmem:[%s3 + $0x80] sm:$0xff]
  %v6171 = vld [vmem:[%s3 + $0x88] sm:$0xff]
  %v6172 = vld [vmem:[%s3 + $0x90] sm:$0xff]
  %v6173 = vld [vmem:[%s3 + $0x98] sm:$0xff]
  %v6174 = vld [vmem:[%s3 + $0xa0] sm:$0xff]
  %v6175 = vld [vmem:[%s3 + $0xa8] sm:$0xff]
  %v6176 = vld [vmem:[%s3 + $0xb0] sm:$0xff]
  %v6177 = vld [vmem:[%s3 + $0xb8] sm:$0xff]
  %v6178 = vld [vmem:[%s3 + $0xc0] sm:$0xff]
  %v6179 = vld [vmem:[%s3 + $0xc8] sm:$0xff]
  %v6180 = vld [vmem:[%s3 + $0xd0] sm:$0xff]
  %v6181 = vld [vmem:[%s3 + $0xd8] sm:$0xff]
  %v6182 = vld [vmem:[%s3 + $0xe0] sm:$0xff]
  %v6183 = vld [vmem:[%s3 + $0xe8] sm:$0xff]
  %v6184 = vld [vmem:[%s3 + $0xf0] sm:$0xff]
  %v6185 = vld [vmem:[%s3 + $0xf8] sm:$0xff]
  %v6186 = vld [vmem:[%s3 + $0x100] sm:$0xff]
  %v6187 = vld [vmem:[%s3 + $0x108] sm:$0xff]
  %v6188 = vld [vmem:[%s3 + $0x110] sm:$0xff]
  %v6189 = vld [vmem:[%s3 + $0x118] sm:$0xff]
  %v6190 = vld [vmem:[%s3 + $0x120] sm:$0xff]
  %v6191 = vld [vmem:[%s3 + $0x128] sm:$0xff]
  %v6192 = vld [vmem:[%s3 + $0x130] sm:$0xff]
  %v6193 = vld [vmem:[%s3 + $0x138] sm:$0xff]
  %v6194 = vld [vmem:[%s3 + $0x140] sm:$0xff]
  %v6195 = vld [vmem:[%s3 + $0x148] sm:$0xff]
  %v6196 = vld [vmem:[%s3 + $0x150] sm:$0xff]
  %v6197 = vld [vmem:[%s3 + $0x158] sm:$0xff]
  %v6198 = vld [vmem:[%s3 + $0x160] sm:$0xff]
  %v6199 = vld [vmem:[%s3 + $0x168] sm:$0xff]
  %v6200 = vld [vmem:[%s3 + $0x170] sm:$0xff]
  %v6201 = vld [vmem:[%s3 + $0x178] sm:$0xff]
  %v6202 = vld [vmem:[%s3 + $0x180] sm:$0xff]
  %v6203 = vld [vmem:[%s3 + $0x188] sm:$0xff]
  %v6204 = vld [vmem:[%s3 + $0x190] sm:$0xff]
  %v6205 = vld [vmem:[%s3 + $0x198] sm:$0xff]
  %v6206 = vld [vmem:[%s3 + $0x1a0] sm:$0xff]
  %v6207 = vld [vmem:[%s3 + $0x1a8] sm:$0xff]
  %v6208 = vld [vmem:[%s3 + $0x1b0] sm:$0xff]
  %v6209 = vld [vmem:[%s3 + $0x1b8] sm:$0xff]
  %v6210 = vld [vmem:[%s3 + $0x1c0] sm:$0xff]
  %v6211 = vld [vmem:[%s3 + $0x1c8] sm:$0xff]
  %v6212 = vld [vmem:[%s3 + $0x1d0] sm:$0xff]
  %v6213 = vld [vmem:[%s3 + $0x1d8] sm:$0xff]
  %v6214 = vld [vmem:[%s3 + $0x1e0] sm:$0xff]
  %v6215 = vld [vmem:[%s3 + $0x1e8] sm:$0xff]
  %v6216 = vld [vmem:[%s3 + $0x1f0] sm:$0xff]
  %v6217 = vld [vmem:[%s3 + $0x1f8] sm:$0xff]
  %v6218 = vld [vmem:[%s4] sm:$0x3]
  %v6220 = vperm.slane %v6218, 0
  %v6221 = vperm.slane %v6218, 1
  %v6288 = vunpack.c.l.b16 %v6154
  %v6289 = vunpack.c.h.b16 %v6154
  %v6290 = vunpack.c.l.b16 %v6155
  %v6291 = vunpack.c.h.b16 %v6155
  %v6292 = vunpack.c.l.b16 %v6156
  %v6293 = vunpack.c.h.b16 %v6156
  %v6294 = vunpack.c.l.b16 %v6157
  %v6295 = vunpack.c.h.b16 %v6157
  %v6296 = vunpack.c.l.b16 %v6158
  %v6297 = vunpack.c.h.b16 %v6158
  %v6298 = vunpack.c.l.b16 %v6159
  %v6299 = vunpack.c.h.b16 %v6159
  %v6300 = vunpack.c.l.b16 %v6160
  %v6301 = vunpack.c.h.b16 %v6160
  %v6302 = vunpack.c.l.b16 %v6161
  %v6303 = vunpack.c.h.b16 %v6161
  %v6304 = vunpack.c.l.b16 %v6162
  %v6305 = vunpack.c.h.b16 %v6162
  %v6306 = vunpack.c.l.b16 %v6163
  %v6307 = vunpack.c.h.b16 %v6163
  %v6308 = vunpack.c.l.b16 %v6164
  %v6309 = vunpack.c.h.b16 %v6164
  %v6310 = vunpack.c.l.b16 %v6165
  %v6311 = vunpack.c.h.b16 %v6165
  %v6312 = vunpack.c.l.b16 %v6166
  %v6313 = vunpack.c.h.b16 %v6166
  %v6314 = vunpack.c.l.b16 %v6167
  %v6315 = vunpack.c.h.b16 %v6167
  %v6316 = vunpack.c.l.b16 %v6168
  %v6317 = vunpack.c.h.b16 %v6168
  %v6318 = vunpack.c.l.b16 %v6169
  %v6319 = vunpack.c.h.b16 %v6169
  %v6320 = vunpack.c.l.b16 %v6170
  %v6321 = vunpack.c.h.b16 %v6170
  %v6322 = vunpack.c.l.b16 %v6171
  %v6323 = vunpack.c.h.b16 %v6171
  %v6324 = vunpack.c.l.b16 %v6172
  %v6325 = vunpack.c.h.b16 %v6172
  %v6326 = vunpack.c.l.b16 %v6173
  %v6327 = vunpack.c.h.b16 %v6173
  %v6328 = vunpack.c.l.b16 %v6174
  %v6329 = vunpack.c.h.b16 %v6174
  %v6330 = vunpack.c.l.b16 %v6175
  %v6331 = vunpack.c.h.b16 %v6175
  %v6332 = vunpack.c.l.b16 %v6176
  %v6333 = vunpack.c.h.b16 %v6176
  %v6334 = vunpack.c.l.b16 %v6177
  %v6335 = vunpack.c.h.b16 %v6177
  %v6336 = vunpack.c.l.b16 %v6178
  %v6337 = vunpack.c.h.b16 %v6178
  %v6338 = vunpack.c.l.b16 %v6179
  %v6339 = vunpack.c.h.b16 %v6179
  %v6340 = vunpack.c.l.b16 %v6180
  %v6341 = vunpack.c.h.b16 %v6180
  %v6342 = vunpack.c.l.b16 %v6181
  %v6343 = vunpack.c.h.b16 %v6181
  %v6344 = vunpack.c.l.b16 %v6182
  %v6345 = vunpack.c.h.b16 %v6182
  %v6346 = vunpack.c.l.b16 %v6183
  %v6347 = vunpack.c.h.b16 %v6183
  %v6348 = vunpack.c.l.b16 %v6184
  %v6349 = vunpack.c.h.b16 %v6184
  %v6350 = vunpack.c.l.b16 %v6185
  %v6351 = vunpack.c.h.b16 %v6185
  %v6352 = vunpack.c.l.b16 %v6186
  %v6353 = vunpack.c.h.b16 %v6186
  %v6354 = vunpack.c.l.b16 %v6187
  %v6355 = vunpack.c.h.b16 %v6187
  %v6356 = vunpack.c.l.b16 %v6188
  %v6357 = vunpack.c.h.b16 %v6188
  %v6358 = vunpack.c.l.b16 %v6189
  %v6359 = vunpack.c.h.b16 %v6189
  %v6360 = vunpack.c.l.b16 %v6190
  %v6361 = vunpack.c.h.b16 %v6190
  %v6362 = vunpack.c.l.b16 %v6191
  %v6363 = vunpack.c.h.b16 %v6191
  %v6364 = vunpack.c.l.b16 %v6192
  %v6365 = vunpack.c.h.b16 %v6192
  %v6366 = vunpack.c.l.b16 %v6193
  %v6367 = vunpack.c.h.b16 %v6193
  %v6368 = vunpack.c.l.b16 %v6194
  %v6369 = vunpack.c.h.b16 %v6194
  %v6370 = vunpack.c.l.b16 %v6195
  %v6371 = vunpack.c.h.b16 %v6195
  %v6372 = vunpack.c.l.b16 %v6196
  %v6373 = vunpack.c.h.b16 %v6196
  %v6374 = vunpack.c.l.b16 %v6197
  %v6375 = vunpack.c.h.b16 %v6197
  %v6376 = vunpack.c.l.b16 %v6198
  %v6377 = vunpack.c.h.b16 %v6198
  %v6378 = vunpack.c.l.b16 %v6199
  %v6379 = vunpack.c.h.b16 %v6199
  %v6380 = vunpack.c.l.b16 %v6200
  %v6381 = vunpack.c.h.b16 %v6200
  %v6382 = vunpack.c.l.b16 %v6201
  %v6383 = vunpack.c.h.b16 %v6201
  %v6384 = vunpack.c.l.b16 %v6202
  %v6385 = vunpack.c.h.b16 %v6202
  %v6386 = vunpack.c.l.b16 %v6203
  %v6387 = vunpack.c.h.b16 %v6203
  %v6388 = vunpack.c.l.b16 %v6204
  %v6389 = vunpack.c.h.b16 %v6204
  %v6390 = vunpack.c.l.b16 %v6205
  %v6391 = vunpack.c.h.b16 %v6205
  %v6392 = vunpack.c.l.b16 %v6206
  %v6393 = vunpack.c.h.b16 %v6206
  %v6394 = vunpack.c.l.b16 %v6207
  %v6395 = vunpack.c.h.b16 %v6207
  %v6396 = vunpack.c.l.b16 %v6208
  %v6397 = vunpack.c.h.b16 %v6208
  %v6398 = vunpack.c.l.b16 %v6209
  %v6399 = vunpack.c.h.b16 %v6209
  %v6400 = vunpack.c.l.b16 %v6210
  %v6401 = vunpack.c.h.b16 %v6210
  %v6402 = vunpack.c.l.b16 %v6211
  %v6403 = vunpack.c.h.b16 %v6211
  %v6404 = vunpack.c.l.b16 %v6212
  %v6405 = vunpack.c.h.b16 %v6212
  %v6406 = vunpack.c.l.b16 %v6213
  %v6407 = vunpack.c.h.b16 %v6213
  %v6408 = vunpack.c.l.b16 %v6214
  %v6409 = vunpack.c.h.b16 %v6214
  %v6410 = vunpack.c.l.b16 %v6215
  %v6411 = vunpack.c.h.b16 %v6215
  %v6412 = vunpack.c.l.b16 %v6216
  %v6413 = vunpack.c.h.b16 %v6216
  %v6414 = vunpack.c.l.b16 %v6217
  %v6415 = vunpack.c.h.b16 %v6217
  %v6416 = vpack.c.b16 %v6290, %v6288
  %v6417 = vpack.c.b16 %v6291, %v6289
  %v6418 = vpack.c.b16 %v6294, %v6292
  %v6419 = vpack.c.b16 %v6295, %v6293
  %v6420 = vpack.c.b16 %v6298, %v6296
  %v6421 = vpack.c.b16 %v6299, %v6297
  %v6422 = vpack.c.b16 %v6302, %v6300
  %v6423 = vpack.c.b16 %v6303, %v6301
  %v6424 = vpack.c.b16 %v6306, %v6304
  %v6425 = vpack.c.b16 %v6307, %v6305
  %v6426 = vpack.c.b16 %v6310, %v6308
  %v6427 = vpack.c.b16 %v6311, %v6309
  %v6428 = vpack.c.b16 %v6314, %v6312
  %v6429 = vpack.c.b16 %v6315, %v6313
  %v6430 = vpack.c.b16 %v6318, %v6316
  %v6431 = vpack.c.b16 %v6319, %v6317
  %v6432 = vpack.c.b16 %v6322, %v6320
  %v6433 = vpack.c.b16 %v6323, %v6321
  %v6434 = vpack.c.b16 %v6326, %v6324
  %v6435 = vpack.c.b16 %v6327, %v6325
  %v6436 = vpack.c.b16 %v6330, %v6328
  %v6437 = vpack.c.b16 %v6331, %v6329
  %v6438 = vpack.c.b16 %v6334, %v6332
  %v6439 = vpack.c.b16 %v6335, %v6333
  %v6440 = vpack.c.b16 %v6338, %v6336
  %v6441 = vpack.c.b16 %v6339, %v6337
  %v6442 = vpack.c.b16 %v6342, %v6340
  %v6443 = vpack.c.b16 %v6343, %v6341
  %v6444 = vpack.c.b16 %v6346, %v6344
  %v6445 = vpack.c.b16 %v6347, %v6345
  %v6446 = vpack.c.b16 %v6350, %v6348
  %v6447 = vpack.c.b16 %v6351, %v6349
  %v6448 = vpack.c.b16 %v6354, %v6352
  %v6449 = vpack.c.b16 %v6355, %v6353
  %v6450 = vpack.c.b16 %v6358, %v6356
  %v6451 = vpack.c.b16 %v6359, %v6357
  %v6452 = vpack.c.b16 %v6362, %v6360
  %v6453 = vpack.c.b16 %v6363, %v6361
  %v6454 = vpack.c.b16 %v6366, %v6364
  %v6455 = vpack.c.b16 %v6367, %v6365
  %v6456 = vpack.c.b16 %v6370, %v6368
  %v6457 = vpack.c.b16 %v6371, %v6369
  %v6458 = vpack.c.b16 %v6374, %v6372
  %v6459 = vpack.c.b16 %v6375, %v6373
  %v6460 = vpack.c.b16 %v6378, %v6376
  %v6461 = vpack.c.b16 %v6379, %v6377
  %v6462 = vpack.c.b16 %v6382, %v6380
  %v6463 = vpack.c.b16 %v6383, %v6381
  %v6464 = vpack.c.b16 %v6386, %v6384
  %v6465 = vpack.c.b16 %v6387, %v6385
  %v6466 = vpack.c.b16 %v6390, %v6388
  %v6467 = vpack.c.b16 %v6391, %v6389
  %v6468 = vpack.c.b16 %v6394, %v6392
  %v6469 = vpack.c.b16 %v6395, %v6393
  %v6470 = vpack.c.b16 %v6398, %v6396
  %v6471 = vpack.c.b16 %v6399, %v6397
  %v6472 = vpack.c.b16 %v6402, %v6400
  %v6473 = vpack.c.b16 %v6403, %v6401
  %v6474 = vpack.c.b16 %v6406, %v6404
  %v6475 = vpack.c.b16 %v6407, %v6405
  %v6476 = vpack.c.b16 %v6410, %v6408
  %v6477 = vpack.c.b16 %v6411, %v6409
  %v6478 = vpack.c.b16 %v6414, %v6412
  %v6479 = vpack.c.b16 %v6415, %v6413
  %6544 = vmatpush.bf16.msra.mxu0 %v6430
  %6545 = vmatpush.bf16.msra.mxu0 %v6428
  %6546 = vmatpush.bf16.msra.mxu0 %v6426
  %6547 = vmatpush.bf16.msra.mxu0 %v6424
  %6548 = vmatpush.bf16.msra.mxu0 %v6422
  %6549 = vmatpush.bf16.msra.mxu0 %v6420
  %6550 = vmatpush.bf16.msra.mxu0 %v6418
  %6551 = vmatpush.bf16.msra.mxu0 %v6416
  %6552 = vmatmul.bf16.gmra.mxu0 %v6150
  %v6553 = vpop.f32.mrf.mxu0
  %v6554 = vadd.f32 %v6220, %v6553
  %v6555 = vpop.f32.mrf.mxu0
  %v6556 = vadd.f32 %v6220, %v6555
  %6557 = vdwg.mxu0
  %6558 = vmatpush.bf16.msra.mxu0 %v6446
  %6559 = vmatpush.bf16.msra.mxu0 %v6444
  %6560 = vmatpush.bf16.msra.mxu0 %v6442
  %6561 = vmatpush.bf16.msra.mxu0 %v6440
  %6562 = vmatpush.bf16.msra.mxu0 %v6438
  %6563 = vmatpush.bf16.msra.mxu0 %v6436
  %6564 = vmatpush.bf16.msra.mxu0 %v6434
  %6565 = vmatpush.bf16.msra.mxu0 %v6432
  %6566 = vmatmul.bf16.gmra.mxu0 %v6151
  %v6567 = vpop.f32.mrf.mxu0
  %v6568 = vadd.f32 %v6554, %v6567
  %v6569 = vpop.f32.mrf.mxu0
  %v6570 = vadd.f32 %v6556, %v6569
  %6571 = vdwg.mxu0
  %6572 = vmatpush.bf16.msra.mxu0 %v6462
  %6573 = vmatpush.bf16.msra.mxu0 %v6460
  %6574 = vmatpush.bf16.msra.mxu0 %v6458
  %6575 = vmatpush.bf16.msra.mxu0 %v6456
  %6576 = vmatpush.bf16.msra.mxu0 %v6454
  %6577 = vmatpush.bf16.msra.mxu0 %v6452
  %6578 = vmatpush.bf16.msra.mxu0 %v6450
  %6579 = vmatpush.bf16.msra.mxu0 %v6448
  %6580 = vmatmul.bf16.gmra.mxu0 %v6152
  %v6581 = vpop.f32.mrf.mxu0
  %v6582 = vadd.f32 %v6568, %v6581
  %v6583 = vpop.f32.mrf.mxu0
  %v6584 = vadd.f32 %v6570, %v6583
  %6585 = vdwg.mxu0
  %6586 = vmatpush.bf16.msra.mxu0 %v6478
  %6587 = vmatpush.bf16.msra.mxu0 %v6476
  %6588 = vmatpush.bf16.msra.mxu0 %v6474
  %6589 = vmatpush.bf16.msra.mxu0 %v6472
  %6590 = vmatpush.bf16.msra.mxu0 %v6470
  %6591 = vmatpush.bf16.msra.mxu0 %v6468
  %6592 = vmatpush.bf16.msra.mxu0 %v6466
  %6593 = vmatpush.bf16.msra.mxu0 %v6464
  %6594 = vmatmul.bf16.gmra.mxu0 %v6153
  %v6595 = vpop.f32.mrf.mxu0
  %v6596 = vadd.f32 %v6582, %v6595
  %v6597 = vpop.f32.mrf.mxu0
  %v6598 = vadd.f32 %v6584, %v6597
  %6599 = vdwg.mxu0
  %6600 = vmatpush.bf16.msra.mxu0 %v6431
  %6601 = vmatpush.bf16.msra.mxu0 %v6429
  %6602 = vmatpush.bf16.msra.mxu0 %v6427
  %6603 = vmatpush.bf16.msra.mxu0 %v6425
  %6604 = vmatpush.bf16.msra.mxu0 %v6423
  %6605 = vmatpush.bf16.msra.mxu0 %v6421
  %6606 = vmatpush.bf16.msra.mxu0 %v6419
  %6607 = vmatpush.bf16.msra.mxu0 %v6417
  %6608 = vmatmul.bf16.gmra.mxu0 %v6150
  %v6609 = vpop.f32.mrf.mxu0
  %v6610 = vadd.f32 %v6221, %v6609
  %v6611 = vpop.f32.mrf.mxu0
  %v6612 = vadd.f32 %v6221, %v6611
  %6613 = vdwg.mxu0
  %6614 = vmatpush.bf16.msra.mxu0 %v6447
  %6615 = vmatpush.bf16.msra.mxu0 %v6445
  %6616 = vmatpush.bf16.msra.mxu0 %v6443
  %6617 = vmatpush.bf16.msra.mxu0 %v6441
  %6618 = vmatpush.bf16.msra.mxu0 %v6439
  %6619 = vmatpush.bf16.msra.mxu0 %v6437
  %6620 = vmatpush.bf16.msra.mxu0 %v6435
  %6621 = vmatpush.bf16.msra.mxu0 %v6433
  %6622 = vmatmul.bf16.gmra.mxu0 %v6151
  %v6623 = vpop.f32.mrf.mxu0
  %v6624 = vadd.f32 %v6610, %v6623
  %v6625 = vpop.f32.mrf.mxu0
  %v6626 = vadd.f32 %v6612, %v6625
  %6627 = vdwg.mxu0
  %6628 = vmatpush.bf16.msra.mxu0 %v6463
  %6629 = vmatpush.bf16.msra.mxu0 %v6461
  %6630 = vmatpush.bf16.msra.mxu0 %v6459
  %6631 = vmatpush.bf16.msra.mxu0 %v6457
  %6632 = vmatpush.bf16.msra.mxu0 %v6455
  %6633 = vmatpush.bf16.msra.mxu0 %v6453
  %6634 = vmatpush.bf16.msra.mxu0 %v6451
  %6635 = vmatpush.bf16.msra.mxu0 %v6449
  %6636 = vmatmul.bf16.gmra.mxu0 %v6152
  %v6637 = vpop.f32.mrf.mxu0
  %v6638 = vadd.f32 %v6624, %v6637
  %v6639 = vpop.f32.mrf.mxu0
  %v6640 = vadd.f32 %v6626, %v6639
  %6641 = vdwg.mxu0
  %6642 = vmatpush.bf16.msra.mxu0 %v6479
  %6643 = vmatpush.bf16.msra.mxu0 %v6477
  %6644 = vmatpush.bf16.msra.mxu0 %v6475
  %6645 = vmatpush.bf16.msra.mxu0 %v6473
  %6646 = vmatpush.bf16.msra.mxu0 %v6471
  %6647 = vmatpush.bf16.msra.mxu0 %v6469
  %6648 = vmatpush.bf16.msra.mxu0 %v6467
  %6649 = vmatpush.bf16.msra.mxu0 %v6465
  %6650 = vmatmul.bf16.gmra.mxu0 %v6153
  %v6651 = vpop.f32.mrf.mxu0
  %v6652 = vadd.f32 %v6638, %v6651
  %v6653 = vpop.f32.mrf.mxu0
  %v6654 = vadd.f32 %v6640, %v6653
  %6655 = vdwg.mxu0
  %vm6656 = vcmp.gt.f32.partialorder %v6596, 0.0
  %vm6657 = vcmp.gt.f32.partialorder %v6652, 0.0
  %vm6658 = vcmp.gt.f32.partialorder %v6598, 0.0
  %vm6659 = vcmp.gt.f32.partialorder %v6654, 0.0
  %v6660 = vmul.f32 %v6596, 0.1
  %v6661 = vmul.f32 %v6652, 0.1
  %v6662 = vmul.f32 %v6598, 0.1
  %v6663 = vmul.f32 %v6654, 0.1
  %v6664 = vsel %vm6656, %v6596, %v6660
  %v6665 = vsel %vm6657, %v6652, %v6661
  %v6666 = vsel %vm6658, %v6598, %v6662
  %v6667 = vsel %vm6659, %v6654, %v6663
  %v6668 = vpack.c.bf16 %v6665, %v6664
  %v6669 = vpack.c.bf16 %v6667, %v6666
  %6670 = vst [vmem:[%s5] sm:$0xff] %v6668
  %6671 = vst [vmem:[%s5 + $0x8] sm:$0xff] %v6669
  // Predicated region
  $region22: #{yolov1_forward.3} parent=0 // pred_check
    _
  $region23: #{yolov1_forward.3} parent=0 // pred_check_branch
    %6673 = sbr.rel (0) target = $region25
  $region24: #{yolov1_forward.3} parent=0 // pred_region
    _
  $region25: #{yolov1_forward.3} parent=0 // pred_fallthru
    _
  // Predicated region
  $region26: #{yolov1_forward.3} parent=0 // pred_check
    _
  $region27: #{yolov1_forward.3} parent=0 // pred_check_branch
    %6675 = sbr.rel (0) target = $region29
  $region28: #{yolov1_forward.3} parent=0 // pred_region
    _
  $region29: #{yolov1_forward.3} parent=0 // pred_fallthru
    _

// kernel: yolov1_forward.5
$region0: #{yolov1_forward.5}
  #allocation0 [shape = 'u32[]', space=smem, size = 0x4, offset = 0x4, fixed_abs, tag = 'smem constant byte address 0x4 - core index']
  #allocation1 [shape = 'u32[72,128]{1,0:T(1,128)}', space=vmem, size = 0x9000, scoped, tag = 'internal scratch']
  %s0 = inlined_call_operand.vmem [shape: bf16[16,512], index: 0, kind: input, shape index: {}]
  %s1 = inlined_call_operand.vmem [shape: bf16[512,512], index: 1, kind: input, shape index: {}]
  %s2 = inlined_call_operand.vmem [shape: f32[1,512], index: 2, kind: input, shape index: {}]
  %s3 = inlined_call_operand.vmem [shape: bf16[512,512], index: 3, kind: input, shape index: {}]
  %s4 = inlined_call_operand.vmem [shape: f32[1,512], index: 4, kind: input, shape index: {}]
  %s5 = inlined_call_operand.vmem [shape: bf16[512,128], index: 5, kind: input, shape index: {}]
  %s6 = inlined_call_operand.vmem [shape: f32[1,128], index: 6, kind: input, shape index: {}]
  %s7 = inlined_call_operand.vmem [shape: bf16[512,512], index: 7, kind: input, shape index: {}]
  %s8 = inlined_call_operand.vmem [shape: f32[1,512], index: 8, kind: input, shape index: {}]
  %s9 = inlined_call_operand.vmem [shape: bf16[512,512], index: 9, kind: input, shape index: {}]
  %s10 = inlined_call_operand.vmem [shape: f32[1,512], index: 10, kind: input, shape index: {}]
  %s11 = inlined_call_operand.vmem [shape: bf16[512,256], index: 11, kind: input, shape index: {}]
  %s12 = inlined_call_operand.vmem [shape: f32[1,256], index: 12, kind: input, shape index: {}]
  %s13 = inlined_call_operand.vmem [shape: f32[16,128], index: 13, kind: output, shape index: {}]
  %s14 = sld [smem:[#allocation0]]
  $region62: #{yolov1_forward.5} parent=0
    _
  %s16 = ssub.s32 1, %s14
  %s17 = scalar_select 0, %s16, %s14
  // Predicated region
  $region2: #{yolov1_forward.5} parent=0 // pred_check
    _
  $region3: #{yolov1_forward.5} parent=0 // pred_check_branch
    %19 = sbr.rel (0) target = $region5
  $region4: #{yolov1_forward.5} parent=0 // pred_region
    _
  $region5: #{yolov1_forward.5} parent=0 // pred_fallthru
    _
  // Predicated region
  $region6: #{yolov1_forward.5} parent=0 // pred_check
    _
  $region7: #{yolov1_forward.5} parent=0 // pred_check_branch
    %21 = sbr.rel (0) target = $region9
  $region8: #{yolov1_forward.5} parent=0 // pred_region
    _
  $region9: #{yolov1_forward.5} parent=0 // pred_fallthru
    _
  // Predicated region
  $region10: #{yolov1_forward.5} parent=0 // pred_check
    _
  $region11: #{yolov1_forward.5} parent=0 // pred_check_branch
    %23 = sbr.rel (0) target = $region13
  $region12: #{yolov1_forward.5} parent=0 // pred_region
    _
  $region13: #{yolov1_forward.5} parent=0 // pred_fallthru
    _
  // Predicated region
  $region14: #{yolov1_forward.5} parent=0 // pred_check
    _
  $region15: #{yolov1_forward.5} parent=0 // pred_check_branch
    %25 = sbr.rel (0) target = $region17
  $region16: #{yolov1_forward.5} parent=0 // pred_region
    _
  $region17: #{yolov1_forward.5} parent=0 // pred_fallthru
    _
  // Predicated region
  $region18: #{yolov1_forward.5} parent=0 // pred_check
    _
  $region19: #{yolov1_forward.5} parent=0 // pred_check_branch
    %27 = sbr.rel (0) target = $region21
  $region20: #{yolov1_forward.5} parent=0 // pred_region
    _
  $region21: #{yolov1_forward.5} parent=0 // pred_fallthru
    _
  // Predicated region
  $region22: #{yolov1_forward.5} parent=0 // pred_check
    _
  $region23: #{yolov1_forward.5} parent=0 // pred_check_branch
    %29 = sbr.rel (0) target = $region25
  $region24: #{yolov1_forward.5} parent=0 // pred_region
    _
  $region25: #{yolov1_forward.5} parent=0 // pred_fallthru
    _
  // Predicated region
  $region26: #{yolov1_forward.5} parent=0 // pred_check
    _
  $region27: #{yolov1_forward.5} parent=0 // pred_check_branch
    %31 = sbr.rel (0) target = $region29
  $region28: #{yolov1_forward.5} parent=0 // pred_region
    _
  $region29: #{yolov1_forward.5} parent=0 // pred_fallthru
    _
  // Predicated region
  $region30: #{yolov1_forward.5} parent=0 // pred_check
    _
  $region31: #{yolov1_forward.5} parent=0 // pred_check_branch
    %33 = sbr.rel (0) target = $region33
  $region32: #{yolov1_forward.5} parent=0 // pred_region
    _
  $region33: #{yolov1_forward.5} parent=0 // pred_fallthru
    _
  // Predicated region
  $region34: #{yolov1_forward.5} parent=0 // pred_check
    _
  $region35: #{yolov1_forward.5} parent=0 // pred_check_branch
    %35 = sbr.rel (0) target = $region37
  $region36: #{yolov1_forward.5} parent=0 // pred_region
    _
  $region37: #{yolov1_forward.5} parent=0 // pred_fallthru
    _
  // Predicated region
  $region38: #{yolov1_forward.5} parent=0 // pred_check
    _
  $region39: #{yolov1_forward.5} parent=0 // pred_check_branch
    %37 = sbr.rel (0) target = $region41
  $region40: #{yolov1_forward.5} parent=0 // pred_region
    _
  $region41: #{yolov1_forward.5} parent=0 // pred_fallthru
    _
  // Predicated region
  $region42: #{yolov1_forward.5} parent=0 // pred_check
    _
  $region43: #{yolov1_forward.5} parent=0 // pred_check_branch
    %39 = sbr.rel (0) target = $region45
  $region44: #{yolov1_forward.5} parent=0 // pred_region
    _
  $region45: #{yolov1_forward.5} parent=0 // pred_fallthru
    _
  // Predicated region
  $region46: #{yolov1_forward.5} parent=0 // pred_check
    _
  $region47: #{yolov1_forward.5} parent=0 // pred_check_branch
    %41 = sbr.rel (0) target = $region49
  $region48: #{yolov1_forward.5} parent=0 // pred_region
    _
  $region49: #{yolov1_forward.5} parent=0 // pred_fallthru
    _
  // Predicated region
  $region50: #{yolov1_forward.5} parent=0 // pred_check
    _
  $region51: #{yolov1_forward.5} parent=0 // pred_check_branch
    %43 = sbr.rel (0) target = $region53
  $region52: #{yolov1_forward.5} parent=0 // pred_region
    _
  $region53: #{yolov1_forward.5} parent=0 // pred_fallthru
    _
  %v44 = vld [vmem:[%s0] sm:$0xff]
  %v45 = vld [vmem:[%s0 + $0x8] sm:$0xff]
  %v46 = vld [vmem:[%s0 + $0x10] sm:$0xff]
  %v47 = vld [vmem:[%s0 + $0x18] sm:$0xff]
  %v48 = vld [vmem:[%s1] sm:$0xff]
  %v49 = vld [vmem:[%s1 + $0x8] sm:$0xff]
  %v50 = vld [vmem:[%s1 + $0x10] sm:$0xff]
  %v51 = vld [vmem:[%s1 + $0x18] sm:$0xff]
  %v52 = vld [vmem:[%s1 + $0x20] sm:$0xff]
  %v53 = vld [vmem:[%s1 + $0x28] sm:$0xff]
  %v54 = vld [vmem:[%s1 + $0x30] sm:$0xff]
  %v55 = vld [vmem:[%s1 + $0x38] sm:$0xff]
  %v56 = vld [vmem:[%s1 + $0x40] sm:$0xff]
  %v57 = vld [vmem:[%s1 + $0x48] sm:$0xff]
  %v58 = vld [vmem:[%s1 + $0x50] sm:$0xff]
  %v59 = vld [vmem:[%s1 + $0x58] sm:$0xff]
  %v60 = vld [vmem:[%s1 + $0x60] sm:$0xff]
  %v61 = vld [vmem:[%s1 + $0x68] sm:$0xff]
  %v62 = vld [vmem:[%s1 + $0x70] sm:$0xff]
  %v63 = vld [vmem:[%s1 + $0x78] sm:$0xff]
  %v64 = vld [vmem:[%s1 + $0x80] sm:$0xff]
  %v65 = vld [vmem:[%s1 + $0x88] sm:$0xff]
  %v66 = vld [vmem:[%s1 + $0x90] sm:$0xff]
  %v67 = vld [vmem:[%s1 + $0x98] sm:$0xff]
  %v68 = vld [vmem:[%s1 + $0xa0] sm:$0xff]
  %v69 = vld [vmem:[%s1 + $0xa8] sm:$0xff]
  %v70 = vld [vmem:[%s1 + $0xb0] sm:$0xff]
  %v71 = vld [vmem:[%s1 + $0xb8] sm:$0xff]
  %v72 = vld [vmem:[%s1 + $0xc0] sm:$0xff]
  %v73 = vld [vmem:[%s1 + $0xc8] sm:$0xff]
  %v74 = vld [vmem:[%s1 + $0xd0] sm:$0xff]
  %v75 = vld [vmem:[%s1 + $0xd8] sm:$0xff]
  %v76 = vld [vmem:[%s1 + $0xe0] sm:$0xff]
  %v77 = vld [vmem:[%s1 + $0xe8] sm:$0xff]
  %v78 = vld [vmem:[%s1 + $0xf0] sm:$0xff]
  %v79 = vld [vmem:[%s1 + $0xf8] sm:$0xff]
  %v80 = vld [vmem:[%s1 + $0x100] sm:$0xff]
  %v81 = vld [vmem:[%s1 + $0x108] sm:$0xff]
  %v82 = vld [vmem:[%s1 + $0x110] sm:$0xff]
  %v83 = vld [vmem:[%s1 + $0x118] sm:$0xff]
  %v84 = vld [vmem:[%s1 + $0x120] sm:$0xff]
  %v85 = vld [vmem:[%s1 + $0x128] sm:$0xff]
  %v86 = vld [vmem:[%s1 + $0x130] sm:$0xff]
  %v87 = vld [vmem:[%s1 + $0x138] sm:$0xff]
  %v88 = vld [vmem:[%s1 + $0x140] sm:$0xff]
  %v89 = vld [vmem:[%s1 + $0x148] sm:$0xff]
  %v90 = vld [vmem:[%s1 + $0x150] sm:$0xff]
  %v91 = vld [vmem:[%s1 + $0x158] sm:$0xff]
  %v92 = vld [vmem:[%s1 + $0x160] sm:$0xff]
  %v93 = vld [vmem:[%s1 + $0x168] sm:$0xff]
  %v94 = vld [vmem:[%s1 + $0x170] sm:$0xff]
  %v95 = vld [vmem:[%s1 + $0x178] sm:$0xff]
  %v96 = vld [vmem:[%s1 + $0x180] sm:$0xff]
  %v97 = vld [vmem:[%s1 + $0x188] sm:$0xff]
  %v98 = vld [vmem:[%s1 + $0x190] sm:$0xff]
  %v99 = vld [vmem:[%s1 + $0x198] sm:$0xff]
  %v100 = vld [vmem:[%s1 + $0x1a0] sm:$0xff]
  %v101 = vld [vmem:[%s1 + $0x1a8] sm:$0xff]
  %v102 = vld [vmem:[%s1 + $0x1b0] sm:$0xff]
  %v103 = vld [vmem:[%s1 + $0x1b8] sm:$0xff]
  %v104 = vld [vmem:[%s1 + $0x1c0] sm:$0xff]
  %v105 = vld [vmem:[%s1 + $0x1c8] sm:$0xff]
  %v106 = vld [vmem:[%s1 + $0x1d0] sm:$0xff]
  %v107 = vld [vmem:[%s1 + $0x1d8] sm:$0xff]
  %v108 = vld [vmem:[%s1 + $0x1e0] sm:$0xff]
  %v109 = vld [vmem:[%s1 + $0x1e8] sm:$0xff]
  %v110 = vld [vmem:[%s1 + $0x1f0] sm:$0xff]
  %v111 = vld [vmem:[%s1 + $0x1f8] sm:$0xff]
  %v112 = vld [vmem:[%s1 + $0x200] sm:$0xff]
  %v113 = vld [vmem:[%s1 + $0x208] sm:$0xff]
  %v114 = vld [vmem:[%s1 + $0x210] sm:$0xff]
  %v115 = vld [vmem:[%s1 + $0x218] sm:$0xff]
  %v116 = vld [vmem:[%s1 + $0x220] sm:$0xff]
  %v117 = vld [vmem:[%s1 + $0x228] sm:$0xff]
  %v118 = vld [vmem:[%s1 + $0x230] sm:$0xff]
  %v119 = vld [vmem:[%s1 + $0x238] sm:$0xff]
  %v120 = vld [vmem:[%s1 + $0x240] sm:$0xff]
  %v121 = vld [vmem:[%s1 + $0x248] sm:$0xff]
  %v122 = vld [vmem:[%s1 + $0x250] sm:$0xff]
  %v123 = vld [vmem:[%s1 + $0x258] sm:$0xff]
  %v124 = vld [vmem:[%s1 + $0x260] sm:$0xff]
  %v125 = vld [vmem:[%s1 + $0x268] sm:$0xff]
  %v126 = vld [vmem:[%s1 + $0x270] sm:$0xff]
  %v127 = vld [vmem:[%s1 + $0x278] sm:$0xff]
  %v128 = vld [vmem:[%s1 + $0x280] sm:$0xff]
  %v129 = vld [vmem:[%s1 + $0x288] sm:$0xff]
  %v130 = vld [vmem:[%s1 + $0x290] sm:$0xff]
  %v131 = vld [vmem:[%s1 + $0x298] sm:$0xff]
  %v132 = vld [vmem:[%s1 + $0x2a0] sm:$0xff]
  %v133 = vld [vmem:[%s1 + $0x2a8] sm:$0xff]
  %v134 = vld [vmem:[%s1 + $0x2b0] sm:$0xff]
  %v135 = vld [vmem:[%s1 + $0x2b8] sm:$0xff]
  %v136 = vld [vmem:[%s1 + $0x2c0] sm:$0xff]
  %v137 = vld [vmem:[%s1 + $0x2c8] sm:$0xff]
  %v138 = vld [vmem:[%s1 + $0x2d0] sm:$0xff]
  %v139 = vld [vmem:[%s1 + $0x2d8] sm:$0xff]
  %v140 = vld [vmem:[%s1 + $0x2e0] sm:$0xff]
  %v141 = vld [vmem:[%s1 + $0x2e8] sm:$0xff]
  %v142 = vld [vmem:[%s1 + $0x2f0] sm:$0xff]
  %v143 = vld [vmem:[%s1 + $0x2f8] sm:$0xff]
  %v144 = vld [vmem:[%s1 + $0x300] sm:$0xff]
  %v145 = vld [vmem:[%s1 + $0x308] sm:$0xff]
  %v146 = vld [vmem:[%s1 + $0x310] sm:$0xff]
  %v147 = vld [vmem:[%s1 + $0x318] sm:$0xff]
  %v148 = vld [vmem:[%s1 + $0x320] sm:$0xff]
  %v149 = vld [vmem:[%s1 + $0x328] sm:$0xff]
  %v150 = vld [vmem:[%s1 + $0x330] sm:$0xff]
  %v151 = vld [vmem:[%s1 + $0x338] sm:$0xff]
  %v152 = vld [vmem:[%s1 + $0x340] sm:$0xff]
  %v153 = vld [vmem:[%s1 + $0x348] sm:$0xff]
  %v154 = vld [vmem:[%s1 + $0x350] sm:$0xff]
  %v155 = vld [vmem:[%s1 + $0x358] sm:$0xff]
  %v156 = vld [vmem:[%s1 + $0x360] sm:$0xff]
  %v157 = vld [vmem:[%s1 + $0x368] sm:$0xff]
  %v158 = vld [vmem:[%s1 + $0x370] sm:$0xff]
  %v159 = vld [vmem:[%s1 + $0x378] sm:$0xff]
  %v160 = vld [vmem:[%s1 + $0x380] sm:$0xff]
  %v161 = vld [vmem:[%s1 + $0x388] sm:$0xff]
  %v162 = vld [vmem:[%s1 + $0x390] sm:$0xff]
  %v163 = vld [vmem:[%s1 + $0x398] sm:$0xff]
  %v164 = vld [vmem:[%s1 + $0x3a0] sm:$0xff]
  %v165 = vld [vmem:[%s1 + $0x3a8] sm:$0xff]
  %v166 = vld [vmem:[%s1 + $0x3b0] sm:$0xff]
  %v167 = vld [vmem:[%s1 + $0x3b8] sm:$0xff]
  %v168 = vld [vmem:[%s1 + $0x3c0] sm:$0xff]
  %v169 = vld [vmem:[%s1 + $0x3c8] sm:$0xff]
  %v170 = vld [vmem:[%s1 + $0x3d0] sm:$0xff]
  %v171 = vld [vmem:[%s1 + $0x3d8] sm:$0xff]
  %v172 = vld [vmem:[%s1 + $0x3e0] sm:$0xff]
  %v173 = vld [vmem:[%s1 + $0x3e8] sm:$0xff]
  %v174 = vld [vmem:[%s1 + $0x3f0] sm:$0xff]
  %v175 = vld [vmem:[%s1 + $0x3f8] sm:$0xff]
  %v176 = vld [vmem:[%s2] sm:$0xf]
  %v178 = vperm.slane %v176, 0
  %v179 = vperm.slane %v176, 1
  %v180 = vperm.slane %v176, 2
  %v181 = vperm.slane %v176, 3
  %v190 = vunpack.c.l.b16 %v44
  %v191 = vunpack.c.h.b16 %v44
  %v192 = vunpack.c.l.b16 %v45
  %v193 = vunpack.c.h.b16 %v45
  %v194 = vunpack.c.l.b16 %v46
  %v195 = vunpack.c.h.b16 %v46
  %v196 = vunpack.c.l.b16 %v47
  %v197 = vunpack.c.h.b16 %v47
  %v198 = vpack.c.b16 %v194, %v190
  %v199 = vpack.c.b16 %v195, %v191
  %v200 = vpack.c.b16 %v196, %v192
  %v201 = vpack.c.b16 %v197, %v193
  %v334 = vunpack.c.l.b16 %v48
  %v335 = vunpack.c.h.b16 %v48
  %v336 = vunpack.c.l.b16 %v49
  %v337 = vunpack.c.h.b16 %v49
  %v338 = vunpack.c.l.b16 %v50
  %v339 = vunpack.c.h.b16 %v50
  %v340 = vunpack.c.l.b16 %v51
  %v341 = vunpack.c.h.b16 %v51
  %v342 = vunpack.c.l.b16 %v52
  %v343 = vunpack.c.h.b16 %v52
  %v344 = vunpack.c.l.b16 %v53
  %v345 = vunpack.c.h.b16 %v53
  %v346 = vunpack.c.l.b16 %v54
  %v347 = vunpack.c.h.b16 %v54
  %v348 = vunpack.c.l.b16 %v55
  %v349 = vunpack.c.h.b16 %v55
  %v350 = vunpack.c.l.b16 %v56
  %v351 = vunpack.c.h.b16 %v56
  %v352 = vunpack.c.l.b16 %v57
  %v353 = vunpack.c.h.b16 %v57
  %v354 = vunpack.c.l.b16 %v58
  %v355 = vunpack.c.h.b16 %v58
  %v356 = vunpack.c.l.b16 %v59
  %v357 = vunpack.c.h.b16 %v59
  %v358 = vunpack.c.l.b16 %v60
  %v359 = vunpack.c.h.b16 %v60
  %v360 = vunpack.c.l.b16 %v61
  %v361 = vunpack.c.h.b16 %v61
  %v362 = vunpack.c.l.b16 %v62
  %v363 = vunpack.c.h.b16 %v62
  %v364 = vunpack.c.l.b16 %v63
  %v365 = vunpack.c.h.b16 %v63
  %v366 = vunpack.c.l.b16 %v64
  %v367 = vunpack.c.h.b16 %v64
  %v368 = vunpack.c.l.b16 %v65
  %v369 = vunpack.c.h.b16 %v65
  %v370 = vunpack.c.l.b16 %v66
  %v371 = vunpack.c.h.b16 %v66
  %v372 = vunpack.c.l.b16 %v67
  %v373 = vunpack.c.h.b16 %v67
  %v374 = vunpack.c.l.b16 %v68
  %v375 = vunpack.c.h.b16 %v68
  %v376 = vunpack.c.l.b16 %v69
  %v377 = vunpack.c.h.b16 %v69
  %v378 = vunpack.c.l.b16 %v70
  %v379 = vunpack.c.h.b16 %v70
  %v380 = vunpack.c.l.b16 %v71
  %v381 = vunpack.c.h.b16 %v71
  %v382 = vunpack.c.l.b16 %v72
  %v383 = vunpack.c.h.b16 %v72
  %v384 = vunpack.c.l.b16 %v73
  %v385 = vunpack.c.h.b16 %v73
  %v386 = vunpack.c.l.b16 %v74
  %v387 = vunpack.c.h.b16 %v74
  %v388 = vunpack.c.l.b16 %v75
  %v389 = vunpack.c.h.b16 %v75
  %v390 = vunpack.c.l.b16 %v76
  %v391 = vunpack.c.h.b16 %v76
  %v392 = vunpack.c.l.b16 %v77
  %v393 = vunpack.c.h.b16 %v77
  %v394 = vunpack.c.l.b16 %v78
  %v395 = vunpack.c.h.b16 %v78
  %v396 = vunpack.c.l.b16 %v79
  %v397 = vunpack.c.h.b16 %v79
  %v398 = vunpack.c.l.b16 %v80
  %v399 = vunpack.c.h.b16 %v80
  %v400 = vunpack.c.l.b16 %v81
  %v401 = vunpack.c.h.b16 %v81
  %v402 = vunpack.c.l.b16 %v82
  %v403 = vunpack.c.h.b16 %v82
  %v404 = vunpack.c.l.b16 %v83
  %v405 = vunpack.c.h.b16 %v83
  %v406 = vunpack.c.l.b16 %v84
  %v407 = vunpack.c.h.b16 %v84
  %v408 = vunpack.c.l.b16 %v85
  %v409 = vunpack.c.h.b16 %v85
  %v410 = vunpack.c.l.b16 %v86
  %v411 = vunpack.c.h.b16 %v86
  %v412 = vunpack.c.l.b16 %v87
  %v413 = vunpack.c.h.b16 %v87
  %v414 = vunpack.c.l.b16 %v88
  %v415 = vunpack.c.h.b16 %v88
  %v416 = vunpack.c.l.b16 %v89
  %v417 = vunpack.c.h.b16 %v89
  %v418 = vunpack.c.l.b16 %v90
  %v419 = vunpack.c.h.b16 %v90
  %v420 = vunpack.c.l.b16 %v91
  %v421 = vunpack.c.h.b16 %v91
  %v422 = vunpack.c.l.b16 %v92
  %v423 = vunpack.c.h.b16 %v92
  %v424 = vunpack.c.l.b16 %v93
  %v425 = vunpack.c.h.b16 %v93
  %v426 = vunpack.c.l.b16 %v94
  %v427 = vunpack.c.h.b16 %v94
  %v428 = vunpack.c.l.b16 %v95
  %v429 = vunpack.c.h.b16 %v95
  %v430 = vunpack.c.l.b16 %v96
  %v431 = vunpack.c.h.b16 %v96
  %v432 = vunpack.c.l.b16 %v97
  %v433 = vunpack.c.h.b16 %v97
  %v434 = vunpack.c.l.b16 %v98
  %v435 = vunpack.c.h.b16 %v98
  %v436 = vunpack.c.l.b16 %v99
  %v437 = vunpack.c.h.b16 %v99
  %v438 = vunpack.c.l.b16 %v100
  %v439 = vunpack.c.h.b16 %v100
  %v440 = vunpack.c.l.b16 %v101
  %v441 = vunpack.c.h.b16 %v101
  %v442 = vunpack.c.l.b16 %v102
  %v443 = vunpack.c.h.b16 %v102
  %v444 = vunpack.c.l.b16 %v103
  %v445 = vunpack.c.h.b16 %v103
  %v446 = vunpack.c.l.b16 %v104
  %v447 = vunpack.c.h.b16 %v104
  %v448 = vunpack.c.l.b16 %v105
  %v449 = vunpack.c.h.b16 %v105
  %v450 = vunpack.c.l.b16 %v106
  %v451 = vunpack.c.h.b16 %v106
  %v452 = vunpack.c.l.b16 %v107
  %v453 = vunpack.c.h.b16 %v107
  %v454 = vunpack.c.l.b16 %v108
  %v455 = vunpack.c.h.b16 %v108
  %v456 = vunpack.c.l.b16 %v109
  %v457 = vunpack.c.h.b16 %v109
  %v458 = vunpack.c.l.b16 %v110
  %v459 = vunpack.c.h.b16 %v110
  %v460 = vunpack.c.l.b16 %v111
  %v461 = vunpack.c.h.b16 %v111
  %v462 = vunpack.c.l.b16 %v112
  %v463 = vunpack.c.h.b16 %v112
  %v464 = vunpack.c.l.b16 %v113
  %v465 = vunpack.c.h.b16 %v113
  %v466 = vunpack.c.l.b16 %v114
  %v467 = vunpack.c.h.b16 %v114
  %v468 = vunpack.c.l.b16 %v115
  %v469 = vunpack.c.h.b16 %v115
  %v470 = vunpack.c.l.b16 %v116
  %v471 = vunpack.c.h.b16 %v116
  %v472 = vunpack.c.l.b16 %v117
  %v473 = vunpack.c.h.b16 %v117
  %v474 = vunpack.c.l.b16 %v118
  %v475 = vunpack.c.h.b16 %v118
  %v476 = vunpack.c.l.b16 %v119
  %v477 = vunpack.c.h.b16 %v119
  %v478 = vunpack.c.l.b16 %v120
  %v479 = vunpack.c.h.b16 %v120
  %v480 = vunpack.c.l.b16 %v121
  %v481 = vunpack.c.h.b16 %v121
  %v482 = vunpack.c.l.b16 %v122
  %v483 = vunpack.c.h.b16 %v122
  %v484 = vunpack.c.l.b16 %v123
  %v485 = vunpack.c.h.b16 %v123
  %v486 = vunpack.c.l.b16 %v124
  %v487 = vunpack.c.h.b16 %v124
  %v488 = vunpack.c.l.b16 %v125
  %v489 = vunpack.c.h.b16 %v125
  %v490 = vunpack.c.l.b16 %v126
  %v491 = vunpack.c.h.b16 %v126
  %v492 = vunpack.c.l.b16 %v127
  %v493 = vunpack.c.h.b16 %v127
  %v494 = vunpack.c.l.b16 %v128
  %v495 = vunpack.c.h.b16 %v128
  %v496 = vunpack.c.l.b16 %v129
  %v497 = vunpack.c.h.b16 %v129
  %v498 = vunpack.c.l.b16 %v130
  %v499 = vunpack.c.h.b16 %v130
  %v500 = vunpack.c.l.b16 %v131
  %v501 = vunpack.c.h.b16 %v131
  %v502 = vunpack.c.l.b16 %v132
  %v503 = vunpack.c.h.b16 %v132
  %v504 = vunpack.c.l.b16 %v133
  %v505 = vunpack.c.h.b16 %v133
  %v506 = vunpack.c.l.b16 %v134
  %v507 = vunpack.c.h.b16 %v134
  %v508 = vunpack.c.l.b16 %v135
  %v509 = vunpack.c.h.b16 %v135
  %v510 = vunpack.c.l.b16 %v136
  %v511 = vunpack.c.h.b16 %v136
  %v512 = vunpack.c.l.b16 %v137
  %v513 = vunpack.c.h.b16 %v137
  %v514 = vunpack.c.l.b16 %v138
  %v515 = vunpack.c.h.b16 %v138
  %v516 = vunpack.c.l.b16 %v139
  %v517 = vunpack.c.h.b16 %v139
  %v518 = vunpack.c.l.b16 %v140
  %v519 = vunpack.c.h.b16 %v140
  %v520 = vunpack.c.l.b16 %v141
  %v521 = vunpack.c.h.b16 %v141
  %v522 = vunpack.c.l.b16 %v142
  %v523 = vunpack.c.h.b16 %v142
  %v524 = vunpack.c.l.b16 %v143
  %v525 = vunpack.c.h.b16 %v143
  %v526 = vunpack.c.l.b16 %v144
  %v527 = vunpack.c.h.b16 %v144
  %v528 = vunpack.c.l.b16 %v145
  %v529 = vunpack.c.h.b16 %v145
  %v530 = vunpack.c.l.b16 %v146
  %v531 = vunpack.c.h.b16 %v146
  %v532 = vunpack.c.l.b16 %v147
  %v533 = vunpack.c.h.b16 %v147
  %v534 = vunpack.c.l.b16 %v148
  %v535 = vunpack.c.h.b16 %v148
  %v536 = vunpack.c.l.b16 %v149
  %v537 = vunpack.c.h.b16 %v149
  %v538 = vunpack.c.l.b16 %v150
  %v539 = vunpack.c.h.b16 %v150
  %v540 = vunpack.c.l.b16 %v151
  %v541 = vunpack.c.h.b16 %v151
  %v542 = vunpack.c.l.b16 %v152
  %v543 = vunpack.c.h.b16 %v152
  %v544 = vunpack.c.l.b16 %v153
  %v545 = vunpack.c.h.b16 %v153
  %v546 = vunpack.c.l.b16 %v154
  %v547 = vunpack.c.h.b16 %v154
  %v548 = vunpack.c.l.b16 %v155
  %v549 = vunpack.c.h.b16 %v155
  %v550 = vunpack.c.l.b16 %v156
  %v551 = vunpack.c.h.b16 %v156
  %v552 = vunpack.c.l.b16 %v157
  %v553 = vunpack.c.h.b16 %v157
  %v554 = vunpack.c.l.b16 %v158
  %v555 = vunpack.c.h.b16 %v158
  %v556 = vunpack.c.l.b16 %v159
  %v557 = vunpack.c.h.b16 %v159
  %v558 = vunpack.c.l.b16 %v160
  %v559 = vunpack.c.h.b16 %v160
  %v560 = vunpack.c.l.b16 %v161
  %v561 = vunpack.c.h.b16 %v161
  %v562 = vunpack.c.l.b16 %v162
  %v563 = vunpack.c.h.b16 %v162
  %v564 = vunpack.c.l.b16 %v163
  %v565 = vunpack.c.h.b16 %v163
  %v566 = vunpack.c.l.b16 %v164
  %v567 = vunpack.c.h.b16 %v164
  %v568 = vunpack.c.l.b16 %v165
  %v569 = vunpack.c.h.b16 %v165
  %v570 = vunpack.c.l.b16 %v166
  %v571 = vunpack.c.h.b16 %v166
  %v572 = vunpack.c.l.b16 %v167
  %v573 = vunpack.c.h.b16 %v167
  %v574 = vunpack.c.l.b16 %v168
  %v575 = vunpack.c.h.b16 %v168
  %v576 = vunpack.c.l.b16 %v169
  %v577 = vunpack.c.h.b16 %v169
  %v578 = vunpack.c.l.b16 %v170
  %v579 = vunpack.c.h.b16 %v170
  %v580 = vunpack.c.l.b16 %v171
  %v581 = vunpack.c.h.b16 %v171
  %v582 = vunpack.c.l.b16 %v172
  %v583 = vunpack.c.h.b16 %v172
  %v584 = vunpack.c.l.b16 %v173
  %v585 = vunpack.c.h.b16 %v173
  %v586 = vunpack.c.l.b16 %v174
  %v587 = vunpack.c.h.b16 %v174
  %v588 = vunpack.c.l.b16 %v175
  %v589 = vunpack.c.h.b16 %v175
  %v590 = vpack.c.b16 %v338, %v334
  %v591 = vpack.c.b16 %v339, %v335
  %v592 = vpack.c.b16 %v340, %v336
  %v593 = vpack.c.b16 %v341, %v337
  %v594 = vpack.c.b16 %v346, %v342
  %v595 = vpack.c.b16 %v347, %v343
  %v596 = vpack.c.b16 %v348, %v344
  %v597 = vpack.c.b16 %v349, %v345
  %v598 = vpack.c.b16 %v354, %v350
  %v599 = vpack.c.b16 %v355, %v351
  %v600 = vpack.c.b16 %v356, %v352
  %v601 = vpack.c.b16 %v357, %v353
  %v602 = vpack.c.b16 %v362, %v358
  %v603 = vpack.c.b16 %v363, %v359
  %v604 = vpack.c.b16 %v364, %v360
  %v605 = vpack.c.b16 %v365, %v361
  %v606 = vpack.c.b16 %v370, %v366
  %v607 = vpack.c.b16 %v371, %v367
  %v608 = vpack.c.b16 %v372, %v368
  %v609 = vpack.c.b16 %v373, %v369
  %v610 = vpack.c.b16 %v378, %v374
  %v611 = vpack.c.b16 %v379, %v375
  %v612 = vpack.c.b16 %v380, %v376
  %v613 = vpack.c.b16 %v381, %v377
  %v614 = vpack.c.b16 %v386, %v382
  %v615 = vpack.c.b16 %v387, %v383
  %v616 = vpack.c.b16 %v388, %v384
  %v617 = vpack.c.b16 %v389, %v385
  %v618 = vpack.c.b16 %v394, %v390
  %v619 = vpack.c.b16 %v395, %v391
  %v620 = vpack.c.b16 %v396, %v392
  %v621 = vpack.c.b16 %v397, %v393
  %v622 = vpack.c.b16 %v402, %v398
  %v623 = vpack.c.b16 %v403, %v399
  %v624 = vpack.c.b16 %v404, %v400
  %v625 = vpack.c.b16 %v405, %v401
  %v626 = vpack.c.b16 %v410, %v406
  %v627 = vpack.c.b16 %v411, %v407
  %v628 = vpack.c.b16 %v412, %v408
  %v629 = vpack.c.b16 %v413, %v409
  %v630 = vpack.c.b16 %v418, %v414
  %v631 = vpack.c.b16 %v419, %v415
  %v632 = vpack.c.b16 %v420, %v416
  %v633 = vpack.c.b16 %v421, %v417
  %v634 = vpack.c.b16 %v426, %v422
  %v635 = vpack.c.b16 %v427, %v423
  %v636 = vpack.c.b16 %v428, %v424
  %v637 = vpack.c.b16 %v429, %v425
  %v638 = vpack.c.b16 %v434, %v430
  %v639 = vpack.c.b16 %v435, %v431
  %v640 = vpack.c.b16 %v436, %v432
  %v641 = vpack.c.b16 %v437, %v433
  %v642 = vpack.c.b16 %v442, %v438
  %v643 = vpack.c.b16 %v443, %v439
  %v644 = vpack.c.b16 %v444, %v440
  %v645 = vpack.c.b16 %v445, %v441
  %v646 = vpack.c.b16 %v450, %v446
  %v647 = vpack.c.b16 %v451, %v447
  %v648 = vpack.c.b16 %v452, %v448
  %v649 = vpack.c.b16 %v453, %v449
  %v650 = vpack.c.b16 %v458, %v454
  %v651 = vpack.c.b16 %v459, %v455
  %v652 = vpack.c.b16 %v460, %v456
  %v653 = vpack.c.b16 %v461, %v457
  %v654 = vpack.c.b16 %v466, %v462
  %v655 = vpack.c.b16 %v467, %v463
  %v656 = vpack.c.b16 %v468, %v464
  %v657 = vpack.c.b16 %v469, %v465
  %v658 = vpack.c.b16 %v474, %v470
  %v659 = vpack.c.b16 %v475, %v471
  %v660 = vpack.c.b16 %v476, %v472
  %v661 = vpack.c.b16 %v477, %v473
  %v662 = vpack.c.b16 %v482, %v478
  %v663 = vpack.c.b16 %v483, %v479
  %v664 = vpack.c.b16 %v484, %v480
  %v665 = vpack.c.b16 %v485, %v481
  %v666 = vpack.c.b16 %v490, %v486
  %v667 = vpack.c.b16 %v491, %v487
  %v668 = vpack.c.b16 %v492, %v488
  %v669 = vpack.c.b16 %v493, %v489
  %v670 = vpack.c.b16 %v498, %v494
  %v671 = vpack.c.b16 %v499, %v495
  %v672 = vpack.c.b16 %v500, %v496
  %v673 = vpack.c.b16 %v501, %v497
  %v674 = vpack.c.b16 %v506, %v502
  %v675 = vpack.c.b16 %v507, %v503
  %v676 = vpack.c.b16 %v508, %v504
  %v677 = vpack.c.b16 %v509, %v505
  %v678 = vpack.c.b16 %v514, %v510
  %v679 = vpack.c.b16 %v515, %v511
  %v680 = vpack.c.b16 %v516, %v512
  %v681 = vpack.c.b16 %v517, %v513
  %v682 = vpack.c.b16 %v522, %v518
  %v683 = vpack.c.b16 %v523, %v519
  %v684 = vpack.c.b16 %v524, %v520
  %v685 = vpack.c.b16 %v525, %v521
  %v686 = vpack.c.b16 %v530, %v526
  %v687 = vpack.c.b16 %v531, %v527
  %v688 = vpack.c.b16 %v532, %v528
  %v689 = vpack.c.b16 %v533, %v529
  %v690 = vpack.c.b16 %v538, %v534
  %v691 = vpack.c.b16 %v539, %v535
  %v692 = vpack.c.b16 %v540, %v536
  %v693 = vpack.c.b16 %v541, %v537
  %v694 = vpack.c.b16 %v546, %v542
  %v695 = vpack.c.b16 %v547, %v543
  %v696 = vpack.c.b16 %v548, %v544
  %v697 = vpack.c.b16 %v549, %v545
  %v698 = vpack.c.b16 %v554, %v550
  %v699 = vpack.c.b16 %v555, %v551
  %v700 = vpack.c.b16 %v556, %v552
  %v701 = vpack.c.b16 %v557, %v553
  %v702 = vpack.c.b16 %v562, %v558
  %v703 = vpack.c.b16 %v563, %v559
  %v704 = vpack.c.b16 %v564, %v560
  %v705 = vpack.c.b16 %v565, %v561
  %v706 = vpack.c.b16 %v570, %v566
  %v707 = vpack.c.b16 %v571, %v567
  %v708 = vpack.c.b16 %v572, %v568
  %v709 = vpack.c.b16 %v573, %v569
  %v710 = vpack.c.b16 %v578, %v574
  %v711 = vpack.c.b16 %v579, %v575
  %v712 = vpack.c.b16 %v580, %v576
  %v713 = vpack.c.b16 %v581, %v577
  %v714 = vpack.c.b16 %v586, %v582
  %v715 = vpack.c.b16 %v587, %v583
  %v716 = vpack.c.b16 %v588, %v584
  %v717 = vpack.c.b16 %v589, %v585
  %846 = vmatpush.bf16.msra.mxu0 %v618
  %847 = vmatpush.bf16.msra.mxu0 %v614
  %848 = vmatpush.bf16.msra.mxu0 %v610
  %849 = vmatpush.bf16.msra.mxu0 %v606
  %850 = vmatpush.bf16.msra.mxu0 %v602
  %851 = vmatpush.bf16.msra.mxu0 %v598
  %852 = vmatpush.bf16.msra.mxu0 %v594
  %853 = vmatpush.bf16.msra.mxu0 %v590
  %854 = vmatmul.bf16.gmra.mxu0 %v198
  %v855 = vpop.f32.mrf.mxu0
  %v856 = vadd.f32 %v178, %v855
  %v857 = vpop.f32.mrf.mxu0
  %v858 = vadd.f32 %v178, %v857
  %859 = vdwg.mxu0
  %860 = vmatpush.bf16.msra.mxu0 %v650
  %861 = vmatpush.bf16.msra.mxu0 %v646
  %862 = vmatpush.bf16.msra.mxu0 %v642
  %863 = vmatpush.bf16.msra.mxu0 %v638
  %864 = vmatpush.bf16.msra.mxu0 %v634
  %865 = vmatpush.bf16.msra.mxu0 %v630
  %866 = vmatpush.bf16.msra.mxu0 %v626
  %867 = vmatpush.bf16.msra.mxu0 %v622
  %868 = vmatmul.bf16.gmra.mxu0 %v199
  %v869 = vpop.f32.mrf.mxu0
  %v870 = vadd.f32 %v856, %v869
  %v871 = vpop.f32.mrf.mxu0
  %v872 = vadd.f32 %v858, %v871
  %873 = vdwg.mxu0
  %874 = vmatpush.bf16.msra.mxu0 %v682
  %875 = vmatpush.bf16.msra.mxu0 %v678
  %876 = vmatpush.bf16.msra.mxu0 %v674
  %877 = vmatpush.bf16.msra.mxu0 %v670
  %878 = vmatpush.bf16.msra.mxu0 %v666
  %879 = vmatpush.bf16.msra.mxu0 %v662
  %880 = vmatpush.bf16.msra.mxu0 %v658
  %881 = vmatpush.bf16.msra.mxu0 %v654
  %882 = vmatmul.bf16.gmra.mxu0 %v200
  %v883 = vpop.f32.mrf.mxu0
  %v884 = vadd.f32 %v870, %v883
  %v885 = vpop.f32.mrf.mxu0
  %v886 = vadd.f32 %v872, %v885
  %887 = vdwg.mxu0
  %888 = vmatpush.bf16.msra.mxu0 %v714
  %889 = vmatpush.bf16.msra.mxu0 %v710
  %890 = vmatpush.bf16.msra.mxu0 %v706
  %891 = vmatpush.bf16.msra.mxu0 %v702
  %892 = vmatpush.bf16.msra.mxu0 %v698
  %893 = vmatpush.bf16.msra.mxu0 %v694
  %894 = vmatpush.bf16.msra.mxu0 %v690
  %895 = vmatpush.bf16.msra.mxu0 %v686
  %896 = vmatmul.bf16.gmra.mxu0 %v201
  %v897 = vpop.f32.mrf.mxu0
  %v898 = vadd.f32 %v884, %v897
  %v899 = vpop.f32.mrf.mxu0
  %v900 = vadd.f32 %v886, %v899
  %901 = vdwg.mxu0
  %902 = vmatpush.bf16.msra.mxu0 %v619
  %903 = vmatpush.bf16.msra.mxu0 %v615
  %904 = vmatpush.bf16.msra.mxu0 %v611
  %905 = vmatpush.bf16.msra.mxu0 %v607
  %906 = vmatpush.bf16.msra.mxu0 %v603
  %907 = vmatpush.bf16.msra.mxu0 %v599
  %908 = vmatpush.bf16.msra.mxu0 %v595
  %909 = vmatpush.bf16.msra.mxu0 %v591
  %910 = vmatmul.bf16.gmra.mxu0 %v198
  %v911 = vpop.f32.mrf.mxu0
  %v912 = vadd.f32 %v179, %v911
  %v913 = vpop.f32.mrf.mxu0
  %v914 = vadd.f32 %v179, %v913
  %915 = vdwg.mxu0
  %916 = vmatpush.bf16.msra.mxu0 %v651
  %917 = vmatpush.bf16.msra.mxu0 %v647
  %918 = vmatpush.bf16.msra.mxu0 %v643
  %919 = vmatpush.bf16.msra.mxu0 %v639
  %920 = vmatpush.bf16.msra.mxu0 %v635
  %921 = vmatpush.bf16.msra.mxu0 %v631
  %922 = vmatpush.bf16.msra.mxu0 %v627
  %923 = vmatpush.bf16.msra.mxu0 %v623
  %924 = vmatmul.bf16.gmra.mxu0 %v199
  %v925 = vpop.f32.mrf.mxu0
  %v926 = vadd.f32 %v912, %v925
  %v927 = vpop.f32.mrf.mxu0
  %v928 = vadd.f32 %v914, %v927
  %929 = vdwg.mxu0
  %930 = vmatpush.bf16.msra.mxu0 %v683
  %931 = vmatpush.bf16.msra.mxu0 %v679
  %932 = vmatpush.bf16.msra.mxu0 %v675
  %933 = vmatpush.bf16.msra.mxu0 %v671
  %934 = vmatpush.bf16.msra.mxu0 %v667
  %935 = vmatpush.bf16.msra.mxu0 %v663
  %936 = vmatpush.bf16.msra.mxu0 %v659
  %937 = vmatpush.bf16.msra.mxu0 %v655
  %938 = vmatmul.bf16.gmra.mxu0 %v200
  %v939 = vpop.f32.mrf.mxu0
  %v940 = vadd.f32 %v926, %v939
  %v941 = vpop.f32.mrf.mxu0
  %v942 = vadd.f32 %v928, %v941
  %943 = vdwg.mxu0
  %944 = vmatpush.bf16.msra.mxu0 %v715
  %945 = vmatpush.bf16.msra.mxu0 %v711
  %946 = vmatpush.bf16.msra.mxu0 %v707
  %947 = vmatpush.bf16.msra.mxu0 %v703
  %948 = vmatpush.bf16.msra.mxu0 %v699
  %949 = vmatpush.bf16.msra.mxu0 %v695
  %950 = vmatpush.bf16.msra.mxu0 %v691
  %951 = vmatpush.bf16.msra.mxu0 %v687
  %952 = vmatmul.bf16.gmra.mxu0 %v201
  %v953 = vpop.f32.mrf.mxu0
  %v954 = vadd.f32 %v940, %v953
  %v955 = vpop.f32.mrf.mxu0
  %v956 = vadd.f32 %v942, %v955
  %957 = vdwg.mxu0
  %958 = vmatpush.bf16.msra.mxu0 %v620
  %959 = vmatpush.bf16.msra.mxu0 %v616
  %960 = vmatpush.bf16.msra.mxu0 %v612
  %961 = vmatpush.bf16.msra.mxu0 %v608
  %962 = vmatpush.bf16.msra.mxu0 %v604
  %963 = vmatpush.bf16.msra.mxu0 %v600
  %964 = vmatpush.bf16.msra.mxu0 %v596
  %965 = vmatpush.bf16.msra.mxu0 %v592
  %966 = vmatmul.bf16.gmra.mxu0 %v198
  %v967 = vpop.f32.mrf.mxu0
  %v968 = vadd.f32 %v180, %v967
  %v969 = vpop.f32.mrf.mxu0
  %v970 = vadd.f32 %v180, %v969
  %971 = vdwg.mxu0
  %972 = vmatpush.bf16.msra.mxu0 %v652
  %973 = vmatpush.bf16.msra.mxu0 %v648
  %974 = vmatpush.bf16.msra.mxu0 %v644
  %975 = vmatpush.bf16.msra.mxu0 %v640
  %976 = vmatpush.bf16.msra.mxu0 %v636
  %977 = vmatpush.bf16.msra.mxu0 %v632
  %978 = vmatpush.bf16.msra.mxu0 %v628
  %979 = vmatpush.bf16.msra.mxu0 %v624
  %980 = vmatmul.bf16.gmra.mxu0 %v199
  %v981 = vpop.f32.mrf.mxu0
  %v982 = vadd.f32 %v968, %v981
  %v983 = vpop.f32.mrf.mxu0
  %v984 = vadd.f32 %v970, %v983
  %985 = vdwg.mxu0
  %986 = vmatpush.bf16.msra.mxu0 %v684
  %987 = vmatpush.bf16.msra.mxu0 %v680
  %988 = vmatpush.bf16.msra.mxu0 %v676
  %989 = vmatpush.bf16.msra.mxu0 %v672
  %990 = vmatpush.bf16.msra.mxu0 %v668
  %991 = vmatpush.bf16.msra.mxu0 %v664
  %992 = vmatpush.bf16.msra.mxu0 %v660
  %993 = vmatpush.bf16.msra.mxu0 %v656
  %994 = vmatmul.bf16.gmra.mxu0 %v200
  %v995 = vpop.f32.mrf.mxu0
  %v996 = vadd.f32 %v982, %v995
  %v997 = vpop.f32.mrf.mxu0
  %v998 = vadd.f32 %v984, %v997
  %999 = vdwg.mxu0
  %1000 = vmatpush.bf16.msra.mxu0 %v716
  %1001 = vmatpush.bf16.msra.mxu0 %v712
  %1002 = vmatpush.bf16.msra.mxu0 %v708
  %1003 = vmatpush.bf16.msra.mxu0 %v704
  %1004 = vmatpush.bf16.msra.mxu0 %v700
  %1005 = vmatpush.bf16.msra.mxu0 %v696
  %1006 = vmatpush.bf16.msra.mxu0 %v692
  %1007 = vmatpush.bf16.msra.mxu0 %v688
  %1008 = vmatmul.bf16.gmra.mxu0 %v201
  %v1009 = vpop.f32.mrf.mxu0
  %v1010 = vadd.f32 %v996, %v1009
  %v1011 = vpop.f32.mrf.mxu0
  %v1012 = vadd.f32 %v998, %v1011
  %1013 = vdwg.mxu0
  %1014 = vmatpush.bf16.msra.mxu0 %v621
  %1015 = vmatpush.bf16.msra.mxu0 %v617
  %1016 = vmatpush.bf16.msra.mxu0 %v613
  %1017 = vmatpush.bf16.msra.mxu0 %v609
  %1018 = vmatpush.bf16.msra.mxu0 %v605
  %1019 = vmatpush.bf16.msra.mxu0 %v601
  %1020 = vmatpush.bf16.msra.mxu0 %v597
  %1021 = vmatpush.bf16.msra.mxu0 %v593
  %1022 = vmatmul.bf16.gmra.mxu0 %v198
  %v1023 = vpop.f32.mrf.mxu0
  %v1024 = vadd.f32 %v181, %v1023
  %v1025 = vpop.f32.mrf.mxu0
  %v1026 = vadd.f32 %v181, %v1025
  %1027 = vdwg.mxu0
  %1028 = vmatpush.bf16.msra.mxu0 %v653
  %1029 = vmatpush.bf16.msra.mxu0 %v649
  %1030 = vmatpush.bf16.msra.mxu0 %v645
  %1031 = vmatpush.bf16.msra.mxu0 %v641
  %1032 = vmatpush.bf16.msra.mxu0 %v637
  %1033 = vmatpush.bf16.msra.mxu0 %v633
  %1034 = vmatpush.bf16.msra.mxu0 %v629
  %1035 = vmatpush.bf16.msra.mxu0 %v625
  %1036 = vmatmul.bf16.gmra.mxu0 %v199
  %v1037 = vpop.f32.mrf.mxu0
  %v1038 = vadd.f32 %v1024, %v1037
  %v1039 = vpop.f32.mrf.mxu0
  %v1040 = vadd.f32 %v1026, %v1039
  %1041 = vdwg.mxu0
  %1042 = vmatpush.bf16.msra.mxu0 %v685
  %1043 = vmatpush.bf16.msra.mxu0 %v681
  %1044 = vmatpush.bf16.msra.mxu0 %v677
  %1045 = vmatpush.bf16.msra.mxu0 %v673
  %1046 = vmatpush.bf16.msra.mxu0 %v669
  %1047 = vmatpush.bf16.msra.mxu0 %v665
  %1048 = vmatpush.bf16.msra.mxu0 %v661
  %1049 = vmatpush.bf16.msra.mxu0 %v657
  %1050 = vmatmul.bf16.gmra.mxu0 %v200
  %v1051 = vpop.f32.mrf.mxu0
  %v1052 = vadd.f32 %v1038, %v1051
  %v1053 = vpop.f32.mrf.mxu0
  %v1054 = vadd.f32 %v1040, %v1053
  %1055 = vdwg.mxu0
  %1056 = vmatpush.bf16.msra.mxu0 %v717
  %1057 = vmatpush.bf16.msra.mxu0 %v713
  %1058 = vmatpush.bf16.msra.mxu0 %v709
  %1059 = vmatpush.bf16.msra.mxu0 %v705
  %1060 = vmatpush.bf16.msra.mxu0 %v701
  %1061 = vmatpush.bf16.msra.mxu0 %v697
  %1062 = vmatpush.bf16.msra.mxu0 %v693
  %1063 = vmatpush.bf16.msra.mxu0 %v689
  %1064 = vmatmul.bf16.gmra.mxu0 %v201
  %v1065 = vpop.f32.mrf.mxu0
  %v1066 = vadd.f32 %v1052, %v1065
  %v1067 = vpop.f32.mrf.mxu0
  %v1068 = vadd.f32 %v1054, %v1067
  %1069 = vdwg.mxu0
  %vm1070 = vcmp.gt.f32.partialorder %v898, 0.0
  %vm1071 = vcmp.gt.f32.partialorder %v954, 0.0
  %vm1072 = vcmp.gt.f32.partialorder %v1010, 0.0
  %vm1073 = vcmp.gt.f32.partialorder %v1066, 0.0
  %vm1074 = vcmp.gt.f32.partialorder %v900, 0.0
  %vm1075 = vcmp.gt.f32.partialorder %v956, 0.0
  %vm1076 = vcmp.gt.f32.partialorder %v1012, 0.0
  %vm1077 = vcmp.gt.f32.partialorder %v1068, 0.0
  %v1078 = vmul.f32 %v898, 0.1
  %v1079 = vmul.f32 %v954, 0.1
  %v1080 = vmul.f32 %v1010, 0.1
  %v1081 = vmul.f32 %v1066, 0.1
  %v1082 = vmul.f32 %v900, 0.1
  %v1083 = vmul.f32 %v956, 0.1
  %v1084 = vmul.f32 %v1012, 0.1
  %v1085 = vmul.f32 %v1068, 0.1
  %v1086 = vsel %vm1070, %v898, %v1078
  %v1087 = vsel %vm1071, %v954, %v1079
  %v1088 = vsel %vm1072, %v1010, %v1080
  %v1089 = vsel %vm1073, %v1066, %v1081
  %v1090 = vsel %vm1074, %v900, %v1082
  %v1091 = vsel %vm1075, %v956, %v1083
  %v1092 = vsel %vm1076, %v1012, %v1084
  %v1093 = vsel %vm1077, %v1068, %v1085
  %v1094 = vpack.c.bf16 %v1090, %v1086
  %v1095 = vpack.c.bf16 %v1091, %v1087
  %v1096 = vpack.c.bf16 %v1092, %v1088
  %v1097 = vpack.c.bf16 %v1093, %v1089
  %v1098 = vld [vmem:[%s3] sm:$0xff]
  %v1099 = vld [vmem:[%s3 + $0x8] sm:$0xff]
  %v1100 = vld [vmem:[%s3 + $0x10] sm:$0xff]
  %v1101 = vld [vmem:[%s3 + $0x18] sm:$0xff]
  %v1102 = vld [vmem:[%s3 + $0x20] sm:$0xff]
  %v1103 = vld [vmem:[%s3 + $0x28] sm:$0xff]
  %v1104 = vld [vmem:[%s3 + $0x30] sm:$0xff]
  %v1105 = vld [vmem:[%s3 + $0x38] sm:$0xff]
  %v1106 = vld [vmem:[%s3 + $0x40] sm:$0xff]
  %v1107 = vld [vmem:[%s3 + $0x48] sm:$0xff]
  %v1108 = vld [vmem:[%s3 + $0x50] sm:$0xff]
  %v1109 = vld [vmem:[%s3 + $0x58] sm:$0xff]
  %v1110 = vld [vmem:[%s3 + $0x60] sm:$0xff]
  %v1111 = vld [vmem:[%s3 + $0x68] sm:$0xff]
  %v1112 = vld [vmem:[%s3 + $0x70] sm:$0xff]
  %v1113 = vld [vmem:[%s3 + $0x78] sm:$0xff]
  %v1114 = vld [vmem:[%s3 + $0x80] sm:$0xff]
  %v1115 = vld [vmem:[%s3 + $0x88] sm:$0xff]
  %v1116 = vld [vmem:[%s3 + $0x90] sm:$0xff]
  %v1117 = vld [vmem:[%s3 + $0x98] sm:$0xff]
  %v1118 = vld [vmem:[%s3 + $0xa0] sm:$0xff]
  %v1119 = vld [vmem:[%s3 + $0xa8] sm:$0xff]
  %v1120 = vld [vmem:[%s3 + $0xb0] sm:$0xff]
  %v1121 = vld [vmem:[%s3 + $0xb8] sm:$0xff]
  %v1122 = vld [vmem:[%s3 + $0xc0] sm:$0xff]
  %v1123 = vld [vmem:[%s3 + $0xc8] sm:$0xff]
  %v1124 = vld [vmem:[%s3 + $0xd0] sm:$0xff]
  %v1125 = vld [vmem:[%s3 + $0xd8] sm:$0xff]
  %v1126 = vld [vmem:[%s3 + $0xe0] sm:$0xff]
  %v1127 = vld [vmem:[%s3 + $0xe8] sm:$0xff]
  %v1128 = vld [vmem:[%s3 + $0xf0] sm:$0xff]
  %v1129 = vld [vmem:[%s3 + $0xf8] sm:$0xff]
  %v1130 = vld [vmem:[%s3 + $0x100] sm:$0xff]
  %v1131 = vld [vmem:[%s3 + $0x108] sm:$0xff]
  %v1132 = vld [vmem:[%s3 + $0x110] sm:$0xff]
  %v1133 = vld [vmem:[%s3 + $0x118] sm:$0xff]
  %v1134 = vld [vmem:[%s3 + $0x120] sm:$0xff]
  %v1135 = vld [vmem:[%s3 + $0x128] sm:$0xff]
  %v1136 = vld [vmem:[%s3 + $0x130] sm:$0xff]
  %v1137 = vld [vmem:[%s3 + $0x138] sm:$0xff]
  %v1138 = vld [vmem:[%s3 + $0x140] sm:$0xff]
  %v1139 = vld [vmem:[%s3 + $0x148] sm:$0xff]
  %v1140 = vld [vmem:[%s3 + $0x150] sm:$0xff]
  %v1141 = vld [vmem:[%s3 + $0x158] sm:$0xff]
  %v1142 = vld [vmem:[%s3 + $0x160] sm:$0xff]
  %v1143 = vld [vmem:[%s3 + $0x168] sm:$0xff]
  %v1144 = vld [vmem:[%s3 + $0x170] sm:$0xff]
  %v1145 = vld [vmem:[%s3 + $0x178] sm:$0xff]
  %v1146 = vld [vmem:[%s3 + $0x180] sm:$0xff]
  %v1147 = vld [vmem:[%s3 + $0x188] sm:$0xff]
  %v1148 = vld [vmem:[%s3 + $0x190] sm:$0xff]
  %v1149 = vld [vmem:[%s3 + $0x198] sm:$0xff]
  %v1150 = vld [vmem:[%s3 + $0x1a0] sm:$0xff]
  %v1151 = vld [vmem:[%s3 + $0x1a8] sm:$0xff]
  %v1152 = vld [vmem:[%s3 + $0x1b0] sm:$0xff]
  %v1153 = vld [vmem:[%s3 + $0x1b8] sm:$0xff]
  %v1154 = vld [vmem:[%s3 + $0x1c0] sm:$0xff]
  %v1155 = vld [vmem:[%s3 + $0x1c8] sm:$0xff]
  %v1156 = vld [vmem:[%s3 + $0x1d0] sm:$0xff]
  %v1157 = vld [vmem:[%s3 + $0x1d8] sm:$0xff]
  %v1158 = vld [vmem:[%s3 + $0x1e0] sm:$0xff]
  %v1159 = vld [vmem:[%s3 + $0x1e8] sm:$0xff]
  %v1160 = vld [vmem:[%s3 + $0x1f0] sm:$0xff]
  %v1161 = vld [vmem:[%s3 + $0x1f8] sm:$0xff]
  %v1162 = vld [vmem:[%s3 + $0x200] sm:$0xff]
  %v1163 = vld [vmem:[%s3 + $0x208] sm:$0xff]
  %v1164 = vld [vmem:[%s3 + $0x210] sm:$0xff]
  %v1165 = vld [vmem:[%s3 + $0x218] sm:$0xff]
  %v1166 = vld [vmem:[%s3 + $0x220] sm:$0xff]
  %v1167 = vld [vmem:[%s3 + $0x228] sm:$0xff]
  %v1168 = vld [vmem:[%s3 + $0x230] sm:$0xff]
  %v1169 = vld [vmem:[%s3 + $0x238] sm:$0xff]
  %v1170 = vld [vmem:[%s3 + $0x240] sm:$0xff]
  %v1171 = vld [vmem:[%s3 + $0x248] sm:$0xff]
  %v1172 = vld [vmem:[%s3 + $0x250] sm:$0xff]
  %v1173 = vld [vmem:[%s3 + $0x258] sm:$0xff]
  %v1174 = vld [vmem:[%s3 + $0x260] sm:$0xff]
  %v1175 = vld [vmem:[%s3 + $0x268] sm:$0xff]
  %v1176 = vld [vmem:[%s3 + $0x270] sm:$0xff]
  %v1177 = vld [vmem:[%s3 + $0x278] sm:$0xff]
  %v1178 = vld [vmem:[%s3 + $0x280] sm:$0xff]
  %v1179 = vld [vmem:[%s3 + $0x288] sm:$0xff]
  %v1180 = vld [vmem:[%s3 + $0x290] sm:$0xff]
  %v1181 = vld [vmem:[%s3 + $0x298] sm:$0xff]
  %v1182 = vld [vmem:[%s3 + $0x2a0] sm:$0xff]
  %v1183 = vld [vmem:[%s3 + $0x2a8] sm:$0xff]
  %v1184 = vld [vmem:[%s3 + $0x2b0] sm:$0xff]
  %v1185 = vld [vmem:[%s3 + $0x2b8] sm:$0xff]
  %v1186 = vld [vmem:[%s3 + $0x2c0] sm:$0xff]
  %v1187 = vld [vmem:[%s3 + $0x2c8] sm:$0xff]
  %v1188 = vld [vmem:[%s3 + $0x2d0] sm:$0xff]
  %v1189 = vld [vmem:[%s3 + $0x2d8] sm:$0xff]
  %v1190 = vld [vmem:[%s3 + $0x2e0] sm:$0xff]
  %v1191 = vld [vmem:[%s3 + $0x2e8] sm:$0xff]
  %v1192 = vld [vmem:[%s3 + $0x2f0] sm:$0xff]
  %v1193 = vld [vmem:[%s3 + $0x2f8] sm:$0xff]
  %v1194 = vld [vmem:[%s3 + $0x300] sm:$0xff]
  %v1195 = vld [vmem:[%s3 + $0x308] sm:$0xff]
  %v1196 = vld [vmem:[%s3 + $0x310] sm:$0xff]
  %v1197 = vld [vmem:[%s3 + $0x318] sm:$0xff]
  %v1198 = vld [vmem:[%s3 + $0x320] sm:$0xff]
  %v1199 = vld [vmem:[%s3 + $0x328] sm:$0xff]
  %v1200 = vld [vmem:[%s3 + $0x330] sm:$0xff]
  %v1201 = vld [vmem:[%s3 + $0x338] sm:$0xff]
  %v1202 = vld [vmem:[%s3 + $0x340] sm:$0xff]
  %v1203 = vld [vmem:[%s3 + $0x348] sm:$0xff]
  %v1204 = vld [vmem:[%s3 + $0x350] sm:$0xff]
  %v1205 = vld [vmem:[%s3 + $0x358] sm:$0xff]
  %v1206 = vld [vmem:[%s3 + $0x360] sm:$0xff]
  %v1207 = vld [vmem:[%s3 + $0x368] sm:$0xff]
  %v1208 = vld [vmem:[%s3 + $0x370] sm:$0xff]
  %v1209 = vld [vmem:[%s3 + $0x378] sm:$0xff]
  %v1210 = vld [vmem:[%s3 + $0x380] sm:$0xff]
  %v1211 = vld [vmem:[%s3 + $0x388] sm:$0xff]
  %v1212 = vld [vmem:[%s3 + $0x390] sm:$0xff]
  %v1213 = vld [vmem:[%s3 + $0x398] sm:$0xff]
  %v1214 = vld [vmem:[%s3 + $0x3a0] sm:$0xff]
  %v1215 = vld [vmem:[%s3 + $0x3a8] sm:$0xff]
  %v1216 = vld [vmem:[%s3 + $0x3b0] sm:$0xff]
  %v1217 = vld [vmem:[%s3 + $0x3b8] sm:$0xff]
  %v1218 = vld [vmem:[%s3 + $0x3c0] sm:$0xff]
  %v1219 = vld [vmem:[%s3 + $0x3c8] sm:$0xff]
  %v1220 = vld [vmem:[%s3 + $0x3d0] sm:$0xff]
  %v1221 = vld [vmem:[%s3 + $0x3d8] sm:$0xff]
  %v1222 = vld [vmem:[%s3 + $0x3e0] sm:$0xff]
  %v1223 = vld [vmem:[%s3 + $0x3e8] sm:$0xff]
  %v1224 = vld [vmem:[%s3 + $0x3f0] sm:$0xff]
  %v1225 = vld [vmem:[%s3 + $0x3f8] sm:$0xff]
  %v1226 = vld [vmem:[%s4] sm:$0xf]
  %v1228 = vperm.slane %v1226, 0
  %v1229 = vperm.slane %v1226, 1
  %v1230 = vperm.slane %v1226, 2
  %v1231 = vperm.slane %v1226, 3
  %v1364 = vunpack.c.l.b16 %v1098
  %v1365 = vunpack.c.h.b16 %v1098
  %v1366 = vunpack.c.l.b16 %v1099
  %v1367 = vunpack.c.h.b16 %v1099
  %v1368 = vunpack.c.l.b16 %v1100
  %v1369 = vunpack.c.h.b16 %v1100
  %v1370 = vunpack.c.l.b16 %v1101
  %v1371 = vunpack.c.h.b16 %v1101
  %v1372 = vunpack.c.l.b16 %v1102
  %v1373 = vunpack.c.h.b16 %v1102
  %v1374 = vunpack.c.l.b16 %v1103
  %v1375 = vunpack.c.h.b16 %v1103
  %v1376 = vunpack.c.l.b16 %v1104
  %v1377 = vunpack.c.h.b16 %v1104
  %v1378 = vunpack.c.l.b16 %v1105
  %v1379 = vunpack.c.h.b16 %v1105
  %v1380 = vunpack.c.l.b16 %v1106
  %v1381 = vunpack.c.h.b16 %v1106
  %v1382 = vunpack.c.l.b16 %v1107
  %v1383 = vunpack.c.h.b16 %v1107
  %v1384 = vunpack.c.l.b16 %v1108
  %v1385 = vunpack.c.h.b16 %v1108
  %v1386 = vunpack.c.l.b16 %v1109
  %v1387 = vunpack.c.h.b16 %v1109
  %v1388 = vunpack.c.l.b16 %v1110
  %v1389 = vunpack.c.h.b16 %v1110
  %v1390 = vunpack.c.l.b16 %v1111
  %v1391 = vunpack.c.h.b16 %v1111
  %v1392 = vunpack.c.l.b16 %v1112
  %v1393 = vunpack.c.h.b16 %v1112
  %v1394 = vunpack.c.l.b16 %v1113
  %v1395 = vunpack.c.h.b16 %v1113
  %v1396 = vunpack.c.l.b16 %v1114
  %v1397 = vunpack.c.h.b16 %v1114
  %v1398 = vunpack.c.l.b16 %v1115
  %v1399 = vunpack.c.h.b16 %v1115
  %v1400 = vunpack.c.l.b16 %v1116
  %v1401 = vunpack.c.h.b16 %v1116
  %v1402 = vunpack.c.l.b16 %v1117
  %v1403 = vunpack.c.h.b16 %v1117
  %v1404 = vunpack.c.l.b16 %v1118
  %v1405 = vunpack.c.h.b16 %v1118
  %v1406 = vunpack.c.l.b16 %v1119
  %v1407 = vunpack.c.h.b16 %v1119
  %v1408 = vunpack.c.l.b16 %v1120
  %v1409 = vunpack.c.h.b16 %v1120
  %v1410 = vunpack.c.l.b16 %v1121
  %v1411 = vunpack.c.h.b16 %v1121
  %v1412 = vunpack.c.l.b16 %v1122
  %v1413 = vunpack.c.h.b16 %v1122
  %v1414 = vunpack.c.l.b16 %v1123
  %v1415 = vunpack.c.h.b16 %v1123
  %v1416 = vunpack.c.l.b16 %v1124
  %v1417 = vunpack.c.h.b16 %v1124
  %v1418 = vunpack.c.l.b16 %v1125
  %v1419 = vunpack.c.h.b16 %v1125
  %v1420 = vunpack.c.l.b16 %v1126
  %v1421 = vunpack.c.h.b16 %v1126
  %v1422 = vunpack.c.l.b16 %v1127
  %v1423 = vunpack.c.h.b16 %v1127
  %v1424 = vunpack.c.l.b16 %v1128
  %v1425 = vunpack.c.h.b16 %v1128
  %v1426 = vunpack.c.l.b16 %v1129
  %v1427 = vunpack.c.h.b16 %v1129
  %v1428 = vunpack.c.l.b16 %v1130
  %v1429 = vunpack.c.h.b16 %v1130
  %v1430 = vunpack.c.l.b16 %v1131
  %v1431 = vunpack.c.h.b16 %v1131
  %v1432 = vunpack.c.l.b16 %v1132
  %v1433 = vunpack.c.h.b16 %v1132
  %v1434 = vunpack.c.l.b16 %v1133
  %v1435 = vunpack.c.h.b16 %v1133
  %v1436 = vunpack.c.l.b16 %v1134
  %v1437 = vunpack.c.h.b16 %v1134
  %v1438 = vunpack.c.l.b16 %v1135
  %v1439 = vunpack.c.h.b16 %v1135
  %v1440 = vunpack.c.l.b16 %v1136
  %v1441 = vunpack.c.h.b16 %v1136
  %v1442 = vunpack.c.l.b16 %v1137
  %v1443 = vunpack.c.h.b16 %v1137
  %v1444 = vunpack.c.l.b16 %v1138
  %v1445 = vunpack.c.h.b16 %v1138
  %v1446 = vunpack.c.l.b16 %v1139
  %v1447 = vunpack.c.h.b16 %v1139
  %v1448 = vunpack.c.l.b16 %v1140
  %v1449 = vunpack.c.h.b16 %v1140
  %v1450 = vunpack.c.l.b16 %v1141
  %v1451 = vunpack.c.h.b16 %v1141
  %v1452 = vunpack.c.l.b16 %v1142
  %v1453 = vunpack.c.h.b16 %v1142
  %v1454 = vunpack.c.l.b16 %v1143
  %v1455 = vunpack.c.h.b16 %v1143
  %v1456 = vunpack.c.l.b16 %v1144
  %v1457 = vunpack.c.h.b16 %v1144
  %v1458 = vunpack.c.l.b16 %v1145
  %v1459 = vunpack.c.h.b16 %v1145
  %v1460 = vunpack.c.l.b16 %v1146
  %v1461 = vunpack.c.h.b16 %v1146
  %v1462 = vunpack.c.l.b16 %v1147
  %v1463 = vunpack.c.h.b16 %v1147
  %v1464 = vunpack.c.l.b16 %v1148
  %v1465 = vunpack.c.h.b16 %v1148
  %v1466 = vunpack.c.l.b16 %v1149
  %v1467 = vunpack.c.h.b16 %v1149
  %v1468 = vunpack.c.l.b16 %v1150
  %v1469 = vunpack.c.h.b16 %v1150
  %v1470 = vunpack.c.l.b16 %v1151
  %v1471 = vunpack.c.h.b16 %v1151
  %v1472 = vunpack.c.l.b16 %v1152
  %v1473 = vunpack.c.h.b16 %v1152
  %v1474 = vunpack.c.l.b16 %v1153
  %v1475 = vunpack.c.h.b16 %v1153
  %v1476 = vunpack.c.l.b16 %v1154
  %v1477 = vunpack.c.h.b16 %v1154
  %v1478 = vunpack.c.l.b16 %v1155
  %v1479 = vunpack.c.h.b16 %v1155
  %v1480 = vunpack.c.l.b16 %v1156
  %v1481 = vunpack.c.h.b16 %v1156
  %v1482 = vunpack.c.l.b16 %v1157
  %v1483 = vunpack.c.h.b16 %v1157
  %v1484 = vunpack.c.l.b16 %v1158
  %v1485 = vunpack.c.h.b16 %v1158
  %v1486 = vunpack.c.l.b16 %v1159
  %v1487 = vunpack.c.h.b16 %v1159
  %v1488 = vunpack.c.l.b16 %v1160
  %v1489 = vunpack.c.h.b16 %v1160
  %v1490 = vunpack.c.l.b16 %v1161
  %v1491 = vunpack.c.h.b16 %v1161
  %v1492 = vunpack.c.l.b16 %v1162
  %v1493 = vunpack.c.h.b16 %v1162
  %v1494 = vunpack.c.l.b16 %v1163
  %v1495 = vunpack.c.h.b16 %v1163
  %v1496 = vunpack.c.l.b16 %v1164
  %v1497 = vunpack.c.h.b16 %v1164
  %v1498 = vunpack.c.l.b16 %v1165
  %v1499 = vunpack.c.h.b16 %v1165
  %v1500 = vunpack.c.l.b16 %v1166
  %v1501 = vunpack.c.h.b16 %v1166
  %v1502 = vunpack.c.l.b16 %v1167
  %v1503 = vunpack.c.h.b16 %v1167
  %v1504 = vunpack.c.l.b16 %v1168
  %v1505 = vunpack.c.h.b16 %v1168
  %v1506 = vunpack.c.l.b16 %v1169
  %v1507 = vunpack.c.h.b16 %v1169
  %v1508 = vunpack.c.l.b16 %v1170
  %v1509 = vunpack.c.h.b16 %v1170
  %v1510 = vunpack.c.l.b16 %v1171
  %v1511 = vunpack.c.h.b16 %v1171
  %v1512 = vunpack.c.l.b16 %v1172
  %v1513 = vunpack.c.h.b16 %v1172
  %v1514 = vunpack.c.l.b16 %v1173
  %v1515 = vunpack.c.h.b16 %v1173
  %v1516 = vunpack.c.l.b16 %v1174
  %v1517 = vunpack.c.h.b16 %v1174
  %v1518 = vunpack.c.l.b16 %v1175
  %v1519 = vunpack.c.h.b16 %v1175
  %v1520 = vunpack.c.l.b16 %v1176
  %v1521 = vunpack.c.h.b16 %v1176
  %v1522 = vunpack.c.l.b16 %v1177
  %v1523 = vunpack.c.h.b16 %v1177
  %v1524 = vunpack.c.l.b16 %v1178
  %v1525 = vunpack.c.h.b16 %v1178
  %v1526 = vunpack.c.l.b16 %v1179
  %v1527 = vunpack.c.h.b16 %v1179
  %v1528 = vunpack.c.l.b16 %v1180
  %v1529 = vunpack.c.h.b16 %v1180
  %v1530 = vunpack.c.l.b16 %v1181
  %v1531 = vunpack.c.h.b16 %v1181
  %v1532 = vunpack.c.l.b16 %v1182
  %v1533 = vunpack.c.h.b16 %v1182
  %v1534 = vunpack.c.l.b16 %v1183
  %v1535 = vunpack.c.h.b16 %v1183
  %v1536 = vunpack.c.l.b16 %v1184
  %v1537 = vunpack.c.h.b16 %v1184
  %v1538 = vunpack.c.l.b16 %v1185
  %v1539 = vunpack.c.h.b16 %v1185
  %v1540 = vunpack.c.l.b16 %v1186
  %v1541 = vunpack.c.h.b16 %v1186
  %v1542 = vunpack.c.l.b16 %v1187
  %v1543 = vunpack.c.h.b16 %v1187
  %v1544 = vunpack.c.l.b16 %v1188
  %v1545 = vunpack.c.h.b16 %v1188
  %v1546 = vunpack.c.l.b16 %v1189
  %v1547 = vunpack.c.h.b16 %v1189
  %v1548 = vunpack.c.l.b16 %v1190
  %v1549 = vunpack.c.h.b16 %v1190
  %v1550 = vunpack.c.l.b16 %v1191
  %v1551 = vunpack.c.h.b16 %v1191
  %v1552 = vunpack.c.l.b16 %v1192
  %v1553 = vunpack.c.h.b16 %v1192
  %v1554 = vunpack.c.l.b16 %v1193
  %v1555 = vunpack.c.h.b16 %v1193
  %v1556 = vunpack.c.l.b16 %v1194
  %v1557 = vunpack.c.h.b16 %v1194
  %v1558 = vunpack.c.l.b16 %v1195
  %v1559 = vunpack.c.h.b16 %v1195
  %v1560 = vunpack.c.l.b16 %v1196
  %v1561 = vunpack.c.h.b16 %v1196
  %v1562 = vunpack.c.l.b16 %v1197
  %v1563 = vunpack.c.h.b16 %v1197
  %v1564 = vunpack.c.l.b16 %v1198
  %v1565 = vunpack.c.h.b16 %v1198
  %v1566 = vunpack.c.l.b16 %v1199
  %v1567 = vunpack.c.h.b16 %v1199
  %v1568 = vunpack.c.l.b16 %v1200
  %v1569 = vunpack.c.h.b16 %v1200
  %v1570 = vunpack.c.l.b16 %v1201
  %v1571 = vunpack.c.h.b16 %v1201
  %v1572 = vunpack.c.l.b16 %v1202
  %v1573 = vunpack.c.h.b16 %v1202
  %v1574 = vunpack.c.l.b16 %v1203
  %v1575 = vunpack.c.h.b16 %v1203
  %v1576 = vunpack.c.l.b16 %v1204
  %v1577 = vunpack.c.h.b16 %v1204
  %v1578 = vunpack.c.l.b16 %v1205
  %v1579 = vunpack.c.h.b16 %v1205
  %v1580 = vunpack.c.l.b16 %v1206
  %v1581 = vunpack.c.h.b16 %v1206
  %v1582 = vunpack.c.l.b16 %v1207
  %v1583 = vunpack.c.h.b16 %v1207
  %v1584 = vunpack.c.l.b16 %v1208
  %v1585 = vunpack.c.h.b16 %v1208
  %v1586 = vunpack.c.l.b16 %v1209
  %v1587 = vunpack.c.h.b16 %v1209
  %v1588 = vunpack.c.l.b16 %v1210
  %v1589 = vunpack.c.h.b16 %v1210
  %v1590 = vunpack.c.l.b16 %v1211
  %v1591 = vunpack.c.h.b16 %v1211
  %v1592 = vunpack.c.l.b16 %v1212
  %v1593 = vunpack.c.h.b16 %v1212
  %v1594 = vunpack.c.l.b16 %v1213
  %v1595 = vunpack.c.h.b16 %v1213
  %v1596 = vunpack.c.l.b16 %v1214
  %v1597 = vunpack.c.h.b16 %v1214
  %v1598 = vunpack.c.l.b16 %v1215
  %v1599 = vunpack.c.h.b16 %v1215
  %v1600 = vunpack.c.l.b16 %v1216
  %v1601 = vunpack.c.h.b16 %v1216
  %v1602 = vunpack.c.l.b16 %v1217
  %v1603 = vunpack.c.h.b16 %v1217
  %v1604 = vunpack.c.l.b16 %v1218
  %v1605 = vunpack.c.h.b16 %v1218
  %v1606 = vunpack.c.l.b16 %v1219
  %v1607 = vunpack.c.h.b16 %v1219
  %v1608 = vunpack.c.l.b16 %v1220
  %v1609 = vunpack.c.h.b16 %v1220
  %v1610 = vunpack.c.l.b16 %v1221
  %v1611 = vunpack.c.h.b16 %v1221
  %v1612 = vunpack.c.l.b16 %v1222
  %v1613 = vunpack.c.h.b16 %v1222
  %v1614 = vunpack.c.l.b16 %v1223
  %v1615 = vunpack.c.h.b16 %v1223
  %v1616 = vunpack.c.l.b16 %v1224
  %v1617 = vunpack.c.h.b16 %v1224
  %v1618 = vunpack.c.l.b16 %v1225
  %v1619 = vunpack.c.h.b16 %v1225
  %v1620 = vpack.c.b16 %v1368, %v1364
  %v1621 = vpack.c.b16 %v1369, %v1365
  %v1622 = vpack.c.b16 %v1370, %v1366
  %v1623 = vpack.c.b16 %v1371, %v1367
  %v1624 = vpack.c.b16 %v1376, %v1372
  %v1625 = vpack.c.b16 %v1377, %v1373
  %v1626 = vpack.c.b16 %v1378, %v1374
  %v1627 = vpack.c.b16 %v1379, %v1375
  %v1628 = vpack.c.b16 %v1384, %v1380
  %v1629 = vpack.c.b16 %v1385, %v1381
  %v1630 = vpack.c.b16 %v1386, %v1382
  %v1631 = vpack.c.b16 %v1387, %v1383
  %v1632 = vpack.c.b16 %v1392, %v1388
  %v1633 = vpack.c.b16 %v1393, %v1389
  %v1634 = vpack.c.b16 %v1394, %v1390
  %v1635 = vpack.c.b16 %v1395, %v1391
  %v1636 = vpack.c.b16 %v1400, %v1396
  %v1637 = vpack.c.b16 %v1401, %v1397
  %v1638 = vpack.c.b16 %v1402, %v1398
  %v1639 = vpack.c.b16 %v1403, %v1399
  %v1640 = vpack.c.b16 %v1408, %v1404
  %v1641 = vpack.c.b16 %v1409, %v1405
  %v1642 = vpack.c.b16 %v1410, %v1406
  %v1643 = vpack.c.b16 %v1411, %v1407
  %v1644 = vpack.c.b16 %v1416, %v1412
  %v1645 = vpack.c.b16 %v1417, %v1413
  %v1646 = vpack.c.b16 %v1418, %v1414
  %v1647 = vpack.c.b16 %v1419, %v1415
  %v1648 = vpack.c.b16 %v1424, %v1420
  %v1649 = vpack.c.b16 %v1425, %v1421
  %v1650 = vpack.c.b16 %v1426, %v1422
  %v1651 = vpack.c.b16 %v1427, %v1423
  %v1652 = vpack.c.b16 %v1432, %v1428
  %v1653 = vpack.c.b16 %v1433, %v1429
  %v1654 = vpack.c.b16 %v1434, %v1430
  %v1655 = vpack.c.b16 %v1435, %v1431
  %v1656 = vpack.c.b16 %v1440, %v1436
  %v1657 = vpack.c.b16 %v1441, %v1437
  %v1658 = vpack.c.b16 %v1442, %v1438
  %v1659 = vpack.c.b16 %v1443, %v1439
  %v1660 = vpack.c.b16 %v1448, %v1444
  %v1661 = vpack.c.b16 %v1449, %v1445
  %v1662 = vpack.c.b16 %v1450, %v1446
  %v1663 = vpack.c.b16 %v1451, %v1447
  %v1664 = vpack.c.b16 %v1456, %v1452
  %v1665 = vpack.c.b16 %v1457, %v1453
  %v1666 = vpack.c.b16 %v1458, %v1454
  %v1667 = vpack.c.b16 %v1459, %v1455
  %v1668 = vpack.c.b16 %v1464, %v1460
  %v1669 = vpack.c.b16 %v1465, %v1461
  %v1670 = vpack.c.b16 %v1466, %v1462
  %v1671 = vpack.c.b16 %v1467, %v1463
  %v1672 = vpack.c.b16 %v1472, %v1468
  %v1673 = vpack.c.b16 %v1473, %v1469
  %v1674 = vpack.c.b16 %v1474, %v1470
  %v1675 = vpack.c.b16 %v1475, %v1471
  %v1676 = vpack.c.b16 %v1480, %v1476
  %v1677 = vpack.c.b16 %v1481, %v1477
  %v1678 = vpack.c.b16 %v1482, %v1478
  %v1679 = vpack.c.b16 %v1483, %v1479
  %v1680 = vpack.c.b16 %v1488, %v1484
  %v1681 = vpack.c.b16 %v1489, %v1485
  %v1682 = vpack.c.b16 %v1490, %v1486
  %v1683 = vpack.c.b16 %v1491, %v1487
  %v1684 = vpack.c.b16 %v1496, %v1492
  %v1685 = vpack.c.b16 %v1497, %v1493
  %v1686 = vpack.c.b16 %v1498, %v1494
  %v1687 = vpack.c.b16 %v1499, %v1495
  %v1688 = vpack.c.b16 %v1504, %v1500
  %v1689 = vpack.c.b16 %v1505, %v1501
  %v1690 = vpack.c.b16 %v1506, %v1502
  %v1691 = vpack.c.b16 %v1507, %v1503
  %v1692 = vpack.c.b16 %v1512, %v1508
  %v1693 = vpack.c.b16 %v1513, %v1509
  %v1694 = vpack.c.b16 %v1514, %v1510
  %v1695 = vpack.c.b16 %v1515, %v1511
  %v1696 = vpack.c.b16 %v1520, %v1516
  %v1697 = vpack.c.b16 %v1521, %v1517
  %v1698 = vpack.c.b16 %v1522, %v1518
  %v1699 = vpack.c.b16 %v1523, %v1519
  %v1700 = vpack.c.b16 %v1528, %v1524
  %v1701 = vpack.c.b16 %v1529, %v1525
  %v1702 = vpack.c.b16 %v1530, %v1526
  %v1703 = vpack.c.b16 %v1531, %v1527
  %v1704 = vpack.c.b16 %v1536, %v1532
  %v1705 = vpack.c.b16 %v1537, %v1533
  %v1706 = vpack.c.b16 %v1538, %v1534
  %v1707 = vpack.c.b16 %v1539, %v1535
  %v1708 = vpack.c.b16 %v1544, %v1540
  %v1709 = vpack.c.b16 %v1545, %v1541
  %v1710 = vpack.c.b16 %v1546, %v1542
  %v1711 = vpack.c.b16 %v1547, %v1543
  %v1712 = vpack.c.b16 %v1552, %v1548
  %v1713 = vpack.c.b16 %v1553, %v1549
  %v1714 = vpack.c.b16 %v1554, %v1550
  %v1715 = vpack.c.b16 %v1555, %v1551
  %v1716 = vpack.c.b16 %v1560, %v1556
  %v1717 = vpack.c.b16 %v1561, %v1557
  %v1718 = vpack.c.b16 %v1562, %v1558
  %v1719 = vpack.c.b16 %v1563, %v1559
  %v1720 = vpack.c.b16 %v1568, %v1564
  %v1721 = vpack.c.b16 %v1569, %v1565
  %v1722 = vpack.c.b16 %v1570, %v1566
  %v1723 = vpack.c.b16 %v1571, %v1567
  %v1724 = vpack.c.b16 %v1576, %v1572
  %v1725 = vpack.c.b16 %v1577, %v1573
  %v1726 = vpack.c.b16 %v1578, %v1574
  %v1727 = vpack.c.b16 %v1579, %v1575
  %v1728 = vpack.c.b16 %v1584, %v1580
  %v1729 = vpack.c.b16 %v1585, %v1581
  %v1730 = vpack.c.b16 %v1586, %v1582
  %v1731 = vpack.c.b16 %v1587, %v1583
  %v1732 = vpack.c.b16 %v1592, %v1588
  %v1733 = vpack.c.b16 %v1593, %v1589
  %v1734 = vpack.c.b16 %v1594, %v1590
  %v1735 = vpack.c.b16 %v1595, %v1591
  %v1736 = vpack.c.b16 %v1600, %v1596
  %v1737 = vpack.c.b16 %v1601, %v1597
  %v1738 = vpack.c.b16 %v1602, %v1598
  %v1739 = vpack.c.b16 %v1603, %v1599
  %v1740 = vpack.c.b16 %v1608, %v1604
  %v1741 = vpack.c.b16 %v1609, %v1605
  %v1742 = vpack.c.b16 %v1610, %v1606
  %v1743 = vpack.c.b16 %v1611, %v1607
  %v1744 = vpack.c.b16 %v1616, %v1612
  %v1745 = vpack.c.b16 %v1617, %v1613
  %v1746 = vpack.c.b16 %v1618, %v1614
  %v1747 = vpack.c.b16 %v1619, %v1615
  %1876 = vmatpush.bf16.msra.mxu0 %v1648
  %1877 = vmatpush.bf16.msra.mxu0 %v1644
  %1878 = vmatpush.bf16.msra.mxu0 %v1640
  %1879 = vmatpush.bf16.msra.mxu0 %v1636
  %1880 = vmatpush.bf16.msra.mxu0 %v1632
  %1881 = vmatpush.bf16.msra.mxu0 %v1628
  %1882 = vmatpush.bf16.msra.mxu0 %v1624
  %1883 = vmatpush.bf16.msra.mxu0 %v1620
  %1884 = vmatmul.bf16.gmra.mxu0 %v1094
  %v1885 = vpop.f32.mrf.mxu0
  %v1886 = vadd.f32 %v1228, %v1885
  %v1887 = vpop.f32.mrf.mxu0
  %v1888 = vadd.f32 %v1228, %v1887
  %1889 = vdwg.mxu0
  %1890 = vmatpush.bf16.msra.mxu0 %v1680
  %1891 = vmatpush.bf16.msra.mxu0 %v1676
  %1892 = vmatpush.bf16.msra.mxu0 %v1672
  %1893 = vmatpush.bf16.msra.mxu0 %v1668
  %1894 = vmatpush.bf16.msra.mxu0 %v1664
  %1895 = vmatpush.bf16.msra.mxu0 %v1660
  %1896 = vmatpush.bf16.msra.mxu0 %v1656
  %1897 = vmatpush.bf16.msra.mxu0 %v1652
  %1898 = vmatmul.bf16.gmra.mxu0 %v1095
  %v1899 = vpop.f32.mrf.mxu0
  %v1900 = vadd.f32 %v1886, %v1899
  %v1901 = vpop.f32.mrf.mxu0
  %v1902 = vadd.f32 %v1888, %v1901
  %1903 = vdwg.mxu0
  %1904 = vmatpush.bf16.msra.mxu0 %v1712
  %1905 = vmatpush.bf16.msra.mxu0 %v1708
  %1906 = vmatpush.bf16.msra.mxu0 %v1704
  %1907 = vmatpush.bf16.msra.mxu0 %v1700
  %1908 = vmatpush.bf16.msra.mxu0 %v1696
  %1909 = vmatpush.bf16.msra.mxu0 %v1692
  %1910 = vmatpush.bf16.msra.mxu0 %v1688
  %1911 = vmatpush.bf16.msra.mxu0 %v1684
  %1912 = vmatmul.bf16.gmra.mxu0 %v1096
  %v1913 = vpop.f32.mrf.mxu0
  %v1914 = vadd.f32 %v1900, %v1913
  %v1915 = vpop.f32.mrf.mxu0
  %v1916 = vadd.f32 %v1902, %v1915
  %1917 = vdwg.mxu0
  %1918 = vmatpush.bf16.msra.mxu0 %v1744
  %1919 = vmatpush.bf16.msra.mxu0 %v1740
  %1920 = vmatpush.bf16.msra.mxu0 %v1736
  %1921 = vmatpush.bf16.msra.mxu0 %v1732
  %1922 = vmatpush.bf16.msra.mxu0 %v1728
  %1923 = vmatpush.bf16.msra.mxu0 %v1724
  %1924 = vmatpush.bf16.msra.mxu0 %v1720
  %1925 = vmatpush.bf16.msra.mxu0 %v1716
  %1926 = vmatmul.bf16.gmra.mxu0 %v1097
  %v1927 = vpop.f32.mrf.mxu0
  %v1928 = vadd.f32 %v1914, %v1927
  %v1929 = vpop.f32.mrf.mxu0
  %v1930 = vadd.f32 %v1916, %v1929
  %1931 = vdwg.mxu0
  %1932 = vmatpush.bf16.msra.mxu0 %v1649
  %1933 = vmatpush.bf16.msra.mxu0 %v1645
  %1934 = vmatpush.bf16.msra.mxu0 %v1641
  %1935 = vmatpush.bf16.msra.mxu0 %v1637
  %1936 = vmatpush.bf16.msra.mxu0 %v1633
  %1937 = vmatpush.bf16.msra.mxu0 %v1629
  %1938 = vmatpush.bf16.msra.mxu0 %v1625
  %1939 = vmatpush.bf16.msra.mxu0 %v1621
  %1940 = vmatmul.bf16.gmra.mxu0 %v1094
  %v1941 = vpop.f32.mrf.mxu0
  %v1942 = vadd.f32 %v1229, %v1941
  %v1943 = vpop.f32.mrf.mxu0
  %v1944 = vadd.f32 %v1229, %v1943
  %1945 = vdwg.mxu0
  %1946 = vmatpush.bf16.msra.mxu0 %v1681
  %1947 = vmatpush.bf16.msra.mxu0 %v1677
  %1948 = vmatpush.bf16.msra.mxu0 %v1673
  %1949 = vmatpush.bf16.msra.mxu0 %v1669
  %1950 = vmatpush.bf16.msra.mxu0 %v1665
  %1951 = vmatpush.bf16.msra.mxu0 %v1661
  %1952 = vmatpush.bf16.msra.mxu0 %v1657
  %1953 = vmatpush.bf16.msra.mxu0 %v1653
  %1954 = vmatmul.bf16.gmra.mxu0 %v1095
  %v1955 = vpop.f32.mrf.mxu0
  %v1956 = vadd.f32 %v1942, %v1955
  %v1957 = vpop.f32.mrf.mxu0
  %v1958 = vadd.f32 %v1944, %v1957
  %1959 = vdwg.mxu0
  %1960 = vmatpush.bf16.msra.mxu0 %v1713
  %1961 = vmatpush.bf16.msra.mxu0 %v1709
  %1962 = vmatpush.bf16.msra.mxu0 %v1705
  %1963 = vmatpush.bf16.msra.mxu0 %v1701
  %1964 = vmatpush.bf16.msra.mxu0 %v1697
  %1965 = vmatpush.bf16.msra.mxu0 %v1693
  %1966 = vmatpush.bf16.msra.mxu0 %v1689
  %1967 = vmatpush.bf16.msra.mxu0 %v1685
  %1968 = vmatmul.bf16.gmra.mxu0 %v1096
  %v1969 = vpop.f32.mrf.mxu0
  %v1970 = vadd.f32 %v1956, %v1969
  %v1971 = vpop.f32.mrf.mxu0
  %v1972 = vadd.f32 %v1958, %v1971
  %1973 = vdwg.mxu0
  %1974 = vmatpush.bf16.msra.mxu0 %v1745
  %1975 = vmatpush.bf16.msra.mxu0 %v1741
  %1976 = vmatpush.bf16.msra.mxu0 %v1737
  %1977 = vmatpush.bf16.msra.mxu0 %v1733
  %1978 = vmatpush.bf16.msra.mxu0 %v1729
  %1979 = vmatpush.bf16.msra.mxu0 %v1725
  %1980 = vmatpush.bf16.msra.mxu0 %v1721
  %1981 = vmatpush.bf16.msra.mxu0 %v1717
  %1982 = vmatmul.bf16.gmra.mxu0 %v1097
  %v1983 = vpop.f32.mrf.mxu0
  %v1984 = vadd.f32 %v1970, %v1983
  %v1985 = vpop.f32.mrf.mxu0
  %v1986 = vadd.f32 %v1972, %v1985
  %1987 = vdwg.mxu0
  %1988 = vmatpush.bf16.msra.mxu0 %v1650
  %1989 = vmatpush.bf16.msra.mxu0 %v1646
  %1990 = vmatpush.bf16.msra.mxu0 %v1642
  %1991 = vmatpush.bf16.msra.mxu0 %v1638
  %1992 = vmatpush.bf16.msra.mxu0 %v1634
  %1993 = vmatpush.bf16.msra.mxu0 %v1630
  %1994 = vmatpush.bf16.msra.mxu0 %v1626
  %1995 = vmatpush.bf16.msra.mxu0 %v1622
  %1996 = vmatmul.bf16.gmra.mxu0 %v1094
  %v1997 = vpop.f32.mrf.mxu0
  %v1998 = vadd.f32 %v1230, %v1997
  %v1999 = vpop.f32.mrf.mxu0
  %v2000 = vadd.f32 %v1230, %v1999
  %2001 = vdwg.mxu0
  %2002 = vmatpush.bf16.msra.mxu0 %v1682
  %2003 = vmatpush.bf16.msra.mxu0 %v1678
  %2004 = vmatpush.bf16.msra.mxu0 %v1674
  %2005 = vmatpush.bf16.msra.mxu0 %v1670
  %2006 = vmatpush.bf16.msra.mxu0 %v1666
  %2007 = vmatpush.bf16.msra.mxu0 %v1662
  %2008 = vmatpush.bf16.msra.mxu0 %v1658
  %2009 = vmatpush.bf16.msra.mxu0 %v1654
  %2010 = vmatmul.bf16.gmra.mxu0 %v1095
  %v2011 = vpop.f32.mrf.mxu0
  %v2012 = vadd.f32 %v1998, %v2011
  %v2013 = vpop.f32.mrf.mxu0
  %v2014 = vadd.f32 %v2000, %v2013
  %2015 = vdwg.mxu0
  %2016 = vmatpush.bf16.msra.mxu0 %v1714
  %2017 = vmatpush.bf16.msra.mxu0 %v1710
  %2018 = vmatpush.bf16.msra.mxu0 %v1706
  %2019 = vmatpush.bf16.msra.mxu0 %v1702
  %2020 = vmatpush.bf16.msra.mxu0 %v1698
  %2021 = vmatpush.bf16.msra.mxu0 %v1694
  %2022 = vmatpush.bf16.msra.mxu0 %v1690
  %2023 = vmatpush.bf16.msra.mxu0 %v1686
  %2024 = vmatmul.bf16.gmra.mxu0 %v1096
  %v2025 = vpop.f32.mrf.mxu0
  %v2026 = vadd.f32 %v2012, %v2025
  %v2027 = vpop.f32.mrf.mxu0
  %v2028 = vadd.f32 %v2014, %v2027
  %2029 = vdwg.mxu0
  %2030 = vmatpush.bf16.msra.mxu0 %v1746
  %2031 = vmatpush.bf16.msra.mxu0 %v1742
  %2032 = vmatpush.bf16.msra.mxu0 %v1738
  %2033 = vmatpush.bf16.msra.mxu0 %v1734
  %2034 = vmatpush.bf16.msra.mxu0 %v1730
  %2035 = vmatpush.bf16.msra.mxu0 %v1726
  %2036 = vmatpush.bf16.msra.mxu0 %v1722
  %2037 = vmatpush.bf16.msra.mxu0 %v1718
  %2038 = vmatmul.bf16.gmra.mxu0 %v1097
  %v2039 = vpop.f32.mrf.mxu0
  %v2040 = vadd.f32 %v2026, %v2039
  %v2041 = vpop.f32.mrf.mxu0
  %v2042 = vadd.f32 %v2028, %v2041
  %2043 = vdwg.mxu0
  %2044 = vmatpush.bf16.msra.mxu0 %v1651
  %2045 = vmatpush.bf16.msra.mxu0 %v1647
  %2046 = vmatpush.bf16.msra.mxu0 %v1643
  %2047 = vmatpush.bf16.msra.mxu0 %v1639
  %2048 = vmatpush.bf16.msra.mxu0 %v1635
  %2049 = vmatpush.bf16.msra.mxu0 %v1631
  %2050 = vmatpush.bf16.msra.mxu0 %v1627
  %2051 = vmatpush.bf16.msra.mxu0 %v1623
  %2052 = vmatmul.bf16.gmra.mxu0 %v1094
  %v2053 = vpop.f32.mrf.mxu0
  %v2054 = vadd.f32 %v1231, %v2053
  %v2055 = vpop.f32.mrf.mxu0
  %v2056 = vadd.f32 %v1231, %v2055
  %2057 = vdwg.mxu0
  %2058 = vmatpush.bf16.msra.mxu0 %v1683
  %2059 = vmatpush.bf16.msra.mxu0 %v1679
  %2060 = vmatpush.bf16.msra.mxu0 %v1675
  %2061 = vmatpush.bf16.msra.mxu0 %v1671
  %2062 = vmatpush.bf16.msra.mxu0 %v1667
  %2063 = vmatpush.bf16.msra.mxu0 %v1663
  %2064 = vmatpush.bf16.msra.mxu0 %v1659
  %2065 = vmatpush.bf16.msra.mxu0 %v1655
  %2066 = vmatmul.bf16.gmra.mxu0 %v1095
  %v2067 = vpop.f32.mrf.mxu0
  %v2068 = vadd.f32 %v2054, %v2067
  %v2069 = vpop.f32.mrf.mxu0
  %v2070 = vadd.f32 %v2056, %v2069
  %2071 = vdwg.mxu0
  %2072 = vmatpush.bf16.msra.mxu0 %v1715
  %2073 = vmatpush.bf16.msra.mxu0 %v1711
  %2074 = vmatpush.bf16.msra.mxu0 %v1707
  %2075 = vmatpush.bf16.msra.mxu0 %v1703
  %2076 = vmatpush.bf16.msra.mxu0 %v1699
  %2077 = vmatpush.bf16.msra.mxu0 %v1695
  %2078 = vmatpush.bf16.msra.mxu0 %v1691
  %2079 = vmatpush.bf16.msra.mxu0 %v1687
  %2080 = vmatmul.bf16.gmra.mxu0 %v1096
  %v2081 = vpop.f32.mrf.mxu0
  %v2082 = vadd.f32 %v2068, %v2081
  %v2083 = vpop.f32.mrf.mxu0
  %v2084 = vadd.f32 %v2070, %v2083
  %2085 = vdwg.mxu0
  %2086 = vmatpush.bf16.msra.mxu0 %v1747
  %2087 = vmatpush.bf16.msra.mxu0 %v1743
  %2088 = vmatpush.bf16.msra.mxu0 %v1739
  %2089 = vmatpush.bf16.msra.mxu0 %v1735
  %2090 = vmatpush.bf16.msra.mxu0 %v1731
  %2091 = vmatpush.bf16.msra.mxu0 %v1727
  %2092 = vmatpush.bf16.msra.mxu0 %v1723
  %2093 = vmatpush.bf16.msra.mxu0 %v1719
  %2094 = vmatmul.bf16.gmra.mxu0 %v1097
  %v2095 = vpop.f32.mrf.mxu0
  %v2096 = vadd.f32 %v2082, %v2095
  %v2097 = vpop.f32.mrf.mxu0
  %v2098 = vadd.f32 %v2084, %v2097
  %2099 = vdwg.mxu0
  %vm2100 = vcmp.gt.f32.partialorder %v1928, 0.0
  %vm2101 = vcmp.gt.f32.partialorder %v1984, 0.0
  %vm2102 = vcmp.gt.f32.partialorder %v2040, 0.0
  %vm2103 = vcmp.gt.f32.partialorder %v2096, 0.0
  %vm2104 = vcmp.gt.f32.partialorder %v1930, 0.0
  %vm2105 = vcmp.gt.f32.partialorder %v1986, 0.0
  %vm2106 = vcmp.gt.f32.partialorder %v2042, 0.0
  %vm2107 = vcmp.gt.f32.partialorder %v2098, 0.0
  %v2108 = vmul.f32 %v1928, 0.1
  %v2109 = vmul.f32 %v1984, 0.1
  %v2110 = vmul.f32 %v2040, 0.1
  %v2111 = vmul.f32 %v2096, 0.1
  %v2112 = vmul.f32 %v1930, 0.1
  %v2113 = vmul.f32 %v1986, 0.1
  %v2114 = vmul.f32 %v2042, 0.1
  %v2115 = vmul.f32 %v2098, 0.1
  %v2116 = vsel %vm2100, %v1928, %v2108
  %v2117 = vsel %vm2101, %v1984, %v2109
  %v2118 = vsel %vm2102, %v2040, %v2110
  %v2119 = vsel %vm2103, %v2096, %v2111
  %v2120 = vsel %vm2104, %v1930, %v2112
  %v2121 = vsel %vm2105, %v1986, %v2113
  %v2122 = vsel %vm2106, %v2042, %v2114
  %v2123 = vsel %vm2107, %v2098, %v2115
  %v2124 = vpack.c.bf16 %v2120, %v2116
  %v2125 = vpack.c.bf16 %v2121, %v2117
  %v2126 = vpack.c.bf16 %v2122, %v2118
  %v2127 = vpack.c.bf16 %v2123, %v2119
  %v2128 = vld [vmem:[%s5] sm:$0xf]
  %v2129 = vld [vmem:[%s5 + $0x4] sm:$0xf]
  %v2130 = vld [vmem:[%s5 + $0x8] sm:$0xf]
  %v2131 = vld [vmem:[%s5 + $0xc] sm:$0xf]
  %v2132 = vld [vmem:[%s5 + $0x10] sm:$0xf]
  %v2133 = vld [vmem:[%s5 + $0x14] sm:$0xf]
  %v2134 = vld [vmem:[%s5 + $0x18] sm:$0xf]
  %v2135 = vld [vmem:[%s5 + $0x1c] sm:$0xf]
  %v2136 = vld [vmem:[%s5 + $0x20] sm:$0xf]
  %v2137 = vld [vmem:[%s5 + $0x24] sm:$0xf]
  %v2138 = vld [vmem:[%s5 + $0x28] sm:$0xf]
  %v2139 = vld [vmem:[%s5 + $0x2c] sm:$0xf]
  %v2140 = vld [vmem:[%s5 + $0x30] sm:$0xf]
  %v2141 = vld [vmem:[%s5 + $0x34] sm:$0xf]
  %v2142 = vld [vmem:[%s5 + $0x38] sm:$0xf]
  %v2143 = vld [vmem:[%s5 + $0x3c] sm:$0xf]
  %v2144 = vld [vmem:[%s5 + $0x40] sm:$0xf]
  %v2145 = vld [vmem:[%s5 + $0x44] sm:$0xf]
  %v2146 = vld [vmem:[%s5 + $0x48] sm:$0xf]
  %v2147 = vld [vmem:[%s5 + $0x4c] sm:$0xf]
  %v2148 = vld [vmem:[%s5 + $0x50] sm:$0xf]
  %v2149 = vld [vmem:[%s5 + $0x54] sm:$0xf]
  %v2150 = vld [vmem:[%s5 + $0x58] sm:$0xf]
  %v2151 = vld [vmem:[%s5 + $0x5c] sm:$0xf]
  %v2152 = vld [vmem:[%s5 + $0x60] sm:$0xf]
  %v2153 = vld [vmem:[%s5 + $0x64] sm:$0xf]
  %v2154 = vld [vmem:[%s5 + $0x68] sm:$0xf]
  %v2155 = vld [vmem:[%s5 + $0x6c] sm:$0xf]
  %v2156 = vld [vmem:[%s5 + $0x70] sm:$0xf]
  %v2157 = vld [vmem:[%s5 + $0x74] sm:$0xf]
  %v2158 = vld [vmem:[%s5 + $0x78] sm:$0xf]
  %v2159 = vld [vmem:[%s5 + $0x7c] sm:$0xf]
  %v2160 = vld [vmem:[%s5 + $0x80] sm:$0xf]
  %v2161 = vld [vmem:[%s5 + $0x84] sm:$0xf]
  %v2162 = vld [vmem:[%s5 + $0x88] sm:$0xf]
  %v2163 = vld [vmem:[%s5 + $0x8c] sm:$0xf]
  %v2164 = vld [vmem:[%s5 + $0x90] sm:$0xf]
  %v2165 = vld [vmem:[%s5 + $0x94] sm:$0xf]
  %v2166 = vld [vmem:[%s5 + $0x98] sm:$0xf]
  %v2167 = vld [vmem:[%s5 + $0x9c] sm:$0xf]
  %v2168 = vld [vmem:[%s5 + $0xa0] sm:$0xf]
  %v2169 = vld [vmem:[%s5 + $0xa4] sm:$0xf]
  %v2170 = vld [vmem:[%s5 + $0xa8] sm:$0xf]
  %v2171 = vld [vmem:[%s5 + $0xac] sm:$0xf]
  %v2172 = vld [vmem:[%s5 + $0xb0] sm:$0xf]
  %v2173 = vld [vmem:[%s5 + $0xb4] sm:$0xf]
  %v2174 = vld [vmem:[%s5 + $0xb8] sm:$0xf]
  %v2175 = vld [vmem:[%s5 + $0xbc] sm:$0xf]
  %v2176 = vld [vmem:[%s5 + $0xc0] sm:$0xf]
  %v2177 = vld [vmem:[%s5 + $0xc4] sm:$0xf]
  %v2178 = vld [vmem:[%s5 + $0xc8] sm:$0xf]
  %v2179 = vld [vmem:[%s5 + $0xcc] sm:$0xf]
  %v2180 = vld [vmem:[%s5 + $0xd0] sm:$0xf]
  %v2181 = vld [vmem:[%s5 + $0xd4] sm:$0xf]
  %v2182 = vld [vmem:[%s5 + $0xd8] sm:$0xf]
  %v2183 = vld [vmem:[%s5 + $0xdc] sm:$0xf]
  %v2184 = vld [vmem:[%s5 + $0xe0] sm:$0xf]
  %v2185 = vld [vmem:[%s5 + $0xe4] sm:$0xf]
  %v2186 = vld [vmem:[%s5 + $0xe8] sm:$0xf]
  %v2187 = vld [vmem:[%s5 + $0xec] sm:$0xf]
  %v2188 = vld [vmem:[%s5 + $0xf0] sm:$0xf]
  %v2189 = vld [vmem:[%s5 + $0xf4] sm:$0xf]
  %v2190 = vld [vmem:[%s5 + $0xf8] sm:$0xf]
  %v2191 = vld [vmem:[%s5 + $0xfc] sm:$0xf]
  %v2192 = vld [vmem:[%s6] sm:$0x1]
  %v2194 = vperm.slane %v2192, 0
  %v2260 = vunpack.c.l.b16 %v2128
  %v2261 = vunpack.c.l.b16 %v2129
  %v2262 = vunpack.c.l.b16 %v2130
  %v2263 = vunpack.c.l.b16 %v2131
  %v2264 = vunpack.c.l.b16 %v2132
  %v2265 = vunpack.c.l.b16 %v2133
  %v2266 = vunpack.c.l.b16 %v2134
  %v2267 = vunpack.c.l.b16 %v2135
  %v2268 = vunpack.c.l.b16 %v2136
  %v2269 = vunpack.c.l.b16 %v2137
  %v2270 = vunpack.c.l.b16 %v2138
  %v2271 = vunpack.c.l.b16 %v2139
  %v2272 = vunpack.c.l.b16 %v2140
  %v2273 = vunpack.c.l.b16 %v2141
  %v2274 = vunpack.c.l.b16 %v2142
  %v2275 = vunpack.c.l.b16 %v2143
  %v2276 = vunpack.c.l.b16 %v2144
  %v2277 = vunpack.c.l.b16 %v2145
  %v2278 = vunpack.c.l.b16 %v2146
  %v2279 = vunpack.c.l.b16 %v2147
  %v2280 = vunpack.c.l.b16 %v2148
  %v2281 = vunpack.c.l.b16 %v2149
  %v2282 = vunpack.c.l.b16 %v2150
  %v2283 = vunpack.c.l.b16 %v2151
  %v2284 = vunpack.c.l.b16 %v2152
  %v2285 = vunpack.c.l.b16 %v2153
  %v2286 = vunpack.c.l.b16 %v2154
  %v2287 = vunpack.c.l.b16 %v2155
  %v2288 = vunpack.c.l.b16 %v2156
  %v2289 = vunpack.c.l.b16 %v2157
  %v2290 = vunpack.c.l.b16 %v2158
  %v2291 = vunpack.c.l.b16 %v2159
  %v2292 = vunpack.c.l.b16 %v2160
  %v2293 = vunpack.c.l.b16 %v2161
  %v2294 = vunpack.c.l.b16 %v2162
  %v2295 = vunpack.c.l.b16 %v2163
  %v2296 = vunpack.c.l.b16 %v2164
  %v2297 = vunpack.c.l.b16 %v2165
  %v2298 = vunpack.c.l.b16 %v2166
  %v2299 = vunpack.c.l.b16 %v2167
  %v2300 = vunpack.c.l.b16 %v2168
  %v2301 = vunpack.c.l.b16 %v2169
  %v2302 = vunpack.c.l.b16 %v2170
  %v2303 = vunpack.c.l.b16 %v2171
  %v2304 = vunpack.c.l.b16 %v2172
  %v2305 = vunpack.c.l.b16 %v2173
  %v2306 = vunpack.c.l.b16 %v2174
  %v2307 = vunpack.c.l.b16 %v2175
  %v2308 = vunpack.c.l.b16 %v2176
  %v2309 = vunpack.c.l.b16 %v2177
  %v2310 = vunpack.c.l.b16 %v2178
  %v2311 = vunpack.c.l.b16 %v2179
  %v2312 = vunpack.c.l.b16 %v2180
  %v2313 = vunpack.c.l.b16 %v2181
  %v2314 = vunpack.c.l.b16 %v2182
  %v2315 = vunpack.c.l.b16 %v2183
  %v2316 = vunpack.c.l.b16 %v2184
  %v2317 = vunpack.c.l.b16 %v2185
  %v2318 = vunpack.c.l.b16 %v2186
  %v2319 = vunpack.c.l.b16 %v2187
  %v2320 = vunpack.c.l.b16 %v2188
  %v2321 = vunpack.c.l.b16 %v2189
  %v2322 = vunpack.c.l.b16 %v2190
  %v2323 = vunpack.c.l.b16 %v2191
  %v2324 = vpack.c.b16 %v2261, %v2260
  %v2325 = vpack.c.b16 %v2263, %v2262
  %v2326 = vpack.c.b16 %v2265, %v2264
  %v2327 = vpack.c.b16 %v2267, %v2266
  %v2328 = vpack.c.b16 %v2269, %v2268
  %v2329 = vpack.c.b16 %v2271, %v2270
  %v2330 = vpack.c.b16 %v2273, %v2272
  %v2331 = vpack.c.b16 %v2275, %v2274
  %v2332 = vpack.c.b16 %v2277, %v2276
  %v2333 = vpack.c.b16 %v2279, %v2278
  %v2334 = vpack.c.b16 %v2281, %v2280
  %v2335 = vpack.c.b16 %v2283, %v2282
  %v2336 = vpack.c.b16 %v2285, %v2284
  %v2337 = vpack.c.b16 %v2287, %v2286
  %v2338 = vpack.c.b16 %v2289, %v2288
  %v2339 = vpack.c.b16 %v2291, %v2290
  %v2340 = vpack.c.b16 %v2293, %v2292
  %v2341 = vpack.c.b16 %v2295, %v2294
  %v2342 = vpack.c.b16 %v2297, %v2296
  %v2343 = vpack.c.b16 %v2299, %v2298
  %v2344 = vpack.c.b16 %v2301, %v2300
  %v2345 = vpack.c.b16 %v2303, %v2302
  %v2346 = vpack.c.b16 %v2305, %v2304
  %v2347 = vpack.c.b16 %v2307, %v2306
  %v2348 = vpack.c.b16 %v2309, %v2308
  %v2349 = vpack.c.b16 %v2311, %v2310
  %v2350 = vpack.c.b16 %v2313, %v2312
  %v2351 = vpack.c.b16 %v2315, %v2314
  %v2352 = vpack.c.b16 %v2317, %v2316
  %v2353 = vpack.c.b16 %v2319, %v2318
  %v2354 = vpack.c.b16 %v2321, %v2320
  %v2355 = vpack.c.b16 %v2323, %v2322
  %2388 = vmatpush.bf16.msra.mxu0 %v2331
  %2389 = vmatpush.bf16.msra.mxu0 %v2330
  %2390 = vmatpush.bf16.msra.mxu0 %v2329
  %2391 = vmatpush.bf16.msra.mxu0 %v2328
  %2392 = vmatpush.bf16.msra.mxu0 %v2327
  %2393 = vmatpush.bf16.msra.mxu0 %v2326
  %2394 = vmatpush.bf16.msra.mxu0 %v2325
  %2395 = vmatpush.bf16.msra.mxu0 %v2324
  %2396 = vmatmul.bf16.gmra.mxu0 %v2124
  %v2397 = vpop.f32.mrf.mxu0
  %v2398 = vadd.f32 %v2194, %v2397
  %v2399 = vpop.f32.mrf.mxu0
  %v2400 = vadd.f32 %v2194, %v2399
  %2401 = vdwg.mxu0
  %2402 = vmatpush.bf16.msra.mxu0 %v2339
  %2403 = vmatpush.bf16.msra.mxu0 %v2338
  %2404 = vmatpush.bf16.msra.mxu0 %v2337
  %2405 = vmatpush.bf16.msra.mxu0 %v2336
  %2406 = vmatpush.bf16.msra.mxu0 %v2335
  %2407 = vmatpush.bf16.msra.mxu0 %v2334
  %2408 = vmatpush.bf16.msra.mxu0 %v2333
  %2409 = vmatpush.bf16.msra.mxu0 %v2332
  %2410 = vmatmul.bf16.gmra.mxu0 %v2125
  %v2411 = vpop.f32.mrf.mxu0
  %v2412 = vadd.f32 %v2398, %v2411
  %v2413 = vpop.f32.mrf.mxu0
  %v2414 = vadd.f32 %v2400, %v2413
  %2415 = vdwg.mxu0
  %2416 = vmatpush.bf16.msra.mxu0 %v2347
  %2417 = vmatpush.bf16.msra.mxu0 %v2346
  %2418 = vmatpush.bf16.msra.mxu0 %v2345
  %2419 = vmatpush.bf16.msra.mxu0 %v2344
  %2420 = vmatpush.bf16.msra.mxu0 %v2343
  %2421 = vmatpush.bf16.msra.mxu0 %v2342
  %2422 = vmatpush.bf16.msra.mxu0 %v2341
  %2423 = vmatpush.bf16.msra.mxu0 %v2340
  %2424 = vmatmul.bf16.gmra.mxu0 %v2126
  %v2425 = vpop.f32.mrf.mxu0
  %v2426 = vadd.f32 %v2412, %v2425
  %v2427 = vpop.f32.mrf.mxu0
  %v2428 = vadd.f32 %v2414, %v2427
  %2429 = vdwg.mxu0
  %2430 = vmatpush.bf16.msra.mxu0 %v2355
  %2431 = vmatpush.bf16.msra.mxu0 %v2354
  %2432 = vmatpush.bf16.msra.mxu0 %v2353
  %2433 = vmatpush.bf16.msra.mxu0 %v2352
  %2434 = vmatpush.bf16.msra.mxu0 %v2351
  %2435 = vmatpush.bf16.msra.mxu0 %v2350
  %2436 = vmatpush.bf16.msra.mxu0 %v2349
  %2437 = vmatpush.bf16.msra.mxu0 %v2348
  %2438 = vmatmul.bf16.gmra.mxu0 %v2127
  %v2439 = vpop.f32.mrf.mxu0
  %v2440 = vadd.f32 %v2426, %v2439
  %v2441 = vpop.f32.mrf.mxu0
  %v2442 = vadd.f32 %v2428, %v2441
  %2443 = vdwg.mxu0
  %v2444 = vld [vmem:[%s7] sm:$0xff]
  %v2445 = vld [vmem:[%s7 + $0x8] sm:$0xff]
  %v2446 = vld [vmem:[%s7 + $0x10] sm:$0xff]
  %v2447 = vld [vmem:[%s7 + $0x18] sm:$0xff]
  %v2448 = vld [vmem:[%s7 + $0x20] sm:$0xff]
  %v2449 = vld [vmem:[%s7 + $0x28] sm:$0xff]
  %v2450 = vld [vmem:[%s7 + $0x30] sm:$0xff]
  %v2451 = vld [vmem:[%s7 + $0x38] sm:$0xff]
  %v2452 = vld [vmem:[%s7 + $0x40] sm:$0xff]
  %v2453 = vld [vmem:[%s7 + $0x48] sm:$0xff]
  %v2454 = vld [vmem:[%s7 + $0x50] sm:$0xff]
  %v2455 = vld [vmem:[%s7 + $0x58] sm:$0xff]
  %v2456 = vld [vmem:[%s7 + $0x60] sm:$0xff]
  %v2457 = vld [vmem:[%s7 + $0x68] sm:$0xff]
  %v2458 = vld [vmem:[%s7 + $0x70] sm:$0xff]
  %v2459 = vld [vmem:[%s7 + $0x78] sm:$0xff]
  %v2460 = vld [vmem:[%s7 + $0x80] sm:$0xff]
  %v2461 = vld [vmem:[%s7 + $0x88] sm:$0xff]
  %v2462 = vld [vmem:[%s7 + $0x90] sm:$0xff]
  %v2463 = vld [vmem:[%s7 + $0x98] sm:$0xff]
  %v2464 = vld [vmem:[%s7 + $0xa0] sm:$0xff]
  %v2465 = vld [vmem:[%s7 + $0xa8] sm:$0xff]
  %v2466 = vld [vmem:[%s7 + $0xb0] sm:$0xff]
  %v2467 = vld [vmem:[%s7 + $0xb8] sm:$0xff]
  %v2468 = vld [vmem:[%s7 + $0xc0] sm:$0xff]
  %v2469 = vld [vmem:[%s7 + $0xc8] sm:$0xff]
  %v2470 = vld [vmem:[%s7 + $0xd0] sm:$0xff]
  %v2471 = vld [vmem:[%s7 + $0xd8] sm:$0xff]
  %v2472 = vld [vmem:[%s7 + $0xe0] sm:$0xff]
  %v2473 = vld [vmem:[%s7 + $0xe8] sm:$0xff]
  %v2474 = vld [vmem:[%s7 + $0xf0] sm:$0xff]
  %v2475 = vld [vmem:[%s7 + $0xf8] sm:$0xff]
  %v2476 = vld [vmem:[%s7 + $0x100] sm:$0xff]
  %v2477 = vld [vmem:[%s7 + $0x108] sm:$0xff]
  %v2478 = vld [vmem:[%s7 + $0x110] sm:$0xff]
  %v2479 = vld [vmem:[%s7 + $0x118] sm:$0xff]
  %v2480 = vld [vmem:[%s7 + $0x120] sm:$0xff]
  %v2481 = vld [vmem:[%s7 + $0x128] sm:$0xff]
  %v2482 = vld [vmem:[%s7 + $0x130] sm:$0xff]
  %v2483 = vld [vmem:[%s7 + $0x138] sm:$0xff]
  %v2484 = vld [vmem:[%s7 + $0x140] sm:$0xff]
  %v2485 = vld [vmem:[%s7 + $0x148] sm:$0xff]
  %v2486 = vld [vmem:[%s7 + $0x150] sm:$0xff]
  %v2487 = vld [vmem:[%s7 + $0x158] sm:$0xff]
  %v2488 = vld [vmem:[%s7 + $0x160] sm:$0xff]
  %v2489 = vld [vmem:[%s7 + $0x168] sm:$0xff]
  %v2490 = vld [vmem:[%s7 + $0x170] sm:$0xff]
  %v2491 = vld [vmem:[%s7 + $0x178] sm:$0xff]
  %v2492 = vld [vmem:[%s7 + $0x180] sm:$0xff]
  %v2493 = vld [vmem:[%s7 + $0x188] sm:$0xff]
  %v2494 = vld [vmem:[%s7 + $0x190] sm:$0xff]
  %v2495 = vld [vmem:[%s7 + $0x198] sm:$0xff]
  %v2496 = vld [vmem:[%s7 + $0x1a0] sm:$0xff]
  %v2497 = vld [vmem:[%s7 + $0x1a8] sm:$0xff]
  %v2498 = vld [vmem:[%s7 + $0x1b0] sm:$0xff]
  %v2499 = vld [vmem:[%s7 + $0x1b8] sm:$0xff]
  %v2500 = vld [vmem:[%s7 + $0x1c0] sm:$0xff]
  %v2501 = vld [vmem:[%s7 + $0x1c8] sm:$0xff]
  %v2502 = vld [vmem:[%s7 + $0x1d0] sm:$0xff]
  %v2503 = vld [vmem:[%s7 + $0x1d8] sm:$0xff]
  %v2504 = vld [vmem:[%s7 + $0x1e0] sm:$0xff]
  %v2505 = vld [vmem:[%s7 + $0x1e8] sm:$0xff]
  %v2506 = vld [vmem:[%s7 + $0x1f0] sm:$0xff]
  %v2507 = vld [vmem:[%s7 + $0x1f8] sm:$0xff]
  %v2508 = vld [vmem:[%s7 + $0x200] sm:$0xff]
  %v2509 = vld [vmem:[%s7 + $0x208] sm:$0xff]
  %v2510 = vld [vmem:[%s7 + $0x210] sm:$0xff]
  %v2511 = vld [vmem:[%s7 + $0x218] sm:$0xff]
  %v2512 = vld [vmem:[%s7 + $0x220] sm:$0xff]
  %v2513 = vld [vmem:[%s7 + $0x228] sm:$0xff]
  %v2514 = vld [vmem:[%s7 + $0x230] sm:$0xff]
  %v2515 = vld [vmem:[%s7 + $0x238] sm:$0xff]
  %v2516 = vld [vmem:[%s7 + $0x240] sm:$0xff]
  %v2517 = vld [vmem:[%s7 + $0x248] sm:$0xff]
  %v2518 = vld [vmem:[%s7 + $0x250] sm:$0xff]
  %v2519 = vld [vmem:[%s7 + $0x258] sm:$0xff]
  %v2520 = vld [vmem:[%s7 + $0x260] sm:$0xff]
  %v2521 = vld [vmem:[%s7 + $0x268] sm:$0xff]
  %v2522 = vld [vmem:[%s7 + $0x270] sm:$0xff]
  %v2523 = vld [vmem:[%s7 + $0x278] sm:$0xff]
  %v2524 = vld [vmem:[%s7 + $0x280] sm:$0xff]
  %v2525 = vld [vmem:[%s7 + $0x288] sm:$0xff]
  %v2526 = vld [vmem:[%s7 + $0x290] sm:$0xff]
  %v2527 = vld [vmem:[%s7 + $0x298] sm:$0xff]
  %v2528 = vld [vmem:[%s7 + $0x2a0] sm:$0xff]
  %v2529 = vld [vmem:[%s7 + $0x2a8] sm:$0xff]
  %v2530 = vld [vmem:[%s7 + $0x2b0] sm:$0xff]
  %v2531 = vld [vmem:[%s7 + $0x2b8] sm:$0xff]
  %v2532 = vld [vmem:[%s7 + $0x2c0] sm:$0xff]
  %v2533 = vld [vmem:[%s7 + $0x2c8] sm:$0xff]
  %v2534 = vld [vmem:[%s7 + $0x2d0] sm:$0xff]
  %v2535 = vld [vmem:[%s7 + $0x2d8] sm:$0xff]
  %v2536 = vld [vmem:[%s7 + $0x2e0] sm:$0xff]
  %v2537 = vld [vmem:[%s7 + $0x2e8] sm:$0xff]
  %v2538 = vld [vmem:[%s7 + $0x2f0] sm:$0xff]
  %v2539 = vld [vmem:[%s7 + $0x2f8] sm:$0xff]
  %v2540 = vld [vmem:[%s7 + $0x300] sm:$0xff]
  %v2541 = vld [vmem:[%s7 + $0x308] sm:$0xff]
  %v2542 = vld [vmem:[%s7 + $0x310] sm:$0xff]
  %v2543 = vld [vmem:[%s7 + $0x318] sm:$0xff]
  %v2544 = vld [vmem:[%s7 + $0x320] sm:$0xff]
  %v2545 = vld [vmem:[%s7 + $0x328] sm:$0xff]
  %v2546 = vld [vmem:[%s7 + $0x330] sm:$0xff]
  %v2547 = vld [vmem:[%s7 + $0x338] sm:$0xff]
  %v2548 = vld [vmem:[%s7 + $0x340] sm:$0xff]
  %v2549 = vld [vmem:[%s7 + $0x348] sm:$0xff]
  %v2550 = vld [vmem:[%s7 + $0x350] sm:$0xff]
  %v2551 = vld [vmem:[%s7 + $0x358] sm:$0xff]
  %v2552 = vld [vmem:[%s7 + $0x360] sm:$0xff]
  %v2553 = vld [vmem:[%s7 + $0x368] sm:$0xff]
  %v2554 = vld [vmem:[%s7 + $0x370] sm:$0xff]
  %v2555 = vld [vmem:[%s7 + $0x378] sm:$0xff]
  %v2556 = vld [vmem:[%s7 + $0x380] sm:$0xff]
  %v2557 = vld [vmem:[%s7 + $0x388] sm:$0xff]
  %v2558 = vld [vmem:[%s7 + $0x390] sm:$0xff]
  %v2559 = vld [vmem:[%s7 + $0x398] sm:$0xff]
  %v2560 = vld [vmem:[%s7 + $0x3a0] sm:$0xff]
  %v2561 = vld [vmem:[%s7 + $0x3a8] sm:$0xff]
  %v2562 = vld [vmem:[%s7 + $0x3b0] sm:$0xff]
  %v2563 = vld [vmem:[%s7 + $0x3b8] sm:$0xff]
  %v2564 = vld [vmem:[%s7 + $0x3c0] sm:$0xff]
  %v2565 = vld [vmem:[%s7 + $0x3c8] sm:$0xff]
  %v2566 = vld [vmem:[%s7 + $0x3d0] sm:$0xff]
  %v2567 = vld [vmem:[%s7 + $0x3d8] sm:$0xff]
  %v2568 = vld [vmem:[%s7 + $0x3e0] sm:$0xff]
  %v2569 = vld [vmem:[%s7 + $0x3e8] sm:$0xff]
  %v2570 = vld [vmem:[%s7 + $0x3f0] sm:$0xff]
  %v2571 = vld [vmem:[%s7 + $0x3f8] sm:$0xff]
  %v2572 = vld [vmem:[%s8] sm:$0xf]
  %v2574 = vperm.slane %v2572, 0
  %v2575 = vperm.slane %v2572, 1
  %v2576 = vperm.slane %v2572, 2
  %v2577 = vperm.slane %v2572, 3
  %v2710 = vunpack.c.l.b16 %v2444
  %v2711 = vunpack.c.h.b16 %v2444
  %v2712 = vunpack.c.l.b16 %v2445
  %v2713 = vunpack.c.h.b16 %v2445
  %v2714 = vunpack.c.l.b16 %v2446
  %v2715 = vunpack.c.h.b16 %v2446
  %v2716 = vunpack.c.l.b16 %v2447
  %v2717 = vunpack.c.h.b16 %v2447
  %v2718 = vunpack.c.l.b16 %v2448
  %v2719 = vunpack.c.h.b16 %v2448
  %v2720 = vunpack.c.l.b16 %v2449
  %v2721 = vunpack.c.h.b16 %v2449
  %v2722 = vunpack.c.l.b16 %v2450
  %v2723 = vunpack.c.h.b16 %v2450
  %v2724 = vunpack.c.l.b16 %v2451
  %v2725 = vunpack.c.h.b16 %v2451
  %v2726 = vunpack.c.l.b16 %v2452
  %v2727 = vunpack.c.h.b16 %v2452
  %v2728 = vunpack.c.l.b16 %v2453
  %v2729 = vunpack.c.h.b16 %v2453
  %v2730 = vunpack.c.l.b16 %v2454
  %v2731 = vunpack.c.h.b16 %v2454
  %v2732 = vunpack.c.l.b16 %v2455
  %v2733 = vunpack.c.h.b16 %v2455
  %v2734 = vunpack.c.l.b16 %v2456
  %v2735 = vunpack.c.h.b16 %v2456
  %v2736 = vunpack.c.l.b16 %v2457
  %v2737 = vunpack.c.h.b16 %v2457
  %v2738 = vunpack.c.l.b16 %v2458
  %v2739 = vunpack.c.h.b16 %v2458
  %v2740 = vunpack.c.l.b16 %v2459
  %v2741 = vunpack.c.h.b16 %v2459
  %v2742 = vunpack.c.l.b16 %v2460
  %v2743 = vunpack.c.h.b16 %v2460
  %v2744 = vunpack.c.l.b16 %v2461
  %v2745 = vunpack.c.h.b16 %v2461
  %v2746 = vunpack.c.l.b16 %v2462
  %v2747 = vunpack.c.h.b16 %v2462
  %v2748 = vunpack.c.l.b16 %v2463
  %v2749 = vunpack.c.h.b16 %v2463
  %v2750 = vunpack.c.l.b16 %v2464
  %v2751 = vunpack.c.h.b16 %v2464
  %v2752 = vunpack.c.l.b16 %v2465
  %v2753 = vunpack.c.h.b16 %v2465
  %v2754 = vunpack.c.l.b16 %v2466
  %v2755 = vunpack.c.h.b16 %v2466
  %v2756 = vunpack.c.l.b16 %v2467
  %v2757 = vunpack.c.h.b16 %v2467
  %v2758 = vunpack.c.l.b16 %v2468
  %v2759 = vunpack.c.h.b16 %v2468
  %v2760 = vunpack.c.l.b16 %v2469
  %v2761 = vunpack.c.h.b16 %v2469
  %v2762 = vunpack.c.l.b16 %v2470
  %v2763 = vunpack.c.h.b16 %v2470
  %v2764 = vunpack.c.l.b16 %v2471
  %v2765 = vunpack.c.h.b16 %v2471
  %v2766 = vunpack.c.l.b16 %v2472
  %v2767 = vunpack.c.h.b16 %v2472
  %v2768 = vunpack.c.l.b16 %v2473
  %v2769 = vunpack.c.h.b16 %v2473
  %v2770 = vunpack.c.l.b16 %v2474
  %v2771 = vunpack.c.h.b16 %v2474
  %v2772 = vunpack.c.l.b16 %v2475
  %v2773 = vunpack.c.h.b16 %v2475
  %v2774 = vunpack.c.l.b16 %v2476
  %v2775 = vunpack.c.h.b16 %v2476
  %v2776 = vunpack.c.l.b16 %v2477
  %v2777 = vunpack.c.h.b16 %v2477
  %v2778 = vunpack.c.l.b16 %v2478
  %v2779 = vunpack.c.h.b16 %v2478
  %v2780 = vunpack.c.l.b16 %v2479
  %v2781 = vunpack.c.h.b16 %v2479
  %v2782 = vunpack.c.l.b16 %v2480
  %v2783 = vunpack.c.h.b16 %v2480
  %v2784 = vunpack.c.l.b16 %v2481
  %v2785 = vunpack.c.h.b16 %v2481
  %v2786 = vunpack.c.l.b16 %v2482
  %v2787 = vunpack.c.h.b16 %v2482
  %v2788 = vunpack.c.l.b16 %v2483
  %v2789 = vunpack.c.h.b16 %v2483
  %v2790 = vunpack.c.l.b16 %v2484
  %v2791 = vunpack.c.h.b16 %v2484
  %v2792 = vunpack.c.l.b16 %v2485
  %v2793 = vunpack.c.h.b16 %v2485
  %v2794 = vunpack.c.l.b16 %v2486
  %v2795 = vunpack.c.h.b16 %v2486
  %v2796 = vunpack.c.l.b16 %v2487
  %v2797 = vunpack.c.h.b16 %v2487
  %v2798 = vunpack.c.l.b16 %v2488
  %v2799 = vunpack.c.h.b16 %v2488
  %v2800 = vunpack.c.l.b16 %v2489
  %v2801 = vunpack.c.h.b16 %v2489
  %v2802 = vunpack.c.l.b16 %v2490
  %v2803 = vunpack.c.h.b16 %v2490
  %v2804 = vunpack.c.l.b16 %v2491
  %v2805 = vunpack.c.h.b16 %v2491
  %v2806 = vunpack.c.l.b16 %v2492
  %v2807 = vunpack.c.h.b16 %v2492
  %v2808 = vunpack.c.l.b16 %v2493
  %v2809 = vunpack.c.h.b16 %v2493
  %v2810 = vunpack.c.l.b16 %v2494
  %v2811 = vunpack.c.h.b16 %v2494
  %v2812 = vunpack.c.l.b16 %v2495
  %v2813 = vunpack.c.h.b16 %v2495
  %v2814 = vunpack.c.l.b16 %v2496
  %v2815 = vunpack.c.h.b16 %v2496
  %v2816 = vunpack.c.l.b16 %v2497
  %v2817 = vunpack.c.h.b16 %v2497
  %v2818 = vunpack.c.l.b16 %v2498
  %v2819 = vunpack.c.h.b16 %v2498
  %v2820 = vunpack.c.l.b16 %v2499
  %v2821 = vunpack.c.h.b16 %v2499
  %v2822 = vunpack.c.l.b16 %v2500
  %v2823 = vunpack.c.h.b16 %v2500
  %v2824 = vunpack.c.l.b16 %v2501
  %v2825 = vunpack.c.h.b16 %v2501
  %v2826 = vunpack.c.l.b16 %v2502
  %v2827 = vunpack.c.h.b16 %v2502
  %v2828 = vunpack.c.l.b16 %v2503
  %v2829 = vunpack.c.h.b16 %v2503
  %v2830 = vunpack.c.l.b16 %v2504
  %v2831 = vunpack.c.h.b16 %v2504
  %v2832 = vunpack.c.l.b16 %v2505
  %v2833 = vunpack.c.h.b16 %v2505
  %v2834 = vunpack.c.l.b16 %v2506
  %v2835 = vunpack.c.h.b16 %v2506
  %v2836 = vunpack.c.l.b16 %v2507
  %v2837 = vunpack.c.h.b16 %v2507
  %v2838 = vunpack.c.l.b16 %v2508
  %v2839 = vunpack.c.h.b16 %v2508
  %v2840 = vunpack.c.l.b16 %v2509
  %v2841 = vunpack.c.h.b16 %v2509
  %v2842 = vunpack.c.l.b16 %v2510
  %v2843 = vunpack.c.h.b16 %v2510
  %v2844 = vunpack.c.l.b16 %v2511
  %v2845 = vunpack.c.h.b16 %v2511
  %v2846 = vunpack.c.l.b16 %v2512
  %v2847 = vunpack.c.h.b16 %v2512
  %v2848 = vunpack.c.l.b16 %v2513
  %v2849 = vunpack.c.h.b16 %v2513
  %v2850 = vunpack.c.l.b16 %v2514
  %v2851 = vunpack.c.h.b16 %v2514
  %v2852 = vunpack.c.l.b16 %v2515
  %v2853 = vunpack.c.h.b16 %v2515
  %v2854 = vunpack.c.l.b16 %v2516
  %v2855 = vunpack.c.h.b16 %v2516
  %v2856 = vunpack.c.l.b16 %v2517
  %v2857 = vunpack.c.h.b16 %v2517
  %v2858 = vunpack.c.l.b16 %v2518
  %v2859 = vunpack.c.h.b16 %v2518
  %v2860 = vunpack.c.l.b16 %v2519
  %v2861 = vunpack.c.h.b16 %v2519
  %v2862 = vunpack.c.l.b16 %v2520
  %v2863 = vunpack.c.h.b16 %v2520
  %v2864 = vunpack.c.l.b16 %v2521
  %v2865 = vunpack.c.h.b16 %v2521
  %v2866 = vunpack.c.l.b16 %v2522
  %v2867 = vunpack.c.h.b16 %v2522
  %v2868 = vunpack.c.l.b16 %v2523
  %v2869 = vunpack.c.h.b16 %v2523
  %v2870 = vunpack.c.l.b16 %v2524
  %v2871 = vunpack.c.h.b16 %v2524
  %v2872 = vunpack.c.l.b16 %v2525
  %v2873 = vunpack.c.h.b16 %v2525
  %v2874 = vunpack.c.l.b16 %v2526
  %v2875 = vunpack.c.h.b16 %v2526
  %v2876 = vunpack.c.l.b16 %v2527
  %v2877 = vunpack.c.h.b16 %v2527
  %v2878 = vunpack.c.l.b16 %v2528
  %v2879 = vunpack.c.h.b16 %v2528
  %v2880 = vunpack.c.l.b16 %v2529
  %v2881 = vunpack.c.h.b16 %v2529
  %v2882 = vunpack.c.l.b16 %v2530
  %v2883 = vunpack.c.h.b16 %v2530
  %v2884 = vunpack.c.l.b16 %v2531
  %v2885 = vunpack.c.h.b16 %v2531
  %v2886 = vunpack.c.l.b16 %v2532
  %v2887 = vunpack.c.h.b16 %v2532
  %v2888 = vunpack.c.l.b16 %v2533
  %v2889 = vunpack.c.h.b16 %v2533
  %v2890 = vunpack.c.l.b16 %v2534
  %v2891 = vunpack.c.h.b16 %v2534
  %v2892 = vunpack.c.l.b16 %v2535
  %v2893 = vunpack.c.h.b16 %v2535
  %v2894 = vunpack.c.l.b16 %v2536
  %v2895 = vunpack.c.h.b16 %v2536
  %v2896 = vunpack.c.l.b16 %v2537
  %v2897 = vunpack.c.h.b16 %v2537
  %v2898 = vunpack.c.l.b16 %v2538
  %v2899 = vunpack.c.h.b16 %v2538
  %v2900 = vunpack.c.l.b16 %v2539
  %v2901 = vunpack.c.h.b16 %v2539
  %v2902 = vunpack.c.l.b16 %v2540
  %v2903 = vunpack.c.h.b16 %v2540
  %v2904 = vunpack.c.l.b16 %v2541
  %v2905 = vunpack.c.h.b16 %v2541
  %v2906 = vunpack.c.l.b16 %v2542
  %v2907 = vunpack.c.h.b16 %v2542
  %v2908 = vunpack.c.l.b16 %v2543
  %v2909 = vunpack.c.h.b16 %v2543
  %v2910 = vunpack.c.l.b16 %v2544
  %v2911 = vunpack.c.h.b16 %v2544
  %v2912 = vunpack.c.l.b16 %v2545
  %v2913 = vunpack.c.h.b16 %v2545
  %v2914 = vunpack.c.l.b16 %v2546
  %v2915 = vunpack.c.h.b16 %v2546
  %v2916 = vunpack.c.l.b16 %v2547
  %v2917 = vunpack.c.h.b16 %v2547
  %v2918 = vunpack.c.l.b16 %v2548
  %v2919 = vunpack.c.h.b16 %v2548
  %v2920 = vunpack.c.l.b16 %v2549
  %v2921 = vunpack.c.h.b16 %v2549
  %v2922 = vunpack.c.l.b16 %v2550
  %v2923 = vunpack.c.h.b16 %v2550
  %v2924 = vunpack.c.l.b16 %v2551
  %v2925 = vunpack.c.h.b16 %v2551
  %v2926 = vunpack.c.l.b16 %v2552
  %v2927 = vunpack.c.h.b16 %v2552
  %v2928 = vunpack.c.l.b16 %v2553
  %v2929 = vunpack.c.h.b16 %v2553
  %v2930 = vunpack.c.l.b16 %v2554
  %v2931 = vunpack.c.h.b16 %v2554
  %v2932 = vunpack.c.l.b16 %v2555
  %v2933 = vunpack.c.h.b16 %v2555
  %v2934 = vunpack.c.l.b16 %v2556
  %v2935 = vunpack.c.h.b16 %v2556
  %v2936 = vunpack.c.l.b16 %v2557
  %v2937 = vunpack.c.h.b16 %v2557
  %v2938 = vunpack.c.l.b16 %v2558
  %v2939 = vunpack.c.h.b16 %v2558
  %v2940 = vunpack.c.l.b16 %v2559
  %v2941 = vunpack.c.h.b16 %v2559
  %v2942 = vunpack.c.l.b16 %v2560
  %v2943 = vunpack.c.h.b16 %v2560
  %v2944 = vunpack.c.l.b16 %v2561
  %v2945 = vunpack.c.h.b16 %v2561
  %v2946 = vunpack.c.l.b16 %v2562
  %v2947 = vunpack.c.h.b16 %v2562
  %v2948 = vunpack.c.l.b16 %v2563
  %v2949 = vunpack.c.h.b16 %v2563
  %v2950 = vunpack.c.l.b16 %v2564
  %v2951 = vunpack.c.h.b16 %v2564
  %v2952 = vunpack.c.l.b16 %v2565
  %v2953 = vunpack.c.h.b16 %v2565
  %v2954 = vunpack.c.l.b16 %v2566
  %v2955 = vunpack.c.h.b16 %v2566
  %v2956 = vunpack.c.l.b16 %v2567
  %v2957 = vunpack.c.h.b16 %v2567
  %v2958 = vunpack.c.l.b16 %v2568
  %v2959 = vunpack.c.h.b16 %v2568
  %v2960 = vunpack.c.l.b16 %v2569
  %v2961 = vunpack.c.h.b16 %v2569
  %v2962 = vunpack.c.l.b16 %v2570
  %v2963 = vunpack.c.h.b16 %v2570
  %v2964 = vunpack.c.l.b16 %v2571
  %v2965 = vunpack.c.h.b16 %v2571
  %v2966 = vpack.c.b16 %v2714, %v2710
  %v2967 = vpack.c.b16 %v2715, %v2711
  %v2968 = vpack.c.b16 %v2716, %v2712
  %v2969 = vpack.c.b16 %v2717, %v2713
  %v2970 = vpack.c.b16 %v2722, %v2718
  %v2971 = vpack.c.b16 %v2723, %v2719
  %v2972 = vpack.c.b16 %v2724, %v2720
  %v2973 = vpack.c.b16 %v2725, %v2721
  %v2974 = vpack.c.b16 %v2730, %v2726
  %v2975 = vpack.c.b16 %v2731, %v2727
  %v2976 = vpack.c.b16 %v2732, %v2728
  %v2977 = vpack.c.b16 %v2733, %v2729
  %v2978 = vpack.c.b16 %v2738, %v2734
  %v2979 = vpack.c.b16 %v2739, %v2735
  %v2980 = vpack.c.b16 %v2740, %v2736
  %v2981 = vpack.c.b16 %v2741, %v2737
  %v2982 = vpack.c.b16 %v2746, %v2742
  %v2983 = vpack.c.b16 %v2747, %v2743
  %v2984 = vpack.c.b16 %v2748, %v2744
  %v2985 = vpack.c.b16 %v2749, %v2745
  %v2986 = vpack.c.b16 %v2754, %v2750
  %v2987 = vpack.c.b16 %v2755, %v2751
  %v2988 = vpack.c.b16 %v2756, %v2752
  %v2989 = vpack.c.b16 %v2757, %v2753
  %v2990 = vpack.c.b16 %v2762, %v2758
  %v2991 = vpack.c.b16 %v2763, %v2759
  %v2992 = vpack.c.b16 %v2764, %v2760
  %v2993 = vpack.c.b16 %v2765, %v2761
  %v2994 = vpack.c.b16 %v2770, %v2766
  %v2995 = vpack.c.b16 %v2771, %v2767
  %v2996 = vpack.c.b16 %v2772, %v2768
  %v2997 = vpack.c.b16 %v2773, %v2769
  %v2998 = vpack.c.b16 %v2778, %v2774
  %v2999 = vpack.c.b16 %v2779, %v2775
  %v3000 = vpack.c.b16 %v2780, %v2776
  %v3001 = vpack.c.b16 %v2781, %v2777
  %v3002 = vpack.c.b16 %v2786, %v2782
  %v3003 = vpack.c.b16 %v2787, %v2783
  %v3004 = vpack.c.b16 %v2788, %v2784
  %v3005 = vpack.c.b16 %v2789, %v2785
  %v3006 = vpack.c.b16 %v2794, %v2790
  %v3007 = vpack.c.b16 %v2795, %v2791
  %v3008 = vpack.c.b16 %v2796, %v2792
  %v3009 = vpack.c.b16 %v2797, %v2793
  %v3010 = vpack.c.b16 %v2802, %v2798
  %v3011 = vpack.c.b16 %v2803, %v2799
  %v3012 = vpack.c.b16 %v2804, %v2800
  %v3013 = vpack.c.b16 %v2805, %v2801
  %v3014 = vpack.c.b16 %v2810, %v2806
  %v3015 = vpack.c.b16 %v2811, %v2807
  %v3016 = vpack.c.b16 %v2812, %v2808
  %v3017 = vpack.c.b16 %v2813, %v2809
  %v3018 = vpack.c.b16 %v2818, %v2814
  %v3019 = vpack.c.b16 %v2819, %v2815
  %v3020 = vpack.c.b16 %v2820, %v2816
  %v3021 = vpack.c.b16 %v2821, %v2817
  %v3022 = vpack.c.b16 %v2826, %v2822
  %v3023 = vpack.c.b16 %v2827, %v2823
  %v3024 = vpack.c.b16 %v2828, %v2824
  %v3025 = vpack.c.b16 %v2829, %v2825
  %v3026 = vpack.c.b16 %v2834, %v2830
  %v3027 = vpack.c.b16 %v2835, %v2831
  %v3028 = vpack.c.b16 %v2836, %v2832
  %v3029 = vpack.c.b16 %v2837, %v2833
  %v3030 = vpack.c.b16 %v2842, %v2838
  %v3031 = vpack.c.b16 %v2843, %v2839
  %v3032 = vpack.c.b16 %v2844, %v2840
  %v3033 = vpack.c.b16 %v2845, %v2841
  %v3034 = vpack.c.b16 %v2850, %v2846
  %v3035 = vpack.c.b16 %v2851, %v2847
  %v3036 = vpack.c.b16 %v2852, %v2848
  %v3037 = vpack.c.b16 %v2853, %v2849
  %v3038 = vpack.c.b16 %v2858, %v2854
  %v3039 = vpack.c.b16 %v2859, %v2855
  %v3040 = vpack.c.b16 %v2860, %v2856
  %v3041 = vpack.c.b16 %v2861, %v2857
  %v3042 = vpack.c.b16 %v2866, %v2862
  %v3043 = vpack.c.b16 %v2867, %v2863
  %v3044 = vpack.c.b16 %v2868, %v2864
  %v3045 = vpack.c.b16 %v2869, %v2865
  %v3046 = vpack.c.b16 %v2874, %v2870
  %v3047 = vpack.c.b16 %v2875, %v2871
  %v3048 = vpack.c.b16 %v2876, %v2872
  %v3049 = vpack.c.b16 %v2877, %v2873
  %v3050 = vpack.c.b16 %v2882, %v2878
  %v3051 = vpack.c.b16 %v2883, %v2879
  %v3052 = vpack.c.b16 %v2884, %v2880
  %v3053 = vpack.c.b16 %v2885, %v2881
  %v3054 = vpack.c.b16 %v2890, %v2886
  %v3055 = vpack.c.b16 %v2891, %v2887
  %v3056 = vpack.c.b16 %v2892, %v2888
  %v3057 = vpack.c.b16 %v2893, %v2889
  %v3058 = vpack.c.b16 %v2898, %v2894
  %v3059 = vpack.c.b16 %v2899, %v2895
  %v3060 = vpack.c.b16 %v2900, %v2896
  %v3061 = vpack.c.b16 %v2901, %v2897
  %v3062 = vpack.c.b16 %v2906, %v2902
  %v3063 = vpack.c.b16 %v2907, %v2903
  %v3064 = vpack.c.b16 %v2908, %v2904
  %v3065 = vpack.c.b16 %v2909, %v2905
  %v3066 = vpack.c.b16 %v2914, %v2910
  %v3067 = vpack.c.b16 %v2915, %v2911
  %v3068 = vpack.c.b16 %v2916, %v2912
  %v3069 = vpack.c.b16 %v2917, %v2913
  %v3070 = vpack.c.b16 %v2922, %v2918
  %v3071 = vpack.c.b16 %v2923, %v2919
  %v3072 = vpack.c.b16 %v2924, %v2920
  %v3073 = vpack.c.b16 %v2925, %v2921
  %v3074 = vpack.c.b16 %v2930, %v2926
  %v3075 = vpack.c.b16 %v2931, %v2927
  %v3076 = vpack.c.b16 %v2932, %v2928
  %v3077 = vpack.c.b16 %v2933, %v2929
  %v3078 = vpack.c.b16 %v2938, %v2934
  %v3079 = vpack.c.b16 %v2939, %v2935
  %v3080 = vpack.c.b16 %v2940, %v2936
  %v3081 = vpack.c.b16 %v2941, %v2937
  %v3082 = vpack.c.b16 %v2946, %v2942
  %v3083 = vpack.c.b16 %v2947, %v2943
  %v3084 = vpack.c.b16 %v2948, %v2944
  %v3085 = vpack.c.b16 %v2949, %v2945
  %v3086 = vpack.c.b16 %v2954, %v2950
  %v3087 = vpack.c.b16 %v2955, %v2951
  %v3088 = vpack.c.b16 %v2956, %v2952
  %v3089 = vpack.c.b16 %v2957, %v2953
  %v3090 = vpack.c.b16 %v2962, %v2958
  %v3091 = vpack.c.b16 %v2963, %v2959
  %v3092 = vpack.c.b16 %v2964, %v2960
  %v3093 = vpack.c.b16 %v2965, %v2961
  %3222 = vmatpush.bf16.msra.mxu0 %v2994
  %3223 = vmatpush.bf16.msra.mxu0 %v2990
  %3224 = vmatpush.bf16.msra.mxu0 %v2986
  %3225 = vmatpush.bf16.msra.mxu0 %v2982
  %3226 = vmatpush.bf16.msra.mxu0 %v2978
  %3227 = vmatpush.bf16.msra.mxu0 %v2974
  %3228 = vmatpush.bf16.msra.mxu0 %v2970
  %3229 = vmatpush.bf16.msra.mxu0 %v2966
  %3230 = vmatmul.bf16.gmra.mxu0 %v198
  %v3231 = vpop.f32.mrf.mxu0
  %v3232 = vadd.f32 %v2574, %v3231
  %v3233 = vpop.f32.mrf.mxu0
  %v3234 = vadd.f32 %v2574, %v3233
  %3235 = vdwg.mxu0
  %3236 = vmatpush.bf16.msra.mxu0 %v3026
  %3237 = vmatpush.bf16.msra.mxu0 %v3022
  %3238 = vmatpush.bf16.msra.mxu0 %v3018
  %3239 = vmatpush.bf16.msra.mxu0 %v3014
  %3240 = vmatpush.bf16.msra.mxu0 %v3010
  %3241 = vmatpush.bf16.msra.mxu0 %v3006
  %3242 = vmatpush.bf16.msra.mxu0 %v3002
  %3243 = vmatpush.bf16.msra.mxu0 %v2998
  %3244 = vmatmul.bf16.gmra.mxu0 %v199
  %v3245 = vpop.f32.mrf.mxu0
  %v3246 = vadd.f32 %v3232, %v3245
  %v3247 = vpop.f32.mrf.mxu0
  %v3248 = vadd.f32 %v3234, %v3247
  %3249 = vdwg.mxu0
  %3250 = vmatpush.bf16.msra.mxu0 %v3058
  %3251 = vmatpush.bf16.msra.mxu0 %v3054
  %3252 = vmatpush.bf16.msra.mxu0 %v3050
  %3253 = vmatpush.bf16.msra.mxu0 %v3046
  %3254 = vmatpush.bf16.msra.mxu0 %v3042
  %3255 = vmatpush.bf16.msra.mxu0 %v3038
  %3256 = vmatpush.bf16.msra.mxu0 %v3034
  %3257 = vmatpush.bf16.msra.mxu0 %v3030
  %3258 = vmatmul.bf16.gmra.mxu0 %v200
  %v3259 = vpop.f32.mrf.mxu0
  %v3260 = vadd.f32 %v3246, %v3259
  %v3261 = vpop.f32.mrf.mxu0
  %v3262 = vadd.f32 %v3248, %v3261
  %3263 = vdwg.mxu0
  %3264 = vmatpush.bf16.msra.mxu0 %v3090
  %3265 = vmatpush.bf16.msra.mxu0 %v3086
  %3266 = vmatpush.bf16.msra.mxu0 %v3082
  %3267 = vmatpush.bf16.msra.mxu0 %v3078
  %3268 = vmatpush.bf16.msra.mxu0 %v3074
  %3269 = vmatpush.bf16.msra.mxu0 %v3070
  %3270 = vmatpush.bf16.msra.mxu0 %v3066
  %3271 = vmatpush.bf16.msra.mxu0 %v3062
  %3272 = vmatmul.bf16.gmra.mxu0 %v201
  %v3273 = vpop.f32.mrf.mxu0
  %v3274 = vadd.f32 %v3260, %v3273
  %v3275 = vpop.f32.mrf.mxu0
  %v3276 = vadd.f32 %v3262, %v3275
  %3277 = vdwg.mxu0
  %3278 = vmatpush.bf16.msra.mxu0 %v2995
  %3279 = vmatpush.bf16.msra.mxu0 %v2991
  %3280 = vmatpush.bf16.msra.mxu0 %v2987
  %3281 = vmatpush.bf16.msra.mxu0 %v2983
  %3282 = vmatpush.bf16.msra.mxu0 %v2979
  %3283 = vmatpush.bf16.msra.mxu0 %v2975
  %3284 = vmatpush.bf16.msra.mxu0 %v2971
  %3285 = vmatpush.bf16.msra.mxu0 %v2967
  %3286 = vmatmul.bf16.gmra.mxu0 %v198
  %v3287 = vpop.f32.mrf.mxu0
  %v3288 = vadd.f32 %v2575, %v3287
  %v3289 = vpop.f32.mrf.mxu0
  %v3290 = vadd.f32 %v2575, %v3289
  %3291 = vdwg.mxu0
  %3292 = vmatpush.bf16.msra.mxu0 %v3027
  %3293 = vmatpush.bf16.msra.mxu0 %v3023
  %3294 = vmatpush.bf16.msra.mxu0 %v3019
  %3295 = vmatpush.bf16.msra.mxu0 %v3015
  %3296 = vmatpush.bf16.msra.mxu0 %v3011
  %3297 = vmatpush.bf16.msra.mxu0 %v3007
  %3298 = vmatpush.bf16.msra.mxu0 %v3003
  %3299 = vmatpush.bf16.msra.mxu0 %v2999
  %3300 = vmatmul.bf16.gmra.mxu0 %v199
  %v3301 = vpop.f32.mrf.mxu0
  %v3302 = vadd.f32 %v3288, %v3301
  %v3303 = vpop.f32.mrf.mxu0
  %v3304 = vadd.f32 %v3290, %v3303
  %3305 = vdwg.mxu0
  %3306 = vmatpush.bf16.msra.mxu0 %v3059
  %3307 = vmatpush.bf16.msra.mxu0 %v3055
  %3308 = vmatpush.bf16.msra.mxu0 %v3051
  %3309 = vmatpush.bf16.msra.mxu0 %v3047
  %3310 = vmatpush.bf16.msra.mxu0 %v3043
  %3311 = vmatpush.bf16.msra.mxu0 %v3039
  %3312 = vmatpush.bf16.msra.mxu0 %v3035
  %3313 = vmatpush.bf16.msra.mxu0 %v3031
  %3314 = vmatmul.bf16.gmra.mxu0 %v200
  %v3315 = vpop.f32.mrf.mxu0
  %v3316 = vadd.f32 %v3302, %v3315
  %v3317 = vpop.f32.mrf.mxu0
  %v3318 = vadd.f32 %v3304, %v3317
  %3319 = vdwg.mxu0
  %3320 = vmatpush.bf16.msra.mxu0 %v3091
  %3321 = vmatpush.bf16.msra.mxu0 %v3087
  %3322 = vmatpush.bf16.msra.mxu0 %v3083
  %3323 = vmatpush.bf16.msra.mxu0 %v3079
  %3324 = vmatpush.bf16.msra.mxu0 %v3075
  %3325 = vmatpush.bf16.msra.mxu0 %v3071
  %3326 = vmatpush.bf16.msra.mxu0 %v3067
  %3327 = vmatpush.bf16.msra.mxu0 %v3063
  %3328 = vmatmul.bf16.gmra.mxu0 %v201
  %v3329 = vpop.f32.mrf.mxu0
  %v3330 = vadd.f32 %v3316, %v3329
  %v3331 = vpop.f32.mrf.mxu0
  %v3332 = vadd.f32 %v3318, %v3331
  %3333 = vdwg.mxu0
  %3334 = vmatpush.bf16.msra.mxu0 %v2996
  %3335 = vmatpush.bf16.msra.mxu0 %v2992
  %3336 = vmatpush.bf16.msra.mxu0 %v2988
  %3337 = vmatpush.bf16.msra.mxu0 %v2984
  %3338 = vmatpush.bf16.msra.mxu0 %v2980
  %3339 = vmatpush.bf16.msra.mxu0 %v2976
  %3340 = vmatpush.bf16.msra.mxu0 %v2972
  %3341 = vmatpush.bf16.msra.mxu0 %v2968
  %3342 = vmatmul.bf16.gmra.mxu0 %v198
  %v3343 = vpop.f32.mrf.mxu0
  %v3344 = vadd.f32 %v2576, %v3343
  %v3345 = vpop.f32.mrf.mxu0
  %v3346 = vadd.f32 %v2576, %v3345
  %3347 = vdwg.mxu0
  %3348 = vmatpush.bf16.msra.mxu0 %v3028
  %3349 = vmatpush.bf16.msra.mxu0 %v3024
  %3350 = vmatpush.bf16.msra.mxu0 %v3020
  %3351 = vmatpush.bf16.msra.mxu0 %v3016
  %3352 = vmatpush.bf16.msra.mxu0 %v3012
  %3353 = vmatpush.bf16.msra.mxu0 %v3008
  %3354 = vmatpush.bf16.msra.mxu0 %v3004
  %3355 = vmatpush.bf16.msra.mxu0 %v3000
  %3356 = vmatmul.bf16.gmra.mxu0 %v199
  %v3357 = vpop.f32.mrf.mxu0
  %v3358 = vadd.f32 %v3344, %v3357
  %v3359 = vpop.f32.mrf.mxu0
  %v3360 = vadd.f32 %v3346, %v3359
  %3361 = vdwg.mxu0
  %3362 = vmatpush.bf16.msra.mxu0 %v3060
  %3363 = vmatpush.bf16.msra.mxu0 %v3056
  %3364 = vmatpush.bf16.msra.mxu0 %v3052
  %3365 = vmatpush.bf16.msra.mxu0 %v3048
  %3366 = vmatpush.bf16.msra.mxu0 %v3044
  %3367 = vmatpush.bf16.msra.mxu0 %v3040
  %3368 = vmatpush.bf16.msra.mxu0 %v3036
  %3369 = vmatpush.bf16.msra.mxu0 %v3032
  %3370 = vmatmul.bf16.gmra.mxu0 %v200
  %v3371 = vpop.f32.mrf.mxu0
  %v3372 = vadd.f32 %v3358, %v3371
  %v3373 = vpop.f32.mrf.mxu0
  %v3374 = vadd.f32 %v3360, %v3373
  %3375 = vdwg.mxu0
  %3376 = vmatpush.bf16.msra.mxu0 %v3092
  %3377 = vmatpush.bf16.msra.mxu0 %v3088
  %3378 = vmatpush.bf16.msra.mxu0 %v3084
  %3379 = vmatpush.bf16.msra.mxu0 %v3080
  %3380 = vmatpush.bf16.msra.mxu0 %v3076
  %3381 = vmatpush.bf16.msra.mxu0 %v3072
  %3382 = vmatpush.bf16.msra.mxu0 %v3068
  %3383 = vmatpush.bf16.msra.mxu0 %v3064
  %3384 = vmatmul.bf16.gmra.mxu0 %v201
  %v3385 = vpop.f32.mrf.mxu0
  %v3386 = vadd.f32 %v3372, %v3385
  %v3387 = vpop.f32.mrf.mxu0
  %v3388 = vadd.f32 %v3374, %v3387
  %3389 = vdwg.mxu0
  %3390 = vmatpush.bf16.msra.mxu0 %v2997
  %3391 = vmatpush.bf16.msra.mxu0 %v2993
  %3392 = vmatpush.bf16.msra.mxu0 %v2989
  %3393 = vmatpush.bf16.msra.mxu0 %v2985
  %3394 = vmatpush.bf16.msra.mxu0 %v2981
  %3395 = vmatpush.bf16.msra.mxu0 %v2977
  %3396 = vmatpush.bf16.msra.mxu0 %v2973
  %3397 = vmatpush.bf16.msra.mxu0 %v2969
  %3398 = vmatmul.bf16.gmra.mxu0 %v198
  %v3399 = vpop.f32.mrf.mxu0
  %v3400 = vadd.f32 %v2577, %v3399
  %v3401 = vpop.f32.mrf.mxu0
  %v3402 = vadd.f32 %v2577, %v3401
  %3403 = vdwg.mxu0
  %3404 = vmatpush.bf16.msra.mxu0 %v3029
  %3405 = vmatpush.bf16.msra.mxu0 %v3025
  %3406 = vmatpush.bf16.msra.mxu0 %v3021
  %3407 = vmatpush.bf16.msra.mxu0 %v3017
  %3408 = vmatpush.bf16.msra.mxu0 %v3013
  %3409 = vmatpush.bf16.msra.mxu0 %v3009
  %3410 = vmatpush.bf16.msra.mxu0 %v3005
  %3411 = vmatpush.bf16.msra.mxu0 %v3001
  %3412 = vmatmul.bf16.gmra.mxu0 %v199
  %v3413 = vpop.f32.mrf.mxu0
  %v3414 = vadd.f32 %v3400, %v3413
  %v3415 = vpop.f32.mrf.mxu0
  %v3416 = vadd.f32 %v3402, %v3415
  %3417 = vdwg.mxu0
  %3418 = vmatpush.bf16.msra.mxu0 %v3061
  %3419 = vmatpush.bf16.msra.mxu0 %v3057
  %3420 = vmatpush.bf16.msra.mxu0 %v3053
  %3421 = vmatpush.bf16.msra.mxu0 %v3049
  %3422 = vmatpush.bf16.msra.mxu0 %v3045
  %3423 = vmatpush.bf16.msra.mxu0 %v3041
  %3424 = vmatpush.bf16.msra.mxu0 %v3037
  %3425 = vmatpush.bf16.msra.mxu0 %v3033
  %3426 = vmatmul.bf16.gmra.mxu0 %v200
  %v3427 = vpop.f32.mrf.mxu0
  %v3428 = vadd.f32 %v3414, %v3427
  %v3429 = vpop.f32.mrf.mxu0
  %v3430 = vadd.f32 %v3416, %v3429
  %3431 = vdwg.mxu0
  %3432 = vmatpush.bf16.msra.mxu0 %v3093
  %3433 = vmatpush.bf16.msra.mxu0 %v3089
  %3434 = vmatpush.bf16.msra.mxu0 %v3085
  %3435 = vmatpush.bf16.msra.mxu0 %v3081
  %3436 = vmatpush.bf16.msra.mxu0 %v3077
  %3437 = vmatpush.bf16.msra.mxu0 %v3073
  %3438 = vmatpush.bf16.msra.mxu0 %v3069
  %3439 = vmatpush.bf16.msra.mxu0 %v3065
  %3440 = vmatmul.bf16.gmra.mxu0 %v201
  %v3441 = vpop.f32.mrf.mxu0
  %v3442 = vadd.f32 %v3428, %v3441
  %v3443 = vpop.f32.mrf.mxu0
  %v3444 = vadd.f32 %v3430, %v3443
  %3445 = vdwg.mxu0
  %vm3446 = vcmp.gt.f32.partialorder %v3274, 0.0
  %vm3447 = vcmp.gt.f32.partialorder %v3330, 0.0
  %vm3448 = vcmp.gt.f32.partialorder %v3386, 0.0
  %vm3449 = vcmp.gt.f32.partialorder %v3442, 0.0
  %vm3450 = vcmp.gt.f32.partialorder %v3276, 0.0
  %vm3451 = vcmp.gt.f32.partialorder %v3332, 0.0
  %vm3452 = vcmp.gt.f32.partialorder %v3388, 0.0
  %vm3453 = vcmp.gt.f32.partialorder %v3444, 0.0
  %v3454 = vmul.f32 %v3274, 0.1
  %v3455 = vmul.f32 %v3330, 0.1
  %v3456 = vmul.f32 %v3386, 0.1
  %v3457 = vmul.f32 %v3442, 0.1
  %v3458 = vmul.f32 %v3276, 0.1
  %v3459 = vmul.f32 %v3332, 0.1
  %v3460 = vmul.f32 %v3388, 0.1
  %v3461 = vmul.f32 %v3444, 0.1
  %v3462 = vsel %vm3446, %v3274, %v3454
  %v3463 = vsel %vm3447, %v3330, %v3455
  %v3464 = vsel %vm3448, %v3386, %v3456
  %v3465 = vsel %vm3449, %v3442, %v3457
  %v3466 = vsel %vm3450, %v3276, %v3458
  %v3467 = vsel %vm3451, %v3332, %v3459
  %v3468 = vsel %vm3452, %v3388, %v3460
  %v3469 = vsel %vm3453, %v3444, %v3461
  %v3470 = vpack.c.bf16 %v3466, %v3462
  %v3471 = vpack.c.bf16 %v3467, %v3463
  %v3472 = vpack.c.bf16 %v3468, %v3464
  %v3473 = vpack.c.bf16 %v3469, %v3465
  %v3474 = vld [vmem:[%s9] sm:$0xff]
  %v3475 = vld [vmem:[%s9 + $0x8] sm:$0xff]
  %v3476 = vld [vmem:[%s9 + $0x10] sm:$0xff]
  %v3477 = vld [vmem:[%s9 + $0x18] sm:$0xff]
  %v3478 = vld [vmem:[%s9 + $0x20] sm:$0xff]
  %v3479 = vld [vmem:[%s9 + $0x28] sm:$0xff]
  %v3480 = vld [vmem:[%s9 + $0x30] sm:$0xff]
  %v3481 = vld [vmem:[%s9 + $0x38] sm:$0xff]
  %v3482 = vld [vmem:[%s9 + $0x40] sm:$0xff]
  %v3483 = vld [vmem:[%s9 + $0x48] sm:$0xff]
  %v3484 = vld [vmem:[%s9 + $0x50] sm:$0xff]
  %v3485 = vld [vmem:[%s9 + $0x58] sm:$0xff]
  %v3486 = vld [vmem:[%s9 + $0x60] sm:$0xff]
  %v3487 = vld [vmem:[%s9 + $0x68] sm:$0xff]
  %v3488 = vld [vmem:[%s9 + $0x70] sm:$0xff]
  %v3489 = vld [vmem:[%s9 + $0x78] sm:$0xff]
  %v3490 = vld [vmem:[%s9 + $0x80] sm:$0xff]
  %v3491 = vld [vmem:[%s9 + $0x88] sm:$0xff]
  %v3492 = vld [vmem:[%s9 + $0x90] sm:$0xff]
  %v3493 = vld [vmem:[%s9 + $0x98] sm:$0xff]
  %v3494 = vld [vmem:[%s9 + $0xa0] sm:$0xff]
  %v3495 = vld [vmem:[%s9 + $0xa8] sm:$0xff]
  %v3496 = vld [vmem:[%s9 + $0xb0] sm:$0xff]
  %v3497 = vld [vmem:[%s9 + $0xb8] sm:$0xff]
  %v3498 = vld [vmem:[%s9 + $0xc0] sm:$0xff]
  %v3499 = vld [vmem:[%s9 + $0xc8] sm:$0xff]
  %v3500 = vld [vmem:[%s9 + $0xd0] sm:$0xff]
  %v3501 = vld [vmem:[%s9 + $0xd8] sm:$0xff]
  %v3502 = vld [vmem:[%s9 + $0xe0] sm:$0xff]
  %v3503 = vld [vmem:[%s9 + $0xe8] sm:$0xff]
  %v3504 = vld [vmem:[%s9 + $0xf0] sm:$0xff]
  %v3505 = vld [vmem:[%s9 + $0xf8] sm:$0xff]
  %v3506 = vld [vmem:[%s9 + $0x100] sm:$0xff]
  %v3507 = vld [vmem:[%s9 + $0x108] sm:$0xff]
  %v3508 = vld [vmem:[%s9 + $0x110] sm:$0xff]
  %v3509 = vld [vmem:[%s9 + $0x118] sm:$0xff]
  %v3510 = vld [vmem:[%s9 + $0x120] sm:$0xff]
  %v3511 = vld [vmem:[%s9 + $0x128] sm:$0xff]
  %v3512 = vld [vmem:[%s9 + $0x130] sm:$0xff]
  %v3513 = vld [vmem:[%s9 + $0x138] sm:$0xff]
  %v3514 = vld [vmem:[%s9 + $0x140] sm:$0xff]
  %v3515 = vld [vmem:[%s9 + $0x148] sm:$0xff]
  %v3516 = vld [vmem:[%s9 + $0x150] sm:$0xff]
  %v3517 = vld [vmem:[%s9 + $0x158] sm:$0xff]
  %v3518 = vld [vmem:[%s9 + $0x160] sm:$0xff]
  %v3519 = vld [vmem:[%s9 + $0x168] sm:$0xff]
  %v3520 = vld [vmem:[%s9 + $0x170] sm:$0xff]
  %v3521 = vld [vmem:[%s9 + $0x178] sm:$0xff]
  %v3522 = vld [vmem:[%s9 + $0x180] sm:$0xff]
  %v3523 = vld [vmem:[%s9 + $0x188] sm:$0xff]
  %v3524 = vld [vmem:[%s9 + $0x190] sm:$0xff]
  %v3525 = vld [vmem:[%s9 + $0x198] sm:$0xff]
  %v3526 = vld [vmem:[%s9 + $0x1a0] sm:$0xff]
  %v3527 = vld [vmem:[%s9 + $0x1a8] sm:$0xff]
  %v3528 = vld [vmem:[%s9 + $0x1b0] sm:$0xff]
  %v3529 = vld [vmem:[%s9 + $0x1b8] sm:$0xff]
  %v3530 = vld [vmem:[%s9 + $0x1c0] sm:$0xff]
  %v3531 = vld [vmem:[%s9 + $0x1c8] sm:$0xff]
  %v3532 = vld [vmem:[%s9 + $0x1d0] sm:$0xff]
  %v3533 = vld [vmem:[%s9 + $0x1d8] sm:$0xff]
  %v3534 = vld [vmem:[%s9 + $0x1e0] sm:$0xff]
  %v3535 = vld [vmem:[%s9 + $0x1e8] sm:$0xff]
  %v3536 = vld [vmem:[%s9 + $0x1f0] sm:$0xff]
  %v3537 = vld [vmem:[%s9 + $0x1f8] sm:$0xff]
  %v3538 = vld [vmem:[%s9 + $0x200] sm:$0xff]
  %v3539 = vld [vmem:[%s9 + $0x208] sm:$0xff]
  %v3540 = vld [vmem:[%s9 + $0x210] sm:$0xff]
  %v3541 = vld [vmem:[%s9 + $0x218] sm:$0xff]
  %v3542 = vld [vmem:[%s9 + $0x220] sm:$0xff]
  %v3543 = vld [vmem:[%s9 + $0x228] sm:$0xff]
  %v3544 = vld [vmem:[%s9 + $0x230] sm:$0xff]
  %v3545 = vld [vmem:[%s9 + $0x238] sm:$0xff]
  %v3546 = vld [vmem:[%s9 + $0x240] sm:$0xff]
  %v3547 = vld [vmem:[%s9 + $0x248] sm:$0xff]
  %v3548 = vld [vmem:[%s9 + $0x250] sm:$0xff]
  %v3549 = vld [vmem:[%s9 + $0x258] sm:$0xff]
  %v3550 = vld [vmem:[%s9 + $0x260] sm:$0xff]
  %v3551 = vld [vmem:[%s9 + $0x268] sm:$0xff]
  %v3552 = vld [vmem:[%s9 + $0x270] sm:$0xff]
  %v3553 = vld [vmem:[%s9 + $0x278] sm:$0xff]
  %v3554 = vld [vmem:[%s9 + $0x280] sm:$0xff]
  %v3555 = vld [vmem:[%s9 + $0x288] sm:$0xff]
  %v3556 = vld [vmem:[%s9 + $0x290] sm:$0xff]
  %v3557 = vld [vmem:[%s9 + $0x298] sm:$0xff]
  %v3558 = vld [vmem:[%s9 + $0x2a0] sm:$0xff]
  %v3559 = vld [vmem:[%s9 + $0x2a8] sm:$0xff]
  %v3560 = vld [vmem:[%s9 + $0x2b0] sm:$0xff]
  %v3561 = vld [vmem:[%s9 + $0x2b8] sm:$0xff]
  %v3562 = vld [vmem:[%s9 + $0x2c0] sm:$0xff]
  %v3563 = vld [vmem:[%s9 + $0x2c8] sm:$0xff]
  %v3564 = vld [vmem:[%s9 + $0x2d0] sm:$0xff]
  %v3565 = vld [vmem:[%s9 + $0x2d8] sm:$0xff]
  %v3566 = vld [vmem:[%s9 + $0x2e0] sm:$0xff]
  %v3567 = vld [vmem:[%s9 + $0x2e8] sm:$0xff]
  %v3568 = vld [vmem:[%s9 + $0x2f0] sm:$0xff]
  %v3569 = vld [vmem:[%s9 + $0x2f8] sm:$0xff]
  %v3570 = vld [vmem:[%s9 + $0x300] sm:$0xff]
  %v3571 = vld [vmem:[%s9 + $0x308] sm:$0xff]
  %v3572 = vld [vmem:[%s9 + $0x310] sm:$0xff]
  %v3573 = vld [vmem:[%s9 + $0x318] sm:$0xff]
  %v3574 = vld [vmem:[%s9 + $0x320] sm:$0xff]
  %v3575 = vld [vmem:[%s9 + $0x328] sm:$0xff]
  %v3576 = vld [vmem:[%s9 + $0x330] sm:$0xff]
  %v3577 = vld [vmem:[%s9 + $0x338] sm:$0xff]
  %v3578 = vld [vmem:[%s9 + $0x340] sm:$0xff]
  %v3579 = vld [vmem:[%s9 + $0x348] sm:$0xff]
  %v3580 = vld [vmem:[%s9 + $0x350] sm:$0xff]
  %v3581 = vld [vmem:[%s9 + $0x358] sm:$0xff]
  %v3582 = vld [vmem:[%s9 + $0x360] sm:$0xff]
  %v3583 = vld [vmem:[%s9 + $0x368] sm:$0xff]
  %v3584 = vld [vmem:[%s9 + $0x370] sm:$0xff]
  %v3585 = vld [vmem:[%s9 + $0x378] sm:$0xff]
  %v3586 = vld [vmem:[%s9 + $0x380] sm:$0xff]
  %v3587 = vld [vmem:[%s9 + $0x388] sm:$0xff]
  %v3588 = vld [vmem:[%s9 + $0x390] sm:$0xff]
  %v3589 = vld [vmem:[%s9 + $0x398] sm:$0xff]
  %v3590 = vld [vmem:[%s9 + $0x3a0] sm:$0xff]
  %v3591 = vld [vmem:[%s9 + $0x3a8] sm:$0xff]
  %v3592 = vld [vmem:[%s9 + $0x3b0] sm:$0xff]
  %v3593 = vld [vmem:[%s9 + $0x3b8] sm:$0xff]
  %v3594 = vld [vmem:[%s9 + $0x3c0] sm:$0xff]
  %v3595 = vld [vmem:[%s9 + $0x3c8] sm:$0xff]
  %v3596 = vld [vmem:[%s9 + $0x3d0] sm:$0xff]
  %v3597 = vld [vmem:[%s9 + $0x3d8] sm:$0xff]
  %v3598 = vld [vmem:[%s9 + $0x3e0] sm:$0xff]
  %v3599 = vld [vmem:[%s9 + $0x3e8] sm:$0xff]
  %v3600 = vld [vmem:[%s9 + $0x3f0] sm:$0xff]
  %v3601 = vld [vmem:[%s9 + $0x3f8] sm:$0xff]
  %v3602 = vld [vmem:[%s10] sm:$0xf]
  %v3604 = vperm.slane %v3602, 0
  %v3605 = vperm.slane %v3602, 1
  %v3606 = vperm.slane %v3602, 2
  %v3607 = vperm.slane %v3602, 3
  %v3740 = vunpack.c.l.b16 %v3474
  %v3741 = vunpack.c.h.b16 %v3474
  %v3742 = vunpack.c.l.b16 %v3475
  %v3743 = vunpack.c.h.b16 %v3475
  %v3744 = vunpack.c.l.b16 %v3476
  %v3745 = vunpack.c.h.b16 %v3476
  %v3746 = vunpack.c.l.b16 %v3477
  %v3747 = vunpack.c.h.b16 %v3477
  %v3748 = vunpack.c.l.b16 %v3478
  %v3749 = vunpack.c.h.b16 %v3478
  %v3750 = vunpack.c.l.b16 %v3479
  %v3751 = vunpack.c.h.b16 %v3479
  %v3752 = vunpack.c.l.b16 %v3480
  %v3753 = vunpack.c.h.b16 %v3480
  %v3754 = vunpack.c.l.b16 %v3481
  %v3755 = vunpack.c.h.b16 %v3481
  %v3756 = vunpack.c.l.b16 %v3482
  %v3757 = vunpack.c.h.b16 %v3482
  %v3758 = vunpack.c.l.b16 %v3483
  %v3759 = vunpack.c.h.b16 %v3483
  %v3760 = vunpack.c.l.b16 %v3484
  %v3761 = vunpack.c.h.b16 %v3484
  %v3762 = vunpack.c.l.b16 %v3485
  %v3763 = vunpack.c.h.b16 %v3485
  %v3764 = vunpack.c.l.b16 %v3486
  %v3765 = vunpack.c.h.b16 %v3486
  %v3766 = vunpack.c.l.b16 %v3487
  %v3767 = vunpack.c.h.b16 %v3487
  %v3768 = vunpack.c.l.b16 %v3488
  %v3769 = vunpack.c.h.b16 %v3488
  %v3770 = vunpack.c.l.b16 %v3489
  %v3771 = vunpack.c.h.b16 %v3489
  %v3772 = vunpack.c.l.b16 %v3490
  %v3773 = vunpack.c.h.b16 %v3490
  %v3774 = vunpack.c.l.b16 %v3491
  %v3775 = vunpack.c.h.b16 %v3491
  %v3776 = vunpack.c.l.b16 %v3492
  %v3777 = vunpack.c.h.b16 %v3492
  %v3778 = vunpack.c.l.b16 %v3493
  %v3779 = vunpack.c.h.b16 %v3493
  %v3780 = vunpack.c.l.b16 %v3494
  %v3781 = vunpack.c.h.b16 %v3494
  %v3782 = vunpack.c.l.b16 %v3495
  %v3783 = vunpack.c.h.b16 %v3495
  %v3784 = vunpack.c.l.b16 %v3496
  %v3785 = vunpack.c.h.b16 %v3496
  %v3786 = vunpack.c.l.b16 %v3497
  %v3787 = vunpack.c.h.b16 %v3497
  %v3788 = vunpack.c.l.b16 %v3498
  %v3789 = vunpack.c.h.b16 %v3498
  %v3790 = vunpack.c.l.b16 %v3499
  %v3791 = vunpack.c.h.b16 %v3499
  %v3792 = vunpack.c.l.b16 %v3500
  %v3793 = vunpack.c.h.b16 %v3500
  %v3794 = vunpack.c.l.b16 %v3501
  %v3795 = vunpack.c.h.b16 %v3501
  %v3796 = vunpack.c.l.b16 %v3502
  %v3797 = vunpack.c.h.b16 %v3502
  %v3798 = vunpack.c.l.b16 %v3503
  %v3799 = vunpack.c.h.b16 %v3503
  %v3800 = vunpack.c.l.b16 %v3504
  %v3801 = vunpack.c.h.b16 %v3504
  %v3802 = vunpack.c.l.b16 %v3505
  %v3803 = vunpack.c.h.b16 %v3505
  %v3804 = vunpack.c.l.b16 %v3506
  %v3805 = vunpack.c.h.b16 %v3506
  %v3806 = vunpack.c.l.b16 %v3507
  %v3807 = vunpack.c.h.b16 %v3507
  %v3808 = vunpack.c.l.b16 %v3508
  %v3809 = vunpack.c.h.b16 %v3508
  %v3810 = vunpack.c.l.b16 %v3509
  %v3811 = vunpack.c.h.b16 %v3509
  %v3812 = vunpack.c.l.b16 %v3510
  %v3813 = vunpack.c.h.b16 %v3510
  %v3814 = vunpack.c.l.b16 %v3511
  %v3815 = vunpack.c.h.b16 %v3511
  %v3816 = vunpack.c.l.b16 %v3512
  %v3817 = vunpack.c.h.b16 %v3512
  %v3818 = vunpack.c.l.b16 %v3513
  %v3819 = vunpack.c.h.b16 %v3513
  %v3820 = vunpack.c.l.b16 %v3514
  %v3821 = vunpack.c.h.b16 %v3514
  %v3822 = vunpack.c.l.b16 %v3515
  %v3823 = vunpack.c.h.b16 %v3515
  %v3824 = vunpack.c.l.b16 %v3516
  %v3825 = vunpack.c.h.b16 %v3516
  %v3826 = vunpack.c.l.b16 %v3517
  %v3827 = vunpack.c.h.b16 %v3517
  %v3828 = vunpack.c.l.b16 %v3518
  %v3829 = vunpack.c.h.b16 %v3518
  %v3830 = vunpack.c.l.b16 %v3519
  %v3831 = vunpack.c.h.b16 %v3519
  %v3832 = vunpack.c.l.b16 %v3520
  %v3833 = vunpack.c.h.b16 %v3520
  %v3834 = vunpack.c.l.b16 %v3521
  %v3835 = vunpack.c.h.b16 %v3521
  %v3836 = vunpack.c.l.b16 %v3522
  %v3837 = vunpack.c.h.b16 %v3522
  %v3838 = vunpack.c.l.b16 %v3523
  %v3839 = vunpack.c.h.b16 %v3523
  %v3840 = vunpack.c.l.b16 %v3524
  %v3841 = vunpack.c.h.b16 %v3524
  %v3842 = vunpack.c.l.b16 %v3525
  %v3843 = vunpack.c.h.b16 %v3525
  %v3844 = vunpack.c.l.b16 %v3526
  %v3845 = vunpack.c.h.b16 %v3526
  %v3846 = vunpack.c.l.b16 %v3527
  %v3847 = vunpack.c.h.b16 %v3527
  %v3848 = vunpack.c.l.b16 %v3528
  %v3849 = vunpack.c.h.b16 %v3528
  %v3850 = vunpack.c.l.b16 %v3529
  %v3851 = vunpack.c.h.b16 %v3529
  %v3852 = vunpack.c.l.b16 %v3530
  %v3853 = vunpack.c.h.b16 %v3530
  %v3854 = vunpack.c.l.b16 %v3531
  %v3855 = vunpack.c.h.b16 %v3531
  %v3856 = vunpack.c.l.b16 %v3532
  %v3857 = vunpack.c.h.b16 %v3532
  %v3858 = vunpack.c.l.b16 %v3533
  %v3859 = vunpack.c.h.b16 %v3533
  %v3860 = vunpack.c.l.b16 %v3534
  %v3861 = vunpack.c.h.b16 %v3534
  %v3862 = vunpack.c.l.b16 %v3535
  %v3863 = vunpack.c.h.b16 %v3535
  %v3864 = vunpack.c.l.b16 %v3536
  %v3865 = vunpack.c.h.b16 %v3536
  %v3866 = vunpack.c.l.b16 %v3537
  %v3867 = vunpack.c.h.b16 %v3537
  %v3868 = vunpack.c.l.b16 %v3538
  %v3869 = vunpack.c.h.b16 %v3538
  %v3870 = vunpack.c.l.b16 %v3539
  %v3871 = vunpack.c.h.b16 %v3539
  %v3872 = vunpack.c.l.b16 %v3540
  %v3873 = vunpack.c.h.b16 %v3540
  %v3874 = vunpack.c.l.b16 %v3541
  %v3875 = vunpack.c.h.b16 %v3541
  %v3876 = vunpack.c.l.b16 %v3542
  %v3877 = vunpack.c.h.b16 %v3542
  %v3878 = vunpack.c.l.b16 %v3543
  %v3879 = vunpack.c.h.b16 %v3543
  %v3880 = vunpack.c.l.b16 %v3544
  %v3881 = vunpack.c.h.b16 %v3544
  %v3882 = vunpack.c.l.b16 %v3545
  %v3883 = vunpack.c.h.b16 %v3545
  %v3884 = vunpack.c.l.b16 %v3546
  %v3885 = vunpack.c.h.b16 %v3546
  %v3886 = vunpack.c.l.b16 %v3547
  %v3887 = vunpack.c.h.b16 %v3547
  %v3888 = vunpack.c.l.b16 %v3548
  %v3889 = vunpack.c.h.b16 %v3548
  %v3890 = vunpack.c.l.b16 %v3549
  %v3891 = vunpack.c.h.b16 %v3549
  %v3892 = vunpack.c.l.b16 %v3550
  %v3893 = vunpack.c.h.b16 %v3550
  %v3894 = vunpack.c.l.b16 %v3551
  %v3895 = vunpack.c.h.b16 %v3551
  %v3896 = vunpack.c.l.b16 %v3552
  %v3897 = vunpack.c.h.b16 %v3552
  %v3898 = vunpack.c.l.b16 %v3553
  %v3899 = vunpack.c.h.b16 %v3553
  %v3900 = vunpack.c.l.b16 %v3554
  %v3901 = vunpack.c.h.b16 %v3554
  %v3902 = vunpack.c.l.b16 %v3555
  %v3903 = vunpack.c.h.b16 %v3555
  %v3904 = vunpack.c.l.b16 %v3556
  %v3905 = vunpack.c.h.b16 %v3556
  %v3906 = vunpack.c.l.b16 %v3557
  %v3907 = vunpack.c.h.b16 %v3557
  %v3908 = vunpack.c.l.b16 %v3558
  %v3909 = vunpack.c.h.b16 %v3558
  %v3910 = vunpack.c.l.b16 %v3559
  %v3911 = vunpack.c.h.b16 %v3559
  %v3912 = vunpack.c.l.b16 %v3560
  %v3913 = vunpack.c.h.b16 %v3560
  %v3914 = vunpack.c.l.b16 %v3561
  %v3915 = vunpack.c.h.b16 %v3561
  %v3916 = vunpack.c.l.b16 %v3562
  %v3917 = vunpack.c.h.b16 %v3562
  %v3918 = vunpack.c.l.b16 %v3563
  %v3919 = vunpack.c.h.b16 %v3563
  %v3920 = vunpack.c.l.b16 %v3564
  %v3921 = vunpack.c.h.b16 %v3564
  %v3922 = vunpack.c.l.b16 %v3565
  %v3923 = vunpack.c.h.b16 %v3565
  %v3924 = vunpack.c.l.b16 %v3566
  %v3925 = vunpack.c.h.b16 %v3566
  %v3926 = vunpack.c.l.b16 %v3567
  %v3927 = vunpack.c.h.b16 %v3567
  %v3928 = vunpack.c.l.b16 %v3568
  %v3929 = vunpack.c.h.b16 %v3568
  %v3930 = vunpack.c.l.b16 %v3569
  %v3931 = vunpack.c.h.b16 %v3569
  %v3932 = vunpack.c.l.b16 %v3570
  %v3933 = vunpack.c.h.b16 %v3570
  %v3934 = vunpack.c.l.b16 %v3571
  %v3935 = vunpack.c.h.b16 %v3571
  %v3936 = vunpack.c.l.b16 %v3572
  %v3937 = vunpack.c.h.b16 %v3572
  %v3938 = vunpack.c.l.b16 %v3573
  %v3939 = vunpack.c.h.b16 %v3573
  %v3940 = vunpack.c.l.b16 %v3574
  %v3941 = vunpack.c.h.b16 %v3574
  %v3942 = vunpack.c.l.b16 %v3575
  %v3943 = vunpack.c.h.b16 %v3575
  %v3944 = vunpack.c.l.b16 %v3576
  %v3945 = vunpack.c.h.b16 %v3576
  %v3946 = vunpack.c.l.b16 %v3577
  %v3947 = vunpack.c.h.b16 %v3577
  %v3948 = vunpack.c.l.b16 %v3578
  %v3949 = vunpack.c.h.b16 %v3578
  %v3950 = vunpack.c.l.b16 %v3579
  %v3951 = vunpack.c.h.b16 %v3579
  %v3952 = vunpack.c.l.b16 %v3580
  %v3953 = vunpack.c.h.b16 %v3580
  %v3954 = vunpack.c.l.b16 %v3581
  %v3955 = vunpack.c.h.b16 %v3581
  %v3956 = vunpack.c.l.b16 %v3582
  %v3957 = vunpack.c.h.b16 %v3582
  %v3958 = vunpack.c.l.b16 %v3583
  %v3959 = vunpack.c.h.b16 %v3583
  %v3960 = vunpack.c.l.b16 %v3584
  %v3961 = vunpack.c.h.b16 %v3584
  %v3962 = vunpack.c.l.b16 %v3585
  %v3963 = vunpack.c.h.b16 %v3585
  %v3964 = vunpack.c.l.b16 %v3586
  %v3965 = vunpack.c.h.b16 %v3586
  %v3966 = vunpack.c.l.b16 %v3587
  %v3967 = vunpack.c.h.b16 %v3587
  %v3968 = vunpack.c.l.b16 %v3588
  %v3969 = vunpack.c.h.b16 %v3588
  %v3970 = vunpack.c.l.b16 %v3589
  %v3971 = vunpack.c.h.b16 %v3589
  %v3972 = vunpack.c.l.b16 %v3590
  %v3973 = vunpack.c.h.b16 %v3590
  %v3974 = vunpack.c.l.b16 %v3591
  %v3975 = vunpack.c.h.b16 %v3591
  %v3976 = vunpack.c.l.b16 %v3592
  %v3977 = vunpack.c.h.b16 %v3592
  %v3978 = vunpack.c.l.b16 %v3593
  %v3979 = vunpack.c.h.b16 %v3593
  %v3980 = vunpack.c.l.b16 %v3594
  %v3981 = vunpack.c.h.b16 %v3594
  %v3982 = vunpack.c.l.b16 %v3595
  %v3983 = vunpack.c.h.b16 %v3595
  %v3984 = vunpack.c.l.b16 %v3596
  %v3985 = vunpack.c.h.b16 %v3596
  %v3986 = vunpack.c.l.b16 %v3597
  %v3987 = vunpack.c.h.b16 %v3597
  %v3988 = vunpack.c.l.b16 %v3598
  %v3989 = vunpack.c.h.b16 %v3598
  %v3990 = vunpack.c.l.b16 %v3599
  %v3991 = vunpack.c.h.b16 %v3599
  %v3992 = vunpack.c.l.b16 %v3600
  %v3993 = vunpack.c.h.b16 %v3600
  %v3994 = vunpack.c.l.b16 %v3601
  %v3995 = vunpack.c.h.b16 %v3601
  %v3996 = vpack.c.b16 %v3744, %v3740
  %v3997 = vpack.c.b16 %v3745, %v3741
  %v3998 = vpack.c.b16 %v3746, %v3742
  %v3999 = vpack.c.b16 %v3747, %v3743
  %v4000 = vpack.c.b16 %v3752, %v3748
  %v4001 = vpack.c.b16 %v3753, %v3749
  %v4002 = vpack.c.b16 %v3754, %v3750
  %v4003 = vpack.c.b16 %v3755, %v3751
  %v4004 = vpack.c.b16 %v3760, %v3756
  %v4005 = vpack.c.b16 %v3761, %v3757
  %v4006 = vpack.c.b16 %v3762, %v3758
  %v4007 = vpack.c.b16 %v3763, %v3759
  %v4008 = vpack.c.b16 %v3768, %v3764
  %v4009 = vpack.c.b16 %v3769, %v3765
  %v4010 = vpack.c.b16 %v3770, %v3766
  %v4011 = vpack.c.b16 %v3771, %v3767
  %v4012 = vpack.c.b16 %v3776, %v3772
  %v4013 = vpack.c.b16 %v3777, %v3773
  %v4014 = vpack.c.b16 %v3778, %v3774
  %v4015 = vpack.c.b16 %v3779, %v3775
  %v4016 = vpack.c.b16 %v3784, %v3780
  %v4017 = vpack.c.b16 %v3785, %v3781
  %v4018 = vpack.c.b16 %v3786, %v3782
  %v4019 = vpack.c.b16 %v3787, %v3783
  %v4020 = vpack.c.b16 %v3792, %v3788
  %v4021 = vpack.c.b16 %v3793, %v3789
  %v4022 = vpack.c.b16 %v3794, %v3790
  %v4023 = vpack.c.b16 %v3795, %v3791
  %v4024 = vpack.c.b16 %v3800, %v3796
  %v4025 = vpack.c.b16 %v3801, %v3797
  %v4026 = vpack.c.b16 %v3802, %v3798
  %v4027 = vpack.c.b16 %v3803, %v3799
  %v4028 = vpack.c.b16 %v3808, %v3804
  %v4029 = vpack.c.b16 %v3809, %v3805
  %v4030 = vpack.c.b16 %v3810, %v3806
  %v4031 = vpack.c.b16 %v3811, %v3807
  %v4032 = vpack.c.b16 %v3816, %v3812
  %v4033 = vpack.c.b16 %v3817, %v3813
  %v4034 = vpack.c.b16 %v3818, %v3814
  %v4035 = vpack.c.b16 %v3819, %v3815
  %v4036 = vpack.c.b16 %v3824, %v3820
  %v4037 = vpack.c.b16 %v3825, %v3821
  %v4038 = vpack.c.b16 %v3826, %v3822
  %v4039 = vpack.c.b16 %v3827, %v3823
  %v4040 = vpack.c.b16 %v3832, %v3828
  %v4041 = vpack.c.b16 %v3833, %v3829
  %v4042 = vpack.c.b16 %v3834, %v3830
  %v4043 = vpack.c.b16 %v3835, %v3831
  %v4044 = vpack.c.b16 %v3840, %v3836
  %v4045 = vpack.c.b16 %v3841, %v3837
  %v4046 = vpack.c.b16 %v3842, %v3838
  %v4047 = vpack.c.b16 %v3843, %v3839
  %v4048 = vpack.c.b16 %v3848, %v3844
  %v4049 = vpack.c.b16 %v3849, %v3845
  %v4050 = vpack.c.b16 %v3850, %v3846
  %v4051 = vpack.c.b16 %v3851, %v3847
  %v4052 = vpack.c.b16 %v3856, %v3852
  %v4053 = vpack.c.b16 %v3857, %v3853
  %v4054 = vpack.c.b16 %v3858, %v3854
  %v4055 = vpack.c.b16 %v3859, %v3855
  %v4056 = vpack.c.b16 %v3864, %v3860
  %v4057 = vpack.c.b16 %v3865, %v3861
  %v4058 = vpack.c.b16 %v3866, %v3862
  %v4059 = vpack.c.b16 %v3867, %v3863
  %v4060 = vpack.c.b16 %v3872, %v3868
  %v4061 = vpack.c.b16 %v3873, %v3869
  %v4062 = vpack.c.b16 %v3874, %v3870
  %v4063 = vpack.c.b16 %v3875, %v3871
  %v4064 = vpack.c.b16 %v3880, %v3876
  %v4065 = vpack.c.b16 %v3881, %v3877
  %v4066 = vpack.c.b16 %v3882, %v3878
  %v4067 = vpack.c.b16 %v3883, %v3879
  %v4068 = vpack.c.b16 %v3888, %v3884
  %v4069 = vpack.c.b16 %v3889, %v3885
  %v4070 = vpack.c.b16 %v3890, %v3886
  %v4071 = vpack.c.b16 %v3891, %v3887
  %v4072 = vpack.c.b16 %v3896, %v3892
  %v4073 = vpack.c.b16 %v3897, %v3893
  %v4074 = vpack.c.b16 %v3898, %v3894
  %v4075 = vpack.c.b16 %v3899, %v3895
  %v4076 = vpack.c.b16 %v3904, %v3900
  %v4077 = vpack.c.b16 %v3905, %v3901
  %v4078 = vpack.c.b16 %v3906, %v3902
  %v4079 = vpack.c.b16 %v3907, %v3903
  %v4080 = vpack.c.b16 %v3912, %v3908
  %v4081 = vpack.c.b16 %v3913, %v3909
  %v4082 = vpack.c.b16 %v3914, %v3910
  %v4083 = vpack.c.b16 %v3915, %v3911
  %v4084 = vpack.c.b16 %v3920, %v3916
  %v4085 = vpack.c.b16 %v3921, %v3917
  %v4086 = vpack.c.b16 %v3922, %v3918
  %v4087 = vpack.c.b16 %v3923, %v3919
  %v4088 = vpack.c.b16 %v3928, %v3924
  %v4089 = vpack.c.b16 %v3929, %v3925
  %v4090 = vpack.c.b16 %v3930, %v3926
  %v4091 = vpack.c.b16 %v3931, %v3927
  %v4092 = vpack.c.b16 %v3936, %v3932
  %v4093 = vpack.c.b16 %v3937, %v3933
  %v4094 = vpack.c.b16 %v3938, %v3934
  %v4095 = vpack.c.b16 %v3939, %v3935
  %v4096 = vpack.c.b16 %v3944, %v3940
  %v4097 = vpack.c.b16 %v3945, %v3941
  %v4098 = vpack.c.b16 %v3946, %v3942
  %v4099 = vpack.c.b16 %v3947, %v3943
  %v4100 = vpack.c.b16 %v3952, %v3948
  %v4101 = vpack.c.b16 %v3953, %v3949
  %v4102 = vpack.c.b16 %v3954, %v3950
  %v4103 = vpack.c.b16 %v3955, %v3951
  %v4104 = vpack.c.b16 %v3960, %v3956
  %v4105 = vpack.c.b16 %v3961, %v3957
  %v4106 = vpack.c.b16 %v3962, %v3958
  %v4107 = vpack.c.b16 %v3963, %v3959
  %v4108 = vpack.c.b16 %v3968, %v3964
  %v4109 = vpack.c.b16 %v3969, %v3965
  %v4110 = vpack.c.b16 %v3970, %v3966
  %v4111 = vpack.c.b16 %v3971, %v3967
  %v4112 = vpack.c.b16 %v3976, %v3972
  %v4113 = vpack.c.b16 %v3977, %v3973
  %v4114 = vpack.c.b16 %v3978, %v3974
  %v4115 = vpack.c.b16 %v3979, %v3975
  %v4116 = vpack.c.b16 %v3984, %v3980
  %v4117 = vpack.c.b16 %v3985, %v3981
  %v4118 = vpack.c.b16 %v3986, %v3982
  %v4119 = vpack.c.b16 %v3987, %v3983
  %v4120 = vpack.c.b16 %v3992, %v3988
  %v4121 = vpack.c.b16 %v3993, %v3989
  %v4122 = vpack.c.b16 %v3994, %v3990
  %v4123 = vpack.c.b16 %v3995, %v3991
  %4252 = vmatpush.bf16.msra.mxu0 %v4024
  %4253 = vmatpush.bf16.msra.mxu0 %v4020
  %4254 = vmatpush.bf16.msra.mxu0 %v4016
  %4255 = vmatpush.bf16.msra.mxu0 %v4012
  %4256 = vmatpush.bf16.msra.mxu0 %v4008
  %4257 = vmatpush.bf16.msra.mxu0 %v4004
  %4258 = vmatpush.bf16.msra.mxu0 %v4000
  %4259 = vmatpush.bf16.msra.mxu0 %v3996
  %4260 = vmatmul.bf16.gmra.mxu0 %v3470
  %v4261 = vpop.f32.mrf.mxu0
  %v4262 = vadd.f32 %v3604, %v4261
  %v4263 = vpop.f32.mrf.mxu0
  %v4264 = vadd.f32 %v3604, %v4263
  %4265 = vdwg.mxu0
  %4266 = vmatpush.bf16.msra.mxu0 %v4056
  %4267 = vmatpush.bf16.msra.mxu0 %v4052
  %4268 = vmatpush.bf16.msra.mxu0 %v4048
  %4269 = vmatpush.bf16.msra.mxu0 %v4044
  %4270 = vmatpush.bf16.msra.mxu0 %v4040
  %4271 = vmatpush.bf16.msra.mxu0 %v4036
  %4272 = vmatpush.bf16.msra.mxu0 %v4032
  %4273 = vmatpush.bf16.msra.mxu0 %v4028
  %4274 = vmatmul.bf16.gmra.mxu0 %v3471
  %v4275 = vpop.f32.mrf.mxu0
  %v4276 = vadd.f32 %v4262, %v4275
  %v4277 = vpop.f32.mrf.mxu0
  %v4278 = vadd.f32 %v4264, %v4277
  %4279 = vdwg.mxu0
  %4280 = vmatpush.bf16.msra.mxu0 %v4088
  %4281 = vmatpush.bf16.msra.mxu0 %v4084
  %4282 = vmatpush.bf16.msra.mxu0 %v4080
  %4283 = vmatpush.bf16.msra.mxu0 %v4076
  %4284 = vmatpush.bf16.msra.mxu0 %v4072
  %4285 = vmatpush.bf16.msra.mxu0 %v4068
  %4286 = vmatpush.bf16.msra.mxu0 %v4064
  %4287 = vmatpush.bf16.msra.mxu0 %v4060
  %4288 = vmatmul.bf16.gmra.mxu0 %v3472
  %v4289 = vpop.f32.mrf.mxu0
  %v4290 = vadd.f32 %v4276, %v4289
  %v4291 = vpop.f32.mrf.mxu0
  %v4292 = vadd.f32 %v4278, %v4291
  %4293 = vdwg.mxu0
  %4294 = vmatpush.bf16.msra.mxu0 %v4120
  %4295 = vmatpush.bf16.msra.mxu0 %v4116
  %4296 = vmatpush.bf16.msra.mxu0 %v4112
  %4297 = vmatpush.bf16.msra.mxu0 %v4108
  %4298 = vmatpush.bf16.msra.mxu0 %v4104
  %4299 = vmatpush.bf16.msra.mxu0 %v4100
  %4300 = vmatpush.bf16.msra.mxu0 %v4096
  %4301 = vmatpush.bf16.msra.mxu0 %v4092
  %4302 = vmatmul.bf16.gmra.mxu0 %v3473
  %v4303 = vpop.f32.mrf.mxu0
  %v4304 = vadd.f32 %v4290, %v4303
  %v4305 = vpop.f32.mrf.mxu0
  %v4306 = vadd.f32 %v4292, %v4305
  %4307 = vdwg.mxu0
  %4308 = vmatpush.bf16.msra.mxu0 %v4025
  %4309 = vmatpush.bf16.msra.mxu0 %v4021
  %4310 = vmatpush.bf16.msra.mxu0 %v4017
  %4311 = vmatpush.bf16.msra.mxu0 %v4013
  %4312 = vmatpush.bf16.msra.mxu0 %v4009
  %4313 = vmatpush.bf16.msra.mxu0 %v4005
  %4314 = vmatpush.bf16.msra.mxu0 %v4001
  %4315 = vmatpush.bf16.msra.mxu0 %v3997
  %4316 = vmatmul.bf16.gmra.mxu0 %v3470
  %v4317 = vpop.f32.mrf.mxu0
  %v4318 = vadd.f32 %v3605, %v4317
  %v4319 = vpop.f32.mrf.mxu0
  %v4320 = vadd.f32 %v3605, %v4319
  %4321 = vdwg.mxu0
  %4322 = vmatpush.bf16.msra.mxu0 %v4057
  %4323 = vmatpush.bf16.msra.mxu0 %v4053
  %4324 = vmatpush.bf16.msra.mxu0 %v4049
  %4325 = vmatpush.bf16.msra.mxu0 %v4045
  %4326 = vmatpush.bf16.msra.mxu0 %v4041
  %4327 = vmatpush.bf16.msra.mxu0 %v4037
  %4328 = vmatpush.bf16.msra.mxu0 %v4033
  %4329 = vmatpush.bf16.msra.mxu0 %v4029
  %4330 = vmatmul.bf16.gmra.mxu0 %v3471
  %v4331 = vpop.f32.mrf.mxu0
  %v4332 = vadd.f32 %v4318, %v4331
  %v4333 = vpop.f32.mrf.mxu0
  %v4334 = vadd.f32 %v4320, %v4333
  %4335 = vdwg.mxu0
  %4336 = vmatpush.bf16.msra.mxu0 %v4089
  %4337 = vmatpush.bf16.msra.mxu0 %v4085
  %4338 = vmatpush.bf16.msra.mxu0 %v4081
  %4339 = vmatpush.bf16.msra.mxu0 %v4077
  %4340 = vmatpush.bf16.msra.mxu0 %v4073
  %4341 = vmatpush.bf16.msra.mxu0 %v4069
  %4342 = vmatpush.bf16.msra.mxu0 %v4065
  %4343 = vmatpush.bf16.msra.mxu0 %v4061
  %4344 = vmatmul.bf16.gmra.mxu0 %v3472
  %v4345 = vpop.f32.mrf.mxu0
  %v4346 = vadd.f32 %v4332, %v4345
  %v4347 = vpop.f32.mrf.mxu0
  %v4348 = vadd.f32 %v4334, %v4347
  %4349 = vdwg.mxu0
  %4350 = vmatpush.bf16.msra.mxu0 %v4121
  %4351 = vmatpush.bf16.msra.mxu0 %v4117
  %4352 = vmatpush.bf16.msra.mxu0 %v4113
  %4353 = vmatpush.bf16.msra.mxu0 %v4109
  %4354 = vmatpush.bf16.msra.mxu0 %v4105
  %4355 = vmatpush.bf16.msra.mxu0 %v4101
  %4356 = vmatpush.bf16.msra.mxu0 %v4097
  %4357 = vmatpush.bf16.msra.mxu0 %v4093
  %4358 = vmatmul.bf16.gmra.mxu0 %v3473
  %v4359 = vpop.f32.mrf.mxu0
  %v4360 = vadd.f32 %v4346, %v4359
  %v4361 = vpop.f32.mrf.mxu0
  %v4362 = vadd.f32 %v4348, %v4361
  %4363 = vdwg.mxu0
  %4364 = vmatpush.bf16.msra.mxu0 %v4026
  %4365 = vmatpush.bf16.msra.mxu0 %v4022
  %4366 = vmatpush.bf16.msra.mxu0 %v4018
  %4367 = vmatpush.bf16.msra.mxu0 %v4014
  %4368 = vmatpush.bf16.msra.mxu0 %v4010
  %4369 = vmatpush.bf16.msra.mxu0 %v4006
  %4370 = vmatpush.bf16.msra.mxu0 %v4002
  %4371 = vmatpush.bf16.msra.mxu0 %v3998
  %4372 = vmatmul.bf16.gmra.mxu0 %v3470
  %v4373 = vpop.f32.mrf.mxu0
  %v4374 = vadd.f32 %v3606, %v4373
  %v4375 = vpop.f32.mrf.mxu0
  %v4376 = vadd.f32 %v3606, %v4375
  %4377 = vdwg.mxu0
  %4378 = vmatpush.bf16.msra.mxu0 %v4058
  %4379 = vmatpush.bf16.msra.mxu0 %v4054
  %4380 = vmatpush.bf16.msra.mxu0 %v4050
  %4381 = vmatpush.bf16.msra.mxu0 %v4046
  %4382 = vmatpush.bf16.msra.mxu0 %v4042
  %4383 = vmatpush.bf16.msra.mxu0 %v4038
  %4384 = vmatpush.bf16.msra.mxu0 %v4034
  %4385 = vmatpush.bf16.msra.mxu0 %v4030
  %4386 = vmatmul.bf16.gmra.mxu0 %v3471
  %v4387 = vpop.f32.mrf.mxu0
  %v4388 = vadd.f32 %v4374, %v4387
  %v4389 = vpop.f32.mrf.mxu0
  %v4390 = vadd.f32 %v4376, %v4389
  %4391 = vdwg.mxu0
  %4392 = vmatpush.bf16.msra.mxu0 %v4090
  %4393 = vmatpush.bf16.msra.mxu0 %v4086
  %4394 = vmatpush.bf16.msra.mxu0 %v4082
  %4395 = vmatpush.bf16.msra.mxu0 %v4078
  %4396 = vmatpush.bf16.msra.mxu0 %v4074
  %4397 = vmatpush.bf16.msra.mxu0 %v4070
  %4398 = vmatpush.bf16.msra.mxu0 %v4066
  %4399 = vmatpush.bf16.msra.mxu0 %v4062
  %4400 = vmatmul.bf16.gmra.mxu0 %v3472
  %v4401 = vpop.f32.mrf.mxu0
  %v4402 = vadd.f32 %v4388, %v4401
  %v4403 = vpop.f32.mrf.mxu0
  %v4404 = vadd.f32 %v4390, %v4403
  %4405 = vdwg.mxu0
  %4406 = vmatpush.bf16.msra.mxu0 %v4122
  %4407 = vmatpush.bf16.msra.mxu0 %v4118
  %4408 = vmatpush.bf16.msra.mxu0 %v4114
  %4409 = vmatpush.bf16.msra.mxu0 %v4110
  %4410 = vmatpush.bf16.msra.mxu0 %v4106
  %4411 = vmatpush.bf16.msra.mxu0 %v4102
  %4412 = vmatpush.bf16.msra.mxu0 %v4098
  %4413 = vmatpush.bf16.msra.mxu0 %v4094
  %4414 = vmatmul.bf16.gmra.mxu0 %v3473
  %v4415 = vpop.f32.mrf.mxu0
  %v4416 = vadd.f32 %v4402, %v4415
  %v4417 = vpop.f32.mrf.mxu0
  %v4418 = vadd.f32 %v4404, %v4417
  %4419 = vdwg.mxu0
  %4420 = vmatpush.bf16.msra.mxu0 %v4027
  %4421 = vmatpush.bf16.msra.mxu0 %v4023
  %4422 = vmatpush.bf16.msra.mxu0 %v4019
  %4423 = vmatpush.bf16.msra.mxu0 %v4015
  %4424 = vmatpush.bf16.msra.mxu0 %v4011
  %4425 = vmatpush.bf16.msra.mxu0 %v4007
  %4426 = vmatpush.bf16.msra.mxu0 %v4003
  %4427 = vmatpush.bf16.msra.mxu0 %v3999
  %4428 = vmatmul.bf16.gmra.mxu0 %v3470
  %v4429 = vpop.f32.mrf.mxu0
  %v4430 = vadd.f32 %v3607, %v4429
  %v4431 = vpop.f32.mrf.mxu0
  %v4432 = vadd.f32 %v3607, %v4431
  %4433 = vdwg.mxu0
  %4434 = vmatpush.bf16.msra.mxu0 %v4059
  %4435 = vmatpush.bf16.msra.mxu0 %v4055
  %4436 = vmatpush.bf16.msra.mxu0 %v4051
  %4437 = vmatpush.bf16.msra.mxu0 %v4047
  %4438 = vmatpush.bf16.msra.mxu0 %v4043
  %4439 = vmatpush.bf16.msra.mxu0 %v4039
  %4440 = vmatpush.bf16.msra.mxu0 %v4035
  %4441 = vmatpush.bf16.msra.mxu0 %v4031
  %4442 = vmatmul.bf16.gmra.mxu0 %v3471
  %v4443 = vpop.f32.mrf.mxu0
  %v4444 = vadd.f32 %v4430, %v4443
  %v4445 = vpop.f32.mrf.mxu0
  %v4446 = vadd.f32 %v4432, %v4445
  %4447 = vdwg.mxu0
  %4448 = vmatpush.bf16.msra.mxu0 %v4091
  %4449 = vmatpush.bf16.msra.mxu0 %v4087
  %4450 = vmatpush.bf16.msra.mxu0 %v4083
  %4451 = vmatpush.bf16.msra.mxu0 %v4079
  %4452 = vmatpush.bf16.msra.mxu0 %v4075
  %4453 = vmatpush.bf16.msra.mxu0 %v4071
  %4454 = vmatpush.bf16.msra.mxu0 %v4067
  %4455 = vmatpush.bf16.msra.mxu0 %v4063
  %4456 = vmatmul.bf16.gmra.mxu0 %v3472
  %v4457 = vpop.f32.mrf.mxu0
  %v4458 = vadd.f32 %v4444, %v4457
  %v4459 = vpop.f32.mrf.mxu0
  %v4460 = vadd.f32 %v4446, %v4459
  %4461 = vdwg.mxu0
  %4462 = vmatpush.bf16.msra.mxu0 %v4123
  %4463 = vmatpush.bf16.msra.mxu0 %v4119
  %4464 = vmatpush.bf16.msra.mxu0 %v4115
  %4465 = vmatpush.bf16.msra.mxu0 %v4111
  %4466 = vmatpush.bf16.msra.mxu0 %v4107
  %4467 = vmatpush.bf16.msra.mxu0 %v4103
  %4468 = vmatpush.bf16.msra.mxu0 %v4099
  %4469 = vmatpush.bf16.msra.mxu0 %v4095
  %4470 = vmatmul.bf16.gmra.mxu0 %v3473
  %v4471 = vpop.f32.mrf.mxu0
  %v4472 = vadd.f32 %v4458, %v4471
  %v4473 = vpop.f32.mrf.mxu0
  %v4474 = vadd.f32 %v4460, %v4473
  %4475 = vdwg.mxu0
  %vm4476 = vcmp.gt.f32.partialorder %v4304, 0.0
  %vm4477 = vcmp.gt.f32.partialorder %v4360, 0.0
  %vm4478 = vcmp.gt.f32.partialorder %v4416, 0.0
  %vm4479 = vcmp.gt.f32.partialorder %v4472, 0.0
  %vm4480 = vcmp.gt.f32.partialorder %v4306, 0.0
  %vm4481 = vcmp.gt.f32.partialorder %v4362, 0.0
  %vm4482 = vcmp.gt.f32.partialorder %v4418, 0.0
  %vm4483 = vcmp.gt.f32.partialorder %v4474, 0.0
  %v4484 = vmul.f32 %v4304, 0.1
  %v4485 = vmul.f32 %v4360, 0.1
  %v4486 = vmul.f32 %v4416, 0.1
  %v4487 = vmul.f32 %v4472, 0.1
  %v4488 = vmul.f32 %v4306, 0.1
  %v4489 = vmul.f32 %v4362, 0.1
  %v4490 = vmul.f32 %v4418, 0.1
  %v4491 = vmul.f32 %v4474, 0.1
  %v4492 = vsel %vm4476, %v4304, %v4484
  %v4493 = vsel %vm4477, %v4360, %v4485
  %v4494 = vsel %vm4478, %v4416, %v4486
  %v4495 = vsel %vm4479, %v4472, %v4487
  %v4496 = vsel %vm4480, %v4306, %v4488
  %v4497 = vsel %vm4481, %v4362, %v4489
  %v4498 = vsel %vm4482, %v4418, %v4490
  %v4499 = vsel %vm4483, %v4474, %v4491
  %v4500 = vpack.c.bf16 %v4496, %v4492
  %v4501 = vpack.c.bf16 %v4497, %v4493
  %v4502 = vpack.c.bf16 %v4498, %v4494
  %v4503 = vpack.c.bf16 %v4499, %v4495
  %v4504 = vld [vmem:[%s11] sm:$0xff]
  %v4505 = vld [vmem:[%s11 + $0x8] sm:$0xff]
  %v4506 = vld [vmem:[%s11 + $0x10] sm:$0xff]
  %v4507 = vld [vmem:[%s11 + $0x18] sm:$0xff]
  %v4508 = vld [vmem:[%s11 + $0x20] sm:$0xff]
  %v4509 = vld [vmem:[%s11 + $0x28] sm:$0xff]
  %v4510 = vld [vmem:[%s11 + $0x30] sm:$0xff]
  %v4511 = vld [vmem:[%s11 + $0x38] sm:$0xff]
  %v4512 = vld [vmem:[%s11 + $0x40] sm:$0xff]
  %v4513 = vld [vmem:[%s11 + $0x48] sm:$0xff]
  %v4514 = vld [vmem:[%s11 + $0x50] sm:$0xff]
  %v4515 = vld [vmem:[%s11 + $0x58] sm:$0xff]
  %v4516 = vld [vmem:[%s11 + $0x60] sm:$0xff]
  %v4517 = vld [vmem:[%s11 + $0x68] sm:$0xff]
  %v4518 = vld [vmem:[%s11 + $0x70] sm:$0xff]
  %v4519 = vld [vmem:[%s11 + $0x78] sm:$0xff]
  %v4520 = vld [vmem:[%s11 + $0x80] sm:$0xff]
  %v4521 = vld [vmem:[%s11 + $0x88] sm:$0xff]
  %v4522 = vld [vmem:[%s11 + $0x90] sm:$0xff]
  %v4523 = vld [vmem:[%s11 + $0x98] sm:$0xff]
  %v4524 = vld [vmem:[%s11 + $0xa0] sm:$0xff]
  %v4525 = vld [vmem:[%s11 + $0xa8] sm:$0xff]
  %v4526 = vld [vmem:[%s11 + $0xb0] sm:$0xff]
  %v4527 = vld [vmem:[%s11 + $0xb8] sm:$0xff]
  %v4528 = vld [vmem:[%s11 + $0xc0] sm:$0xff]
  %v4529 = vld [vmem:[%s11 + $0xc8] sm:$0xff]
  %v4530 = vld [vmem:[%s11 + $0xd0] sm:$0xff]
  %v4531 = vld [vmem:[%s11 + $0xd8] sm:$0xff]
  %v4532 = vld [vmem:[%s11 + $0xe0] sm:$0xff]
  %v4533 = vld [vmem:[%s11 + $0xe8] sm:$0xff]
  %v4534 = vld [vmem:[%s11 + $0xf0] sm:$0xff]
  %v4535 = vld [vmem:[%s11 + $0xf8] sm:$0xff]
  %v4536 = vld [vmem:[%s11 + $0x100] sm:$0xff]
  %v4537 = vld [vmem:[%s11 + $0x108] sm:$0xff]
  %v4538 = vld [vmem:[%s11 + $0x110] sm:$0xff]
  %v4539 = vld [vmem:[%s11 + $0x118] sm:$0xff]
  %v4540 = vld [vmem:[%s11 + $0x120] sm:$0xff]
  %v4541 = vld [vmem:[%s11 + $0x128] sm:$0xff]
  %v4542 = vld [vmem:[%s11 + $0x130] sm:$0xff]
  %v4543 = vld [vmem:[%s11 + $0x138] sm:$0xff]
  %v4544 = vld [vmem:[%s11 + $0x140] sm:$0xff]
  %v4545 = vld [vmem:[%s11 + $0x148] sm:$0xff]
  %v4546 = vld [vmem:[%s11 + $0x150] sm:$0xff]
  %v4547 = vld [vmem:[%s11 + $0x158] sm:$0xff]
  %v4548 = vld [vmem:[%s11 + $0x160] sm:$0xff]
  %v4549 = vld [vmem:[%s11 + $0x168] sm:$0xff]
  %v4550 = vld [vmem:[%s11 + $0x170] sm:$0xff]
  %v4551 = vld [vmem:[%s11 + $0x178] sm:$0xff]
  %v4552 = vld [vmem:[%s11 + $0x180] sm:$0xff]
  %v4553 = vld [vmem:[%s11 + $0x188] sm:$0xff]
  %v4554 = vld [vmem:[%s11 + $0x190] sm:$0xff]
  %v4555 = vld [vmem:[%s11 + $0x198] sm:$0xff]
  %v4556 = vld [vmem:[%s11 + $0x1a0] sm:$0xff]
  %v4557 = vld [vmem:[%s11 + $0x1a8] sm:$0xff]
  %v4558 = vld [vmem:[%s11 + $0x1b0] sm:$0xff]
  %v4559 = vld [vmem:[%s11 + $0x1b8] sm:$0xff]
  %v4560 = vld [vmem:[%s11 + $0x1c0] sm:$0xff]
  %v4561 = vld [vmem:[%s11 + $0x1c8] sm:$0xff]
  %v4562 = vld [vmem:[%s11 + $0x1d0] sm:$0xff]
  %v4563 = vld [vmem:[%s11 + $0x1d8] sm:$0xff]
  %v4564 = vld [vmem:[%s11 + $0x1e0] sm:$0xff]
  %v4565 = vld [vmem:[%s11 + $0x1e8] sm:$0xff]
  %v4566 = vld [vmem:[%s11 + $0x1f0] sm:$0xff]
  %v4567 = vld [vmem:[%s11 + $0x1f8] sm:$0xff]
  %v4568 = vld [vmem:[%s12] sm:$0x3]
  %v4570 = vperm.slane %v4568, 0
  %v4571 = vperm.slane %v4568, 1
  %v4638 = vunpack.c.l.b16 %v4504
  %v4639 = vunpack.c.h.b16 %v4504
  %v4640 = vunpack.c.l.b16 %v4505
  %v4641 = vunpack.c.h.b16 %v4505
  %v4642 = vunpack.c.l.b16 %v4506
  %v4643 = vunpack.c.h.b16 %v4506
  %v4644 = vunpack.c.l.b16 %v4507
  %v4645 = vunpack.c.h.b16 %v4507
  %v4646 = vunpack.c.l.b16 %v4508
  %v4647 = vunpack.c.h.b16 %v4508
  %v4648 = vunpack.c.l.b16 %v4509
  %v4649 = vunpack.c.h.b16 %v4509
  %v4650 = vunpack.c.l.b16 %v4510
  %v4651 = vunpack.c.h.b16 %v4510
  %v4652 = vunpack.c.l.b16 %v4511
  %v4653 = vunpack.c.h.b16 %v4511
  %v4654 = vunpack.c.l.b16 %v4512
  %v4655 = vunpack.c.h.b16 %v4512
  %v4656 = vunpack.c.l.b16 %v4513
  %v4657 = vunpack.c.h.b16 %v4513
  %v4658 = vunpack.c.l.b16 %v4514
  %v4659 = vunpack.c.h.b16 %v4514
  %v4660 = vunpack.c.l.b16 %v4515
  %v4661 = vunpack.c.h.b16 %v4515
  %v4662 = vunpack.c.l.b16 %v4516
  %v4663 = vunpack.c.h.b16 %v4516
  %v4664 = vunpack.c.l.b16 %v4517
  %v4665 = vunpack.c.h.b16 %v4517
  %v4666 = vunpack.c.l.b16 %v4518
  %v4667 = vunpack.c.h.b16 %v4518
  %v4668 = vunpack.c.l.b16 %v4519
  %v4669 = vunpack.c.h.b16 %v4519
  %v4670 = vunpack.c.l.b16 %v4520
  %v4671 = vunpack.c.h.b16 %v4520
  %v4672 = vunpack.c.l.b16 %v4521
  %v4673 = vunpack.c.h.b16 %v4521
  %v4674 = vunpack.c.l.b16 %v4522
  %v4675 = vunpack.c.h.b16 %v4522
  %v4676 = vunpack.c.l.b16 %v4523
  %v4677 = vunpack.c.h.b16 %v4523
  %v4678 = vunpack.c.l.b16 %v4524
  %v4679 = vunpack.c.h.b16 %v4524
  %v4680 = vunpack.c.l.b16 %v4525
  %v4681 = vunpack.c.h.b16 %v4525
  %v4682 = vunpack.c.l.b16 %v4526
  %v4683 = vunpack.c.h.b16 %v4526
  %v4684 = vunpack.c.l.b16 %v4527
  %v4685 = vunpack.c.h.b16 %v4527
  %v4686 = vunpack.c.l.b16 %v4528
  %v4687 = vunpack.c.h.b16 %v4528
  %v4688 = vunpack.c.l.b16 %v4529
  %v4689 = vunpack.c.h.b16 %v4529
  %v4690 = vunpack.c.l.b16 %v4530
  %v4691 = vunpack.c.h.b16 %v4530
  %v4692 = vunpack.c.l.b16 %v4531
  %v4693 = vunpack.c.h.b16 %v4531
  %v4694 = vunpack.c.l.b16 %v4532
  %v4695 = vunpack.c.h.b16 %v4532
  %v4696 = vunpack.c.l.b16 %v4533
  %v4697 = vunpack.c.h.b16 %v4533
  %v4698 = vunpack.c.l.b16 %v4534
  %v4699 = vunpack.c.h.b16 %v4534
  %v4700 = vunpack.c.l.b16 %v4535
  %v4701 = vunpack.c.h.b16 %v4535
  %v4702 = vunpack.c.l.b16 %v4536
  %v4703 = vunpack.c.h.b16 %v4536
  %v4704 = vunpack.c.l.b16 %v4537
  %v4705 = vunpack.c.h.b16 %v4537
  %v4706 = vunpack.c.l.b16 %v4538
  %v4707 = vunpack.c.h.b16 %v4538
  %v4708 = vunpack.c.l.b16 %v4539
  %v4709 = vunpack.c.h.b16 %v4539
  %v4710 = vunpack.c.l.b16 %v4540
  %v4711 = vunpack.c.h.b16 %v4540
  %v4712 = vunpack.c.l.b16 %v4541
  %v4713 = vunpack.c.h.b16 %v4541
  %v4714 = vunpack.c.l.b16 %v4542
  %v4715 = vunpack.c.h.b16 %v4542
  %v4716 = vunpack.c.l.b16 %v4543
  %v4717 = vunpack.c.h.b16 %v4543
  %v4718 = vunpack.c.l.b16 %v4544
  %v4719 = vunpack.c.h.b16 %v4544
  %v4720 = vunpack.c.l.b16 %v4545
  %v4721 = vunpack.c.h.b16 %v4545
  %v4722 = vunpack.c.l.b16 %v4546
  %v4723 = vunpack.c.h.b16 %v4546
  %v4724 = vunpack.c.l.b16 %v4547
  %v4725 = vunpack.c.h.b16 %v4547
  %v4726 = vunpack.c.l.b16 %v4548
  %v4727 = vunpack.c.h.b16 %v4548
  %v4728 = vunpack.c.l.b16 %v4549
  %v4729 = vunpack.c.h.b16 %v4549
  %v4730 = vunpack.c.l.b16 %v4550
  %v4731 = vunpack.c.h.b16 %v4550
  %v4732 = vunpack.c.l.b16 %v4551
  %v4733 = vunpack.c.h.b16 %v4551
  %v4734 = vunpack.c.l.b16 %v4552
  %v4735 = vunpack.c.h.b16 %v4552
  %v4736 = vunpack.c.l.b16 %v4553
  %v4737 = vunpack.c.h.b16 %v4553
  %v4738 = vunpack.c.l.b16 %v4554
  %v4739 = vunpack.c.h.b16 %v4554
  %v4740 = vunpack.c.l.b16 %v4555
  %v4741 = vunpack.c.h.b16 %v4555
  %v4742 = vunpack.c.l.b16 %v4556
  %v4743 = vunpack.c.h.b16 %v4556
  %v4744 = vunpack.c.l.b16 %v4557
  %v4745 = vunpack.c.h.b16 %v4557
  %v4746 = vunpack.c.l.b16 %v4558
  %v4747 = vunpack.c.h.b16 %v4558
  %v4748 = vunpack.c.l.b16 %v4559
  %v4749 = vunpack.c.h.b16 %v4559
  %v4750 = vunpack.c.l.b16 %v4560
  %v4751 = vunpack.c.h.b16 %v4560
  %v4752 = vunpack.c.l.b16 %v4561
  %v4753 = vunpack.c.h.b16 %v4561
  %v4754 = vunpack.c.l.b16 %v4562
  %v4755 = vunpack.c.h.b16 %v4562
  %v4756 = vunpack.c.l.b16 %v4563
  %v4757 = vunpack.c.h.b16 %v4563
  %v4758 = vunpack.c.l.b16 %v4564
  %v4759 = vunpack.c.h.b16 %v4564
  %v4760 = vunpack.c.l.b16 %v4565
  %v4761 = vunpack.c.h.b16 %v4565
  %v4762 = vunpack.c.l.b16 %v4566
  %v4763 = vunpack.c.h.b16 %v4566
  %v4764 = vunpack.c.l.b16 %v4567
  %v4765 = vunpack.c.h.b16 %v4567
  %v4766 = vpack.c.b16 %v4640, %v4638
  %v4767 = vpack.c.b16 %v4641, %v4639
  %v4768 = vpack.c.b16 %v4644, %v4642
  %v4769 = vpack.c.b16 %v4645, %v4643
  %v4770 = vpack.c.b16 %v4648, %v4646
  %v4771 = vpack.c.b16 %v4649, %v4647
  %v4772 = vpack.c.b16 %v4652, %v4650
  %v4773 = vpack.c.b16 %v4653, %v4651
  %v4774 = vpack.c.b16 %v4656, %v4654
  %v4775 = vpack.c.b16 %v4657, %v4655
  %v4776 = vpack.c.b16 %v4660, %v4658
  %v4777 = vpack.c.b16 %v4661, %v4659
  %v4778 = vpack.c.b16 %v4664, %v4662
  %v4779 = vpack.c.b16 %v4665, %v4663
  %v4780 = vpack.c.b16 %v4668, %v4666
  %v4781 = vpack.c.b16 %v4669, %v4667
  %v4782 = vpack.c.b16 %v4672, %v4670
  %v4783 = vpack.c.b16 %v4673, %v4671
  %v4784 = vpack.c.b16 %v4676, %v4674
  %v4785 = vpack.c.b16 %v4677, %v4675
  %v4786 = vpack.c.b16 %v4680, %v4678
  %v4787 = vpack.c.b16 %v4681, %v4679
  %v4788 = vpack.c.b16 %v4684, %v4682
  %v4789 = vpack.c.b16 %v4685, %v4683
  %v4790 = vpack.c.b16 %v4688, %v4686
  %v4791 = vpack.c.b16 %v4689, %v4687
  %v4792 = vpack.c.b16 %v4692, %v4690
  %v4793 = vpack.c.b16 %v4693, %v4691
  %v4794 = vpack.c.b16 %v4696, %v4694
  %v4795 = vpack.c.b16 %v4697, %v4695
  %v4796 = vpack.c.b16 %v4700, %v4698
  %v4797 = vpack.c.b16 %v4701, %v4699
  %v4798 = vpack.c.b16 %v4704, %v4702
  %v4799 = vpack.c.b16 %v4705, %v4703
  %v4800 = vpack.c.b16 %v4708, %v4706
  %v4801 = vpack.c.b16 %v4709, %v4707
  %v4802 = vpack.c.b16 %v4712, %v4710
  %v4803 = vpack.c.b16 %v4713, %v4711
  %v4804 = vpack.c.b16 %v4716, %v4714
  %v4805 = vpack.c.b16 %v4717, %v4715
  %v4806 = vpack.c.b16 %v4720, %v4718
  %v4807 = vpack.c.b16 %v4721, %v4719
  %v4808 = vpack.c.b16 %v4724, %v4722
  %v4809 = vpack.c.b16 %v4725, %v4723
  %v4810 = vpack.c.b16 %v4728, %v4726
  %v4811 = vpack.c.b16 %v4729, %v4727
  %v4812 = vpack.c.b16 %v4732, %v4730
  %v4813 = vpack.c.b16 %v4733, %v4731
  %v4814 = vpack.c.b16 %v4736, %v4734
  %v4815 = vpack.c.b16 %v4737, %v4735
  %v4816 = vpack.c.b16 %v4740, %v4738
  %v4817 = vpack.c.b16 %v4741, %v4739
  %v4818 = vpack.c.b16 %v4744, %v4742
  %v4819 = vpack.c.b16 %v4745, %v4743
  %v4820 = vpack.c.b16 %v4748, %v4746
  %v4821 = vpack.c.b16 %v4749, %v4747
  %v4822 = vpack.c.b16 %v4752, %v4750
  %v4823 = vpack.c.b16 %v4753, %v4751
  %v4824 = vpack.c.b16 %v4756, %v4754
  %v4825 = vpack.c.b16 %v4757, %v4755
  %v4826 = vpack.c.b16 %v4760, %v4758
  %v4827 = vpack.c.b16 %v4761, %v4759
  %v4828 = vpack.c.b16 %v4764, %v4762
  %v4829 = vpack.c.b16 %v4765, %v4763
  %4894 = vmatpush.bf16.msra.mxu0 %v4780
  %4895 = vmatpush.bf16.msra.mxu0 %v4778
  %4896 = vmatpush.bf16.msra.mxu0 %v4776
  %4897 = vmatpush.bf16.msra.mxu0 %v4774
  %4898 = vmatpush.bf16.msra.mxu0 %v4772
  %4899 = vmatpush.bf16.msra.mxu0 %v4770
  %4900 = vmatpush.bf16.msra.mxu0 %v4768
  %4901 = vmatpush.bf16.msra.mxu0 %v4766
  %4902 = vmatmul.bf16.gmra.mxu0 %v4500
  %v4903 = vpop.f32.mrf.mxu0
  %v4904 = vadd.f32 %v4570, %v4903
  %v4905 = vpop.f32.mrf.mxu0
  %v4906 = vadd.f32 %v4570, %v4905
  %4907 = vdwg.mxu0
  %4908 = vmatpush.bf16.msra.mxu0 %v4796
  %4909 = vmatpush.bf16.msra.mxu0 %v4794
  %4910 = vmatpush.bf16.msra.mxu0 %v4792
  %4911 = vmatpush.bf16.msra.mxu0 %v4790
  %4912 = vmatpush.bf16.msra.mxu0 %v4788
  %4913 = vmatpush.bf16.msra.mxu0 %v4786
  %4914 = vmatpush.bf16.msra.mxu0 %v4784
  %4915 = vmatpush.bf16.msra.mxu0 %v4782
  %4916 = vmatmul.bf16.gmra.mxu0 %v4501
  %v4917 = vpop.f32.mrf.mxu0
  %v4918 = vadd.f32 %v4904, %v4917
  %v4919 = vpop.f32.mrf.mxu0
  %v4920 = vadd.f32 %v4906, %v4919
  %4921 = vdwg.mxu0
  %4922 = vmatpush.bf16.msra.mxu0 %v4812
  %4923 = vmatpush.bf16.msra.mxu0 %v4810
  %4924 = vmatpush.bf16.msra.mxu0 %v4808
  %4925 = vmatpush.bf16.msra.mxu0 %v4806
  %4926 = vmatpush.bf16.msra.mxu0 %v4804
  %4927 = vmatpush.bf16.msra.mxu0 %v4802
  %4928 = vmatpush.bf16.msra.mxu0 %v4800
  %4929 = vmatpush.bf16.msra.mxu0 %v4798
  %4930 = vmatmul.bf16.gmra.mxu0 %v4502
  %v4931 = vpop.f32.mrf.mxu0
  %v4932 = vadd.f32 %v4918, %v4931
  %v4933 = vpop.f32.mrf.mxu0
  %v4934 = vadd.f32 %v4920, %v4933
  %4935 = vdwg.mxu0
  %4936 = vmatpush.bf16.msra.mxu0 %v4828
  %4937 = vmatpush.bf16.msra.mxu0 %v4826
  %4938 = vmatpush.bf16.msra.mxu0 %v4824
  %4939 = vmatpush.bf16.msra.mxu0 %v4822
  %4940 = vmatpush.bf16.msra.mxu0 %v4820
  %4941 = vmatpush.bf16.msra.mxu0 %v4818
  %4942 = vmatpush.bf16.msra.mxu0 %v4816
  %4943 = vmatpush.bf16.msra.mxu0 %v4814
  %4944 = vmatmul.bf16.gmra.mxu0 %v4503
  %v4945 = vpop.f32.mrf.mxu0
  %v4946 = vadd.f32 %v4932, %v4945
  %v4947 = vpop.f32.mrf.mxu0
  %v4948 = vadd.f32 %v4934, %v4947
  %4949 = vdwg.mxu0
  %4950 = vmatpush.bf16.msra.mxu0 %v4781
  %4951 = vmatpush.bf16.msra.mxu0 %v4779
  %4952 = vmatpush.bf16.msra.mxu0 %v4777
  %4953 = vmatpush.bf16.msra.mxu0 %v4775
  %4954 = vmatpush.bf16.msra.mxu0 %v4773
  %4955 = vmatpush.bf16.msra.mxu0 %v4771
  %4956 = vmatpush.bf16.msra.mxu0 %v4769
  %4957 = vmatpush.bf16.msra.mxu0 %v4767
  %4958 = vmatmul.bf16.gmra.mxu0 %v4500
  %v4959 = vpop.f32.mrf.mxu0
  %v4960 = vadd.f32 %v4571, %v4959
  %v4961 = vpop.f32.mrf.mxu0
  %v4962 = vadd.f32 %v4571, %v4961
  %4963 = vdwg.mxu0
  %4964 = vmatpush.bf16.msra.mxu0 %v4797
  %4965 = vmatpush.bf16.msra.mxu0 %v4795
  %4966 = vmatpush.bf16.msra.mxu0 %v4793
  %4967 = vmatpush.bf16.msra.mxu0 %v4791
  %4968 = vmatpush.bf16.msra.mxu0 %v4789
  %4969 = vmatpush.bf16.msra.mxu0 %v4787
  %4970 = vmatpush.bf16.msra.mxu0 %v4785
  %4971 = vmatpush.bf16.msra.mxu0 %v4783
  %4972 = vmatmul.bf16.gmra.mxu0 %v4501
  %v4973 = vpop.f32.mrf.mxu0
  %v4974 = vadd.f32 %v4960, %v4973
  %v4975 = vpop.f32.mrf.mxu0
  %v4976 = vadd.f32 %v4962, %v4975
  %4977 = vdwg.mxu0
  %4978 = vmatpush.bf16.msra.mxu0 %v4813
  %4979 = vmatpush.bf16.msra.mxu0 %v4811
  %4980 = vmatpush.bf16.msra.mxu0 %v4809
  %4981 = vmatpush.bf16.msra.mxu0 %v4807
  %4982 = vmatpush.bf16.msra.mxu0 %v4805
  %4983 = vmatpush.bf16.msra.mxu0 %v4803
  %4984 = vmatpush.bf16.msra.mxu0 %v4801
  %4985 = vmatpush.bf16.msra.mxu0 %v4799
  %4986 = vmatmul.bf16.gmra.mxu0 %v4502
  %v4987 = vpop.f32.mrf.mxu0
  %v4988 = vadd.f32 %v4974, %v4987
  %v4989 = vpop.f32.mrf.mxu0
  %v4990 = vadd.f32 %v4976, %v4989
  %4991 = vdwg.mxu0
  %4992 = vmatpush.bf16.msra.mxu0 %v4829
  %4993 = vmatpush.bf16.msra.mxu0 %v4827
  %4994 = vmatpush.bf16.msra.mxu0 %v4825
  %4995 = vmatpush.bf16.msra.mxu0 %v4823
  %4996 = vmatpush.bf16.msra.mxu0 %v4821
  %4997 = vmatpush.bf16.msra.mxu0 %v4819
  %4998 = vmatpush.bf16.msra.mxu0 %v4817
  %4999 = vmatpush.bf16.msra.mxu0 %v4815
  %5000 = vmatmul.bf16.gmra.mxu0 %v4503
  %v5001 = vpop.f32.mrf.mxu0
  %v5002 = vadd.f32 %v4988, %v5001
  %v5003 = vpop.f32.mrf.mxu0
  %v5004 = vadd.f32 %v4990, %v5003
  %5005 = vdwg.mxu0
  %s5006 = smul.u32 0, 16
  %v5007 = vlaneseq
  %v5008 = vshrl.u32 %v5007, 7
  %v5009 = vadd.s32 %v5008, 8
  %v5010 = vstv %s5006
  %v5011 = vadd.s32 %v5010, %v5008
  %v5012 = vadd.s32 %v5010, %v5009
  %v5013 = vcvt.s32.f32 %v5011
  %v5014 = vcvt.s32.f32 %v5012
  %v5015 = vadd.f32 %v5013, 0.5
  %v5016 = vadd.f32 %v5014, 0.5
  %v5017 = vrcp.pop 4.0
  %v5018 = vmul.f32 4.0, %v5017
  %v5019 = vsub.f32 1.0, %v5018
  %v5020 = vmul.f32 %v5017, %v5019
  %v5021 = vadd.f32 %v5017, %v5020
  %vm5022 = vweird.f32 %v5017
  %v5023 = vsel %vm5022, %v5017, %v5021
  %v5024 = vmul.f32 %v5015, %v5023
  %v5025 = vmul.f32 %v5016, %v5023
  %v5026 = vfloor.f32 %v5024
  %v5027 = vfloor.f32 %v5025
  %v5028 = vmul.f32 %v5026, 4.0
  %v5029 = vmul.f32 %v5027, 4.0
  %v5030 = vsub.f32 %v5013, %v5028
  %v5031 = vsub.f32 %v5014, %v5029
  %v5032 = vadd.f32 %v5030, 0.5
  %v5033 = vadd.f32 %v5031, 0.5
  %v5034 = vrcp.pop 2.0
  %v5035 = vmul.f32 2.0, %v5034
  %v5036 = vsub.f32 1.0, %v5035
  %v5037 = vmul.f32 %v5034, %v5036
  %v5038 = vadd.f32 %v5034, %v5037
  %vm5039 = vweird.f32 %v5034
  %v5040 = vsel %vm5039, %v5034, %v5038
  %v5041 = vmul.f32 %v5032, %v5040
  %v5042 = vmul.f32 %v5033, %v5040
  %v5043 = vfloor.f32 %v5041
  %v5044 = vfloor.f32 %v5042
  %v5045 = vmul.f32 %v5043, 2.0
  %v5046 = vmul.f32 %v5044, 2.0
  %v5047 = vsub.f32 %v5030, %v5045
  %v5048 = vsub.f32 %v5031, %v5046
  %v5049 = vlaneseq
  %v5050 = vand.u32 %v5049, 127
  %vm5051 = vcmp.eq.s32.totalorder %v5050, 0
  %vm5052 = vcmp.eq.s32.totalorder %v5050, 2
  %vm5053 = vmor %vm5051, %vm5052
  %v5054 = vsel %vm5053, %v5047, %v5043
  %v5055 = vsel %vm5053, %v5048, %v5044
  %vm5056 = vcmp.lt.s32.totalorder %v5050, 4
  %v5057 = vsel %vm5056, %v5054, 0.0
  %v5058 = vsel %vm5056, %v5055, 0.0
  %v5059 = vsub.f32 0.0, %v4946
  %v5060 = vsub.f32 0.0, %v4948
  %v5061 = vmul.f32 %v5059, 1.442695
  %v5062 = vpow.pop %v5061
  %v5063 = vmul.f32 %v5060, 1.442695
  %v5064 = vpow.pop %v5063
  %v5065 = vadd.f32 %v5062, 1.0
  %v5066 = vadd.f32 %v5064, 1.0
  %v5067 = vrcp.pop %v5065
  %v5068 = vmul.f32 %v5065, %v5067
  %v5069 = vsub.f32 1.0, %v5068
  %v5070 = vmul.f32 %v5067, %v5069
  %v5071 = vadd.f32 %v5067, %v5070
  %vm5072 = vweird.f32 %v5065
  %vm5073 = vweird.f32 %v5067
  %vm5074 = vmor %vm5072, %vm5073
  %v5075 = vsel %vm5074, %v5067, %v5071
  %v5076 = vand.u32 2147483647, %v5065
  %vm5077 = vcmp.eq.f32.partialorder %v5076, 8.507059e+37
  %v5078 = vand.u32 %v5065, 2147483648
  %v5079 = vor.u32 1.1754944e-38, %v5078
  %v5080 = vsel %vm5077, %v5079, %v5075
  %v5081 = vmul.f32 1.0, %v5080
  %v5082 = vrcp.pop %v5066
  %v5083 = vmul.f32 %v5066, %v5082
  %v5084 = vsub.f32 1.0, %v5083
  %v5085 = vmul.f32 %v5082, %v5084
  %v5086 = vadd.f32 %v5082, %v5085
  %vm5087 = vweird.f32 %v5066
  %vm5088 = vweird.f32 %v5082
  %vm5089 = vmor %vm5087, %vm5088
  %v5090 = vsel %vm5089, %v5082, %v5086
  %v5091 = vand.u32 2147483647, %v5066
  %vm5092 = vcmp.eq.f32.partialorder %v5091, 8.507059e+37
  %v5093 = vand.u32 %v5066, 2147483648
  %v5094 = vor.u32 1.1754944e-38, %v5093
  %v5095 = vsel %vm5092, %v5094, %v5090
  %v5096 = vmul.f32 1.0, %v5095
  %v5097 = vadd.f32 %v5081, %v5057
  %v5098 = vadd.f32 %v5096, %v5058
  %v5099 = vmul.f32 %v5097, 32.0
  %v5100 = vmul.f32 %v5098, 32.0
  %v5101 = vmul.f32 %v5002, 1.442695
  %v5102 = vpow.pop %v5101
  %v5103 = vmul.f32 %v5004, 1.442695
  %v5104 = vpow.pop %v5103
  %v5105 = vmul.f32 %v5102, 32.0
  %v5106 = vmul.f32 %v5104, 32.0
  %vm5107 = vcmp.lt.s32.totalorder %v5050, 2
  %v5108 = vsel %vm5056, 0.5, 0.0
  %v5109 = vsel %vm5107, -0.5, %v5108
  %v5110 = vmul.f32 %v5109, %v5105
  %v5111 = vmul.f32 %v5109, %v5106
  %v5112 = vadd.f32 %v5099, %v5110
  %v5113 = vadd.f32 %v5100, %v5111
  %v5114 = vsel %vm5056, %v5112, %v2440
  %v5115 = vsel %vm5056, %v5113, %v2442
  %5116 = vst [vmem:[%s13] sm:$0xff] %v5114
  %5117 = vst [vmem:[%s13 + $0x8] sm:$0xff] %v5115
  // Predicated region
  $region54: #{yolov1_forward.5} parent=0 // pred_check
    _
  $region55: #{yolov1_forward.5} parent=0 // pred_check_branch
    %5119 = sbr.rel (0) target = $region57
  $region56: #{yolov1_forward.5} parent=0 // pred_region
    _
  $region57: #{yolov1_forward.5} parent=0 // pred_fallthru
    _
  // Predicated region
  $region58: #{yolov1_forward.5} parent=0 // pred_check
    _
  $region59: #{yolov1_forward.5} parent=0 // pred_check_branch
    %5121 = sbr.rel (0) target = $region61
  $region60: #{yolov1_forward.5} parent=0 // pred_region
    _
  $region61: #{yolov1_forward.5} parent=0 // pred_fallthru
    _

</llo_original>
